<compile_context>
chip_gen: v7x
topology: tpu7x:2x2x1
jax: 0.10.0
libtpu: 0.0.40
codegen_flags: <defaults>
</compile_context>

<pallas_src>
import functools
import math

import jax
import jax.numpy as jnp
from jax import lax
from jax.experimental import pallas as pl
from jax.experimental.pallas import tpu as pltpu


# ---------------------------------------------------------------------------
# Fused Pallas kernel: conv-matmul (K-grid accumulated) + BN + residual + ReLU
# ---------------------------------------------------------------------------

def _conv_bn_act_kernel(a_ref, b_ref, gb_ref, *rest,
                        residual_mode, relu, eps, inv_m):
    """Grid axis 0 walks the grouped 3x3-tap / K axis.

    Every step accumulates A[k] @ B[k] into the f32 VMEM accumulator (MXU).
    The last step runs the epilogue: BN batch stats + apply, the optional
    fused downsample-branch 1x1 conv + BN residual (or an external residual),
    ReLU, and one lane-dense store of the output tile.
    """
    if residual_mode == 'ext':
        res_ref, o_ref, acc_ref = rest
    elif residual_mode == 'ds':
        ads_ref, bds_ref, gbds_ref, o_ref, acc_ref = rest
    else:
        o_ref, acc_ref = rest

    k = pl.program_id(0)

    @pl.when(k == 0)
    def _():
        acc_ref[...] = jnp.zeros_like(acc_ref)

    # Partial contraction for this group of taps (bf16 operands, f32 acc).
    acc_ref[...] += jnp.dot(a_ref[0], b_ref[0],
                            preferred_element_type=jnp.float32)

    @pl.when(k == pl.num_programs(0) - 1)
    def _():
        acc = acc_ref[...]
        # Training-mode BatchNorm stats over M = N*H*W (biased variance,
        # two-pass centered to avoid E[x^2] - mean^2 cancellation).
        mean = jnp.sum(acc, axis=-1, keepdims=True) * inv_m
        centered = acc - mean
        var = jnp.sum(centered * centered, axis=-1, keepdims=True) * inv_m
        y = centered * (gb_ref[:, 0:1] * lax.rsqrt(var + eps)) + gb_ref[:, 1:2]

        if residual_mode == 'ext':
            y = y + res_ref[...]
        elif residual_mode == 'ds':
            # Fused downsample path: residual = BN(1x1-stride-2 conv(x)).
            r = jnp.dot(ads_ref[...], bds_ref[...],
                        preferred_element_type=jnp.float32)
            rmean = jnp.sum(r, axis=-1, keepdims=True) * inv_m
            rcent = r - rmean
            rvar = jnp.sum(rcent * rcent, axis=-1, keepdims=True) * inv_m
            y = (y + rcent * (gbds_ref[:, 0:1] * lax.rsqrt(rvar + eps))
                 + gbds_ref[:, 1:2])

        if relu:
            y = jnp.maximum(y, 0.0)
        o_ref[...] = y


def fused_conv_bn_act(A, B, gb, *, residual=None, ds=None, relu=True,
                      eps=1e-5):
    """A: (T, Cout, Kg) bf16 weights; B: (T, Kg, M) bf16 im2col^T;
    gb: (Cout, 2) f32 packed gamma/beta.  Returns (Cout, M) f32."""
    T, Cout, Kg = A.shape
    M = B.shape[-1]

    residual_mode = ('ds' if ds is not None
                     else ('ext' if residual is not None else 'none'))
    kernel = functools.partial(_conv_bn_act_kernel,
                               residual_mode=residual_mode, relu=relu,
                               eps=eps, inv_m=1.0 / M)

    args = [A, B, gb]
    in_specs = [
        pl.BlockSpec((1, Cout, Kg), lambda k: (k, 0, 0)),
        pl.BlockSpec((1, Kg, M), lambda k: (k, 0, 0)),
        pl.BlockSpec((Cout, 2), lambda k: (0, 0)),
    ]
    if residual_mode == 'ext':
        args.append(residual)
        in_specs.append(pl.BlockSpec((Cout, M), lambda k: (0, 0)))
    elif residual_mode == 'ds':
        A_ds, B_ds, gb_ds = ds
        Cds = A_ds.shape[1]
        args += [A_ds, B_ds, gb_ds]
        in_specs += [
            pl.BlockSpec((Cout, Cds), lambda k: (0, 0)),
            pl.BlockSpec((Cds, M), lambda k: (0, 0)),
            pl.BlockSpec((Cout, 2), lambda k: (0, 0)),
        ]

    return pl.pallas_call(
        kernel,
        out_shape=jax.ShapeDtypeStruct((Cout, M), jnp.float32),
        grid=(T,),                       # K/tap axis — sequential reduction
        in_specs=in_specs,
        out_specs=pl.BlockSpec((Cout, M), lambda k: (0, 0)),
        scratch_shapes=[pltpu.VMEM((Cout, M), jnp.float32)],
        compiler_params=pltpu.CompilerParams(
            dimension_semantics=("arbitrary",)),
    )(*args)


# ---------------------------------------------------------------------------
# Conv wrapper (padding / tap stacking in JAX glue, everything else fused)
# ---------------------------------------------------------------------------

def _num_tap_groups(Cin, M):
    # Pipeline the tap/K axis only when the stacked bf16 im2col operand is big
    # enough that its HBM DMA would otherwise sit exposed in front of the MXU;
    # tiny layers are launch-overhead bound and keep a single grid step.
    return 3 if 9 * Cin * M * 2 >= (256 << 10) else 1


def conv3x3_bn_act(x, w, gamma, beta, *, stride=1, residual=None, ds=None,
                   relu=True):
    """x: (Cin, N, H, W); w: (3, 3, Cin, Cout) HWIO; padding=1, no bias."""
    Cin, N, H, W = x.shape
    Cout = w.shape[-1]
    Ho = (H + 2 - 3) // stride + 1
    Wo = (W + 2 - 3) // stride + 1
    M = N * Ho * Wo

    # TODO(synk): the 3x3 tap stacking (im2col^T) is still materialized by XLA;
    # building it in-kernel from the padded (Cin,N,Hp,Wp) activation needs
    # non-128-aligned window reshapes that Mosaic does not lower reliably, so
    # the stacked bf16 operand is instead streamed tap-group by tap-group into
    # the single fused kernel (DMA overlapped with the MXU accumulation).
    xp = jnp.pad(x, ((0, 0), (0, 0), (1, 1), (1, 1))).astype(jnp.bfloat16)
    taps = []
    for dy in range(3):
        for dx in range(3):
            win = xp[:, :,
                     dy:dy + stride * (Ho - 1) + 1:stride,
                     dx:dx + stride * (Wo - 1) + 1:stride]
            taps.append(win.reshape(Cin, M))
    T = _num_tap_groups(Cin, M)
    Kg = (9 // T) * Cin
    B = jnp.stack(taps, axis=0).reshape(T, Kg, M)                 # (T, Kg, M)

    A9 = jnp.transpose(w.reshape(9, Cin, Cout), (0, 2, 1))        # (9,Cout,Cin)
    A = (A9.reshape(T, 9 // T, Cout, Cin).transpose(0, 2, 1, 3)
           .reshape(T, Cout, Kg).astype(jnp.bfloat16))

    gb = jnp.stack([gamma, beta], axis=1)                         # (Cout, 2)
    res2 = residual.reshape(Cout, M) if residual is not None else None
    y = fused_conv_bn_act(A, B, gb, residual=res2, ds=ds, relu=relu)
    return y.reshape(Cout, N, Ho, Wo)


# ---------------------------------------------------------------------------
# Model
# ---------------------------------------------------------------------------

def resblock_forward(x, p):
    downsample = 'ds_w' in p
    stride = 2 if downsample else 1

    out = conv3x3_bn_act(x, p['conv1_w'], p['bn1_g'], p['bn1_b'],
                         stride=stride, relu=True)

    if downsample:
        # Downsample branch is fused into the conv2 kernel's epilogue.
        Cin_in = x.shape[0]
        Cout = p['conv2_w'].shape[-1]
        xs = x[:, :, ::2, ::2]                                    # top-left pick
        M = xs.shape[1] * xs.shape[2] * xs.shape[3]
        B_ds = xs.reshape(Cin_in, M).astype(jnp.bfloat16)
        A_ds = p['ds_w'].reshape(Cin_in, Cout).T.astype(jnp.bfloat16)
        gb_ds = jnp.stack([p['ds_bn_g'], p['ds_bn_b']], axis=1)
        out = conv3x3_bn_act(out, p['conv2_w'], p['bn2_g'], p['bn2_b'],
                             stride=1, ds=(A_ds, B_ds, gb_ds), relu=True)
    else:
        # bn2(conv2(out)) + x, then ReLU — one kernel.
        out = conv3x3_bn_act(out, p['conv2_w'], p['bn2_g'], p['bn2_b'],
                             stride=1, residual=x, relu=True)
    return out


def resnet_forward(params, x_nchw):
    # TODO(synk): whole-residual-block single-kernel fusion needs the in-kernel
    # im2col above; until then each conv layer is one fused pallas_call.
    x = jnp.transpose(x_nchw, (1, 0, 2, 3)).astype(jnp.float32)   # (C,N,H,W)

    pre = conv3x3_bn_act(x, params['conv1_w'], params['bn1_g'],
                         params['bn1_b'], stride=1, relu=True)

    def run_layer(h, blocks):
        for p in blocks:
            h = resblock_forward(h, p)
        return h

    rb1 = run_layer(pre, params['res1'])
    rb2 = run_layer(rb1, params['res2'])
    rb3 = run_layer(rb2, params['res3'])

    # AvgPool2d(8) + FC: tiny (N=2, C=64) — plain JAX per the perf review.
    C, N, H, W = rb3.shape
    pooled = rb3.reshape(C, N, H // 8, 8, W // 8, 8).mean(axis=(3, 5))
    pooled_nchw = jnp.transpose(pooled, (1, 0, 2, 3))             # (N,C,1,1)
    flat = pooled_nchw.reshape(N, -1)
    logits = flat @ params['fc_w'].T + params['fc_b']

    to_nchw = lambda t: jnp.transpose(t, (1, 0, 2, 3))
    return (to_nchw(pre), to_nchw(rb1), to_nchw(rb2), to_nchw(rb3), logits)


# ---------------------------------------------------------------------------
# Deterministic parameter init (mirrors the module's __init__ shapes / init)
# ---------------------------------------------------------------------------

def init_params(key, num_class=10, num_blocks=(1, 1, 1)):
    keys = iter(jax.random.split(key, 64))

    def conv_w(kh, kw, cin, cout):
        # kaiming_normal_, mode='fan_out', relu: std = sqrt(2 / (cout*kh*kw))
        std = math.sqrt(2.0 / (cout * kh * kw))
        return jax.random.normal(next(keys), (kh, kw, cin, cout),
                                 jnp.float32) * std

    def bn(c):
        return jnp.ones((c,), jnp.float32), jnp.zeros((c,), jnp.float32)

    params = {'conv1_w': conv_w(3, 3, 3, 16)}
    params['bn1_g'], params['bn1_b'] = bn(16)

    def make_layer(num, cin, cout):
        blocks = []
        for i in range(num):
            ic = cin if i == 0 else cout
            p = {}
            p['conv1_w'] = conv_w(3, 3, ic, cout)
            p['bn1_g'], p['bn1_b'] = bn(cout)
            p['conv2_w'] = conv_w(3, 3, cout, cout)
            p['bn2_g'], p['bn2_b'] = bn(cout)
            if ic != cout:
                p['ds_w'] = conv_w(1, 1, ic, cout)
                p['ds_bn_g'], p['ds_bn_b'] = bn(cout)
            blocks.append(p)
        return blocks

    params['res1'] = make_layer(num_blocks[0], 16, 16)
    params['res2'] = make_layer(num_blocks[1], 16, 32)
    params['res3'] = make_layer(num_blocks[2], 32, 64)

    # nn.Linear default init (uniform with bound 1/sqrt(fan_in))
    bound = 1.0 / math.sqrt(64)
    params['fc_w'] = jax.random.uniform(next(keys), (num_class, 64),
                                        jnp.float32, -bound, bound)
    params['fc_b'] = jax.random.uniform(next(keys), (num_class,),
                                        jnp.float32, -bound, bound)
    return params


# ---------------------------------------------------------------------------

if __name__ == "__main__":
    key = jax.random.PRNGKey(0)
    kp, kx = jax.random.split(key)

    params = init_params(kp, num_class=10, num_blocks=(1, 1, 1))
    # Spatial must be 32 so the 8x8 average pool after two stride-2 stages
    # produces the 64 features the FC expects.
    x = jax.random.normal(kx, (2, 3, 32, 32), jnp.float32)

    fwd = jax.jit(functools.partial(resnet_forward, params))
    pre, rb1, rb2, rb3, out = fwd(x)
    jax.block_until_ready((pre, rb1, rb2, rb3, out))

    assert pre.shape == (2, 16, 32, 32)
    assert rb1.shape == (2, 16, 32, 32)
    assert rb2.shape == (2, 32, 16, 16)
    assert rb3.shape == (2, 64, 8, 8)
    assert out.shape == (2, 10)
    print("KERNEL_OK")
</pallas_src>

<mosaic_0001>
module attributes {stable_mosaic.version = 11 : i64} {
  func.func @_conv_bn_act_kernel(%arg0: i32, %arg1: memref<1x16x27xbf16, #tpu.memory_space<vmem>>, %arg2: memref<1x27x2048xbf16, #tpu.memory_space<vmem>>, %arg3: memref<16x2xf32, #tpu.memory_space<vmem>>, %arg4: memref<16x2048xf32, #tpu.memory_space<vmem>>, %arg5: memref<16x2048xf32, #tpu.memory_space<vmem>>) attributes {dimension_semantics = [#tpu.dimension_semantics<arbitrary>], iteration_bounds = array<i64: 1>, scalar_prefetch = 0 : i64, scratch_operands = 1 : i64, tpu.core_type = #tpu.core_type<tc>, window_params = [{transform_indices = @transform_0, window_bounds = array<i64: 1, 16, 27>}, {transform_indices = @transform_1, window_bounds = array<i64: 1, 27, 2048>}, {pipeline_mode = #tpu.pipeline_mode<synchronous>, transform_indices = @transform_2, window_bounds = array<i64: 16, 2>}, {pipeline_mode = #tpu.pipeline_mode<synchronous>, transform_indices = @transform_3, window_bounds = array<i64: 16, 2048>}]} {
    %c0_i32 = arith.constant 0 : i32
    %0 = arith.cmpi eq, %arg0, %c0_i32 : i32
    %1 = arith.extui %0 : i1 to i32
    %c0_i32_0 = arith.constant 0 : i32
    %2 = arith.cmpi ne, %1, %c0_i32_0 : i32
    scf.if %2 {
      %cst_12 = arith.constant 0.000000e+00 : f32
      %14 = vector.broadcast %cst_12 : f32 to vector<16x2048xf32>
      %c0_13 = arith.constant 0 : index
      %c0_14 = arith.constant 0 : index
      %15 = vector.load %arg5[%c0_13, %c0_14] : memref<16x2048xf32, #tpu.memory_space<vmem>>, vector<16x2048xf32>
      tpu.vector_store %arg5[%c0_13, %c0_14], %14 {strides = array<i32>} : memref<16x2048xf32, #tpu.memory_space<vmem>>, vector<16x2048xf32>,
    } else {
    }
    %c0 = arith.constant 0 : index
    %c0_1 = arith.constant 0 : index
    %3 = vector.load %arg5[%c0, %c0_1] : memref<16x2048xf32, #tpu.memory_space<vmem>>, vector<16x2048xf32>
    %c0_2 = arith.constant 0 : index
    %c0_3 = arith.constant 0 : index
    %c0_4 = arith.constant 0 : index
    %4 = vector.load %arg1[%c0_2, %c0_3, %c0_4] : memref<1x16x27xbf16, #tpu.memory_space<vmem>>, vector<1x16x27xbf16>
    %5 = vector.shape_cast %4 : vector<1x16x27xbf16> to vector<16x27xbf16>
    %c0_5 = arith.constant 0 : index
    %c0_6 = arith.constant 0 : index
    %c0_7 = arith.constant 0 : index
    %6 = vector.load %arg2[%c0_5, %c0_6, %c0_7] : memref<1x27x2048xbf16, #tpu.memory_space<vmem>>, vector<1x27x2048xbf16>
    %7 = vector.shape_cast %6 : vector<1x27x2048xbf16> to vector<27x2048xbf16>
    %cst = arith.constant dense<0.000000e+00> : vector<16x2048xf32>
    %8 = tpu.matmul %5, %7, %cst {dimension_numbers = #tpu.dot_dimension_numbers<[1], [0], [0], [1], [0, 0, 1, 1], [], []>} : vector<16x27xbf16>, vector<27x2048xbf16>, vector<16x2048xf32> -> vector<16x2048xf32>
    %9 = arith.addf %3, %8 : vector<16x2048xf32>
    %c0_8 = arith.constant 0 : index
    %c0_9 = arith.constant 0 : index
    %10 = vector.load %arg5[%c0_8, %c0_9] : memref<16x2048xf32, #tpu.memory_space<vmem>>, vector<16x2048xf32>
    tpu.vector_store %arg5[%c0_8, %c0_9], %9 {strides = array<i32>} : memref<16x2048xf32, #tpu.memory_space<vmem>>, vector<16x2048xf32>,
    %c0_i32_10 = arith.constant 0 : i32
    %11 = arith.cmpi eq, %arg0, %c0_i32_10 : i32
    %12 = arith.extui %11 : i1 to i32
    %c0_i32_11 = arith.constant 0 : i32
    %13 = arith.cmpi ne, %12, %c0_i32_11 : i32
    scf.if %13 {
      %c0_12 = arith.constant 0 : index
      %c0_13 = arith.constant 0 : index
      %14 = vector.load %arg5[%c0_12, %c0_13] : memref<16x2048xf32, #tpu.memory_space<vmem>>, vector<16x2048xf32>
      %cst_14 = arith.constant dense<0.000000e+00> : vector<16xf32>
      %15 = vector.multi_reduction <add>, %14, %cst_14 [1] : vector<16x2048xf32> to vector<16xf32>
      %16 = vector.shape_cast %15 : vector<16xf32> to vector<16x1xf32>
      %cst_15 = arith.constant 4.8828125E-4 : f32
      %17 = vector.broadcast %cst_15 : f32 to vector<16x1xf32>
      %18 = arith.mulf %16, %17 : vector<16x1xf32>
      %19 = vector.broadcast %18 : vector<16x1xf32> to vector<16x2048xf32>
      %20 = arith.subf %14, %19 : vector<16x2048xf32>
      %21 = arith.mulf %20, %20 : vector<16x2048xf32>
      %cst_16 = arith.constant dense<0.000000e+00> : vector<16xf32>
      %22 = vector.multi_reduction <add>, %21, %cst_16 [1] : vector<16x2048xf32> to vector<16xf32>
      %23 = vector.shape_cast %22 : vector<16xf32> to vector<16x1xf32>
      %cst_17 = arith.constant 4.8828125E-4 : f32
      %24 = vector.broadcast %cst_17 : f32 to vector<16x1xf32>
      %25 = arith.mulf %23, %24 : vector<16x1xf32>
      %c0_18 = arith.constant 0 : index
      %c0_19 = arith.constant 0 : index
      %26 = vector.load %arg3[%c0_18, %c0_19] : memref<16x2xf32, #tpu.memory_space<vmem>>, vector<16x1xf32>
      %cst_20 = arith.constant 9.99999974E-6 : f32
      %27 = vector.broadcast %cst_20 : f32 to vector<16x1xf32>
      %28 = arith.addf %25, %27 : vector<16x1xf32>
      %29 = math.rsqrt %28 : vector<16x1xf32>
      %30 = arith.mulf %26, %29 : vector<16x1xf32>
      %31 = vector.broadcast %30 : vector<16x1xf32> to vector<16x2048xf32>
      %32 = arith.mulf %20, %31 : vector<16x2048xf32>
      %c0_21 = arith.constant 0 : index
      %c1 = arith.constant 1 : index
      %33 = vector.load %arg3[%c0_21, %c1] : memref<16x2xf32, #tpu.memory_space<vmem>>, vector<16x1xf32>
      %34 = vector.broadcast %33 : vector<16x1xf32> to vector<16x2048xf32>
      %35 = arith.addf %32, %34 : vector<16x2048xf32>
      %cst_22 = arith.constant 0.000000e+00 : f32
      %36 = vector.broadcast %cst_22 : f32 to vector<16x2048xf32>
      %37 = arith.maximumf %35, %36 : vector<16x2048xf32>
      %c0_23 = arith.constant 0 : index
      %c0_24 = arith.constant 0 : index
      %38 = vector.load %arg4[%c0_23, %c0_24] : memref<16x2048xf32, #tpu.memory_space<vmem>>, vector<16x2048xf32>
      tpu.vector_store %arg4[%c0_23, %c0_24], %37 {strides = array<i32>} : memref<16x2048xf32, #tpu.memory_space<vmem>>, vector<16x2048xf32>,
    } else {
    }
    return
  }
  func.func @transform_0(%arg0: i32) -> (i32, i32, i32) {
    %c0_i32 = arith.constant 0 : i32
    %c0_i32_0 = arith.constant 0 : i32
    %c0_i32_1 = arith.constant 0 : i32
    return %arg0, %c0_i32, %c0_i32_0 : i32, i32, i32
  }
  func.func @transform_1(%arg0: i32) -> (i32, i32, i32) {
    %c0_i32 = arith.constant 0 : i32
    %c0_i32_0 = arith.constant 0 : i32
    %c0_i32_1 = arith.constant 0 : i32
    return %arg0, %c0_i32, %c0_i32_0 : i32, i32, i32
  }
  func.func @transform_2(%arg0: i32) -> (i32, i32) {
    %c0_i32 = arith.constant 0 : i32
    %c0_i32_0 = arith.constant 0 : i32
    %c0_i32_1 = arith.constant 0 : i32
    return %c0_i32, %c0_i32_0 : i32, i32
  }
  func.func @transform_3(%arg0: i32) -> (i32, i32) {
    %c0_i32 = arith.constant 0 : i32
    %c0_i32_0 = arith.constant 0 : i32
    %c0_i32_1 = arith.constant 0 : i32
    return %c0_i32, %c0_i32_0 : i32, i32
  }
}

module attributes {stable_mosaic.version = 11 : i64} {
  func.func @_conv_bn_act_kernel(%arg0: i32, %arg1: memref<1x16x48xbf16, #tpu.memory_space<vmem>>, %arg2: memref<1x48x2048xbf16, #tpu.memory_space<vmem>>, %arg3: memref<16x2xf32, #tpu.memory_space<vmem>>, %arg4: memref<16x2048xf32, #tpu.memory_space<vmem>>, %arg5: memref<16x2048xf32, #tpu.memory_space<vmem>>) attributes {dimension_semantics = [#tpu.dimension_semantics<arbitrary>], iteration_bounds = array<i64: 3>, scalar_prefetch = 0 : i64, scratch_operands = 1 : i64, tpu.core_type = #tpu.core_type<tc>, window_params = [{transform_indices = @transform_0, window_bounds = array<i64: 1, 16, 48>}, {transform_indices = @transform_1, window_bounds = array<i64: 1, 48, 2048>}, {pipeline_mode = #tpu.pipeline_mode<synchronous>, transform_indices = @transform_2, window_bounds = array<i64: 16, 2>}, {pipeline_mode = #tpu.pipeline_mode<synchronous>, transform_indices = @transform_3, window_bounds = array<i64: 16, 2048>}]} {
    %c0_i32 = arith.constant 0 : i32
    %0 = arith.cmpi eq, %arg0, %c0_i32 : i32
    %1 = arith.extui %0 : i1 to i32
    %c0_i32_0 = arith.constant 0 : i32
    %2 = arith.cmpi ne, %1, %c0_i32_0 : i32
    scf.if %2 {
      %cst_11 = arith.constant 0.000000e+00 : f32
      %14 = vector.broadcast %cst_11 : f32 to vector<16x2048xf32>
      %c0_12 = arith.constant 0 : index
      %c0_13 = arith.constant 0 : index
      %15 = vector.load %arg5[%c0_12, %c0_13] : memref<16x2048xf32, #tpu.memory_space<vmem>>, vector<16x2048xf32>
      tpu.vector_store %arg5[%c0_12, %c0_13], %14 {strides = array<i32>} : memref<16x2048xf32, #tpu.memory_space<vmem>>, vector<16x2048xf32>,
    } else {
    }
    %c0 = arith.constant 0 : index
    %c0_1 = arith.constant 0 : index
    %3 = vector.load %arg5[%c0, %c0_1] : memref<16x2048xf32, #tpu.memory_space<vmem>>, vector<16x2048xf32>
    %c0_2 = arith.constant 0 : index
    %c0_3 = arith.constant 0 : index
    %c0_4 = arith.constant 0 : index
    %4 = vector.load %arg1[%c0_2, %c0_3, %c0_4] : memref<1x16x48xbf16, #tpu.memory_space<vmem>>, vector<1x16x48xbf16>
    %5 = vector.shape_cast %4 : vector<1x16x48xbf16> to vector<16x48xbf16>
    %c0_5 = arith.constant 0 : index
    %c0_6 = arith.constant 0 : index
    %c0_7 = arith.constant 0 : index
    %6 = vector.load %arg2[%c0_5, %c0_6, %c0_7] : memref<1x48x2048xbf16, #tpu.memory_space<vmem>>, vector<1x48x2048xbf16>
    %7 = vector.shape_cast %6 : vector<1x48x2048xbf16> to vector<48x2048xbf16>
    %cst = arith.constant dense<0.000000e+00> : vector<16x2048xf32>
    %8 = tpu.matmul %5, %7, %cst {dimension_numbers = #tpu.dot_dimension_numbers<[1], [0], [0], [1], [0, 0, 1, 1], [], []>} : vector<16x48xbf16>, vector<48x2048xbf16>, vector<16x2048xf32> -> vector<16x2048xf32>
    %9 = arith.addf %3, %8 : vector<16x2048xf32>
    %c0_8 = arith.constant 0 : index
    %c0_9 = arith.constant 0 : index
    %10 = vector.load %arg5[%c0_8, %c0_9] : memref<16x2048xf32, #tpu.memory_space<vmem>>, vector<16x2048xf32>
    tpu.vector_store %arg5[%c0_8, %c0_9], %9 {strides = array<i32>} : memref<16x2048xf32, #tpu.memory_space<vmem>>, vector<16x2048xf32>,
    %c2_i32 = arith.constant 2 : i32
    %11 = arith.cmpi eq, %arg0, %c2_i32 : i32
    %12 = arith.extui %11 : i1 to i32
    %c0_i32_10 = arith.constant 0 : i32
    %13 = arith.cmpi ne, %12, %c0_i32_10 : i32
    scf.if %13 {
      %c0_11 = arith.constant 0 : index
      %c0_12 = arith.constant 0 : index
      %14 = vector.load %arg5[%c0_11, %c0_12] : memref<16x2048xf32, #tpu.memory_space<vmem>>, vector<16x2048xf32>
      %cst_13 = arith.constant dense<0.000000e+00> : vector<16xf32>
      %15 = vector.multi_reduction <add>, %14, %cst_13 [1] : vector<16x2048xf32> to vector<16xf32>
      %16 = vector.shape_cast %15 : vector<16xf32> to vector<16x1xf32>
      %cst_14 = arith.constant 4.8828125E-4 : f32
      %17 = vector.broadcast %cst_14 : f32 to vector<16x1xf32>
      %18 = arith.mulf %16, %17 : vector<16x1xf32>
      %19 = vector.broadcast %18 : vector<16x1xf32> to vector<16x2048xf32>
      %20 = arith.subf %14, %19 : vector<16x2048xf32>
      %21 = arith.mulf %20, %20 : vector<16x2048xf32>
      %cst_15 = arith.constant dense<0.000000e+00> : vector<16xf32>
      %22 = vector.multi_reduction <add>, %21, %cst_15 [1] : vector<16x2048xf32> to vector<16xf32>
      %23 = vector.shape_cast %22 : vector<16xf32> to vector<16x1xf32>
      %cst_16 = arith.constant 4.8828125E-4 : f32
      %24 = vector.broadcast %cst_16 : f32 to vector<16x1xf32>
      %25 = arith.mulf %23, %24 : vector<16x1xf32>
      %c0_17 = arith.constant 0 : index
      %c0_18 = arith.constant 0 : index
      %26 = vector.load %arg3[%c0_17, %c0_18] : memref<16x2xf32, #tpu.memory_space<vmem>>, vector<16x1xf32>
      %cst_19 = arith.constant 9.99999974E-6 : f32
      %27 = vector.broadcast %cst_19 : f32 to vector<16x1xf32>
      %28 = arith.addf %25, %27 : vector<16x1xf32>
      %29 = math.rsqrt %28 : vector<16x1xf32>
      %30 = arith.mulf %26, %29 : vector<16x1xf32>
      %31 = vector.broadcast %30 : vector<16x1xf32> to vector<16x2048xf32>
      %32 = arith.mulf %20, %31 : vector<16x2048xf32>
      %c0_20 = arith.constant 0 : index
      %c1 = arith.constant 1 : index
      %33 = vector.load %arg3[%c0_20, %c1] : memref<16x2xf32, #tpu.memory_space<vmem>>, vector<16x1xf32>
      %34 = vector.broadcast %33 : vector<16x1xf32> to vector<16x2048xf32>
      %35 = arith.addf %32, %34 : vector<16x2048xf32>
      %cst_21 = arith.constant 0.000000e+00 : f32
      %36 = vector.broadcast %cst_21 : f32 to vector<16x2048xf32>
      %37 = arith.maximumf %35, %36 : vector<16x2048xf32>
      %c0_22 = arith.constant 0 : index
      %c0_23 = arith.constant 0 : index
      %38 = vector.load %arg4[%c0_22, %c0_23] : memref<16x2048xf32, #tpu.memory_space<vmem>>, vector<16x2048xf32>
      tpu.vector_store %arg4[%c0_22, %c0_23], %37 {strides = array<i32>} : memref<16x2048xf32, #tpu.memory_space<vmem>>, vector<16x2048xf32>,
    } else {
    }
    return
  }
  func.func @transform_0(%arg0: i32) -> (i32, i32, i32) {
    %c0_i32 = arith.constant 0 : i32
    %c0_i32_0 = arith.constant 0 : i32
    %c0_i32_1 = arith.constant 0 : i32
    return %arg0, %c0_i32, %c0_i32_0 : i32, i32, i32
  }
  func.func @transform_1(%arg0: i32) -> (i32, i32, i32) {
    %c0_i32 = arith.constant 0 : i32
    %c0_i32_0 = arith.constant 0 : i32
    %c0_i32_1 = arith.constant 0 : i32
    return %arg0, %c0_i32, %c0_i32_0 : i32, i32, i32
  }
  func.func @transform_2(%arg0: i32) -> (i32, i32) {
    %c0_i32 = arith.constant 0 : i32
    %c0_i32_0 = arith.constant 0 : i32
    %c0_i32_1 = arith.constant 0 : i32
    return %c0_i32, %c0_i32_0 : i32, i32
  }
  func.func @transform_3(%arg0: i32) -> (i32, i32) {
    %c0_i32 = arith.constant 0 : i32
    %c0_i32_0 = arith.constant 0 : i32
    %c0_i32_1 = arith.constant 0 : i32
    return %c0_i32, %c0_i32_0 : i32, i32
  }
}

module attributes {stable_mosaic.version = 11 : i64} {
  func.func @_conv_bn_act_kernel(%arg0: i32, %arg1: memref<1x16x48xbf16, #tpu.memory_space<vmem>>, %arg2: memref<1x48x2048xbf16, #tpu.memory_space<vmem>>, %arg3: memref<16x2xf32, #tpu.memory_space<vmem>>, %arg4: memref<16x2048xf32, #tpu.memory_space<vmem>>, %arg5: memref<16x2048xf32, #tpu.memory_space<vmem>>, %arg6: memref<16x2048xf32, #tpu.memory_space<vmem>>) attributes {dimension_semantics = [#tpu.dimension_semantics<arbitrary>], iteration_bounds = array<i64: 3>, scalar_prefetch = 0 : i64, scratch_operands = 1 : i64, tpu.core_type = #tpu.core_type<tc>, window_params = [{transform_indices = @transform_0, window_bounds = array<i64: 1, 16, 48>}, {transform_indices = @transform_1, window_bounds = array<i64: 1, 48, 2048>}, {pipeline_mode = #tpu.pipeline_mode<synchronous>, transform_indices = @transform_2, window_bounds = array<i64: 16, 2>}, {pipeline_mode = #tpu.pipeline_mode<synchronous>, transform_indices = @transform_3, window_bounds = array<i64: 16, 2048>}, {pipeline_mode = #tpu.pipeline_mode<synchronous>, transform_indices = @transform_4, window_bounds = array<i64: 16, 2048>}]} {
    %c0_i32 = arith.constant 0 : i32
    %0 = arith.cmpi eq, %arg0, %c0_i32 : i32
    %1 = arith.extui %0 : i1 to i32
    %c0_i32_0 = arith.constant 0 : i32
    %2 = arith.cmpi ne, %1, %c0_i32_0 : i32
    scf.if %2 {
      %cst_11 = arith.constant 0.000000e+00 : f32
      %14 = vector.broadcast %cst_11 : f32 to vector<16x2048xf32>
      %c0_12 = arith.constant 0 : index
      %c0_13 = arith.constant 0 : index
      %15 = vector.load %arg6[%c0_12, %c0_13] : memref<16x2048xf32, #tpu.memory_space<vmem>>, vector<16x2048xf32>
      tpu.vector_store %arg6[%c0_12, %c0_13], %14 {strides = array<i32>} : memref<16x2048xf32, #tpu.memory_space<vmem>>, vector<16x2048xf32>,
    } else {
    }
    %c0 = arith.constant 0 : index
    %c0_1 = arith.constant 0 : index
    %3 = vector.load %arg6[%c0, %c0_1] : memref<16x2048xf32, #tpu.memory_space<vmem>>, vector<16x2048xf32>
    %c0_2 = arith.constant 0 : index
    %c0_3 = arith.constant 0 : index
    %c0_4 = arith.constant 0 : index
    %4 = vector.load %arg1[%c0_2, %c0_3, %c0_4] : memref<1x16x48xbf16, #tpu.memory_space<vmem>>, vector<1x16x48xbf16>
    %5 = vector.shape_cast %4 : vector<1x16x48xbf16> to vector<16x48xbf16>
    %c0_5 = arith.constant 0 : index
    %c0_6 = arith.constant 0 : index
    %c0_7 = arith.constant 0 : index
    %6 = vector.load %arg2[%c0_5, %c0_6, %c0_7] : memref<1x48x2048xbf16, #tpu.memory_space<vmem>>, vector<1x48x2048xbf16>
    %7 = vector.shape_cast %6 : vector<1x48x2048xbf16> to vector<48x2048xbf16>
    %cst = arith.constant dense<0.000000e+00> : vector<16x2048xf32>
    %8 = tpu.matmul %5, %7, %cst {dimension_numbers = #tpu.dot_dimension_numbers<[1], [0], [0], [1], [0, 0, 1, 1], [], []>} : vector<16x48xbf16>, vector<48x2048xbf16>, vector<16x2048xf32> -> vector<16x2048xf32>
    %9 = arith.addf %3, %8 : vector<16x2048xf32>
    %c0_8 = arith.constant 0 : index
    %c0_9 = arith.constant 0 : index
    %10 = vector.load %arg6[%c0_8, %c0_9] : memref<16x2048xf32, #tpu.memory_space<vmem>>, vector<16x2048xf32>
    tpu.vector_store %arg6[%c0_8, %c0_9], %9 {strides = array<i32>} : memref<16x2048xf32, #tpu.memory_space<vmem>>, vector<16x2048xf32>,
    %c2_i32 = arith.constant 2 : i32
    %11 = arith.cmpi eq, %arg0, %c2_i32 : i32
    %12 = arith.extui %11 : i1 to i32
    %c0_i32_10 = arith.constant 0 : i32
    %13 = arith.cmpi ne, %12, %c0_i32_10 : i32
    scf.if %13 {
      %c0_11 = arith.constant 0 : index
      %c0_12 = arith.constant 0 : index
      %14 = vector.load %arg6[%c0_11, %c0_12] : memref<16x2048xf32, #tpu.memory_space<vmem>>, vector<16x2048xf32>
      %cst_13 = arith.constant dense<0.000000e+00> : vector<16xf32>
      %15 = vector.multi_reduction <add>, %14, %cst_13 [1] : vector<16x2048xf32> to vector<16xf32>
      %16 = vector.shape_cast %15 : vector<16xf32> to vector<16x1xf32>
      %cst_14 = arith.constant 4.8828125E-4 : f32
      %17 = vector.broadcast %cst_14 : f32 to vector<16x1xf32>
      %18 = arith.mulf %16, %17 : vector<16x1xf32>
      %19 = vector.broadcast %18 : vector<16x1xf32> to vector<16x2048xf32>
      %20 = arith.subf %14, %19 : vector<16x2048xf32>
      %21 = arith.mulf %20, %20 : vector<16x2048xf32>
      %cst_15 = arith.constant dense<0.000000e+00> : vector<16xf32>
      %22 = vector.multi_reduction <add>, %21, %cst_15 [1] : vector<16x2048xf32> to vector<16xf32>
      %23 = vector.shape_cast %22 : vector<16xf32> to vector<16x1xf32>
      %cst_16 = arith.constant 4.8828125E-4 : f32
      %24 = vector.broadcast %cst_16 : f32 to vector<16x1xf32>
      %25 = arith.mulf %23, %24 : vector<16x1xf32>
      %c0_17 = arith.constant 0 : index
      %c0_18 = arith.constant 0 : index
      %26 = vector.load %arg3[%c0_17, %c0_18] : memref<16x2xf32, #tpu.memory_space<vmem>>, vector<16x1xf32>
      %cst_19 = arith.constant 9.99999974E-6 : f32
      %27 = vector.broadcast %cst_19 : f32 to vector<16x1xf32>
      %28 = arith.addf %25, %27 : vector<16x1xf32>
      %29 = math.rsqrt %28 : vector<16x1xf32>
      %30 = arith.mulf %26, %29 : vector<16x1xf32>
      %31 = vector.broadcast %30 : vector<16x1xf32> to vector<16x2048xf32>
      %32 = arith.mulf %20, %31 : vector<16x2048xf32>
      %c0_20 = arith.constant 0 : index
      %c1 = arith.constant 1 : index
      %33 = vector.load %arg3[%c0_20, %c1] : memref<16x2xf32, #tpu.memory_space<vmem>>, vector<16x1xf32>
      %34 = vector.broadcast %33 : vector<16x1xf32> to vector<16x2048xf32>
      %35 = arith.addf %32, %34 : vector<16x2048xf32>
      %c0_21 = arith.constant 0 : index
      %c0_22 = arith.constant 0 : index
      %36 = vector.load %arg4[%c0_21, %c0_22] : memref<16x2048xf32, #tpu.memory_space<vmem>>, vector<16x2048xf32>
      %37 = arith.addf %35, %36 : vector<16x2048xf32>
      %cst_23 = arith.constant 0.000000e+00 : f32
      %38 = vector.broadcast %cst_23 : f32 to vector<16x2048xf32>
      %39 = arith.maximumf %37, %38 : vector<16x2048xf32>
      %c0_24 = arith.constant 0 : index
      %c0_25 = arith.constant 0 : index
      %40 = vector.load %arg5[%c0_24, %c0_25] : memref<16x2048xf32, #tpu.memory_space<vmem>>, vector<16x2048xf32>
      tpu.vector_store %arg5[%c0_24, %c0_25], %39 {strides = array<i32>} : memref<16x2048xf32, #tpu.memory_space<vmem>>, vector<16x2048xf32>,
    } else {
    }
    return
  }
  func.func @transform_0(%arg0: i32) -> (i32, i32, i32) {
    %c0_i32 = arith.constant 0 : i32
    %c0_i32_0 = arith.constant 0 : i32
    %c0_i32_1 = arith.constant 0 : i32
    return %arg0, %c0_i32, %c0_i32_0 : i32, i32, i32
  }
  func.func @transform_1(%arg0: i32) -> (i32, i32, i32) {
    %c0_i32 = arith.constant 0 : i32
    %c0_i32_0 = arith.constant 0 : i32
    %c0_i32_1 = arith.constant 0 : i32
    return %arg0, %c0_i32, %c0_i32_0 : i32, i32, i32
  }
  func.func @transform_2(%arg0: i32) -> (i32, i32) {
    %c0_i32 = arith.constant 0 : i32
    %c0_i32_0 = arith.constant 0 : i32
    %c0_i32_1 = arith.constant 0 : i32
    return %c0_i32, %c0_i32_0 : i32, i32
  }
  func.func @transform_3(%arg0: i32) -> (i32, i32) {
    %c0_i32 = arith.constant 0 : i32
    %c0_i32_0 = arith.constant 0 : i32
    %c0_i32_1 = arith.constant 0 : i32
    return %c0_i32, %c0_i32_0 : i32, i32
  }
  func.func @transform_4(%arg0: i32) -> (i32, i32) {
    %c0_i32 = arith.constant 0 : i32
    %c0_i32_0 = arith.constant 0 : i32
    %c0_i32_1 = arith.constant 0 : i32
    return %c0_i32, %c0_i32_0 : i32, i32
  }
}

module attributes {stable_mosaic.version = 11 : i64} {
  func.func @_conv_bn_act_kernel(%arg0: i32, %arg1: memref<1x32x144xbf16, #tpu.memory_space<vmem>>, %arg2: memref<1x144x512xbf16, #tpu.memory_space<vmem>>, %arg3: memref<32x2xf32, #tpu.memory_space<vmem>>, %arg4: memref<32x512xf32, #tpu.memory_space<vmem>>, %arg5: memref<32x512xf32, #tpu.memory_space<vmem>>) attributes {dimension_semantics = [#tpu.dimension_semantics<arbitrary>], iteration_bounds = array<i64: 1>, scalar_prefetch = 0 : i64, scratch_operands = 1 : i64, tpu.core_type = #tpu.core_type<tc>, window_params = [{transform_indices = @transform_0, window_bounds = array<i64: 1, 32, 144>}, {transform_indices = @transform_1, window_bounds = array<i64: 1, 144, 512>}, {pipeline_mode = #tpu.pipeline_mode<synchronous>, transform_indices = @transform_2, window_bounds = array<i64: 32, 2>}, {pipeline_mode = #tpu.pipeline_mode<synchronous>, transform_indices = @transform_3, window_bounds = array<i64: 32, 512>}]} {
    %c0_i32 = arith.constant 0 : i32
    %0 = arith.cmpi eq, %arg0, %c0_i32 : i32
    %1 = arith.extui %0 : i1 to i32
    %c0_i32_0 = arith.constant 0 : i32
    %2 = arith.cmpi ne, %1, %c0_i32_0 : i32
    scf.if %2 {
      %cst_12 = arith.constant 0.000000e+00 : f32
      %14 = vector.broadcast %cst_12 : f32 to vector<32x512xf32>
      %c0_13 = arith.constant 0 : index
      %c0_14 = arith.constant 0 : index
      %15 = vector.load %arg5[%c0_13, %c0_14] : memref<32x512xf32, #tpu.memory_space<vmem>>, vector<32x512xf32>
      tpu.vector_store %arg5[%c0_13, %c0_14], %14 {strides = array<i32>} : memref<32x512xf32, #tpu.memory_space<vmem>>, vector<32x512xf32>,
    } else {
    }
    %c0 = arith.constant 0 : index
    %c0_1 = arith.constant 0 : index
    %3 = vector.load %arg5[%c0, %c0_1] : memref<32x512xf32, #tpu.memory_space<vmem>>, vector<32x512xf32>
    %c0_2 = arith.constant 0 : index
    %c0_3 = arith.constant 0 : index
    %c0_4 = arith.constant 0 : index
    %4 = vector.load %arg1[%c0_2, %c0_3, %c0_4] : memref<1x32x144xbf16, #tpu.memory_space<vmem>>, vector<1x32x144xbf16>
    %5 = vector.shape_cast %4 : vector<1x32x144xbf16> to vector<32x144xbf16>
    %c0_5 = arith.constant 0 : index
    %c0_6 = arith.constant 0 : index
    %c0_7 = arith.constant 0 : index
    %6 = vector.load %arg2[%c0_5, %c0_6, %c0_7] : memref<1x144x512xbf16, #tpu.memory_space<vmem>>, vector<1x144x512xbf16>
    %7 = vector.shape_cast %6 : vector<1x144x512xbf16> to vector<144x512xbf16>
    %cst = arith.constant dense<0.000000e+00> : vector<32x512xf32>
    %8 = tpu.matmul %5, %7, %cst {dimension_numbers = #tpu.dot_dimension_numbers<[1], [0], [0], [1], [0, 0, 1, 1], [], []>} : vector<32x144xbf16>, vector<144x512xbf16>, vector<32x512xf32> -> vector<32x512xf32>
    %9 = arith.addf %3, %8 : vector<32x512xf32>
    %c0_8 = arith.constant 0 : index
    %c0_9 = arith.constant 0 : index
    %10 = vector.load %arg5[%c0_8, %c0_9] : memref<32x512xf32, #tpu.memory_space<vmem>>, vector<32x512xf32>
    tpu.vector_store %arg5[%c0_8, %c0_9], %9 {strides = array<i32>} : memref<32x512xf32, #tpu.memory_space<vmem>>, vector<32x512xf32>,
    %c0_i32_10 = arith.constant 0 : i32
    %11 = arith.cmpi eq, %arg0, %c0_i32_10 : i32
    %12 = arith.extui %11 : i1 to i32
    %c0_i32_11 = arith.constant 0 : i32
    %13 = arith.cmpi ne, %12, %c0_i32_11 : i32
    scf.if %13 {
      %c0_12 = arith.constant 0 : index
      %c0_13 = arith.constant 0 : index
      %14 = vector.load %arg5[%c0_12, %c0_13] : memref<32x512xf32, #tpu.memory_space<vmem>>, vector<32x512xf32>
      %cst_14 = arith.constant dense<0.000000e+00> : vector<32xf32>
      %15 = vector.multi_reduction <add>, %14, %cst_14 [1] : vector<32x512xf32> to vector<32xf32>
      %16 = vector.shape_cast %15 : vector<32xf32> to vector<32x1xf32>
      %cst_15 = arith.constant 0.001953125 : f32
      %17 = vector.broadcast %cst_15 : f32 to vector<32x1xf32>
      %18 = arith.mulf %16, %17 : vector<32x1xf32>
      %19 = vector.broadcast %18 : vector<32x1xf32> to vector<32x512xf32>
      %20 = arith.subf %14, %19 : vector<32x512xf32>
      %21 = arith.mulf %20, %20 : vector<32x512xf32>
      %cst_16 = arith.constant dense<0.000000e+00> : vector<32xf32>
      %22 = vector.multi_reduction <add>, %21, %cst_16 [1] : vector<32x512xf32> to vector<32xf32>
      %23 = vector.shape_cast %22 : vector<32xf32> to vector<32x1xf32>
      %cst_17 = arith.constant 0.001953125 : f32
      %24 = vector.broadcast %cst_17 : f32 to vector<32x1xf32>
      %25 = arith.mulf %23, %24 : vector<32x1xf32>
      %c0_18 = arith.constant 0 : index
      %c0_19 = arith.constant 0 : index
      %26 = vector.load %arg3[%c0_18, %c0_19] : memref<32x2xf32, #tpu.memory_space<vmem>>, vector<32x1xf32>
      %cst_20 = arith.constant 9.99999974E-6 : f32
      %27 = vector.broadcast %cst_20 : f32 to vector<32x1xf32>
      %28 = arith.addf %25, %27 : vector<32x1xf32>
      %29 = math.rsqrt %28 : vector<32x1xf32>
      %30 = arith.mulf %26, %29 : vector<32x1xf32>
      %31 = vector.broadcast %30 : vector<32x1xf32> to vector<32x512xf32>
      %32 = arith.mulf %20, %31 : vector<32x512xf32>
      %c0_21 = arith.constant 0 : index
      %c1 = arith.constant 1 : index
      %33 = vector.load %arg3[%c0_21, %c1] : memref<32x2xf32, #tpu.memory_space<vmem>>, vector<32x1xf32>
      %34 = vector.broadcast %33 : vector<32x1xf32> to vector<32x512xf32>
      %35 = arith.addf %32, %34 : vector<32x512xf32>
      %cst_22 = arith.constant 0.000000e+00 : f32
      %36 = vector.broadcast %cst_22 : f32 to vector<32x512xf32>
      %37 = arith.maximumf %35, %36 : vector<32x512xf32>
      %c0_23 = arith.constant 0 : index
      %c0_24 = arith.constant 0 : index
      %38 = vector.load %arg4[%c0_23, %c0_24] : memref<32x512xf32, #tpu.memory_space<vmem>>, vector<32x512xf32>
      tpu.vector_store %arg4[%c0_23, %c0_24], %37 {strides = array<i32>} : memref<32x512xf32, #tpu.memory_space<vmem>>, vector<32x512xf32>,
    } else {
    }
    return
  }
  func.func @transform_0(%arg0: i32) -> (i32, i32, i32) {
    %c0_i32 = arith.constant 0 : i32
    %c0_i32_0 = arith.constant 0 : i32
    %c0_i32_1 = arith.constant 0 : i32
    return %arg0, %c0_i32, %c0_i32_0 : i32, i32, i32
  }
  func.func @transform_1(%arg0: i32) -> (i32, i32, i32) {
    %c0_i32 = arith.constant 0 : i32
    %c0_i32_0 = arith.constant 0 : i32
    %c0_i32_1 = arith.constant 0 : i32
    return %arg0, %c0_i32, %c0_i32_0 : i32, i32, i32
  }
  func.func @transform_2(%arg0: i32) -> (i32, i32) {
    %c0_i32 = arith.constant 0 : i32
    %c0_i32_0 = arith.constant 0 : i32
    %c0_i32_1 = arith.constant 0 : i32
    return %c0_i32, %c0_i32_0 : i32, i32
  }
  func.func @transform_3(%arg0: i32) -> (i32, i32) {
    %c0_i32 = arith.constant 0 : i32
    %c0_i32_0 = arith.constant 0 : i32
    %c0_i32_1 = arith.constant 0 : i32
    return %c0_i32, %c0_i32_0 : i32, i32
  }
}

module attributes {stable_mosaic.version = 11 : i64} {
  func.func @_conv_bn_act_kernel(%arg0: i32, %arg1: memref<1x32x96xbf16, #tpu.memory_space<vmem>>, %arg2: memref<1x96x512xbf16, #tpu.memory_space<vmem>>, %arg3: memref<32x2xf32, #tpu.memory_space<vmem>>, %arg4: memref<32x16xbf16, #tpu.memory_space<vmem>>, %arg5: memref<16x512xbf16, #tpu.memory_space<vmem>>, %arg6: memref<32x2xf32, #tpu.memory_space<vmem>>, %arg7: memref<32x512xf32, #tpu.memory_space<vmem>>, %arg8: memref<32x512xf32, #tpu.memory_space<vmem>>) attributes {dimension_semantics = [#tpu.dimension_semantics<arbitrary>], iteration_bounds = array<i64: 3>, scalar_prefetch = 0 : i64, scratch_operands = 1 : i64, tpu.core_type = #tpu.core_type<tc>, window_params = [{transform_indices = @transform_0, window_bounds = array<i64: 1, 32, 96>}, {transform_indices = @transform_1, window_bounds = array<i64: 1, 96, 512>}, {pipeline_mode = #tpu.pipeline_mode<synchronous>, transform_indices = @transform_2, window_bounds = array<i64: 32, 2>}, {pipeline_mode = #tpu.pipeline_mode<synchronous>, transform_indices = @transform_3, window_bounds = array<i64: 32, 16>}, {pipeline_mode = #tpu.pipeline_mode<synchronous>, transform_indices = @transform_4, window_bounds = array<i64: 16, 512>}, {pipeline_mode = #tpu.pipeline_mode<synchronous>, transform_indices = @transform_5, window_bounds = array<i64: 32, 2>}, {pipeline_mode = #tpu.pipeline_mode<synchronous>, transform_indices = @transform_6, window_bounds = array<i64: 32, 512>}]} {
    %c0_i32 = arith.constant 0 : i32
    %0 = arith.cmpi eq, %arg0, %c0_i32 : i32
    %1 = arith.extui %0 : i1 to i32
    %c0_i32_0 = arith.constant 0 : i32
    %2 = arith.cmpi ne, %1, %c0_i32_0 : i32
    scf.if %2 {
      %cst_11 = arith.constant 0.000000e+00 : f32
      %14 = vector.broadcast %cst_11 : f32 to vector<32x512xf32>
      %c0_12 = arith.constant 0 : index
      %c0_13 = arith.constant 0 : index
      %15 = vector.load %arg8[%c0_12, %c0_13] : memref<32x512xf32, #tpu.memory_space<vmem>>, vector<32x512xf32>
      tpu.vector_store %arg8[%c0_12, %c0_13], %14 {strides = array<i32>} : memref<32x512xf32, #tpu.memory_space<vmem>>, vector<32x512xf32>,
    } else {
    }
    %c0 = arith.constant 0 : index
    %c0_1 = arith.constant 0 : index
    %3 = vector.load %arg8[%c0, %c0_1] : memref<32x512xf32, #tpu.memory_space<vmem>>, vector<32x512xf32>
    %c0_2 = arith.constant 0 : index
    %c0_3 = arith.constant 0 : index
    %c0_4 = arith.constant 0 : index
    %4 = vector.load %arg1[%c0_2, %c0_3, %c0_4] : memref<1x32x96xbf16, #tpu.memory_space<vmem>>, vector<1x32x96xbf16>
    %5 = vector.shape_cast %4 : vector<1x32x96xbf16> to vector<32x96xbf16>
    %c0_5 = arith.constant 0 : index
    %c0_6 = arith.constant 0 : index
    %c0_7 = arith.constant 0 : index
    %6 = vector.load %arg2[%c0_5, %c0_6, %c0_7] : memref<1x96x512xbf16, #tpu.memory_space<vmem>>, vector<1x96x512xbf16>
    %7 = vector.shape_cast %6 : vector<1x96x512xbf16> to vector<96x512xbf16>
    %cst = arith.constant dense<0.000000e+00> : vector<32x512xf32>
    %8 = tpu.matmul %5, %7, %cst {dimension_numbers = #tpu.dot_dimension_numbers<[1], [0], [0], [1], [0, 0, 1, 1], [], []>} : vector<32x96xbf16>, vector<96x512xbf16>, vector<32x512xf32> -> vector<32x512xf32>
    %9 = arith.addf %3, %8 : vector<32x512xf32>
    %c0_8 = arith.constant 0 : index
    %c0_9 = arith.constant 0 : index
    %10 = vector.load %arg8[%c0_8, %c0_9] : memref<32x512xf32, #tpu.memory_space<vmem>>, vector<32x512xf32>
    tpu.vector_store %arg8[%c0_8, %c0_9], %9 {strides = array<i32>} : memref<32x512xf32, #tpu.memory_space<vmem>>, vector<32x512xf32>,
    %c2_i32 = arith.constant 2 : i32
    %11 = arith.cmpi eq, %arg0, %c2_i32 : i32
    %12 = arith.extui %11 : i1 to i32
    %c0_i32_10 = arith.constant 0 : i32
    %13 = arith.cmpi ne, %12, %c0_i32_10 : i32
    scf.if %13 {
      %c0_11 = arith.constant 0 : index
      %c0_12 = arith.constant 0 : index
      %14 = vector.load %arg8[%c0_11, %c0_12] : memref<32x512xf32, #tpu.memory_space<vmem>>, vector<32x512xf32>
      %cst_13 = arith.constant dense<0.000000e+00> : vector<32xf32>
      %15 = vector.multi_reduction <add>, %14, %cst_13 [1] : vector<32x512xf32> to vector<32xf32>
      %16 = vector.shape_cast %15 : vector<32xf32> to vector<32x1xf32>
      %cst_14 = arith.constant 0.001953125 : f32
      %17 = vector.broadcast %cst_14 : f32 to vector<32x1xf32>
      %18 = arith.mulf %16, %17 : vector<32x1xf32>
      %19 = vector.broadcast %18 : vector<32x1xf32> to vector<32x512xf32>
      %20 = arith.subf %14, %19 : vector<32x512xf32>
      %21 = arith.mulf %20, %20 : vector<32x512xf32>
      %cst_15 = arith.constant dense<0.000000e+00> : vector<32xf32>
      %22 = vector.multi_reduction <add>, %21, %cst_15 [1] : vector<32x512xf32> to vector<32xf32>
      %23 = vector.shape_cast %22 : vector<32xf32> to vector<32x1xf32>
      %cst_16 = arith.constant 0.001953125 : f32
      %24 = vector.broadcast %cst_16 : f32 to vector<32x1xf32>
      %25 = arith.mulf %23, %24 : vector<32x1xf32>
      %c0_17 = arith.constant 0 : index
      %c0_18 = arith.constant 0 : index
      %26 = vector.load %arg3[%c0_17, %c0_18] : memref<32x2xf32, #tpu.memory_space<vmem>>, vector<32x1xf32>
      %cst_19 = arith.constant 9.99999974E-6 : f32
      %27 = vector.broadcast %cst_19 : f32 to vector<32x1xf32>
      %28 = arith.addf %25, %27 : vector<32x1xf32>
      %29 = math.rsqrt %28 : vector<32x1xf32>
      %30 = arith.mulf %26, %29 : vector<32x1xf32>
      %31 = vector.broadcast %30 : vector<32x1xf32> to vector<32x512xf32>
      %32 = arith.mulf %20, %31 : vector<32x512xf32>
      %c0_20 = arith.constant 0 : index
      %c1 = arith.constant 1 : index
      %33 = vector.load %arg3[%c0_20, %c1] : memref<32x2xf32, #tpu.memory_space<vmem>>, vector<32x1xf32>
      %34 = vector.broadcast %33 : vector<32x1xf32> to vector<32x512xf32>
      %35 = arith.addf %32, %34 : vector<32x512xf32>
      %c0_21 = arith.constant 0 : index
      %c0_22 = arith.constant 0 : index
      %36 = vector.load %arg4[%c0_21, %c0_22] : memref<32x16xbf16, #tpu.memory_space<vmem>>, vector<32x16xbf16>
      %c0_23 = arith.constant 0 : index
      %c0_24 = arith.constant 0 : index
      %37 = vector.load %arg5[%c0_23, %c0_24] : memref<16x512xbf16, #tpu.memory_space<vmem>>, vector<16x512xbf16>
      %cst_25 = arith.constant dense<0.000000e+00> : vector<32x512xf32>
      %38 = tpu.matmul %36, %37, %cst_25 {dimension_numbers = #tpu.dot_dimension_numbers<[1], [0], [0], [1], [0, 0, 1, 1], [], []>} : vector<32x16xbf16>, vector<16x512xbf16>, vector<32x512xf32> -> vector<32x512xf32>
      %cst_26 = arith.constant dense<0.000000e+00> : vector<32xf32>
      %39 = vector.multi_reduction <add>, %38, %cst_26 [1] : vector<32x512xf32> to vector<32xf32>
      %40 = vector.shape_cast %39 : vector<32xf32> to vector<32x1xf32>
      %cst_27 = arith.constant 0.001953125 : f32
      %41 = vector.broadcast %cst_27 : f32 to vector<32x1xf32>
      %42 = arith.mulf %40, %41 : vector<32x1xf32>
      %43 = vector.broadcast %42 : vector<32x1xf32> to vector<32x512xf32>
      %44 = arith.subf %38, %43 : vector<32x512xf32>
      %45 = arith.mulf %44, %44 : vector<32x512xf32>
      %cst_28 = arith.constant dense<0.000000e+00> : vector<32xf32>
      %46 = vector.multi_reduction <add>, %45, %cst_28 [1] : vector<32x512xf32> to vector<32xf32>
      %47 = vector.shape_cast %46 : vector<32xf32> to vector<32x1xf32>
      %cst_29 = arith.constant 0.001953125 : f32
      %48 = vector.broadcast %cst_29 : f32 to vector<32x1xf32>
      %49 = arith.mulf %47, %48 : vector<32x1xf32>
      %c0_30 = arith.constant 0 : index
      %c0_31 = arith.constant 0 : index
      %50 = vector.load %arg6[%c0_30, %c0_31] : memref<32x2xf32, #tpu.memory_space<vmem>>, vector<32x1xf32>
      %cst_32 = arith.constant 9.99999974E-6 : f32
      %51 = vector.broadcast %cst_32 : f32 to vector<32x1xf32>
      %52 = arith.addf %49, %51 : vector<32x1xf32>
      %53 = math.rsqrt %52 : vector<32x1xf32>
      %54 = arith.mulf %50, %53 : vector<32x1xf32>
      %55 = vector.broadcast %54 : vector<32x1xf32> to vector<32x512xf32>
      %56 = arith.mulf %44, %55 : vector<32x512xf32>
      %57 = arith.addf %35, %56 : vector<32x512xf32>
      %c0_33 = arith.constant 0 : index
      %c1_34 = arith.constant 1 : index
      %58 = vector.load %arg6[%c0_33, %c1_34] : memref<32x2xf32, #tpu.memory_space<vmem>>, vector<32x1xf32>
      %59 = vector.broadcast %58 : vector<32x1xf32> to vector<32x512xf32>
      %60 = arith.addf %57, %59 : vector<32x512xf32>
      %cst_35 = arith.constant 0.000000e+00 : f32
      %61 = vector.broadcast %cst_35 : f32 to vector<32x512xf32>
      %62 = arith.maximumf %60, %61 : vector<32x512xf32>
      %c0_36 = arith.constant 0 : index
      %c0_37 = arith.constant 0 : index
      %63 = vector.load %arg7[%c0_36, %c0_37] : memref<32x512xf32, #tpu.memory_space<vmem>>, vector<32x512xf32>
      tpu.vector_store %arg7[%c0_36, %c0_37], %62 {strides = array<i32>} : memref<32x512xf32, #tpu.memory_space<vmem>>, vector<32x512xf32>,
    } else {
    }
    return
  }
  func.func @transform_0(%arg0: i32) -> (i32, i32, i32) {
    %c0_i32 = arith.constant 0 : i32
    %c0_i32_0 = arith.constant 0 : i32
    %c0_i32_1 = arith.constant 0 : i32
    return %arg0, %c0_i32, %c0_i32_0 : i32, i32, i32
  }
  func.func @transform_1(%arg0: i32) -> (i32, i32, i32) {
    %c0_i32 = arith.constant 0 : i32
    %c0_i32_0 = arith.constant 0 : i32
    %c0_i32_1 = arith.constant 0 : i32
    return %arg0, %c0_i32, %c0_i32_0 : i32, i32, i32
  }
  func.func @transform_2(%arg0: i32) -> (i32, i32) {
    %c0_i32 = arith.constant 0 : i32
    %c0_i32_0 = arith.constant 0 : i32
    %c0_i32_1 = arith.constant 0 : i32
    return %c0_i32, %c0_i32_0 : i32, i32
  }
  func.func @transform_3(%arg0: i32) -> (i32, i32) {
    %c0_i32 = arith.constant 0 : i32
    %c0_i32_0 = arith.constant 0 : i32
    %c0_i32_1 = arith.constant 0 : i32
    return %c0_i32, %c0_i32_0 : i32, i32
  }
  func.func @transform_4(%arg0: i32) -> (i32, i32) {
    %c0_i32 = arith.constant 0 : i32
    %c0_i32_0 = arith.constant 0 : i32
    %c0_i32_1 = arith.constant 0 : i32
    return %c0_i32, %c0_i32_0 : i32, i32
  }
  func.func @transform_5(%arg0: i32) -> (i32, i32) {
    %c0_i32 = arith.constant 0 : i32
    %c0_i32_0 = arith.constant 0 : i32
    %c0_i32_1 = arith.constant 0 : i32
    return %c0_i32, %c0_i32_0 : i32, i32
  }
  func.func @transform_6(%arg0: i32) -> (i32, i32) {
    %c0_i32 = arith.constant 0 : i32
    %c0_i32_0 = arith.constant 0 : i32
    %c0_i32_1 = arith.constant 0 : i32
    return %c0_i32, %c0_i32_0 : i32, i32
  }
}

module attributes {stable_mosaic.version = 11 : i64} {
  func.func @_conv_bn_act_kernel(%arg0: i32, %arg1: memref<1x64x288xbf16, #tpu.memory_space<vmem>>, %arg2: memref<1x288x128xbf16, #tpu.memory_space<vmem>>, %arg3: memref<64x2xf32, #tpu.memory_space<vmem>>, %arg4: memref<64x128xf32, #tpu.memory_space<vmem>>, %arg5: memref<64x128xf32, #tpu.memory_space<vmem>>) attributes {dimension_semantics = [#tpu.dimension_semantics<arbitrary>], iteration_bounds = array<i64: 1>, scalar_prefetch = 0 : i64, scratch_operands = 1 : i64, tpu.core_type = #tpu.core_type<tc>, window_params = [{transform_indices = @transform_0, window_bounds = array<i64: 1, 64, 288>}, {transform_indices = @transform_1, window_bounds = array<i64: 1, 288, 128>}, {pipeline_mode = #tpu.pipeline_mode<synchronous>, transform_indices = @transform_2, window_bounds = array<i64: 64, 2>}, {pipeline_mode = #tpu.pipeline_mode<synchronous>, transform_indices = @transform_3, window_bounds = array<i64: 64, 128>}]} {
    %c0_i32 = arith.constant 0 : i32
    %0 = arith.cmpi eq, %arg0, %c0_i32 : i32
    %1 = arith.extui %0 : i1 to i32
    %c0_i32_0 = arith.constant 0 : i32
    %2 = arith.cmpi ne, %1, %c0_i32_0 : i32
    scf.if %2 {
      %cst_12 = arith.constant 0.000000e+00 : f32
      %14 = vector.broadcast %cst_12 : f32 to vector<64x128xf32>
      %c0_13 = arith.constant 0 : index
      %c0_14 = arith.constant 0 : index
      %15 = vector.load %arg5[%c0_13, %c0_14] : memref<64x128xf32, #tpu.memory_space<vmem>>, vector<64x128xf32>
      tpu.vector_store %arg5[%c0_13, %c0_14], %14 {strides = array<i32>} : memref<64x128xf32, #tpu.memory_space<vmem>>, vector<64x128xf32>,
    } else {
    }
    %c0 = arith.constant 0 : index
    %c0_1 = arith.constant 0 : index
    %3 = vector.load %arg5[%c0, %c0_1] : memref<64x128xf32, #tpu.memory_space<vmem>>, vector<64x128xf32>
    %c0_2 = arith.constant 0 : index
    %c0_3 = arith.constant 0 : index
    %c0_4 = arith.constant 0 : index
    %4 = vector.load %arg1[%c0_2, %c0_3, %c0_4] : memref<1x64x288xbf16, #tpu.memory_space<vmem>>, vector<1x64x288xbf16>
    %5 = vector.shape_cast %4 : vector<1x64x288xbf16> to vector<64x288xbf16>
    %c0_5 = arith.constant 0 : index
    %c0_6 = arith.constant 0 : index
    %c0_7 = arith.constant 0 : index
    %6 = vector.load %arg2[%c0_5, %c0_6, %c0_7] : memref<1x288x128xbf16, #tpu.memory_space<vmem>>, vector<1x288x128xbf16>
    %7 = vector.shape_cast %6 : vector<1x288x128xbf16> to vector<288x128xbf16>
    %cst = arith.constant dense<0.000000e+00> : vector<64x128xf32>
    %8 = tpu.matmul %5, %7, %cst {dimension_numbers = #tpu.dot_dimension_numbers<[1], [0], [0], [1], [0, 0, 1, 1], [], []>} : vector<64x288xbf16>, vector<288x128xbf16>, vector<64x128xf32> -> vector<64x128xf32>
    %9 = arith.addf %3, %8 : vector<64x128xf32>
    %c0_8 = arith.constant 0 : index
    %c0_9 = arith.constant 0 : index
    %10 = vector.load %arg5[%c0_8, %c0_9] : memref<64x128xf32, #tpu.memory_space<vmem>>, vector<64x128xf32>
    tpu.vector_store %arg5[%c0_8, %c0_9], %9 {strides = array<i32>} : memref<64x128xf32, #tpu.memory_space<vmem>>, vector<64x128xf32>,
    %c0_i32_10 = arith.constant 0 : i32
    %11 = arith.cmpi eq, %arg0, %c0_i32_10 : i32
    %12 = arith.extui %11 : i1 to i32
    %c0_i32_11 = arith.constant 0 : i32
    %13 = arith.cmpi ne, %12, %c0_i32_11 : i32
    scf.if %13 {
      %c0_12 = arith.constant 0 : index
      %c0_13 = arith.constant 0 : index
      %14 = vector.load %arg5[%c0_12, %c0_13] : memref<64x128xf32, #tpu.memory_space<vmem>>, vector<64x128xf32>
      %cst_14 = arith.constant dense<0.000000e+00> : vector<64xf32>
      %15 = vector.multi_reduction <add>, %14, %cst_14 [1] : vector<64x128xf32> to vector<64xf32>
      %16 = vector.shape_cast %15 : vector<64xf32> to vector<64x1xf32>
      %cst_15 = arith.constant 7.812500e-03 : f32
      %17 = vector.broadcast %cst_15 : f32 to vector<64x1xf32>
      %18 = arith.mulf %16, %17 : vector<64x1xf32>
      %19 = vector.broadcast %18 : vector<64x1xf32> to vector<64x128xf32>
      %20 = arith.subf %14, %19 : vector<64x128xf32>
      %21 = arith.mulf %20, %20 : vector<64x128xf32>
      %cst_16 = arith.constant dense<0.000000e+00> : vector<64xf32>
      %22 = vector.multi_reduction <add>, %21, %cst_16 [1] : vector<64x128xf32> to vector<64xf32>
      %23 = vector.shape_cast %22 : vector<64xf32> to vector<64x1xf32>
      %cst_17 = arith.constant 7.812500e-03 : f32
      %24 = vector.broadcast %cst_17 : f32 to vector<64x1xf32>
      %25 = arith.mulf %23, %24 : vector<64x1xf32>
      %c0_18 = arith.constant 0 : index
      %c0_19 = arith.constant 0 : index
      %26 = vector.load %arg3[%c0_18, %c0_19] : memref<64x2xf32, #tpu.memory_space<vmem>>, vector<64x1xf32>
      %cst_20 = arith.constant 9.99999974E-6 : f32
      %27 = vector.broadcast %cst_20 : f32 to vector<64x1xf32>
      %28 = arith.addf %25, %27 : vector<64x1xf32>
      %29 = math.rsqrt %28 : vector<64x1xf32>
      %30 = arith.mulf %26, %29 : vector<64x1xf32>
      %31 = vector.broadcast %30 : vector<64x1xf32> to vector<64x128xf32>
      %32 = arith.mulf %20, %31 : vector<64x128xf32>
      %c0_21 = arith.constant 0 : index
      %c1 = arith.constant 1 : index
      %33 = vector.load %arg3[%c0_21, %c1] : memref<64x2xf32, #tpu.memory_space<vmem>>, vector<64x1xf32>
      %34 = vector.broadcast %33 : vector<64x1xf32> to vector<64x128xf32>
      %35 = arith.addf %32, %34 : vector<64x128xf32>
      %cst_22 = arith.constant 0.000000e+00 : f32
      %36 = vector.broadcast %cst_22 : f32 to vector<64x128xf32>
      %37 = arith.maximumf %35, %36 : vector<64x128xf32>
      %c0_23 = arith.constant 0 : index
      %c0_24 = arith.constant 0 : index
      %38 = vector.load %arg4[%c0_23, %c0_24] : memref<64x128xf32, #tpu.memory_space<vmem>>, vector<64x128xf32>
      tpu.vector_store %arg4[%c0_23, %c0_24], %37 {strides = array<i32>} : memref<64x128xf32, #tpu.memory_space<vmem>>, vector<64x128xf32>,
    } else {
    }
    return
  }
  func.func @transform_0(%arg0: i32) -> (i32, i32, i32) {
    %c0_i32 = arith.constant 0 : i32
    %c0_i32_0 = arith.constant 0 : i32
    %c0_i32_1 = arith.constant 0 : i32
    return %arg0, %c0_i32, %c0_i32_0 : i32, i32, i32
  }
  func.func @transform_1(%arg0: i32) -> (i32, i32, i32) {
    %c0_i32 = arith.constant 0 : i32
    %c0_i32_0 = arith.constant 0 : i32
    %c0_i32_1 = arith.constant 0 : i32
    return %arg0, %c0_i32, %c0_i32_0 : i32, i32, i32
  }
  func.func @transform_2(%arg0: i32) -> (i32, i32) {
    %c0_i32 = arith.constant 0 : i32
    %c0_i32_0 = arith.constant 0 : i32
    %c0_i32_1 = arith.constant 0 : i32
    return %c0_i32, %c0_i32_0 : i32, i32
  }
  func.func @transform_3(%arg0: i32) -> (i32, i32) {
    %c0_i32 = arith.constant 0 : i32
    %c0_i32_0 = arith.constant 0 : i32
    %c0_i32_1 = arith.constant 0 : i32
    return %c0_i32, %c0_i32_0 : i32, i32
  }
}

module attributes {stable_mosaic.version = 11 : i64} {
  func.func @_conv_bn_act_kernel(%arg0: i32, %arg1: memref<1x64x576xbf16, #tpu.memory_space<vmem>>, %arg2: memref<1x576x128xbf16, #tpu.memory_space<vmem>>, %arg3: memref<64x2xf32, #tpu.memory_space<vmem>>, %arg4: memref<64x32xbf16, #tpu.memory_space<vmem>>, %arg5: memref<32x128xbf16, #tpu.memory_space<vmem>>, %arg6: memref<64x2xf32, #tpu.memory_space<vmem>>, %arg7: memref<64x128xf32, #tpu.memory_space<vmem>>, %arg8: memref<64x128xf32, #tpu.memory_space<vmem>>) attributes {dimension_semantics = [#tpu.dimension_semantics<arbitrary>], iteration_bounds = array<i64: 1>, scalar_prefetch = 0 : i64, scratch_operands = 1 : i64, tpu.core_type = #tpu.core_type<tc>, window_params = [{transform_indices = @transform_0, window_bounds = array<i64: 1, 64, 576>}, {transform_indices = @transform_1, window_bounds = array<i64: 1, 576, 128>}, {pipeline_mode = #tpu.pipeline_mode<synchronous>, transform_indices = @transform_2, window_bounds = array<i64: 64, 2>}, {pipeline_mode = #tpu.pipeline_mode<synchronous>, transform_indices = @transform_3, window_bounds = array<i64: 64, 32>}, {pipeline_mode = #tpu.pipeline_mode<synchronous>, transform_indices = @transform_4, window_bounds = array<i64: 32, 128>}, {pipeline_mode = #tpu.pipeline_mode<synchronous>, transform_indices = @transform_5, window_bounds = array<i64: 64, 2>}, {pipeline_mode = #tpu.pipeline_mode<synchronous>, transform_indices = @transform_6, window_bounds = array<i64: 64, 128>}]} {
    %c0_i32 = arith.constant 0 : i32
    %0 = arith.cmpi eq, %arg0, %c0_i32 : i32
    %1 = arith.extui %0 : i1 to i32
    %c0_i32_0 = arith.constant 0 : i32
    %2 = arith.cmpi ne, %1, %c0_i32_0 : i32
    scf.if %2 {
      %cst_12 = arith.constant 0.000000e+00 : f32
      %14 = vector.broadcast %cst_12 : f32 to vector<64x128xf32>
      %c0_13 = arith.constant 0 : index
      %c0_14 = arith.constant 0 : index
      %15 = vector.load %arg8[%c0_13, %c0_14] : memref<64x128xf32, #tpu.memory_space<vmem>>, vector<64x128xf32>
      tpu.vector_store %arg8[%c0_13, %c0_14], %14 {strides = array<i32>} : memref<64x128xf32, #tpu.memory_space<vmem>>, vector<64x128xf32>,
    } else {
    }
    %c0 = arith.constant 0 : index
    %c0_1 = arith.constant 0 : index
    %3 = vector.load %arg8[%c0, %c0_1] : memref<64x128xf32, #tpu.memory_space<vmem>>, vector<64x128xf32>
    %c0_2 = arith.constant 0 : index
    %c0_3 = arith.constant 0 : index
    %c0_4 = arith.constant 0 : index
    %4 = vector.load %arg1[%c0_2, %c0_3, %c0_4] : memref<1x64x576xbf16, #tpu.memory_space<vmem>>, vector<1x64x576xbf16>
    %5 = vector.shape_cast %4 : vector<1x64x576xbf16> to vector<64x576xbf16>
    %c0_5 = arith.constant 0 : index
    %c0_6 = arith.constant 0 : index
    %c0_7 = arith.constant 0 : index
    %6 = vector.load %arg2[%c0_5, %c0_6, %c0_7] : memref<1x576x128xbf16, #tpu.memory_space<vmem>>, vector<1x576x128xbf16>
    %7 = vector.shape_cast %6 : vector<1x576x128xbf16> to vector<576x128xbf16>
    %cst = arith.constant dense<0.000000e+00> : vector<64x128xf32>
    %8 = tpu.matmul %5, %7, %cst {dimension_numbers = #tpu.dot_dimension_numbers<[1], [0], [0], [1], [0, 0, 1, 1], [], []>} : vector<64x576xbf16>, vector<576x128xbf16>, vector<64x128xf32> -> vector<64x128xf32>
    %9 = arith.addf %3, %8 : vector<64x128xf32>
    %c0_8 = arith.constant 0 : index
    %c0_9 = arith.constant 0 : index
    %10 = vector.load %arg8[%c0_8, %c0_9] : memref<64x128xf32, #tpu.memory_space<vmem>>, vector<64x128xf32>
    tpu.vector_store %arg8[%c0_8, %c0_9], %9 {strides = array<i32>} : memref<64x128xf32, #tpu.memory_space<vmem>>, vector<64x128xf32>,
    %c0_i32_10 = arith.constant 0 : i32
    %11 = arith.cmpi eq, %arg0, %c0_i32_10 : i32
    %12 = arith.extui %11 : i1 to i32
    %c0_i32_11 = arith.constant 0 : i32
    %13 = arith.cmpi ne, %12, %c0_i32_11 : i32
    scf.if %13 {
      %c0_12 = arith.constant 0 : index
      %c0_13 = arith.constant 0 : index
      %14 = vector.load %arg8[%c0_12, %c0_13] : memref<64x128xf32, #tpu.memory_space<vmem>>, vector<64x128xf32>
      %cst_14 = arith.constant dense<0.000000e+00> : vector<64xf32>
      %15 = vector.multi_reduction <add>, %14, %cst_14 [1] : vector<64x128xf32> to vector<64xf32>
      %16 = vector.shape_cast %15 : vector<64xf32> to vector<64x1xf32>
      %cst_15 = arith.constant 7.812500e-03 : f32
      %17 = vector.broadcast %cst_15 : f32 to vector<64x1xf32>
      %18 = arith.mulf %16, %17 : vector<64x1xf32>
      %19 = vector.broadcast %18 : vector<64x1xf32> to vector<64x128xf32>
      %20 = arith.subf %14, %19 : vector<64x128xf32>
      %21 = arith.mulf %20, %20 : vector<64x128xf32>
      %cst_16 = arith.constant dense<0.000000e+00> : vector<64xf32>
      %22 = vector.multi_reduction <add>, %21, %cst_16 [1] : vector<64x128xf32> to vector<64xf32>
      %23 = vector.shape_cast %22 : vector<64xf32> to vector<64x1xf32>
      %cst_17 = arith.constant 7.812500e-03 : f32
      %24 = vector.broadcast %cst_17 : f32 to vector<64x1xf32>
      %25 = arith.mulf %23, %24 : vector<64x1xf32>
      %c0_18 = arith.constant 0 : index
      %c0_19 = arith.constant 0 : index
      %26 = vector.load %arg3[%c0_18, %c0_19] : memref<64x2xf32, #tpu.memory_space<vmem>>, vector<64x1xf32>
      %cst_20 = arith.constant 9.99999974E-6 : f32
      %27 = vector.broadcast %cst_20 : f32 to vector<64x1xf32>
      %28 = arith.addf %25, %27 : vector<64x1xf32>
      %29 = math.rsqrt %28 : vector<64x1xf32>
      %30 = arith.mulf %26, %29 : vector<64x1xf32>
      %31 = vector.broadcast %30 : vector<64x1xf32> to vector<64x128xf32>
      %32 = arith.mulf %20, %31 : vector<64x128xf32>
      %c0_21 = arith.constant 0 : index
      %c1 = arith.constant 1 : index
      %33 = vector.load %arg3[%c0_21, %c1] : memref<64x2xf32, #tpu.memory_space<vmem>>, vector<64x1xf32>
      %34 = vector.broadcast %33 : vector<64x1xf32> to vector<64x128xf32>
      %35 = arith.addf %32, %34 : vector<64x128xf32>
      %c0_22 = arith.constant 0 : index
      %c0_23 = arith.constant 0 : index
      %36 = vector.load %arg4[%c0_22, %c0_23] : memref<64x32xbf16, #tpu.memory_space<vmem>>, vector<64x32xbf16>
      %c0_24 = arith.constant 0 : index
      %c0_25 = arith.constant 0 : index
      %37 = vector.load %arg5[%c0_24, %c0_25] : memref<32x128xbf16, #tpu.memory_space<vmem>>, vector<32x128xbf16>
      %cst_26 = arith.constant dense<0.000000e+00> : vector<64x128xf32>
      %38 = tpu.matmul %36, %37, %cst_26 {dimension_numbers = #tpu.dot_dimension_numbers<[1], [0], [0], [1], [0, 0, 1, 1], [], []>} : vector<64x32xbf16>, vector<32x128xbf16>, vector<64x128xf32> -> vector<64x128xf32>
      %cst_27 = arith.constant dense<0.000000e+00> : vector<64xf32>
      %39 = vector.multi_reduction <add>, %38, %cst_27 [1] : vector<64x128xf32> to vector<64xf32>
      %40 = vector.shape_cast %39 : vector<64xf32> to vector<64x1xf32>
      %cst_28 = arith.constant 7.812500e-03 : f32
      %41 = vector.broadcast %cst_28 : f32 to vector<64x1xf32>
      %42 = arith.mulf %40, %41 : vector<64x1xf32>
      %43 = vector.broadcast %42 : vector<64x1xf32> to vector<64x128xf32>
      %44 = arith.subf %38, %43 : vector<64x128xf32>
      %45 = arith.mulf %44, %44 : vector<64x128xf32>
      %cst_29 = arith.constant dense<0.000000e+00> : vector<64xf32>
      %46 = vector.multi_reduction <add>, %45, %cst_29 [1] : vector<64x128xf32> to vector<64xf32>
      %47 = vector.shape_cast %46 : vector<64xf32> to vector<64x1xf32>
      %cst_30 = arith.constant 7.812500e-03 : f32
      %48 = vector.broadcast %cst_30 : f32 to vector<64x1xf32>
      %49 = arith.mulf %47, %48 : vector<64x1xf32>
      %c0_31 = arith.constant 0 : index
      %c0_32 = arith.constant 0 : index
      %50 = vector.load %arg6[%c0_31, %c0_32] : memref<64x2xf32, #tpu.memory_space<vmem>>, vector<64x1xf32>
      %cst_33 = arith.constant 9.99999974E-6 : f32
      %51 = vector.broadcast %cst_33 : f32 to vector<64x1xf32>
      %52 = arith.addf %49, %51 : vector<64x1xf32>
      %53 = math.rsqrt %52 : vector<64x1xf32>
      %54 = arith.mulf %50, %53 : vector<64x1xf32>
      %55 = vector.broadcast %54 : vector<64x1xf32> to vector<64x128xf32>
      %56 = arith.mulf %44, %55 : vector<64x128xf32>
      %57 = arith.addf %35, %56 : vector<64x128xf32>
      %c0_34 = arith.constant 0 : index
      %c1_35 = arith.constant 1 : index
      %58 = vector.load %arg6[%c0_34, %c1_35] : memref<64x2xf32, #tpu.memory_space<vmem>>, vector<64x1xf32>
      %59 = vector.broadcast %58 : vector<64x1xf32> to vector<64x128xf32>
      %60 = arith.addf %57, %59 : vector<64x128xf32>
      %cst_36 = arith.constant 0.000000e+00 : f32
      %61 = vector.broadcast %cst_36 : f32 to vector<64x128xf32>
      %62 = arith.maximumf %60, %61 : vector<64x128xf32>
      %c0_37 = arith.constant 0 : index
      %c0_38 = arith.constant 0 : index
      %63 = vector.load %arg7[%c0_37, %c0_38] : memref<64x128xf32, #tpu.memory_space<vmem>>, vector<64x128xf32>
      tpu.vector_store %arg7[%c0_37, %c0_38], %62 {strides = array<i32>} : memref<64x128xf32, #tpu.memory_space<vmem>>, vector<64x128xf32>,
    } else {
    }
    return
  }
  func.func @transform_0(%arg0: i32) -> (i32, i32, i32) {
    %c0_i32 = arith.constant 0 : i32
    %c0_i32_0 = arith.constant 0 : i32
    %c0_i32_1 = arith.constant 0 : i32
    return %arg0, %c0_i32, %c0_i32_0 : i32, i32, i32
  }
  func.func @transform_1(%arg0: i32) -> (i32, i32, i32) {
    %c0_i32 = arith.constant 0 : i32
    %c0_i32_0 = arith.constant 0 : i32
    %c0_i32_1 = arith.constant 0 : i32
    return %arg0, %c0_i32, %c0_i32_0 : i32, i32, i32
  }
  func.func @transform_2(%arg0: i32) -> (i32, i32) {
    %c0_i32 = arith.constant 0 : i32
    %c0_i32_0 = arith.constant 0 : i32
    %c0_i32_1 = arith.constant 0 : i32
    return %c0_i32, %c0_i32_0 : i32, i32
  }
  func.func @transform_3(%arg0: i32) -> (i32, i32) {
    %c0_i32 = arith.constant 0 : i32
    %c0_i32_0 = arith.constant 0 : i32
    %c0_i32_1 = arith.constant 0 : i32
    return %c0_i32, %c0_i32_0 : i32, i32
  }
  func.func @transform_4(%arg0: i32) -> (i32, i32) {
    %c0_i32 = arith.constant 0 : i32
    %c0_i32_0 = arith.constant 0 : i32
    %c0_i32_1 = arith.constant 0 : i32
    return %c0_i32, %c0_i32_0 : i32, i32
  }
  func.func @transform_5(%arg0: i32) -> (i32, i32) {
    %c0_i32 = arith.constant 0 : i32
    %c0_i32_0 = arith.constant 0 : i32
    %c0_i32_1 = arith.constant 0 : i32
    return %c0_i32, %c0_i32_0 : i32, i32
  }
  func.func @transform_6(%arg0: i32) -> (i32, i32) {
    %c0_i32 = arith.constant 0 : i32
    %c0_i32_0 = arith.constant 0 : i32
    %c0_i32_1 = arith.constant 0 : i32
    return %c0_i32, %c0_i32_0 : i32, i32
  }
}

</mosaic_0001>

<llo_original>
// kernel: resnet_forward.7
$region0: #{resnet_forward.7}
  #allocation0 [shape = 'u32[]', space=smem, size = 0x4, offset = 0x4, fixed_abs, tag = 'smem constant byte address 0x4 - core index']
  #allocation1 [shape = 'u32[144,128]{1,0:T(1,128)}', space=vmem, size = 0x12000, scoped, tag = 'internal scratch']
  #allocation2 [shape = 'f32[16,2048]{1,0:T(8,128)}', space=vmem, size = 0x20000, scoped, tag = 'scratch operand']
  %s0 = inlined_call_operand.vmem [shape: bf16[1,16,27], index: 0, kind: input, shape index: {}]
  %s1 = inlined_call_operand.vmem [shape: bf16[1,27,2048], index: 1, kind: input, shape index: {}]
  %s2 = inlined_call_operand.vmem [shape: f32[16,2], index: 2, kind: input, shape index: {}]
  %s3 = inlined_call_operand.vmem [shape: f32[16,2048], index: 3, kind: output, shape index: {}]
  %s4 = sld [smem:[#allocation0]]
  $region30: #{resnet_forward.7} parent=0
    _
  %s6 = ssub.s32 1, %s4
  %s7 = scalar_select 0, %s6, %s4
  // Predicated region
  $region2: #{resnet_forward.7} parent=0 // pred_check
    _
  $region3: #{resnet_forward.7} parent=0 // pred_check_branch
    %9 = sbr.rel (0) target = $region5
  $region4: #{resnet_forward.7} parent=0 // pred_region
    _
  $region5: #{resnet_forward.7} parent=0 // pred_fallthru
    _
  // Predicated region
  $region6: #{resnet_forward.7} parent=0 // pred_check
    _
  $region7: #{resnet_forward.7} parent=0 // pred_check_branch
    %11 = sbr.rel (0) target = $region9
  $region8: #{resnet_forward.7} parent=0 // pred_region
    _
  $region9: #{resnet_forward.7} parent=0 // pred_fallthru
    _
  // Predicated region
  $region10: #{resnet_forward.7} parent=0 // pred_check
    _
  $region11: #{resnet_forward.7} parent=0 // pred_check_branch
    %13 = sbr.rel (0) target = $region13
  $region12: #{resnet_forward.7} parent=0 // pred_region
    _
  $region13: #{resnet_forward.7} parent=0 // pred_fallthru
    _
  %p15 = scmp.eq.s32.totalorder 0, 0
  // Predicated region
  $region14: #{resnet_forward.7} parent=0 // pred_check
    %p16 = pneg %p15
  $region15: #{resnet_forward.7} parent=0 // pred_check_branch
    %18 = sbr.rel (%p16) target = $region17
  $region16: #{resnet_forward.7} parent=0 // pred_region
    %19 = vst [vmem:[#allocation2] sm:$0xff] 0.0
    %20 = vst [vmem:[#allocation2 + $0x8] sm:$0xff] 0.0
    %21 = vst [vmem:[#allocation2 + $0x10] sm:$0xff] 0.0
    %22 = vst [vmem:[#allocation2 + $0x18] sm:$0xff] 0.0
    %23 = vst [vmem:[#allocation2 + $0x20] sm:$0xff] 0.0
    %24 = vst [vmem:[#allocation2 + $0x28] sm:$0xff] 0.0
    %25 = vst [vmem:[#allocation2 + $0x30] sm:$0xff] 0.0
    %26 = vst [vmem:[#allocation2 + $0x38] sm:$0xff] 0.0
    %27 = vst [vmem:[#allocation2 + $0x40] sm:$0xff] 0.0
    %28 = vst [vmem:[#allocation2 + $0x48] sm:$0xff] 0.0
    %29 = vst [vmem:[#allocation2 + $0x50] sm:$0xff] 0.0
    %30 = vst [vmem:[#allocation2 + $0x58] sm:$0xff] 0.0
    %31 = vst [vmem:[#allocation2 + $0x60] sm:$0xff] 0.0
    %32 = vst [vmem:[#allocation2 + $0x68] sm:$0xff] 0.0
    %33 = vst [vmem:[#allocation2 + $0x70] sm:$0xff] 0.0
    %34 = vst [vmem:[#allocation2 + $0x78] sm:$0xff] 0.0
    %35 = vst [vmem:[#allocation2 + $0x80] sm:$0xff] 0.0
    %36 = vst [vmem:[#allocation2 + $0x88] sm:$0xff] 0.0
    %37 = vst [vmem:[#allocation2 + $0x90] sm:$0xff] 0.0
    %38 = vst [vmem:[#allocation2 + $0x98] sm:$0xff] 0.0
    %39 = vst [vmem:[#allocation2 + $0xa0] sm:$0xff] 0.0
    %40 = vst [vmem:[#allocation2 + $0xa8] sm:$0xff] 0.0
    %41 = vst [vmem:[#allocation2 + $0xb0] sm:$0xff] 0.0
    %42 = vst [vmem:[#allocation2 + $0xb8] sm:$0xff] 0.0
    %43 = vst [vmem:[#allocation2 + $0xc0] sm:$0xff] 0.0
    %44 = vst [vmem:[#allocation2 + $0xc8] sm:$0xff] 0.0
    %45 = vst [vmem:[#allocation2 + $0xd0] sm:$0xff] 0.0
    %46 = vst [vmem:[#allocation2 + $0xd8] sm:$0xff] 0.0
    %47 = vst [vmem:[#allocation2 + $0xe0] sm:$0xff] 0.0
    %48 = vst [vmem:[#allocation2 + $0xe8] sm:$0xff] 0.0
    %49 = vst [vmem:[#allocation2 + $0xf0] sm:$0xff] 0.0
    %50 = vst [vmem:[#allocation2 + $0xf8] sm:$0xff] 0.0
  $region17: #{resnet_forward.7} parent=0 // pred_fallthru
    _
  %v51 = vld [vmem:[#allocation2] sm:$0xff]
  %v52 = vld [vmem:[#allocation2 + $0x8] sm:$0xff]
  %v53 = vld [vmem:[#allocation2 + $0x10] sm:$0xff]
  %v54 = vld [vmem:[#allocation2 + $0x18] sm:$0xff]
  %v55 = vld [vmem:[#allocation2 + $0x20] sm:$0xff]
  %v56 = vld [vmem:[#allocation2 + $0x28] sm:$0xff]
  %v57 = vld [vmem:[#allocation2 + $0x30] sm:$0xff]
  %v58 = vld [vmem:[#allocation2 + $0x38] sm:$0xff]
  %v59 = vld [vmem:[#allocation2 + $0x40] sm:$0xff]
  %v60 = vld [vmem:[#allocation2 + $0x48] sm:$0xff]
  %v61 = vld [vmem:[#allocation2 + $0x50] sm:$0xff]
  %v62 = vld [vmem:[#allocation2 + $0x58] sm:$0xff]
  %v63 = vld [vmem:[#allocation2 + $0x60] sm:$0xff]
  %v64 = vld [vmem:[#allocation2 + $0x68] sm:$0xff]
  %v65 = vld [vmem:[#allocation2 + $0x70] sm:$0xff]
  %v66 = vld [vmem:[#allocation2 + $0x78] sm:$0xff]
  %v67 = vld [vmem:[#allocation2 + $0x80] sm:$0xff]
  %v68 = vld [vmem:[#allocation2 + $0x88] sm:$0xff]
  %v69 = vld [vmem:[#allocation2 + $0x90] sm:$0xff]
  %v70 = vld [vmem:[#allocation2 + $0x98] sm:$0xff]
  %v71 = vld [vmem:[#allocation2 + $0xa0] sm:$0xff]
  %v72 = vld [vmem:[#allocation2 + $0xa8] sm:$0xff]
  %v73 = vld [vmem:[#allocation2 + $0xb0] sm:$0xff]
  %v74 = vld [vmem:[#allocation2 + $0xb8] sm:$0xff]
  %v75 = vld [vmem:[#allocation2 + $0xc0] sm:$0xff]
  %v76 = vld [vmem:[#allocation2 + $0xc8] sm:$0xff]
  %v77 = vld [vmem:[#allocation2 + $0xd0] sm:$0xff]
  %v78 = vld [vmem:[#allocation2 + $0xd8] sm:$0xff]
  %v79 = vld [vmem:[#allocation2 + $0xe0] sm:$0xff]
  %v80 = vld [vmem:[#allocation2 + $0xe8] sm:$0xff]
  %v81 = vld [vmem:[#allocation2 + $0xf0] sm:$0xff]
  %v82 = vld [vmem:[#allocation2 + $0xf8] sm:$0xff]
  %v83 = vld [vmem:[%s0] sm:$0xf]
  %v84 = vld [vmem:[%s0 + $0x4] sm:$0xf]
  %v85 = vld [vmem:[%s1] sm:$0xff]
  %v86 = vld [vmem:[%s1 + $0x8] sm:$0xff]
  %v87 = vld [vmem:[%s1 + $0x10] sm:$0xff]
  %v88 = vld [vmem:[%s1 + $0x18] sm:$0xff]
  %v89 = vld [vmem:[%s1 + $0x20] sm:$0xff]
  %v90 = vld [vmem:[%s1 + $0x28] sm:$0xff]
  %v91 = vld [vmem:[%s1 + $0x30] sm:$0xff]
  %v92 = vld [vmem:[%s1 + $0x38] sm:$0xff]
  %v93 = vld [vmem:[%s1 + $0x40] sm:$0xff]
  %v94 = vld [vmem:[%s1 + $0x48] sm:$0xff]
  %v95 = vld [vmem:[%s1 + $0x50] sm:$0xff]
  %v96 = vld [vmem:[%s1 + $0x58] sm:$0xff]
  %v97 = vld [vmem:[%s1 + $0x60] sm:$0xff]
  %v98 = vld [vmem:[%s1 + $0x68] sm:$0xff]
  %v99 = vld [vmem:[%s1 + $0x70] sm:$0xff]
  %v100 = vld [vmem:[%s1 + $0x78] sm:$0xff]
  %v101 = vld [vmem:[%s1 + $0x80] sm:$0xff]
  %v102 = vld [vmem:[%s1 + $0x88] sm:$0xff]
  %v103 = vld [vmem:[%s1 + $0x90] sm:$0xff]
  %v104 = vld [vmem:[%s1 + $0x98] sm:$0xff]
  %v105 = vld [vmem:[%s1 + $0xa0] sm:$0xff]
  %v106 = vld [vmem:[%s1 + $0xa8] sm:$0xff]
  %v107 = vld [vmem:[%s1 + $0xb0] sm:$0xff]
  %v108 = vld [vmem:[%s1 + $0xb8] sm:$0xff]
  %v109 = vld [vmem:[%s1 + $0xc0] sm:$0x33]
  %v110 = vld [vmem:[%s1 + $0xc8] sm:$0x33]
  %v111 = vld [vmem:[%s1 + $0xd0] sm:$0x33]
  %v112 = vld [vmem:[%s1 + $0xd8] sm:$0x33]
  %v113 = vld [vmem:[%s1 + $0xe0] sm:$0x33]
  %v114 = vld [vmem:[%s1 + $0xe8] sm:$0x33]
  %v115 = vld [vmem:[%s1 + $0xf0] sm:$0x33]
  %v116 = vld [vmem:[%s1 + $0xf8] sm:$0x33]
  %v119 = vunpack.c.l.b16 %v83
  %v120 = vunpack.c.l.b16 %v84
  %v121 = vpack.c.b16 %v120, %v119
  %v154 = vunpack.c.l.b16 %v85
  %v155 = vunpack.c.h.b16 %v85
  %v156 = vunpack.c.l.b16 %v86
  %v157 = vunpack.c.h.b16 %v86
  %v158 = vunpack.c.l.b16 %v87
  %v159 = vunpack.c.h.b16 %v87
  %v160 = vunpack.c.l.b16 %v88
  %v161 = vunpack.c.h.b16 %v88
  %v162 = vunpack.c.l.b16 %v89
  %v163 = vunpack.c.h.b16 %v89
  %v164 = vunpack.c.l.b16 %v90
  %v165 = vunpack.c.h.b16 %v90
  %v166 = vunpack.c.l.b16 %v91
  %v167 = vunpack.c.h.b16 %v91
  %v168 = vunpack.c.l.b16 %v92
  %v169 = vunpack.c.h.b16 %v92
  %v170 = vunpack.c.l.b16 %v93
  %v171 = vunpack.c.h.b16 %v93
  %v172 = vunpack.c.l.b16 %v94
  %v173 = vunpack.c.h.b16 %v94
  %v174 = vunpack.c.l.b16 %v95
  %v175 = vunpack.c.h.b16 %v95
  %v176 = vunpack.c.l.b16 %v96
  %v177 = vunpack.c.h.b16 %v96
  %v178 = vunpack.c.l.b16 %v97
  %v179 = vunpack.c.h.b16 %v97
  %v180 = vunpack.c.l.b16 %v98
  %v181 = vunpack.c.h.b16 %v98
  %v182 = vunpack.c.l.b16 %v99
  %v183 = vunpack.c.h.b16 %v99
  %v184 = vunpack.c.l.b16 %v100
  %v185 = vunpack.c.h.b16 %v100
  %v186 = vunpack.c.l.b16 %v101
  %v187 = vunpack.c.h.b16 %v101
  %v188 = vunpack.c.l.b16 %v102
  %v189 = vunpack.c.h.b16 %v102
  %v190 = vunpack.c.l.b16 %v103
  %v191 = vunpack.c.h.b16 %v103
  %v192 = vunpack.c.l.b16 %v104
  %v193 = vunpack.c.h.b16 %v104
  %v194 = vunpack.c.l.b16 %v105
  %v195 = vunpack.c.h.b16 %v105
  %v196 = vunpack.c.l.b16 %v106
  %v197 = vunpack.c.h.b16 %v106
  %v198 = vunpack.c.l.b16 %v107
  %v199 = vunpack.c.h.b16 %v107
  %v200 = vunpack.c.l.b16 %v108
  %v201 = vunpack.c.h.b16 %v108
  %v202 = vunpack.c.l.b16 %v109
  %v203 = vunpack.c.h.b16 %v109
  %v204 = vunpack.c.l.b16 %v110
  %v205 = vunpack.c.h.b16 %v110
  %v206 = vunpack.c.l.b16 %v111
  %v207 = vunpack.c.h.b16 %v111
  %v208 = vunpack.c.l.b16 %v112
  %v209 = vunpack.c.h.b16 %v112
  %v210 = vunpack.c.l.b16 %v113
  %v211 = vunpack.c.h.b16 %v113
  %v212 = vunpack.c.l.b16 %v114
  %v213 = vunpack.c.h.b16 %v114
  %v214 = vunpack.c.l.b16 %v115
  %v215 = vunpack.c.h.b16 %v115
  %v216 = vunpack.c.l.b16 %v116
  %v217 = vunpack.c.h.b16 %v116
  %v218 = vpack.c.b16 %v170, %v154
  %v219 = vpack.c.b16 %v171, %v155
  %v220 = vpack.c.b16 %v172, %v156
  %v221 = vpack.c.b16 %v173, %v157
  %v222 = vpack.c.b16 %v174, %v158
  %v223 = vpack.c.b16 %v175, %v159
  %v224 = vpack.c.b16 %v176, %v160
  %v225 = vpack.c.b16 %v177, %v161
  %v226 = vpack.c.b16 %v178, %v162
  %v227 = vpack.c.b16 %v179, %v163
  %v228 = vpack.c.b16 %v180, %v164
  %v229 = vpack.c.b16 %v181, %v165
  %v230 = vpack.c.b16 %v182, %v166
  %v231 = vpack.c.b16 %v183, %v167
  %v232 = vpack.c.b16 %v184, %v168
  %v233 = vpack.c.b16 %v185, %v169
  %v234 = vpack.c.b16 %v202, %v186
  %v235 = vpack.c.b16 %v203, %v187
  %v236 = vpack.c.b16 %v204, %v188
  %v237 = vpack.c.b16 %v205, %v189
  %v238 = vpack.c.b16 %v206, %v190
  %v239 = vpack.c.b16 %v207, %v191
  %v240 = vpack.c.b16 %v208, %v192
  %v241 = vpack.c.b16 %v209, %v193
  %v242 = vpack.c.b16 %v210, %v194
  %v243 = vpack.c.b16 %v211, %v195
  %v244 = vpack.c.b16 %v212, %v196
  %v245 = vpack.c.b16 %v213, %v197
  %v246 = vpack.c.b16 %v214, %v198
  %v247 = vpack.c.b16 %v215, %v199
  %v248 = vpack.c.b16 %v216, %v200
  %v249 = vpack.c.b16 %v217, %v201
  %vm266 = vcmask 220160
  %v268 = vsel %vm266, %v121, 0
  %vm270 = vcmask 1044480
  %vm271 = vcmask 1045504
  %v272 = vsel %vm270, 4294967295, 65535
  %v273 = vsel %vm271, %v272, 0
  %v275 = vand.u32 %v234, %v273
  %v278 = vand.u32 %v235, %v273
  %v281 = vand.u32 %v236, %v273
  %v284 = vand.u32 %v237, %v273
  %v287 = vand.u32 %v238, %v273
  %v290 = vand.u32 %v239, %v273
  %v293 = vand.u32 %v240, %v273
  %v296 = vand.u32 %v241, %v273
  %v299 = vand.u32 %v242, %v273
  %v302 = vand.u32 %v243, %v273
  %v305 = vand.u32 %v244, %v273
  %v308 = vand.u32 %v245, %v273
  %v311 = vand.u32 %v246, %v273
  %v314 = vand.u32 %v247, %v273
  %v317 = vand.u32 %v248, %v273
  %v320 = vand.u32 %v249, %v273
  %322 = vmatprep.subr.bf16.mxu0 %v219
  %323 = vmatpush1.bf16.msra.mxu0 %v218
  %324 = vmatprep.subr.bf16.mxu0 %v278
  %325 = vmatpush1.bf16.msra.mxu0 %v275
  %326 = vmatprep.subr.bf16.mxu0 0
  %327 = vmatpush1.bf16.msra.mxu0 0
  %328 = vmatprep.subr.bf16.mxu0 0
  %329 = vmatpush1.bf16.msra.mxu0 0
  %330 = vmatprep.subr.bf16.mxu0 0
  %331 = vmatpush1.bf16.msra.mxu0 0
  %332 = vmatprep.subr.bf16.mxu0 0
  %333 = vmatpush1.bf16.msra.mxu0 0
  %334 = vmatprep.subr.bf16.mxu0 0
  %335 = vmatpush1.bf16.msra.mxu0 0
  %336 = vmatprep.subr.bf16.mxu0 0
  %337 = vmatpush1.bf16.msra.mxu0 0
  %338 = vmatprep.subr.bf16.mxu0 0
  %339 = vmatpush1.bf16.msra.mxu0 0
  %340 = vmatprep.subr.bf16.mxu0 0
  %341 = vmatpush1.bf16.msra.mxu0 0
  %342 = vmatprep.subr.bf16.mxu0 0
  %343 = vmatpush1.bf16.msra.mxu0 0
  %344 = vmatprep.subr.bf16.mxu0 0
  %345 = vmatpush1.bf16.msra.mxu0 0
  %346 = vmatprep.subr.bf16.mxu0 0
  %347 = vmatpush1.bf16.msra.mxu0 0
  %348 = vmatprep.subr.bf16.mxu0 0
  %349 = vmatpush1.bf16.msra.mxu0 0
  %350 = vmatprep.subr.bf16.mxu0 0
  %351 = vmatpush1.bf16.msra.mxu0 0
  %352 = vmatprep.subr.bf16.mxu0 0
  %353 = vmatpush1.bf16.msra.mxu0 0
  %354 = vmatprep.mubr.bf16.mxu0 0
  %355 = vmatmul.mubr.bf16.gmra.mrb[0].mxu0 %v268
  %v356 = vpop.f32.mrb[0].mxu0
  %v357 = vadd.f32 0.0, %v356
  %v358 = vpop.f32.mrb[0].mxu0
  %v359 = vadd.f32 0.0, %v358
  %v360 = vpop.f32.mrb[0].mxu0
  %v361 = vadd.f32 0.0, %v360
  %v362 = vpop.f32.mrb[0].mxu0
  %v363 = vadd.f32 0.0, %v362
  %364 = vdwg.mxu0
  %365 = vmatprep.subr.bf16.mxu0 %v221
  %366 = vmatpush1.bf16.msra.mxu0 %v220
  %367 = vmatprep.subr.bf16.mxu0 %v284
  %368 = vmatpush1.bf16.msra.mxu0 %v281
  %369 = vmatprep.subr.bf16.mxu0 0
  %370 = vmatpush1.bf16.msra.mxu0 0
  %371 = vmatprep.subr.bf16.mxu0 0
  %372 = vmatpush1.bf16.msra.mxu0 0
  %373 = vmatprep.subr.bf16.mxu0 0
  %374 = vmatpush1.bf16.msra.mxu0 0
  %375 = vmatprep.subr.bf16.mxu0 0
  %376 = vmatpush1.bf16.msra.mxu0 0
  %377 = vmatprep.subr.bf16.mxu0 0
  %378 = vmatpush1.bf16.msra.mxu0 0
  %379 = vmatprep.subr.bf16.mxu0 0
  %380 = vmatpush1.bf16.msra.mxu0 0
  %381 = vmatprep.subr.bf16.mxu0 0
  %382 = vmatpush1.bf16.msra.mxu0 0
  %383 = vmatprep.subr.bf16.mxu0 0
  %384 = vmatpush1.bf16.msra.mxu0 0
  %385 = vmatprep.subr.bf16.mxu0 0
  %386 = vmatpush1.bf16.msra.mxu0 0
  %387 = vmatprep.subr.bf16.mxu0 0
  %388 = vmatpush1.bf16.msra.mxu0 0
  %389 = vmatprep.subr.bf16.mxu0 0
  %390 = vmatpush1.bf16.msra.mxu0 0
  %391 = vmatprep.subr.bf16.mxu0 0
  %392 = vmatpush1.bf16.msra.mxu0 0
  %393 = vmatprep.subr.bf16.mxu0 0
  %394 = vmatpush1.bf16.msra.mxu0 0
  %395 = vmatprep.subr.bf16.mxu0 0
  %396 = vmatpush1.bf16.msra.mxu0 0
  %397 = vmatprep.mubr.bf16.mxu0 0
  %398 = vmatmul.mubr.bf16.gmra.mrb[0].mxu0 %v268
  %v399 = vpop.f32.mrb[0].mxu0
  %v400 = vadd.f32 0.0, %v399
  %v401 = vpop.f32.mrb[0].mxu0
  %v402 = vadd.f32 0.0, %v401
  %v403 = vpop.f32.mrb[0].mxu0
  %v404 = vadd.f32 0.0, %v403
  %v405 = vpop.f32.mrb[0].mxu0
  %v406 = vadd.f32 0.0, %v405
  %407 = vdwg.mxu0
  %408 = vmatprep.subr.bf16.mxu0 %v223
  %409 = vmatpush1.bf16.msra.mxu0 %v222
  %410 = vmatprep.subr.bf16.mxu0 %v290
  %411 = vmatpush1.bf16.msra.mxu0 %v287
  %412 = vmatprep.subr.bf16.mxu0 0
  %413 = vmatpush1.bf16.msra.mxu0 0
  %414 = vmatprep.subr.bf16.mxu0 0
  %415 = vmatpush1.bf16.msra.mxu0 0
  %416 = vmatprep.subr.bf16.mxu0 0
  %417 = vmatpush1.bf16.msra.mxu0 0
  %418 = vmatprep.subr.bf16.mxu0 0
  %419 = vmatpush1.bf16.msra.mxu0 0
  %420 = vmatprep.subr.bf16.mxu0 0
  %421 = vmatpush1.bf16.msra.mxu0 0
  %422 = vmatprep.subr.bf16.mxu0 0
  %423 = vmatpush1.bf16.msra.mxu0 0
  %424 = vmatprep.subr.bf16.mxu0 0
  %425 = vmatpush1.bf16.msra.mxu0 0
  %426 = vmatprep.subr.bf16.mxu0 0
  %427 = vmatpush1.bf16.msra.mxu0 0
  %428 = vmatprep.subr.bf16.mxu0 0
  %429 = vmatpush1.bf16.msra.mxu0 0
  %430 = vmatprep.subr.bf16.mxu0 0
  %431 = vmatpush1.bf16.msra.mxu0 0
  %432 = vmatprep.subr.bf16.mxu0 0
  %433 = vmatpush1.bf16.msra.mxu0 0
  %434 = vmatprep.subr.bf16.mxu0 0
  %435 = vmatpush1.bf16.msra.mxu0 0
  %436 = vmatprep.subr.bf16.mxu0 0
  %437 = vmatpush1.bf16.msra.mxu0 0
  %438 = vmatprep.subr.bf16.mxu0 0
  %439 = vmatpush1.bf16.msra.mxu0 0
  %440 = vmatprep.mubr.bf16.mxu0 0
  %441 = vmatmul.mubr.bf16.gmra.mrb[0].mxu0 %v268
  %v442 = vpop.f32.mrb[0].mxu0
  %v443 = vadd.f32 0.0, %v442
  %v444 = vpop.f32.mrb[0].mxu0
  %v445 = vadd.f32 0.0, %v444
  %v446 = vpop.f32.mrb[0].mxu0
  %v447 = vadd.f32 0.0, %v446
  %v448 = vpop.f32.mrb[0].mxu0
  %v449 = vadd.f32 0.0, %v448
  %450 = vdwg.mxu0
  %451 = vmatprep.subr.bf16.mxu0 %v225
  %452 = vmatpush1.bf16.msra.mxu0 %v224
  %453 = vmatprep.subr.bf16.mxu0 %v296
  %454 = vmatpush1.bf16.msra.mxu0 %v293
  %455 = vmatprep.subr.bf16.mxu0 0
  %456 = vmatpush1.bf16.msra.mxu0 0
  %457 = vmatprep.subr.bf16.mxu0 0
  %458 = vmatpush1.bf16.msra.mxu0 0
  %459 = vmatprep.subr.bf16.mxu0 0
  %460 = vmatpush1.bf16.msra.mxu0 0
  %461 = vmatprep.subr.bf16.mxu0 0
  %462 = vmatpush1.bf16.msra.mxu0 0
  %463 = vmatprep.subr.bf16.mxu0 0
  %464 = vmatpush1.bf16.msra.mxu0 0
  %465 = vmatprep.subr.bf16.mxu0 0
  %466 = vmatpush1.bf16.msra.mxu0 0
  %467 = vmatprep.subr.bf16.mxu0 0
  %468 = vmatpush1.bf16.msra.mxu0 0
  %469 = vmatprep.subr.bf16.mxu0 0
  %470 = vmatpush1.bf16.msra.mxu0 0
  %471 = vmatprep.subr.bf16.mxu0 0
  %472 = vmatpush1.bf16.msra.mxu0 0
  %473 = vmatprep.subr.bf16.mxu0 0
  %474 = vmatpush1.bf16.msra.mxu0 0
  %475 = vmatprep.subr.bf16.mxu0 0
  %476 = vmatpush1.bf16.msra.mxu0 0
  %477 = vmatprep.subr.bf16.mxu0 0
  %478 = vmatpush1.bf16.msra.mxu0 0
  %479 = vmatprep.subr.bf16.mxu0 0
  %480 = vmatpush1.bf16.msra.mxu0 0
  %481 = vmatprep.subr.bf16.mxu0 0
  %482 = vmatpush1.bf16.msra.mxu0 0
  %483 = vmatprep.mubr.bf16.mxu0 0
  %484 = vmatmul.mubr.bf16.gmra.mrb[0].mxu0 %v268
  %v485 = vpop.f32.mrb[0].mxu0
  %v486 = vadd.f32 0.0, %v485
  %v487 = vpop.f32.mrb[0].mxu0
  %v488 = vadd.f32 0.0, %v487
  %v489 = vpop.f32.mrb[0].mxu0
  %v490 = vadd.f32 0.0, %v489
  %v491 = vpop.f32.mrb[0].mxu0
  %v492 = vadd.f32 0.0, %v491
  %493 = vdwg.mxu0
  %494 = vmatprep.subr.bf16.mxu0 %v227
  %495 = vmatpush1.bf16.msra.mxu0 %v226
  %496 = vmatprep.subr.bf16.mxu0 %v302
  %497 = vmatpush1.bf16.msra.mxu0 %v299
  %498 = vmatprep.subr.bf16.mxu0 0
  %499 = vmatpush1.bf16.msra.mxu0 0
  %500 = vmatprep.subr.bf16.mxu0 0
  %501 = vmatpush1.bf16.msra.mxu0 0
  %502 = vmatprep.subr.bf16.mxu0 0
  %503 = vmatpush1.bf16.msra.mxu0 0
  %504 = vmatprep.subr.bf16.mxu0 0
  %505 = vmatpush1.bf16.msra.mxu0 0
  %506 = vmatprep.subr.bf16.mxu0 0
  %507 = vmatpush1.bf16.msra.mxu0 0
  %508 = vmatprep.subr.bf16.mxu0 0
  %509 = vmatpush1.bf16.msra.mxu0 0
  %510 = vmatprep.subr.bf16.mxu0 0
  %511 = vmatpush1.bf16.msra.mxu0 0
  %512 = vmatprep.subr.bf16.mxu0 0
  %513 = vmatpush1.bf16.msra.mxu0 0
  %514 = vmatprep.subr.bf16.mxu0 0
  %515 = vmatpush1.bf16.msra.mxu0 0
  %516 = vmatprep.subr.bf16.mxu0 0
  %517 = vmatpush1.bf16.msra.mxu0 0
  %518 = vmatprep.subr.bf16.mxu0 0
  %519 = vmatpush1.bf16.msra.mxu0 0
  %520 = vmatprep.subr.bf16.mxu0 0
  %521 = vmatpush1.bf16.msra.mxu0 0
  %522 = vmatprep.subr.bf16.mxu0 0
  %523 = vmatpush1.bf16.msra.mxu0 0
  %524 = vmatprep.subr.bf16.mxu0 0
  %525 = vmatpush1.bf16.msra.mxu0 0
  %526 = vmatprep.mubr.bf16.mxu0 0
  %527 = vmatmul.mubr.bf16.gmra.mrb[0].mxu0 %v268
  %v528 = vpop.f32.mrb[0].mxu0
  %v529 = vadd.f32 0.0, %v528
  %v530 = vpop.f32.mrb[0].mxu0
  %v531 = vadd.f32 0.0, %v530
  %v532 = vpop.f32.mrb[0].mxu0
  %v533 = vadd.f32 0.0, %v532
  %v534 = vpop.f32.mrb[0].mxu0
  %v535 = vadd.f32 0.0, %v534
  %536 = vdwg.mxu0
  %537 = vmatprep.subr.bf16.mxu0 %v229
  %538 = vmatpush1.bf16.msra.mxu0 %v228
  %539 = vmatprep.subr.bf16.mxu0 %v308
  %540 = vmatpush1.bf16.msra.mxu0 %v305
  %541 = vmatprep.subr.bf16.mxu0 0
  %542 = vmatpush1.bf16.msra.mxu0 0
  %543 = vmatprep.subr.bf16.mxu0 0
  %544 = vmatpush1.bf16.msra.mxu0 0
  %545 = vmatprep.subr.bf16.mxu0 0
  %546 = vmatpush1.bf16.msra.mxu0 0
  %547 = vmatprep.subr.bf16.mxu0 0
  %548 = vmatpush1.bf16.msra.mxu0 0
  %549 = vmatprep.subr.bf16.mxu0 0
  %550 = vmatpush1.bf16.msra.mxu0 0
  %551 = vmatprep.subr.bf16.mxu0 0
  %552 = vmatpush1.bf16.msra.mxu0 0
  %553 = vmatprep.subr.bf16.mxu0 0
  %554 = vmatpush1.bf16.msra.mxu0 0
  %555 = vmatprep.subr.bf16.mxu0 0
  %556 = vmatpush1.bf16.msra.mxu0 0
  %557 = vmatprep.subr.bf16.mxu0 0
  %558 = vmatpush1.bf16.msra.mxu0 0
  %559 = vmatprep.subr.bf16.mxu0 0
  %560 = vmatpush1.bf16.msra.mxu0 0
  %561 = vmatprep.subr.bf16.mxu0 0
  %562 = vmatpush1.bf16.msra.mxu0 0
  %563 = vmatprep.subr.bf16.mxu0 0
  %564 = vmatpush1.bf16.msra.mxu0 0
  %565 = vmatprep.subr.bf16.mxu0 0
  %566 = vmatpush1.bf16.msra.mxu0 0
  %567 = vmatprep.subr.bf16.mxu0 0
  %568 = vmatpush1.bf16.msra.mxu0 0
  %569 = vmatprep.mubr.bf16.mxu0 0
  %570 = vmatmul.mubr.bf16.gmra.mrb[0].mxu0 %v268
  %v571 = vpop.f32.mrb[0].mxu0
  %v572 = vadd.f32 0.0, %v571
  %v573 = vpop.f32.mrb[0].mxu0
  %v574 = vadd.f32 0.0, %v573
  %v575 = vpop.f32.mrb[0].mxu0
  %v576 = vadd.f32 0.0, %v575
  %v577 = vpop.f32.mrb[0].mxu0
  %v578 = vadd.f32 0.0, %v577
  %579 = vdwg.mxu0
  %580 = vmatprep.subr.bf16.mxu0 %v231
  %581 = vmatpush1.bf16.msra.mxu0 %v230
  %582 = vmatprep.subr.bf16.mxu0 %v314
  %583 = vmatpush1.bf16.msra.mxu0 %v311
  %584 = vmatprep.subr.bf16.mxu0 0
  %585 = vmatpush1.bf16.msra.mxu0 0
  %586 = vmatprep.subr.bf16.mxu0 0
  %587 = vmatpush1.bf16.msra.mxu0 0
  %588 = vmatprep.subr.bf16.mxu0 0
  %589 = vmatpush1.bf16.msra.mxu0 0
  %590 = vmatprep.subr.bf16.mxu0 0
  %591 = vmatpush1.bf16.msra.mxu0 0
  %592 = vmatprep.subr.bf16.mxu0 0
  %593 = vmatpush1.bf16.msra.mxu0 0
  %594 = vmatprep.subr.bf16.mxu0 0
  %595 = vmatpush1.bf16.msra.mxu0 0
  %596 = vmatprep.subr.bf16.mxu0 0
  %597 = vmatpush1.bf16.msra.mxu0 0
  %598 = vmatprep.subr.bf16.mxu0 0
  %599 = vmatpush1.bf16.msra.mxu0 0
  %600 = vmatprep.subr.bf16.mxu0 0
  %601 = vmatpush1.bf16.msra.mxu0 0
  %602 = vmatprep.subr.bf16.mxu0 0
  %603 = vmatpush1.bf16.msra.mxu0 0
  %604 = vmatprep.subr.bf16.mxu0 0
  %605 = vmatpush1.bf16.msra.mxu0 0
  %606 = vmatprep.subr.bf16.mxu0 0
  %607 = vmatpush1.bf16.msra.mxu0 0
  %608 = vmatprep.subr.bf16.mxu0 0
  %609 = vmatpush1.bf16.msra.mxu0 0
  %610 = vmatprep.subr.bf16.mxu0 0
  %611 = vmatpush1.bf16.msra.mxu0 0
  %612 = vmatprep.mubr.bf16.mxu0 0
  %613 = vmatmul.mubr.bf16.gmra.mrb[0].mxu0 %v268
  %v614 = vpop.f32.mrb[0].mxu0
  %v615 = vadd.f32 0.0, %v614
  %v616 = vpop.f32.mrb[0].mxu0
  %v617 = vadd.f32 0.0, %v616
  %v618 = vpop.f32.mrb[0].mxu0
  %v619 = vadd.f32 0.0, %v618
  %v620 = vpop.f32.mrb[0].mxu0
  %v621 = vadd.f32 0.0, %v620
  %622 = vdwg.mxu0
  %623 = vmatprep.subr.bf16.mxu0 %v233
  %624 = vmatpush1.bf16.msra.mxu0 %v232
  %625 = vmatprep.subr.bf16.mxu0 %v320
  %626 = vmatpush1.bf16.msra.mxu0 %v317
  %627 = vmatprep.subr.bf16.mxu0 0
  %628 = vmatpush1.bf16.msra.mxu0 0
  %629 = vmatprep.subr.bf16.mxu0 0
  %630 = vmatpush1.bf16.msra.mxu0 0
  %631 = vmatprep.subr.bf16.mxu0 0
  %632 = vmatpush1.bf16.msra.mxu0 0
  %633 = vmatprep.subr.bf16.mxu0 0
  %634 = vmatpush1.bf16.msra.mxu0 0
  %635 = vmatprep.subr.bf16.mxu0 0
  %636 = vmatpush1.bf16.msra.mxu0 0
  %637 = vmatprep.subr.bf16.mxu0 0
  %638 = vmatpush1.bf16.msra.mxu0 0
  %639 = vmatprep.subr.bf16.mxu0 0
  %640 = vmatpush1.bf16.msra.mxu0 0
  %641 = vmatprep.subr.bf16.mxu0 0
  %642 = vmatpush1.bf16.msra.mxu0 0
  %643 = vmatprep.subr.bf16.mxu0 0
  %644 = vmatpush1.bf16.msra.mxu0 0
  %645 = vmatprep.subr.bf16.mxu0 0
  %646 = vmatpush1.bf16.msra.mxu0 0
  %647 = vmatprep.subr.bf16.mxu0 0
  %648 = vmatpush1.bf16.msra.mxu0 0
  %649 = vmatprep.subr.bf16.mxu0 0
  %650 = vmatpush1.bf16.msra.mxu0 0
  %651 = vmatprep.subr.bf16.mxu0 0
  %652 = vmatpush1.bf16.msra.mxu0 0
  %653 = vmatprep.subr.bf16.mxu0 0
  %654 = vmatpush1.bf16.msra.mxu0 0
  %655 = vmatprep.mubr.bf16.mxu0 0
  %656 = vmatmul.mubr.bf16.gmra.mrb[0].mxu0 %v268
  %v657 = vpop.f32.mrb[0].mxu0
  %v658 = vadd.f32 0.0, %v657
  %v659 = vpop.f32.mrb[0].mxu0
  %v660 = vadd.f32 0.0, %v659
  %v661 = vpop.f32.mrb[0].mxu0
  %v662 = vadd.f32 0.0, %v661
  %v663 = vpop.f32.mrb[0].mxu0
  %v664 = vadd.f32 0.0, %v663
  %665 = vdwg.mxu0
  %v666 = vadd.f32 %v51, %v357
  %v667 = vadd.f32 %v52, %v359
  %v668 = vadd.f32 %v53, %v400
  %v669 = vadd.f32 %v54, %v402
  %v670 = vadd.f32 %v55, %v443
  %v671 = vadd.f32 %v56, %v445
  %v672 = vadd.f32 %v57, %v486
  %v673 = vadd.f32 %v58, %v488
  %v674 = vadd.f32 %v59, %v529
  %v675 = vadd.f32 %v60, %v531
  %v676 = vadd.f32 %v61, %v572
  %v677 = vadd.f32 %v62, %v574
  %v678 = vadd.f32 %v63, %v615
  %v679 = vadd.f32 %v64, %v617
  %v680 = vadd.f32 %v65, %v658
  %v681 = vadd.f32 %v66, %v660
  %v682 = vadd.f32 %v67, %v361
  %v683 = vadd.f32 %v68, %v363
  %v684 = vadd.f32 %v69, %v404
  %v685 = vadd.f32 %v70, %v406
  %v686 = vadd.f32 %v71, %v447
  %v687 = vadd.f32 %v72, %v449
  %v688 = vadd.f32 %v73, %v490
  %v689 = vadd.f32 %v74, %v492
  %v690 = vadd.f32 %v75, %v533
  %v691 = vadd.f32 %v76, %v535
  %v692 = vadd.f32 %v77, %v576
  %v693 = vadd.f32 %v78, %v578
  %v694 = vadd.f32 %v79, %v619
  %v695 = vadd.f32 %v80, %v621
  %v696 = vadd.f32 %v81, %v662
  %v697 = vadd.f32 %v82, %v664
  %698 = vst [vmem:[#allocation2] sm:$0xff] %v666
  %699 = vst [vmem:[#allocation2 + $0x8] sm:$0xff] %v667
  %700 = vst [vmem:[#allocation2 + $0x10] sm:$0xff] %v668
  %701 = vst [vmem:[#allocation2 + $0x18] sm:$0xff] %v669
  %702 = vst [vmem:[#allocation2 + $0x20] sm:$0xff] %v670
  %703 = vst [vmem:[#allocation2 + $0x28] sm:$0xff] %v671
  %704 = vst [vmem:[#allocation2 + $0x30] sm:$0xff] %v672
  %705 = vst [vmem:[#allocation2 + $0x38] sm:$0xff] %v673
  %706 = vst [vmem:[#allocation2 + $0x40] sm:$0xff] %v674
  %707 = vst [vmem:[#allocation2 + $0x48] sm:$0xff] %v675
  %708 = vst [vmem:[#allocation2 + $0x50] sm:$0xff] %v676
  %709 = vst [vmem:[#allocation2 + $0x58] sm:$0xff] %v677
  %710 = vst [vmem:[#allocation2 + $0x60] sm:$0xff] %v678
  %711 = vst [vmem:[#allocation2 + $0x68] sm:$0xff] %v679
  %712 = vst [vmem:[#allocation2 + $0x70] sm:$0xff] %v680
  %713 = vst [vmem:[#allocation2 + $0x78] sm:$0xff] %v681
  %714 = vst [vmem:[#allocation2 + $0x80] sm:$0xff] %v682
  %715 = vst [vmem:[#allocation2 + $0x88] sm:$0xff] %v683
  %716 = vst [vmem:[#allocation2 + $0x90] sm:$0xff] %v684
  %717 = vst [vmem:[#allocation2 + $0x98] sm:$0xff] %v685
  %718 = vst [vmem:[#allocation2 + $0xa0] sm:$0xff] %v686
  %719 = vst [vmem:[#allocation2 + $0xa8] sm:$0xff] %v687
  %720 = vst [vmem:[#allocation2 + $0xb0] sm:$0xff] %v688
  %721 = vst [vmem:[#allocation2 + $0xb8] sm:$0xff] %v689
  %722 = vst [vmem:[#allocation2 + $0xc0] sm:$0xff] %v690
  %723 = vst [vmem:[#allocation2 + $0xc8] sm:$0xff] %v691
  %724 = vst [vmem:[#allocation2 + $0xd0] sm:$0xff] %v692
  %725 = vst [vmem:[#allocation2 + $0xd8] sm:$0xff] %v693
  %726 = vst [vmem:[#allocation2 + $0xe0] sm:$0xff] %v694
  %727 = vst [vmem:[#allocation2 + $0xe8] sm:$0xff] %v695
  %728 = vst [vmem:[#allocation2 + $0xf0] sm:$0xff] %v696
  %729 = vst [vmem:[#allocation2 + $0xf8] sm:$0xff] %v697
  // Predicated region
  $region18: #{resnet_forward.7} parent=0 // pred_check
    %p730 = pneg %p15
  $region19: #{resnet_forward.7} parent=0 // pred_check_branch
    %732 = sbr.rel (%p730) target = $region21
  $region20: #{resnet_forward.7} parent=0 // pred_region
    %v733 = vld [vmem:[#allocation2] sm:$0xff]
    %v734 = vld [vmem:[#allocation2 + $0x8] sm:$0xff]
    %v735 = vld [vmem:[#allocation2 + $0x10] sm:$0xff]
    %v736 = vld [vmem:[#allocation2 + $0x18] sm:$0xff]
    %v737 = vld [vmem:[#allocation2 + $0x20] sm:$0xff]
    %v738 = vld [vmem:[#allocation2 + $0x28] sm:$0xff]
    %v739 = vld [vmem:[#allocation2 + $0x30] sm:$0xff]
    %v740 = vld [vmem:[#allocation2 + $0x38] sm:$0xff]
    %v741 = vld [vmem:[#allocation2 + $0x40] sm:$0xff]
    %v742 = vld [vmem:[#allocation2 + $0x48] sm:$0xff]
    %v743 = vld [vmem:[#allocation2 + $0x50] sm:$0xff]
    %v744 = vld [vmem:[#allocation2 + $0x58] sm:$0xff]
    %v745 = vld [vmem:[#allocation2 + $0x60] sm:$0xff]
    %v746 = vld [vmem:[#allocation2 + $0x68] sm:$0xff]
    %v747 = vld [vmem:[#allocation2 + $0x70] sm:$0xff]
    %v748 = vld [vmem:[#allocation2 + $0x78] sm:$0xff]
    %v749 = vld [vmem:[#allocation2 + $0x80] sm:$0xff]
    %v750 = vld [vmem:[#allocation2 + $0x88] sm:$0xff]
    %v751 = vld [vmem:[#allocation2 + $0x90] sm:$0xff]
    %v752 = vld [vmem:[#allocation2 + $0x98] sm:$0xff]
    %v753 = vld [vmem:[#allocation2 + $0xa0] sm:$0xff]
    %v754 = vld [vmem:[#allocation2 + $0xa8] sm:$0xff]
    %v755 = vld [vmem:[#allocation2 + $0xb0] sm:$0xff]
    %v756 = vld [vmem:[#allocation2 + $0xb8] sm:$0xff]
    %v757 = vld [vmem:[#allocation2 + $0xc0] sm:$0xff]
    %v758 = vld [vmem:[#allocation2 + $0xc8] sm:$0xff]
    %v759 = vld [vmem:[#allocation2 + $0xd0] sm:$0xff]
    %v760 = vld [vmem:[#allocation2 + $0xd8] sm:$0xff]
    %v761 = vld [vmem:[#allocation2 + $0xe0] sm:$0xff]
    %v762 = vld [vmem:[#allocation2 + $0xe8] sm:$0xff]
    %v763 = vld [vmem:[#allocation2 + $0xf0] sm:$0xff]
    %v764 = vld [vmem:[#allocation2 + $0xf8] sm:$0xff]
    %v765 = vadd.f32 %v733, %v734
    %v766 = vadd.f32 %v765, %v735
    %v767 = vadd.f32 %v766, %v736
    %v768 = vadd.f32 %v767, %v737
    %v769 = vadd.f32 %v768, %v738
    %v770 = vadd.f32 %v769, %v739
    %v771 = vadd.f32 %v770, %v740
    %v772 = vadd.f32 %v771, %v741
    %v773 = vadd.f32 %v772, %v742
    %v774 = vadd.f32 %v773, %v743
    %v775 = vadd.f32 %v774, %v744
    %v776 = vadd.f32 %v775, %v745
    %v777 = vadd.f32 %v776, %v746
    %v778 = vadd.f32 %v777, %v747
    %v779 = vadd.f32 %v778, %v748
    %780 = vadd.xlane.f32.xlu0 %v779
    %v781 = vpop.xlane.xlu0 %780
    %v782 = vadd.f32 %v749, %v750
    %v783 = vadd.f32 %v782, %v751
    %v784 = vadd.f32 %v783, %v752
    %v785 = vadd.f32 %v784, %v753
    %v786 = vadd.f32 %v785, %v754
    %v787 = vadd.f32 %v786, %v755
    %v788 = vadd.f32 %v787, %v756
    %v789 = vadd.f32 %v788, %v757
    %v790 = vadd.f32 %v789, %v758
    %v791 = vadd.f32 %v790, %v759
    %v792 = vadd.f32 %v791, %v760
    %v793 = vadd.f32 %v792, %v761
    %v794 = vadd.f32 %v793, %v762
    %v795 = vadd.f32 %v794, %v763
    %v796 = vadd.f32 %v795, %v764
    %797 = vadd.xlane.f32.xlu0 %v796
    %v798 = vpop.xlane.xlu0 %797
    %v799 = vmul.f32 %v781, 0.00048828125
    %v800 = vmul.f32 %v798, 0.00048828125
    %v801 = vsub.f32 %v733, %v799
    %v802 = vsub.f32 %v734, %v799
    %v803 = vsub.f32 %v735, %v799
    %v804 = vsub.f32 %v736, %v799
    %v805 = vsub.f32 %v737, %v799
    %v806 = vsub.f32 %v738, %v799
    %v807 = vsub.f32 %v739, %v799
    %v808 = vsub.f32 %v740, %v799
    %v809 = vsub.f32 %v741, %v799
    %v810 = vsub.f32 %v742, %v799
    %v811 = vsub.f32 %v743, %v799
    %v812 = vsub.f32 %v744, %v799
    %v813 = vsub.f32 %v745, %v799
    %v814 = vsub.f32 %v746, %v799
    %v815 = vsub.f32 %v747, %v799
    %v816 = vsub.f32 %v748, %v799
    %v817 = vsub.f32 %v749, %v800
    %v818 = vsub.f32 %v750, %v800
    %v819 = vsub.f32 %v751, %v800
    %v820 = vsub.f32 %v752, %v800
    %v821 = vsub.f32 %v753, %v800
    %v822 = vsub.f32 %v754, %v800
    %v823 = vsub.f32 %v755, %v800
    %v824 = vsub.f32 %v756, %v800
    %v825 = vsub.f32 %v757, %v800
    %v826 = vsub.f32 %v758, %v800
    %v827 = vsub.f32 %v759, %v800
    %v828 = vsub.f32 %v760, %v800
    %v829 = vsub.f32 %v761, %v800
    %v830 = vsub.f32 %v762, %v800
    %v831 = vsub.f32 %v763, %v800
    %v832 = vsub.f32 %v764, %v800
    %v833 = vmul.f32 %v801, %v801
    %v834 = vmul.f32 %v802, %v802
    %v835 = vmul.f32 %v803, %v803
    %v836 = vmul.f32 %v804, %v804
    %v837 = vmul.f32 %v805, %v805
    %v838 = vmul.f32 %v806, %v806
    %v839 = vmul.f32 %v807, %v807
    %v840 = vmul.f32 %v808, %v808
    %v841 = vmul.f32 %v809, %v809
    %v842 = vmul.f32 %v810, %v810
    %v843 = vmul.f32 %v811, %v811
    %v844 = vmul.f32 %v812, %v812
    %v845 = vmul.f32 %v813, %v813
    %v846 = vmul.f32 %v814, %v814
    %v847 = vmul.f32 %v815, %v815
    %v848 = vmul.f32 %v816, %v816
    %v849 = vmul.f32 %v817, %v817
    %v850 = vmul.f32 %v818, %v818
    %v851 = vmul.f32 %v819, %v819
    %v852 = vmul.f32 %v820, %v820
    %v853 = vmul.f32 %v821, %v821
    %v854 = vmul.f32 %v822, %v822
    %v855 = vmul.f32 %v823, %v823
    %v856 = vmul.f32 %v824, %v824
    %v857 = vmul.f32 %v825, %v825
    %v858 = vmul.f32 %v826, %v826
    %v859 = vmul.f32 %v827, %v827
    %v860 = vmul.f32 %v828, %v828
    %v861 = vmul.f32 %v829, %v829
    %v862 = vmul.f32 %v830, %v830
    %v863 = vmul.f32 %v831, %v831
    %v864 = vmul.f32 %v832, %v832
    %v865 = vadd.f32 %v833, %v834
    %v866 = vadd.f32 %v865, %v835
    %v867 = vadd.f32 %v866, %v836
    %v868 = vadd.f32 %v867, %v837
    %v869 = vadd.f32 %v868, %v838
    %v870 = vadd.f32 %v869, %v839
    %v871 = vadd.f32 %v870, %v840
    %v872 = vadd.f32 %v871, %v841
    %v873 = vadd.f32 %v872, %v842
    %v874 = vadd.f32 %v873, %v843
    %v875 = vadd.f32 %v874, %v844
    %v876 = vadd.f32 %v875, %v845
    %v877 = vadd.f32 %v876, %v846
    %v878 = vadd.f32 %v877, %v847
    %v879 = vadd.f32 %v878, %v848
    %880 = vadd.xlane.f32.xlu0 %v879
    %v881 = vpop.xlane.xlu0 %880
    %v882 = vadd.f32 %v849, %v850
    %v883 = vadd.f32 %v882, %v851
    %v884 = vadd.f32 %v883, %v852
    %v885 = vadd.f32 %v884, %v853
    %v886 = vadd.f32 %v885, %v854
    %v887 = vadd.f32 %v886, %v855
    %v888 = vadd.f32 %v887, %v856
    %v889 = vadd.f32 %v888, %v857
    %v890 = vadd.f32 %v889, %v858
    %v891 = vadd.f32 %v890, %v859
    %v892 = vadd.f32 %v891, %v860
    %v893 = vadd.f32 %v892, %v861
    %v894 = vadd.f32 %v893, %v862
    %v895 = vadd.f32 %v894, %v863
    %v896 = vadd.f32 %v895, %v864
    %897 = vadd.xlane.f32.xlu0 %v896
    %v898 = vpop.xlane.xlu0 %897
    %v899 = vmul.f32 %v881, 0.00048828125
    %v900 = vmul.f32 %v898, 0.00048828125
    %v901 = vld [vmem:[%s2] sm:$0xff]
    %v902 = vld [vmem:[%s2 + $0x8] sm:$0xff]
    %v903 = vadd.f32 %v899, 1e-05
    %v904 = vadd.f32 %v900, 1e-05
    %v905 = vrsqrt.pop %v903
    %v906 = vrsqrt.pop %v904
    %v907 = vmul.f32 %v901, %v905
    %v908 = vmul.f32 %v902, %v906
    %910 = vset.pattern.permute.xlu0 0
    %911 = vperm.xlu0 %910, %v907
    %v912 = vpop.permute.xlu0 %911
    %915 = vset.pattern.permute.xlu0 0
    %916 = vperm.xlu0 %915, %v908
    %v917 = vpop.permute.xlu0 %916
    %v919 = vmul.f32 %v801, %v912
    %v920 = vmul.f32 %v802, %v912
    %v921 = vmul.f32 %v803, %v912
    %v922 = vmul.f32 %v804, %v912
    %v923 = vmul.f32 %v805, %v912
    %v924 = vmul.f32 %v806, %v912
    %v925 = vmul.f32 %v807, %v912
    %v926 = vmul.f32 %v808, %v912
    %v927 = vmul.f32 %v809, %v912
    %v928 = vmul.f32 %v810, %v912
    %v929 = vmul.f32 %v811, %v912
    %v930 = vmul.f32 %v812, %v912
    %v931 = vmul.f32 %v813, %v912
    %v932 = vmul.f32 %v814, %v912
    %v933 = vmul.f32 %v815, %v912
    %v934 = vmul.f32 %v816, %v912
    %v935 = vmul.f32 %v817, %v917
    %v936 = vmul.f32 %v818, %v917
    %v937 = vmul.f32 %v819, %v917
    %v938 = vmul.f32 %v820, %v917
    %v939 = vmul.f32 %v821, %v917
    %v940 = vmul.f32 %v822, %v917
    %v941 = vmul.f32 %v823, %v917
    %v942 = vmul.f32 %v824, %v917
    %v943 = vmul.f32 %v825, %v917
    %v944 = vmul.f32 %v826, %v917
    %v945 = vmul.f32 %v827, %v917
    %v946 = vmul.f32 %v828, %v917
    %v947 = vmul.f32 %v829, %v917
    %v948 = vmul.f32 %v830, %v917
    %v949 = vmul.f32 %v831, %v917
    %v950 = vmul.f32 %v832, %v917
    %952 = vset.pattern.permute.xlu0 1
    %953 = vperm.xlu0 %952, %v901
    %v954 = vpop.permute.xlu0 %953
    %957 = vset.pattern.permute.xlu0 1
    %958 = vperm.xlu0 %957, %v902
    %v959 = vpop.permute.xlu0 %958
    %v961 = vadd.f32 %v919, %v954
    %v962 = vadd.f32 %v920, %v954
    %v963 = vadd.f32 %v921, %v954
    %v964 = vadd.f32 %v922, %v954
    %v965 = vadd.f32 %v923, %v954
    %v966 = vadd.f32 %v924, %v954
    %v967 = vadd.f32 %v925, %v954
    %v968 = vadd.f32 %v926, %v954
    %v969 = vadd.f32 %v927, %v954
    %v970 = vadd.f32 %v928, %v954
    %v971 = vadd.f32 %v929, %v954
    %v972 = vadd.f32 %v930, %v954
    %v973 = vadd.f32 %v931, %v954
    %v974 = vadd.f32 %v932, %v954
    %v975 = vadd.f32 %v933, %v954
    %v976 = vadd.f32 %v934, %v954
    %v977 = vadd.f32 %v935, %v959
    %v978 = vadd.f32 %v936, %v959
    %v979 = vadd.f32 %v937, %v959
    %v980 = vadd.f32 %v938, %v959
    %v981 = vadd.f32 %v939, %v959
    %v982 = vadd.f32 %v940, %v959
    %v983 = vadd.f32 %v941, %v959
    %v984 = vadd.f32 %v942, %v959
    %v985 = vadd.f32 %v943, %v959
    %v986 = vadd.f32 %v944, %v959
    %v987 = vadd.f32 %v945, %v959
    %v988 = vadd.f32 %v946, %v959
    %v989 = vadd.f32 %v947, %v959
    %v990 = vadd.f32 %v948, %v959
    %v991 = vadd.f32 %v949, %v959
    %v992 = vadd.f32 %v950, %v959
    %v993 = vmax.f32 %v961, 0.0
    %v994 = vmax.f32 %v962, 0.0
    %v995 = vmax.f32 %v963, 0.0
    %v996 = vmax.f32 %v964, 0.0
    %v997 = vmax.f32 %v965, 0.0
    %v998 = vmax.f32 %v966, 0.0
    %v999 = vmax.f32 %v967, 0.0
    %v1000 = vmax.f32 %v968, 0.0
    %v1001 = vmax.f32 %v969, 0.0
    %v1002 = vmax.f32 %v970, 0.0
    %v1003 = vmax.f32 %v971, 0.0
    %v1004 = vmax.f32 %v972, 0.0
    %v1005 = vmax.f32 %v973, 0.0
    %v1006 = vmax.f32 %v974, 0.0
    %v1007 = vmax.f32 %v975, 0.0
    %v1008 = vmax.f32 %v976, 0.0
    %v1009 = vmax.f32 %v977, 0.0
    %v1010 = vmax.f32 %v978, 0.0
    %v1011 = vmax.f32 %v979, 0.0
    %v1012 = vmax.f32 %v980, 0.0
    %v1013 = vmax.f32 %v981, 0.0
    %v1014 = vmax.f32 %v982, 0.0
    %v1015 = vmax.f32 %v983, 0.0
    %v1016 = vmax.f32 %v984, 0.0
    %v1017 = vmax.f32 %v985, 0.0
    %v1018 = vmax.f32 %v986, 0.0
    %v1019 = vmax.f32 %v987, 0.0
    %v1020 = vmax.f32 %v988, 0.0
    %v1021 = vmax.f32 %v989, 0.0
    %v1022 = vmax.f32 %v990, 0.0
    %v1023 = vmax.f32 %v991, 0.0
    %v1024 = vmax.f32 %v992, 0.0
    %1025 = vst [vmem:[%s3] sm:$0xff] %v993
    %1026 = vst [vmem:[%s3 + $0x8] sm:$0xff] %v994
    %1027 = vst [vmem:[%s3 + $0x10] sm:$0xff] %v995
    %1028 = vst [vmem:[%s3 + $0x18] sm:$0xff] %v996
    %1029 = vst [vmem:[%s3 + $0x20] sm:$0xff] %v997
    %1030 = vst [vmem:[%s3 + $0x28] sm:$0xff] %v998
    %1031 = vst [vmem:[%s3 + $0x30] sm:$0xff] %v999
    %1032 = vst [vmem:[%s3 + $0x38] sm:$0xff] %v1000
    %1033 = vst [vmem:[%s3 + $0x40] sm:$0xff] %v1001
    %1034 = vst [vmem:[%s3 + $0x48] sm:$0xff] %v1002
    %1035 = vst [vmem:[%s3 + $0x50] sm:$0xff] %v1003
    %1036 = vst [vmem:[%s3 + $0x58] sm:$0xff] %v1004
    %1037 = vst [vmem:[%s3 + $0x60] sm:$0xff] %v1005
    %1038 = vst [vmem:[%s3 + $0x68] sm:$0xff] %v1006
    %1039 = vst [vmem:[%s3 + $0x70] sm:$0xff] %v1007
    %1040 = vst [vmem:[%s3 + $0x78] sm:$0xff] %v1008
    %1041 = vst [vmem:[%s3 + $0x80] sm:$0xff] %v1009
    %1042 = vst [vmem:[%s3 + $0x88] sm:$0xff] %v1010
    %1043 = vst [vmem:[%s3 + $0x90] sm:$0xff] %v1011
    %1044 = vst [vmem:[%s3 + $0x98] sm:$0xff] %v1012
    %1045 = vst [vmem:[%s3 + $0xa0] sm:$0xff] %v1013
    %1046 = vst [vmem:[%s3 + $0xa8] sm:$0xff] %v1014
    %1047 = vst [vmem:[%s3 + $0xb0] sm:$0xff] %v1015
    %1048 = vst [vmem:[%s3 + $0xb8] sm:$0xff] %v1016
    %1049 = vst [vmem:[%s3 + $0xc0] sm:$0xff] %v1017
    %1050 = vst [vmem:[%s3 + $0xc8] sm:$0xff] %v1018
    %1051 = vst [vmem:[%s3 + $0xd0] sm:$0xff] %v1019
    %1052 = vst [vmem:[%s3 + $0xd8] sm:$0xff] %v1020
    %1053 = vst [vmem:[%s3 + $0xe0] sm:$0xff] %v1021
    %1054 = vst [vmem:[%s3 + $0xe8] sm:$0xff] %v1022
    %1055 = vst [vmem:[%s3 + $0xf0] sm:$0xff] %v1023
    %1056 = vst [vmem:[%s3 + $0xf8] sm:$0xff] %v1024
  $region21: #{resnet_forward.7} parent=0 // pred_fallthru
    _
  // Predicated region
  $region22: #{resnet_forward.7} parent=0 // pred_check
    _
  $region23: #{resnet_forward.7} parent=0 // pred_check_branch
    %1058 = sbr.rel (0) target = $region25
  $region24: #{resnet_forward.7} parent=0 // pred_region
    _
  $region25: #{resnet_forward.7} parent=0 // pred_fallthru
    _
  // Predicated region
  $region26: #{resnet_forward.7} parent=0 // pred_check
    _
  $region27: #{resnet_forward.7} parent=0 // pred_check_branch
    %1060 = sbr.rel (0) target = $region29
  $region28: #{resnet_forward.7} parent=0 // pred_region
    _
  $region29: #{resnet_forward.7} parent=0 // pred_fallthru
    _

// kernel: resnet_forward.8
$region0: #{resnet_forward.8}
  #allocation0 [shape = 'u32[]', space=smem, size = 0x4, offset = 0x4, fixed_abs, tag = 'smem constant byte address 0x4 - core index']
  #allocation1 [shape = 'u32[144,128]{1,0:T(1,128)}', space=vmem, size = 0x12000, scoped, tag = 'internal scratch']
  #allocation2 [shape = 'f32[16,2048]{1,0:T(8,128)}', space=vmem, size = 0x20000, scoped, tag = 'scratch operand']
  %s0 = inlined_call_operand.vmem [shape: bf16[3,16,48], index: 0, kind: input, shape index: {}]
  %s1 = inlined_call_operand.vmem [shape: bf16[3,48,2048], index: 1, kind: input, shape index: {}]
  %s2 = inlined_call_operand.vmem [shape: f32[16,2], index: 2, kind: input, shape index: {}]
  %s3 = inlined_call_operand.vmem [shape: f32[16,2048], index: 3, kind: output, shape index: {}]
  %s4 = sld [smem:[#allocation0]]
  $region53: #{resnet_forward.8} parent=0
    _
  %s6 = ssub.s32 1, %s4
  %s7 = scalar_select 0, %s6, %s4
  loop: start=0, step=1, limit=5
  $region2: #{resnet_forward.8} parent=0 // loop_pre_header
    _
  $region3: #{resnet_forward.8} parent=0 // loop_header
    %s9 = sphi 0, %s13
    %p10 = scmp.ge.s32.totalorder %s9, 5
    %s19 = sphi 0, %s21
    %s22 = sphi 0, %s19
    %s23 = sphi 0, %s22
    %s39 = sphi 0, %s23
    %s45 = sphi 0, %s47
    %s48 = sphi 0, %s45
    %s49 = sphi 0, %s48
    %s65 = sphi 0, %s49
    %s69 = sphi 0, %s69
    %s71 = sphi 0, %s69
    %s72 = sphi 0, %s71
    %s86 = sphi 0, %s72
    %s90 = sphi 0, %s90
    %s92 = sphi 0, %s90
    %s93 = sphi 0, %s92
    %s107 = sphi 0, %s93
  $region4: #{resnet_forward.8} parent=0 // loop_header_branch
    %12 = sbr.rel (%p10) target = $region8
  $region5: #{resnet_forward.8} parent=0 // loop_body
    %s14 = ssub.s32 %s9, 1
    %s15 = ssub.s32 %s9, 2
    %s16 = sadd.s32 %s9, 1
    %s17 = ssub.s32 %s9, %s16
    %p18 = scmp.eq.s32.totalorder %s17, 0
    %s20 = sadd.s32 %s19, 1
    %s21 = scalar_select %p18, %s19, %s20
    %p24 = pneg %p18
    %p25 = scmp.eq.s32.totalorder %s9, 2
    %p26 = por %p24, %p25
    %p27 = scmp.ne.s32.totalorder %s19, %s22
    %p28 = scmp.eq.s32.totalorder %s9, 0
    %p29 = por %p27, %p28
    %p30 = scmp.ne.s32.totalorder %s19, %s22
    %p31 = scmp.eq.s32.totalorder %s14, 2
    %p32 = por %p30, %p31
    %p33 = scmp.ne.s32.totalorder %s22, %s23
    %p34 = scmp.eq.s32.totalorder %s14, 0
    %p35 = por %p33, %p34
    %p36 = scmp.ne.s32.totalorder %s22, %s23
    %p37 = scmp.eq.s32.totalorder %s15, 2
    %p38 = por %p36, %p37
    %p40 = scmp.ne.s32.totalorder %s23, %s39
    %p41 = scmp.eq.s32.totalorder %s15, 0
    %p42 = por %p40, %p41
    %s43 = ssub.s32 %s9, %s16
    %p44 = scmp.eq.s32.totalorder %s43, 0
    %s46 = sadd.s32 %s45, 1
    %s47 = scalar_select %p44, %s45, %s46
    %p50 = pneg %p44
    %p51 = scmp.eq.s32.totalorder %s9, 2
    %p52 = por %p50, %p51
    %p53 = scmp.ne.s32.totalorder %s45, %s48
    %p54 = scmp.eq.s32.totalorder %s9, 0
    %p55 = por %p53, %p54
    %p56 = scmp.ne.s32.totalorder %s45, %s48
    %p57 = scmp.eq.s32.totalorder %s14, 2
    %p58 = por %p56, %p57
    %p59 = scmp.ne.s32.totalorder %s48, %s49
    %p60 = scmp.eq.s32.totalorder %s14, 0
    %p61 = por %p59, %p60
    %p62 = scmp.ne.s32.totalorder %s48, %s49
    %p63 = scmp.eq.s32.totalorder %s15, 2
    %p64 = por %p62, %p63
    %p66 = scmp.ne.s32.totalorder %s49, %s65
    %p67 = scmp.eq.s32.totalorder %s15, 0
    %p68 = por %p66, %p67
    %s70 = sadd.s32 %s69, 1
    %p73 = scmp.eq.s32.totalorder %s9, 2
    %p74 = scmp.ne.s32.totalorder %s69, %s71
    %p75 = scmp.eq.s32.totalorder %s9, 0
    %p76 = por %p74, %p75
    %p77 = scmp.ne.s32.totalorder %s69, %s71
    %p78 = scmp.eq.s32.totalorder %s14, 2
    %p79 = por %p77, %p78
    %p80 = scmp.ne.s32.totalorder %s71, %s72
    %p81 = scmp.eq.s32.totalorder %s14, 0
    %p82 = por %p80, %p81
    %p83 = scmp.ne.s32.totalorder %s71, %s72
    %p84 = scmp.eq.s32.totalorder %s15, 2
    %p85 = por %p83, %p84
    %p87 = scmp.ne.s32.totalorder %s72, %s86
    %p88 = scmp.eq.s32.totalorder %s15, 0
    %p89 = por %p87, %p88
    %s91 = sadd.s32 %s90, 1
    %p94 = scmp.eq.s32.totalorder %s9, 2
    %p95 = scmp.ne.s32.totalorder %s90, %s92
    %p96 = scmp.eq.s32.totalorder %s9, 0
    %p97 = por %p95, %p96
    %p98 = scmp.ne.s32.totalorder %s90, %s92
    %p99 = scmp.eq.s32.totalorder %s14, 2
    %p100 = por %p98, %p99
    %p101 = scmp.ne.s32.totalorder %s92, %s93
    %p102 = scmp.eq.s32.totalorder %s14, 0
    %p103 = por %p101, %p102
    %p104 = scmp.ne.s32.totalorder %s92, %s93
    %p105 = scmp.eq.s32.totalorder %s15, 2
    %p106 = por %p104, %p105
    %p108 = scmp.ne.s32.totalorder %s93, %s107
    %p109 = scmp.eq.s32.totalorder %s15, 0
    %p110 = por %p108, %p109
    %p111 = scmp.le.s32.totalorder 1, %s9
    %p112 = scmp.lt.s32.totalorder %s9, 4
    %p113 = pnand %p111, %p112
    %p114 = pneg %p113
    // Predicated region
    $region9: #{resnet_forward.8} parent=5 // pred_check
      _
    $region10: #{resnet_forward.8} parent=5 // pred_check_branch
      %116 = sbr.rel (%p113) target = $region12
    $region11: #{resnet_forward.8} parent=5 // pred_region
      %s117 = ssub.s32 %s9, 1
      // Predicated region
      $region13: #{resnet_forward.8} parent=11 // pred_check
        %p118 = pneg %p82
      $region14: #{resnet_forward.8} parent=11 // pred_check_branch
        %120 = sbr.rel (%p118) target = $region16
      $region15: #{resnet_forward.8} parent=11 // pred_region
        _
      $region16: #{resnet_forward.8} parent=11 // pred_fallthru
        _
    $region12: #{resnet_forward.8} parent=5 // pred_fallthru
      _
    %p121 = scmp.lt.s32.totalorder %s9, 3
    // Predicated region
    $region17: #{resnet_forward.8} parent=5 // pred_check
      %p122 = pneg %p121
    $region18: #{resnet_forward.8} parent=5 // pred_check_branch
      %124 = sbr.rel (%p122) target = $region20
    $region19: #{resnet_forward.8} parent=5 // pred_region
      // Predicated region
      $region21: #{resnet_forward.8} parent=19 // pred_check
        %p125 = pneg %p29
      $region22: #{resnet_forward.8} parent=19 // pred_check_branch
        %127 = sbr.rel (%p125) target = $region24
      $region23: #{resnet_forward.8} parent=19 // pred_region
        %p128 = scmp.lt.s32.totalorder %s9, 2
        %s129 = scalar_select %p128, %s9, 2
        %s130 = smul.addr %s129, 2
        %s131 = smul.addr %s130, 4
        %s132 = scalar_lea.vmem %s0, %s131
      $region24: #{resnet_forward.8} parent=19 // pred_fallthru
        _
      // Predicated region
      $region25: #{resnet_forward.8} parent=19 // pred_check
        %p133 = pneg %p55
      $region26: #{resnet_forward.8} parent=19 // pred_check_branch
        %135 = sbr.rel (%p133) target = $region28
      $region27: #{resnet_forward.8} parent=19 // pred_region
        %p136 = scmp.lt.s32.totalorder %s9, 2
        %s137 = scalar_select %p136, %s9, 2
        %s138 = smul.addr %s137, 96
        %s139 = smul.addr %s138, 4
        %s140 = scalar_lea.vmem %s1, %s139
      $region28: #{resnet_forward.8} parent=19 // pred_fallthru
        _
    $region20: #{resnet_forward.8} parent=5 // pred_fallthru
      _
    %p141 = scmp.le.s32.totalorder 1, %s9
    %p142 = scmp.lt.s32.totalorder %s9, 4
    %p143 = pnand %p141, %p142
    %p144 = pneg %p143
    // Predicated region
    $region29: #{resnet_forward.8} parent=5 // pred_check
      _
    $region30: #{resnet_forward.8} parent=5 // pred_check_branch
      %146 = sbr.rel (%p143) target = $region32
    $region31: #{resnet_forward.8} parent=5 // pred_region
      %s147 = ssub.s32 %s9, 1
      %p148 = scmp.lt.s32.totalorder %s14, 2
      %s149 = scalar_select %p148, %s14, 2
      %s150 = smul.addr %s149, 2
      %s151 = smul.addr %s150, 4
      %s152 = scalar_lea.vmem %s0, %s151
      %p153 = pneg %p35
      %p154 = pneg %p32
      %p155 = scmp.lt.s32.totalorder %s14, 2
      %s156 = scalar_select %p155, %s14, 2
      %s157 = smul.addr %s156, 96
      %s158 = smul.addr %s157, 4
      %s159 = scalar_lea.vmem %s1, %s158
      %p160 = pneg %p61
      %p161 = pneg %p58
      %p162 = pneg %p82
      %p163 = pneg %p79
      %p164 = pneg %p103
      %p165 = pneg %p100
      %p166 = scmp.lt.s32.totalorder %s14, 2
      %s167 = scalar_select %p166, %s14, 2
      %s168 = smul.addr %s167, 2
      %s169 = smul.addr %s168, 4
      %s170 = scalar_lea.vmem %s0, %s169
      %p171 = scmp.lt.s32.totalorder %s14, 2
      %s172 = scalar_select %p171, %s14, 2
      %s173 = smul.addr %s172, 96
      %s174 = smul.addr %s173, 4
      %s175 = scalar_lea.vmem %s1, %s174
      %p177 = scmp.eq.s32.totalorder %s14, 0
      // Predicated region
      $region33: #{resnet_forward.8} parent=31 // pred_check
        %p178 = pneg %p177
      $region34: #{resnet_forward.8} parent=31 // pred_check_branch
        %180 = sbr.rel (%p178) target = $region36
      $region35: #{resnet_forward.8} parent=31 // pred_region
        %181 = vst [vmem:[#allocation2] sm:$0xff] 0.0
        %182 = vst [vmem:[#allocation2 + $0x8] sm:$0xff] 0.0
        %183 = vst [vmem:[#allocation2 + $0x10] sm:$0xff] 0.0
        %184 = vst [vmem:[#allocation2 + $0x18] sm:$0xff] 0.0
        %185 = vst [vmem:[#allocation2 + $0x20] sm:$0xff] 0.0
        %186 = vst [vmem:[#allocation2 + $0x28] sm:$0xff] 0.0
        %187 = vst [vmem:[#allocation2 + $0x30] sm:$0xff] 0.0
        %188 = vst [vmem:[#allocation2 + $0x38] sm:$0xff] 0.0
        %189 = vst [vmem:[#allocation2 + $0x40] sm:$0xff] 0.0
        %190 = vst [vmem:[#allocation2 + $0x48] sm:$0xff] 0.0
        %191 = vst [vmem:[#allocation2 + $0x50] sm:$0xff] 0.0
        %192 = vst [vmem:[#allocation2 + $0x58] sm:$0xff] 0.0
        %193 = vst [vmem:[#allocation2 + $0x60] sm:$0xff] 0.0
        %194 = vst [vmem:[#allocation2 + $0x68] sm:$0xff] 0.0
        %195 = vst [vmem:[#allocation2 + $0x70] sm:$0xff] 0.0
        %196 = vst [vmem:[#allocation2 + $0x78] sm:$0xff] 0.0
        %197 = vst [vmem:[#allocation2 + $0x80] sm:$0xff] 0.0
        %198 = vst [vmem:[#allocation2 + $0x88] sm:$0xff] 0.0
        %199 = vst [vmem:[#allocation2 + $0x90] sm:$0xff] 0.0
        %200 = vst [vmem:[#allocation2 + $0x98] sm:$0xff] 0.0
        %201 = vst [vmem:[#allocation2 + $0xa0] sm:$0xff] 0.0
        %202 = vst [vmem:[#allocation2 + $0xa8] sm:$0xff] 0.0
        %203 = vst [vmem:[#allocation2 + $0xb0] sm:$0xff] 0.0
        %204 = vst [vmem:[#allocation2 + $0xb8] sm:$0xff] 0.0
        %205 = vst [vmem:[#allocation2 + $0xc0] sm:$0xff] 0.0
        %206 = vst [vmem:[#allocation2 + $0xc8] sm:$0xff] 0.0
        %207 = vst [vmem:[#allocation2 + $0xd0] sm:$0xff] 0.0
        %208 = vst [vmem:[#allocation2 + $0xd8] sm:$0xff] 0.0
        %209 = vst [vmem:[#allocation2 + $0xe0] sm:$0xff] 0.0
        %210 = vst [vmem:[#allocation2 + $0xe8] sm:$0xff] 0.0
        %211 = vst [vmem:[#allocation2 + $0xf0] sm:$0xff] 0.0
        %212 = vst [vmem:[#allocation2 + $0xf8] sm:$0xff] 0.0
      $region36: #{resnet_forward.8} parent=31 // pred_fallthru
        _
      %v213 = vld [vmem:[#allocation2] sm:$0xff]
      %v214 = vld [vmem:[#allocation2 + $0x8] sm:$0xff]
      %v215 = vld [vmem:[#allocation2 + $0x10] sm:$0xff]
      %v216 = vld [vmem:[#allocation2 + $0x18] sm:$0xff]
      %v217 = vld [vmem:[#allocation2 + $0x20] sm:$0xff]
      %v218 = vld [vmem:[#allocation2 + $0x28] sm:$0xff]
      %v219 = vld [vmem:[#allocation2 + $0x30] sm:$0xff]
      %v220 = vld [vmem:[#allocation2 + $0x38] sm:$0xff]
      %v221 = vld [vmem:[#allocation2 + $0x40] sm:$0xff]
      %v222 = vld [vmem:[#allocation2 + $0x48] sm:$0xff]
      %v223 = vld [vmem:[#allocation2 + $0x50] sm:$0xff]
      %v224 = vld [vmem:[#allocation2 + $0x58] sm:$0xff]
      %v225 = vld [vmem:[#allocation2 + $0x60] sm:$0xff]
      %v226 = vld [vmem:[#allocation2 + $0x68] sm:$0xff]
      %v227 = vld [vmem:[#allocation2 + $0x70] sm:$0xff]
      %v228 = vld [vmem:[#allocation2 + $0x78] sm:$0xff]
      %v229 = vld [vmem:[#allocation2 + $0x80] sm:$0xff]
      %v230 = vld [vmem:[#allocation2 + $0x88] sm:$0xff]
      %v231 = vld [vmem:[#allocation2 + $0x90] sm:$0xff]
      %v232 = vld [vmem:[#allocation2 + $0x98] sm:$0xff]
      %v233 = vld [vmem:[#allocation2 + $0xa0] sm:$0xff]
      %v234 = vld [vmem:[#allocation2 + $0xa8] sm:$0xff]
      %v235 = vld [vmem:[#allocation2 + $0xb0] sm:$0xff]
      %v236 = vld [vmem:[#allocation2 + $0xb8] sm:$0xff]
      %v237 = vld [vmem:[#allocation2 + $0xc0] sm:$0xff]
      %v238 = vld [vmem:[#allocation2 + $0xc8] sm:$0xff]
      %v239 = vld [vmem:[#allocation2 + $0xd0] sm:$0xff]
      %v240 = vld [vmem:[#allocation2 + $0xd8] sm:$0xff]
      %v241 = vld [vmem:[#allocation2 + $0xe0] sm:$0xff]
      %v242 = vld [vmem:[#allocation2 + $0xe8] sm:$0xff]
      %v243 = vld [vmem:[#allocation2 + $0xf0] sm:$0xff]
      %v244 = vld [vmem:[#allocation2 + $0xf8] sm:$0xff]
      %v245 = vld [vmem:[%s170] sm:$0xf]
      %v246 = vld [vmem:[%s170 + $0x4] sm:$0xf]
      %v247 = vld [vmem:[%s175] sm:$0xff]
      %v248 = vld [vmem:[%s175 + $0x8] sm:$0xff]
      %v249 = vld [vmem:[%s175 + $0x10] sm:$0xff]
      %v250 = vld [vmem:[%s175 + $0x18] sm:$0xff]
      %v251 = vld [vmem:[%s175 + $0x20] sm:$0xff]
      %v252 = vld [vmem:[%s175 + $0x28] sm:$0xff]
      %v253 = vld [vmem:[%s175 + $0x30] sm:$0xff]
      %v254 = vld [vmem:[%s175 + $0x38] sm:$0xff]
      %v255 = vld [vmem:[%s175 + $0x40] sm:$0xff]
      %v256 = vld [vmem:[%s175 + $0x48] sm:$0xff]
      %v257 = vld [vmem:[%s175 + $0x50] sm:$0xff]
      %v258 = vld [vmem:[%s175 + $0x58] sm:$0xff]
      %v259 = vld [vmem:[%s175 + $0x60] sm:$0xff]
      %v260 = vld [vmem:[%s175 + $0x68] sm:$0xff]
      %v261 = vld [vmem:[%s175 + $0x70] sm:$0xff]
      %v262 = vld [vmem:[%s175 + $0x78] sm:$0xff]
      %v263 = vld [vmem:[%s175 + $0x80] sm:$0xff]
      %v264 = vld [vmem:[%s175 + $0x88] sm:$0xff]
      %v265 = vld [vmem:[%s175 + $0x90] sm:$0xff]
      %v266 = vld [vmem:[%s175 + $0x98] sm:$0xff]
      %v267 = vld [vmem:[%s175 + $0xa0] sm:$0xff]
      %v268 = vld [vmem:[%s175 + $0xa8] sm:$0xff]
      %v269 = vld [vmem:[%s175 + $0xb0] sm:$0xff]
      %v270 = vld [vmem:[%s175 + $0xb8] sm:$0xff]
      %v271 = vld [vmem:[%s175 + $0xc0] sm:$0xff]
      %v272 = vld [vmem:[%s175 + $0xc8] sm:$0xff]
      %v273 = vld [vmem:[%s175 + $0xd0] sm:$0xff]
      %v274 = vld [vmem:[%s175 + $0xd8] sm:$0xff]
      %v275 = vld [vmem:[%s175 + $0xe0] sm:$0xff]
      %v276 = vld [vmem:[%s175 + $0xe8] sm:$0xff]
      %v277 = vld [vmem:[%s175 + $0xf0] sm:$0xff]
      %v278 = vld [vmem:[%s175 + $0xf8] sm:$0xff]
      %v279 = vld [vmem:[%s175 + $0x100] sm:$0xff]
      %v280 = vld [vmem:[%s175 + $0x108] sm:$0xff]
      %v281 = vld [vmem:[%s175 + $0x110] sm:$0xff]
      %v282 = vld [vmem:[%s175 + $0x118] sm:$0xff]
      %v283 = vld [vmem:[%s175 + $0x120] sm:$0xff]
      %v284 = vld [vmem:[%s175 + $0x128] sm:$0xff]
      %v285 = vld [vmem:[%s175 + $0x130] sm:$0xff]
      %v286 = vld [vmem:[%s175 + $0x138] sm:$0xff]
      %v287 = vld [vmem:[%s175 + $0x140] sm:$0xff]
      %v288 = vld [vmem:[%s175 + $0x148] sm:$0xff]
      %v289 = vld [vmem:[%s175 + $0x150] sm:$0xff]
      %v290 = vld [vmem:[%s175 + $0x158] sm:$0xff]
      %v291 = vld [vmem:[%s175 + $0x160] sm:$0xff]
      %v292 = vld [vmem:[%s175 + $0x168] sm:$0xff]
      %v293 = vld [vmem:[%s175 + $0x170] sm:$0xff]
      %v294 = vld [vmem:[%s175 + $0x178] sm:$0xff]
      %v297 = vunpack.c.l.b16 %v245
      %v298 = vunpack.c.l.b16 %v246
      %v299 = vpack.c.b16 %v298, %v297
      %v348 = vunpack.c.l.b16 %v247
      %v349 = vunpack.c.h.b16 %v247
      %v350 = vunpack.c.l.b16 %v248
      %v351 = vunpack.c.h.b16 %v248
      %v352 = vunpack.c.l.b16 %v249
      %v353 = vunpack.c.h.b16 %v249
      %v354 = vunpack.c.l.b16 %v250
      %v355 = vunpack.c.h.b16 %v250
      %v356 = vunpack.c.l.b16 %v251
      %v357 = vunpack.c.h.b16 %v251
      %v358 = vunpack.c.l.b16 %v252
      %v359 = vunpack.c.h.b16 %v252
      %v360 = vunpack.c.l.b16 %v253
      %v361 = vunpack.c.h.b16 %v253
      %v362 = vunpack.c.l.b16 %v254
      %v363 = vunpack.c.h.b16 %v254
      %v364 = vunpack.c.l.b16 %v255
      %v365 = vunpack.c.h.b16 %v255
      %v366 = vunpack.c.l.b16 %v256
      %v367 = vunpack.c.h.b16 %v256
      %v368 = vunpack.c.l.b16 %v257
      %v369 = vunpack.c.h.b16 %v257
      %v370 = vunpack.c.l.b16 %v258
      %v371 = vunpack.c.h.b16 %v258
      %v372 = vunpack.c.l.b16 %v259
      %v373 = vunpack.c.h.b16 %v259
      %v374 = vunpack.c.l.b16 %v260
      %v375 = vunpack.c.h.b16 %v260
      %v376 = vunpack.c.l.b16 %v261
      %v377 = vunpack.c.h.b16 %v261
      %v378 = vunpack.c.l.b16 %v262
      %v379 = vunpack.c.h.b16 %v262
      %v380 = vunpack.c.l.b16 %v263
      %v381 = vunpack.c.h.b16 %v263
      %v382 = vunpack.c.l.b16 %v264
      %v383 = vunpack.c.h.b16 %v264
      %v384 = vunpack.c.l.b16 %v265
      %v385 = vunpack.c.h.b16 %v265
      %v386 = vunpack.c.l.b16 %v266
      %v387 = vunpack.c.h.b16 %v266
      %v388 = vunpack.c.l.b16 %v267
      %v389 = vunpack.c.h.b16 %v267
      %v390 = vunpack.c.l.b16 %v268
      %v391 = vunpack.c.h.b16 %v268
      %v392 = vunpack.c.l.b16 %v269
      %v393 = vunpack.c.h.b16 %v269
      %v394 = vunpack.c.l.b16 %v270
      %v395 = vunpack.c.h.b16 %v270
      %v396 = vunpack.c.l.b16 %v271
      %v397 = vunpack.c.h.b16 %v271
      %v398 = vunpack.c.l.b16 %v272
      %v399 = vunpack.c.h.b16 %v272
      %v400 = vunpack.c.l.b16 %v273
      %v401 = vunpack.c.h.b16 %v273
      %v402 = vunpack.c.l.b16 %v274
      %v403 = vunpack.c.h.b16 %v274
      %v404 = vunpack.c.l.b16 %v275
      %v405 = vunpack.c.h.b16 %v275
      %v406 = vunpack.c.l.b16 %v276
      %v407 = vunpack.c.h.b16 %v276
      %v408 = vunpack.c.l.b16 %v277
      %v409 = vunpack.c.h.b16 %v277
      %v410 = vunpack.c.l.b16 %v278
      %v411 = vunpack.c.h.b16 %v278
      %v412 = vunpack.c.l.b16 %v279
      %v413 = vunpack.c.h.b16 %v279
      %v414 = vunpack.c.l.b16 %v280
      %v415 = vunpack.c.h.b16 %v280
      %v416 = vunpack.c.l.b16 %v281
      %v417 = vunpack.c.h.b16 %v281
      %v418 = vunpack.c.l.b16 %v282
      %v419 = vunpack.c.h.b16 %v282
      %v420 = vunpack.c.l.b16 %v283
      %v421 = vunpack.c.h.b16 %v283
      %v422 = vunpack.c.l.b16 %v284
      %v423 = vunpack.c.h.b16 %v284
      %v424 = vunpack.c.l.b16 %v285
      %v425 = vunpack.c.h.b16 %v285
      %v426 = vunpack.c.l.b16 %v286
      %v427 = vunpack.c.h.b16 %v286
      %v428 = vunpack.c.l.b16 %v287
      %v429 = vunpack.c.h.b16 %v287
      %v430 = vunpack.c.l.b16 %v288
      %v431 = vunpack.c.h.b16 %v288
      %v432 = vunpack.c.l.b16 %v289
      %v433 = vunpack.c.h.b16 %v289
      %v434 = vunpack.c.l.b16 %v290
      %v435 = vunpack.c.h.b16 %v290
      %v436 = vunpack.c.l.b16 %v291
      %v437 = vunpack.c.h.b16 %v291
      %v438 = vunpack.c.l.b16 %v292
      %v439 = vunpack.c.h.b16 %v292
      %v440 = vunpack.c.l.b16 %v293
      %v441 = vunpack.c.h.b16 %v293
      %v442 = vunpack.c.l.b16 %v294
      %v443 = vunpack.c.h.b16 %v294
      %v444 = vpack.c.b16 %v364, %v348
      %v445 = vpack.c.b16 %v365, %v349
      %v446 = vpack.c.b16 %v366, %v350
      %v447 = vpack.c.b16 %v367, %v351
      %v448 = vpack.c.b16 %v368, %v352
      %v449 = vpack.c.b16 %v369, %v353
      %v450 = vpack.c.b16 %v370, %v354
      %v451 = vpack.c.b16 %v371, %v355
      %v452 = vpack.c.b16 %v372, %v356
      %v453 = vpack.c.b16 %v373, %v357
      %v454 = vpack.c.b16 %v374, %v358
      %v455 = vpack.c.b16 %v375, %v359
      %v456 = vpack.c.b16 %v376, %v360
      %v457 = vpack.c.b16 %v377, %v361
      %v458 = vpack.c.b16 %v378, %v362
      %v459 = vpack.c.b16 %v379, %v363
      %v460 = vpack.c.b16 %v396, %v380
      %v461 = vpack.c.b16 %v397, %v381
      %v462 = vpack.c.b16 %v398, %v382
      %v463 = vpack.c.b16 %v399, %v383
      %v464 = vpack.c.b16 %v400, %v384
      %v465 = vpack.c.b16 %v401, %v385
      %v466 = vpack.c.b16 %v402, %v386
      %v467 = vpack.c.b16 %v403, %v387
      %v468 = vpack.c.b16 %v404, %v388
      %v469 = vpack.c.b16 %v405, %v389
      %v470 = vpack.c.b16 %v406, %v390
      %v471 = vpack.c.b16 %v407, %v391
      %v472 = vpack.c.b16 %v408, %v392
      %v473 = vpack.c.b16 %v409, %v393
      %v474 = vpack.c.b16 %v410, %v394
      %v475 = vpack.c.b16 %v411, %v395
      %v476 = vpack.c.b16 %v428, %v412
      %v477 = vpack.c.b16 %v429, %v413
      %v478 = vpack.c.b16 %v430, %v414
      %v479 = vpack.c.b16 %v431, %v415
      %v480 = vpack.c.b16 %v432, %v416
      %v481 = vpack.c.b16 %v433, %v417
      %v482 = vpack.c.b16 %v434, %v418
      %v483 = vpack.c.b16 %v435, %v419
      %v484 = vpack.c.b16 %v436, %v420
      %v485 = vpack.c.b16 %v437, %v421
      %v486 = vpack.c.b16 %v438, %v422
      %v487 = vpack.c.b16 %v439, %v423
      %v488 = vpack.c.b16 %v440, %v424
      %v489 = vpack.c.b16 %v441, %v425
      %v490 = vpack.c.b16 %v442, %v426
      %v491 = vpack.c.b16 %v443, %v427
      %vm540 = vcmask 392192
      %v542 = vsel %vm540, %v299, 0
      %544 = vmatprep.subr.bf16.mxu0 %v445
      %545 = vmatpush1.bf16.msra.mxu0 %v444
      %546 = vmatprep.subr.bf16.mxu0 %v461
      %547 = vmatpush1.bf16.msra.mxu0 %v460
      %548 = vmatprep.subr.bf16.mxu0 %v477
      %549 = vmatpush1.bf16.msra.mxu0 %v476
      %550 = vmatprep.subr.bf16.mxu0 0
      %551 = vmatpush1.bf16.msra.mxu0 0
      %552 = vmatprep.subr.bf16.mxu0 0
      %553 = vmatpush1.bf16.msra.mxu0 0
      %554 = vmatprep.subr.bf16.mxu0 0
      %555 = vmatpush1.bf16.msra.mxu0 0
      %556 = vmatprep.subr.bf16.mxu0 0
      %557 = vmatpush1.bf16.msra.mxu0 0
      %558 = vmatprep.subr.bf16.mxu0 0
      %559 = vmatpush1.bf16.msra.mxu0 0
      %560 = vmatprep.subr.bf16.mxu0 0
      %561 = vmatpush1.bf16.msra.mxu0 0
      %562 = vmatprep.subr.bf16.mxu0 0
      %563 = vmatpush1.bf16.msra.mxu0 0
      %564 = vmatprep.subr.bf16.mxu0 0
      %565 = vmatpush1.bf16.msra.mxu0 0
      %566 = vmatprep.subr.bf16.mxu0 0
      %567 = vmatpush1.bf16.msra.mxu0 0
      %568 = vmatprep.subr.bf16.mxu0 0
      %569 = vmatpush1.bf16.msra.mxu0 0
      %570 = vmatprep.subr.bf16.mxu0 0
      %571 = vmatpush1.bf16.msra.mxu0 0
      %572 = vmatprep.subr.bf16.mxu0 0
      %573 = vmatpush1.bf16.msra.mxu0 0
      %574 = vmatprep.subr.bf16.mxu0 0
      %575 = vmatpush1.bf16.msra.mxu0 0
      %576 = vmatprep.mubr.bf16.mxu0 0
      %577 = vmatmul.mubr.bf16.gmra.mrb[0].mxu0 %v542
      %v578 = vpop.f32.mrb[0].mxu0
      %v579 = vadd.f32 0.0, %v578
      %v580 = vpop.f32.mrb[0].mxu0
      %v581 = vadd.f32 0.0, %v580
      %v582 = vpop.f32.mrb[0].mxu0
      %v583 = vadd.f32 0.0, %v582
      %v584 = vpop.f32.mrb[0].mxu0
      %v585 = vadd.f32 0.0, %v584
      %586 = vdwg.mxu0
      %587 = vmatprep.subr.bf16.mxu0 %v447
      %588 = vmatpush1.bf16.msra.mxu0 %v446
      %589 = vmatprep.subr.bf16.mxu0 %v463
      %590 = vmatpush1.bf16.msra.mxu0 %v462
      %591 = vmatprep.subr.bf16.mxu0 %v479
      %592 = vmatpush1.bf16.msra.mxu0 %v478
      %593 = vmatprep.subr.bf16.mxu0 0
      %594 = vmatpush1.bf16.msra.mxu0 0
      %595 = vmatprep.subr.bf16.mxu0 0
      %596 = vmatpush1.bf16.msra.mxu0 0
      %597 = vmatprep.subr.bf16.mxu0 0
      %598 = vmatpush1.bf16.msra.mxu0 0
      %599 = vmatprep.subr.bf16.mxu0 0
      %600 = vmatpush1.bf16.msra.mxu0 0
      %601 = vmatprep.subr.bf16.mxu0 0
      %602 = vmatpush1.bf16.msra.mxu0 0
      %603 = vmatprep.subr.bf16.mxu0 0
      %604 = vmatpush1.bf16.msra.mxu0 0
      %605 = vmatprep.subr.bf16.mxu0 0
      %606 = vmatpush1.bf16.msra.mxu0 0
      %607 = vmatprep.subr.bf16.mxu0 0
      %608 = vmatpush1.bf16.msra.mxu0 0
      %609 = vmatprep.subr.bf16.mxu0 0
      %610 = vmatpush1.bf16.msra.mxu0 0
      %611 = vmatprep.subr.bf16.mxu0 0
      %612 = vmatpush1.bf16.msra.mxu0 0
      %613 = vmatprep.subr.bf16.mxu0 0
      %614 = vmatpush1.bf16.msra.mxu0 0
      %615 = vmatprep.subr.bf16.mxu0 0
      %616 = vmatpush1.bf16.msra.mxu0 0
      %617 = vmatprep.subr.bf16.mxu0 0
      %618 = vmatpush1.bf16.msra.mxu0 0
      %619 = vmatprep.mubr.bf16.mxu0 0
      %620 = vmatmul.mubr.bf16.gmra.mrb[0].mxu0 %v542
      %v621 = vpop.f32.mrb[0].mxu0
      %v622 = vadd.f32 0.0, %v621
      %v623 = vpop.f32.mrb[0].mxu0
      %v624 = vadd.f32 0.0, %v623
      %v625 = vpop.f32.mrb[0].mxu0
      %v626 = vadd.f32 0.0, %v625
      %v627 = vpop.f32.mrb[0].mxu0
      %v628 = vadd.f32 0.0, %v627
      %629 = vdwg.mxu0
      %630 = vmatprep.subr.bf16.mxu0 %v449
      %631 = vmatpush1.bf16.msra.mxu0 %v448
      %632 = vmatprep.subr.bf16.mxu0 %v465
      %633 = vmatpush1.bf16.msra.mxu0 %v464
      %634 = vmatprep.subr.bf16.mxu0 %v481
      %635 = vmatpush1.bf16.msra.mxu0 %v480
      %636 = vmatprep.subr.bf16.mxu0 0
      %637 = vmatpush1.bf16.msra.mxu0 0
      %638 = vmatprep.subr.bf16.mxu0 0
      %639 = vmatpush1.bf16.msra.mxu0 0
      %640 = vmatprep.subr.bf16.mxu0 0
      %641 = vmatpush1.bf16.msra.mxu0 0
      %642 = vmatprep.subr.bf16.mxu0 0
      %643 = vmatpush1.bf16.msra.mxu0 0
      %644 = vmatprep.subr.bf16.mxu0 0
      %645 = vmatpush1.bf16.msra.mxu0 0
      %646 = vmatprep.subr.bf16.mxu0 0
      %647 = vmatpush1.bf16.msra.mxu0 0
      %648 = vmatprep.subr.bf16.mxu0 0
      %649 = vmatpush1.bf16.msra.mxu0 0
      %650 = vmatprep.subr.bf16.mxu0 0
      %651 = vmatpush1.bf16.msra.mxu0 0
      %652 = vmatprep.subr.bf16.mxu0 0
      %653 = vmatpush1.bf16.msra.mxu0 0
      %654 = vmatprep.subr.bf16.mxu0 0
      %655 = vmatpush1.bf16.msra.mxu0 0
      %656 = vmatprep.subr.bf16.mxu0 0
      %657 = vmatpush1.bf16.msra.mxu0 0
      %658 = vmatprep.subr.bf16.mxu0 0
      %659 = vmatpush1.bf16.msra.mxu0 0
      %660 = vmatprep.subr.bf16.mxu0 0
      %661 = vmatpush1.bf16.msra.mxu0 0
      %662 = vmatprep.mubr.bf16.mxu0 0
      %663 = vmatmul.mubr.bf16.gmra.mrb[0].mxu0 %v542
      %v664 = vpop.f32.mrb[0].mxu0
      %v665 = vadd.f32 0.0, %v664
      %v666 = vpop.f32.mrb[0].mxu0
      %v667 = vadd.f32 0.0, %v666
      %v668 = vpop.f32.mrb[0].mxu0
      %v669 = vadd.f32 0.0, %v668
      %v670 = vpop.f32.mrb[0].mxu0
      %v671 = vadd.f32 0.0, %v670
      %672 = vdwg.mxu0
      %673 = vmatprep.subr.bf16.mxu0 %v451
      %674 = vmatpush1.bf16.msra.mxu0 %v450
      %675 = vmatprep.subr.bf16.mxu0 %v467
      %676 = vmatpush1.bf16.msra.mxu0 %v466
      %677 = vmatprep.subr.bf16.mxu0 %v483
      %678 = vmatpush1.bf16.msra.mxu0 %v482
      %679 = vmatprep.subr.bf16.mxu0 0
      %680 = vmatpush1.bf16.msra.mxu0 0
      %681 = vmatprep.subr.bf16.mxu0 0
      %682 = vmatpush1.bf16.msra.mxu0 0
      %683 = vmatprep.subr.bf16.mxu0 0
      %684 = vmatpush1.bf16.msra.mxu0 0
      %685 = vmatprep.subr.bf16.mxu0 0
      %686 = vmatpush1.bf16.msra.mxu0 0
      %687 = vmatprep.subr.bf16.mxu0 0
      %688 = vmatpush1.bf16.msra.mxu0 0
      %689 = vmatprep.subr.bf16.mxu0 0
      %690 = vmatpush1.bf16.msra.mxu0 0
      %691 = vmatprep.subr.bf16.mxu0 0
      %692 = vmatpush1.bf16.msra.mxu0 0
      %693 = vmatprep.subr.bf16.mxu0 0
      %694 = vmatpush1.bf16.msra.mxu0 0
      %695 = vmatprep.subr.bf16.mxu0 0
      %696 = vmatpush1.bf16.msra.mxu0 0
      %697 = vmatprep.subr.bf16.mxu0 0
      %698 = vmatpush1.bf16.msra.mxu0 0
      %699 = vmatprep.subr.bf16.mxu0 0
      %700 = vmatpush1.bf16.msra.mxu0 0
      %701 = vmatprep.subr.bf16.mxu0 0
      %702 = vmatpush1.bf16.msra.mxu0 0
      %703 = vmatprep.subr.bf16.mxu0 0
      %704 = vmatpush1.bf16.msra.mxu0 0
      %705 = vmatprep.mubr.bf16.mxu0 0
      %706 = vmatmul.mubr.bf16.gmra.mrb[0].mxu0 %v542
      %v707 = vpop.f32.mrb[0].mxu0
      %v708 = vadd.f32 0.0, %v707
      %v709 = vpop.f32.mrb[0].mxu0
      %v710 = vadd.f32 0.0, %v709
      %v711 = vpop.f32.mrb[0].mxu0
      %v712 = vadd.f32 0.0, %v711
      %v713 = vpop.f32.mrb[0].mxu0
      %v714 = vadd.f32 0.0, %v713
      %715 = vdwg.mxu0
      %716 = vmatprep.subr.bf16.mxu0 %v453
      %717 = vmatpush1.bf16.msra.mxu0 %v452
      %718 = vmatprep.subr.bf16.mxu0 %v469
      %719 = vmatpush1.bf16.msra.mxu0 %v468
      %720 = vmatprep.subr.bf16.mxu0 %v485
      %721 = vmatpush1.bf16.msra.mxu0 %v484
      %722 = vmatprep.subr.bf16.mxu0 0
      %723 = vmatpush1.bf16.msra.mxu0 0
      %724 = vmatprep.subr.bf16.mxu0 0
      %725 = vmatpush1.bf16.msra.mxu0 0
      %726 = vmatprep.subr.bf16.mxu0 0
      %727 = vmatpush1.bf16.msra.mxu0 0
      %728 = vmatprep.subr.bf16.mxu0 0
      %729 = vmatpush1.bf16.msra.mxu0 0
      %730 = vmatprep.subr.bf16.mxu0 0
      %731 = vmatpush1.bf16.msra.mxu0 0
      %732 = vmatprep.subr.bf16.mxu0 0
      %733 = vmatpush1.bf16.msra.mxu0 0
      %734 = vmatprep.subr.bf16.mxu0 0
      %735 = vmatpush1.bf16.msra.mxu0 0
      %736 = vmatprep.subr.bf16.mxu0 0
      %737 = vmatpush1.bf16.msra.mxu0 0
      %738 = vmatprep.subr.bf16.mxu0 0
      %739 = vmatpush1.bf16.msra.mxu0 0
      %740 = vmatprep.subr.bf16.mxu0 0
      %741 = vmatpush1.bf16.msra.mxu0 0
      %742 = vmatprep.subr.bf16.mxu0 0
      %743 = vmatpush1.bf16.msra.mxu0 0
      %744 = vmatprep.subr.bf16.mxu0 0
      %745 = vmatpush1.bf16.msra.mxu0 0
      %746 = vmatprep.subr.bf16.mxu0 0
      %747 = vmatpush1.bf16.msra.mxu0 0
      %748 = vmatprep.mubr.bf16.mxu0 0
      %749 = vmatmul.mubr.bf16.gmra.mrb[0].mxu0 %v542
      %v750 = vpop.f32.mrb[0].mxu0
      %v751 = vadd.f32 0.0, %v750
      %v752 = vpop.f32.mrb[0].mxu0
      %v753 = vadd.f32 0.0, %v752
      %v754 = vpop.f32.mrb[0].mxu0
      %v755 = vadd.f32 0.0, %v754
      %v756 = vpop.f32.mrb[0].mxu0
      %v757 = vadd.f32 0.0, %v756
      %758 = vdwg.mxu0
      %759 = vmatprep.subr.bf16.mxu0 %v455
      %760 = vmatpush1.bf16.msra.mxu0 %v454
      %761 = vmatprep.subr.bf16.mxu0 %v471
      %762 = vmatpush1.bf16.msra.mxu0 %v470
      %763 = vmatprep.subr.bf16.mxu0 %v487
      %764 = vmatpush1.bf16.msra.mxu0 %v486
      %765 = vmatprep.subr.bf16.mxu0 0
      %766 = vmatpush1.bf16.msra.mxu0 0
      %767 = vmatprep.subr.bf16.mxu0 0
      %768 = vmatpush1.bf16.msra.mxu0 0
      %769 = vmatprep.subr.bf16.mxu0 0
      %770 = vmatpush1.bf16.msra.mxu0 0
      %771 = vmatprep.subr.bf16.mxu0 0
      %772 = vmatpush1.bf16.msra.mxu0 0
      %773 = vmatprep.subr.bf16.mxu0 0
      %774 = vmatpush1.bf16.msra.mxu0 0
      %775 = vmatprep.subr.bf16.mxu0 0
      %776 = vmatpush1.bf16.msra.mxu0 0
      %777 = vmatprep.subr.bf16.mxu0 0
      %778 = vmatpush1.bf16.msra.mxu0 0
      %779 = vmatprep.subr.bf16.mxu0 0
      %780 = vmatpush1.bf16.msra.mxu0 0
      %781 = vmatprep.subr.bf16.mxu0 0
      %782 = vmatpush1.bf16.msra.mxu0 0
      %783 = vmatprep.subr.bf16.mxu0 0
      %784 = vmatpush1.bf16.msra.mxu0 0
      %785 = vmatprep.subr.bf16.mxu0 0
      %786 = vmatpush1.bf16.msra.mxu0 0
      %787 = vmatprep.subr.bf16.mxu0 0
      %788 = vmatpush1.bf16.msra.mxu0 0
      %789 = vmatprep.subr.bf16.mxu0 0
      %790 = vmatpush1.bf16.msra.mxu0 0
      %791 = vmatprep.mubr.bf16.mxu0 0
      %792 = vmatmul.mubr.bf16.gmra.mrb[0].mxu0 %v542
      %v793 = vpop.f32.mrb[0].mxu0
      %v794 = vadd.f32 0.0, %v793
      %v795 = vpop.f32.mrb[0].mxu0
      %v796 = vadd.f32 0.0, %v795
      %v797 = vpop.f32.mrb[0].mxu0
      %v798 = vadd.f32 0.0, %v797
      %v799 = vpop.f32.mrb[0].mxu0
      %v800 = vadd.f32 0.0, %v799
      %801 = vdwg.mxu0
      %802 = vmatprep.subr.bf16.mxu0 %v457
      %803 = vmatpush1.bf16.msra.mxu0 %v456
      %804 = vmatprep.subr.bf16.mxu0 %v473
      %805 = vmatpush1.bf16.msra.mxu0 %v472
      %806 = vmatprep.subr.bf16.mxu0 %v489
      %807 = vmatpush1.bf16.msra.mxu0 %v488
      %808 = vmatprep.subr.bf16.mxu0 0
      %809 = vmatpush1.bf16.msra.mxu0 0
      %810 = vmatprep.subr.bf16.mxu0 0
      %811 = vmatpush1.bf16.msra.mxu0 0
      %812 = vmatprep.subr.bf16.mxu0 0
      %813 = vmatpush1.bf16.msra.mxu0 0
      %814 = vmatprep.subr.bf16.mxu0 0
      %815 = vmatpush1.bf16.msra.mxu0 0
      %816 = vmatprep.subr.bf16.mxu0 0
      %817 = vmatpush1.bf16.msra.mxu0 0
      %818 = vmatprep.subr.bf16.mxu0 0
      %819 = vmatpush1.bf16.msra.mxu0 0
      %820 = vmatprep.subr.bf16.mxu0 0
      %821 = vmatpush1.bf16.msra.mxu0 0
      %822 = vmatprep.subr.bf16.mxu0 0
      %823 = vmatpush1.bf16.msra.mxu0 0
      %824 = vmatprep.subr.bf16.mxu0 0
      %825 = vmatpush1.bf16.msra.mxu0 0
      %826 = vmatprep.subr.bf16.mxu0 0
      %827 = vmatpush1.bf16.msra.mxu0 0
      %828 = vmatprep.subr.bf16.mxu0 0
      %829 = vmatpush1.bf16.msra.mxu0 0
      %830 = vmatprep.subr.bf16.mxu0 0
      %831 = vmatpush1.bf16.msra.mxu0 0
      %832 = vmatprep.subr.bf16.mxu0 0
      %833 = vmatpush1.bf16.msra.mxu0 0
      %834 = vmatprep.mubr.bf16.mxu0 0
      %835 = vmatmul.mubr.bf16.gmra.mrb[0].mxu0 %v542
      %v836 = vpop.f32.mrb[0].mxu0
      %v837 = vadd.f32 0.0, %v836
      %v838 = vpop.f32.mrb[0].mxu0
      %v839 = vadd.f32 0.0, %v838
      %v840 = vpop.f32.mrb[0].mxu0
      %v841 = vadd.f32 0.0, %v840
      %v842 = vpop.f32.mrb[0].mxu0
      %v843 = vadd.f32 0.0, %v842
      %844 = vdwg.mxu0
      %845 = vmatprep.subr.bf16.mxu0 %v459
      %846 = vmatpush1.bf16.msra.mxu0 %v458
      %847 = vmatprep.subr.bf16.mxu0 %v475
      %848 = vmatpush1.bf16.msra.mxu0 %v474
      %849 = vmatprep.subr.bf16.mxu0 %v491
      %850 = vmatpush1.bf16.msra.mxu0 %v490
      %851 = vmatprep.subr.bf16.mxu0 0
      %852 = vmatpush1.bf16.msra.mxu0 0
      %853 = vmatprep.subr.bf16.mxu0 0
      %854 = vmatpush1.bf16.msra.mxu0 0
      %855 = vmatprep.subr.bf16.mxu0 0
      %856 = vmatpush1.bf16.msra.mxu0 0
      %857 = vmatprep.subr.bf16.mxu0 0
      %858 = vmatpush1.bf16.msra.mxu0 0
      %859 = vmatprep.subr.bf16.mxu0 0
      %860 = vmatpush1.bf16.msra.mxu0 0
      %861 = vmatprep.subr.bf16.mxu0 0
      %862 = vmatpush1.bf16.msra.mxu0 0
      %863 = vmatprep.subr.bf16.mxu0 0
      %864 = vmatpush1.bf16.msra.mxu0 0
      %865 = vmatprep.subr.bf16.mxu0 0
      %866 = vmatpush1.bf16.msra.mxu0 0
      %867 = vmatprep.subr.bf16.mxu0 0
      %868 = vmatpush1.bf16.msra.mxu0 0
      %869 = vmatprep.subr.bf16.mxu0 0
      %870 = vmatpush1.bf16.msra.mxu0 0
      %871 = vmatprep.subr.bf16.mxu0 0
      %872 = vmatpush1.bf16.msra.mxu0 0
      %873 = vmatprep.subr.bf16.mxu0 0
      %874 = vmatpush1.bf16.msra.mxu0 0
      %875 = vmatprep.subr.bf16.mxu0 0
      %876 = vmatpush1.bf16.msra.mxu0 0
      %877 = vmatprep.mubr.bf16.mxu0 0
      %878 = vmatmul.mubr.bf16.gmra.mrb[0].mxu0 %v542
      %v879 = vpop.f32.mrb[0].mxu0
      %v880 = vadd.f32 0.0, %v879
      %v881 = vpop.f32.mrb[0].mxu0
      %v882 = vadd.f32 0.0, %v881
      %v883 = vpop.f32.mrb[0].mxu0
      %v884 = vadd.f32 0.0, %v883
      %v885 = vpop.f32.mrb[0].mxu0
      %v886 = vadd.f32 0.0, %v885
      %887 = vdwg.mxu0
      %v888 = vadd.f32 %v213, %v579
      %v889 = vadd.f32 %v214, %v581
      %v890 = vadd.f32 %v215, %v622
      %v891 = vadd.f32 %v216, %v624
      %v892 = vadd.f32 %v217, %v665
      %v893 = vadd.f32 %v218, %v667
      %v894 = vadd.f32 %v219, %v708
      %v895 = vadd.f32 %v220, %v710
      %v896 = vadd.f32 %v221, %v751
      %v897 = vadd.f32 %v222, %v753
      %v898 = vadd.f32 %v223, %v794
      %v899 = vadd.f32 %v224, %v796
      %v900 = vadd.f32 %v225, %v837
      %v901 = vadd.f32 %v226, %v839
      %v902 = vadd.f32 %v227, %v880
      %v903 = vadd.f32 %v228, %v882
      %v904 = vadd.f32 %v229, %v583
      %v905 = vadd.f32 %v230, %v585
      %v906 = vadd.f32 %v231, %v626
      %v907 = vadd.f32 %v232, %v628
      %v908 = vadd.f32 %v233, %v669
      %v909 = vadd.f32 %v234, %v671
      %v910 = vadd.f32 %v235, %v712
      %v911 = vadd.f32 %v236, %v714
      %v912 = vadd.f32 %v237, %v755
      %v913 = vadd.f32 %v238, %v757
      %v914 = vadd.f32 %v239, %v798
      %v915 = vadd.f32 %v240, %v800
      %v916 = vadd.f32 %v241, %v841
      %v917 = vadd.f32 %v242, %v843
      %v918 = vadd.f32 %v243, %v884
      %v919 = vadd.f32 %v244, %v886
      %920 = vst [vmem:[#allocation2] sm:$0xff] %v888
      %921 = vst [vmem:[#allocation2 + $0x8] sm:$0xff] %v889
      %922 = vst [vmem:[#allocation2 + $0x10] sm:$0xff] %v890
      %923 = vst [vmem:[#allocation2 + $0x18] sm:$0xff] %v891
      %924 = vst [vmem:[#allocation2 + $0x20] sm:$0xff] %v892
      %925 = vst [vmem:[#allocation2 + $0x28] sm:$0xff] %v893
      %926 = vst [vmem:[#allocation2 + $0x30] sm:$0xff] %v894
      %927 = vst [vmem:[#allocation2 + $0x38] sm:$0xff] %v895
      %928 = vst [vmem:[#allocation2 + $0x40] sm:$0xff] %v896
      %929 = vst [vmem:[#allocation2 + $0x48] sm:$0xff] %v897
      %930 = vst [vmem:[#allocation2 + $0x50] sm:$0xff] %v898
      %931 = vst [vmem:[#allocation2 + $0x58] sm:$0xff] %v899
      %932 = vst [vmem:[#allocation2 + $0x60] sm:$0xff] %v900
      %933 = vst [vmem:[#allocation2 + $0x68] sm:$0xff] %v901
      %934 = vst [vmem:[#allocation2 + $0x70] sm:$0xff] %v902
      %935 = vst [vmem:[#allocation2 + $0x78] sm:$0xff] %v903
      %936 = vst [vmem:[#allocation2 + $0x80] sm:$0xff] %v904
      %937 = vst [vmem:[#allocation2 + $0x88] sm:$0xff] %v905
      %938 = vst [vmem:[#allocation2 + $0x90] sm:$0xff] %v906
      %939 = vst [vmem:[#allocation2 + $0x98] sm:$0xff] %v907
      %940 = vst [vmem:[#allocation2 + $0xa0] sm:$0xff] %v908
      %941 = vst [vmem:[#allocation2 + $0xa8] sm:$0xff] %v909
      %942 = vst [vmem:[#allocation2 + $0xb0] sm:$0xff] %v910
      %943 = vst [vmem:[#allocation2 + $0xb8] sm:$0xff] %v911
      %944 = vst [vmem:[#allocation2 + $0xc0] sm:$0xff] %v912
      %945 = vst [vmem:[#allocation2 + $0xc8] sm:$0xff] %v913
      %946 = vst [vmem:[#allocation2 + $0xd0] sm:$0xff] %v914
      %947 = vst [vmem:[#allocation2 + $0xd8] sm:$0xff] %v915
      %948 = vst [vmem:[#allocation2 + $0xe0] sm:$0xff] %v916
      %949 = vst [vmem:[#allocation2 + $0xe8] sm:$0xff] %v917
      %950 = vst [vmem:[#allocation2 + $0xf0] sm:$0xff] %v918
      %951 = vst [vmem:[#allocation2 + $0xf8] sm:$0xff] %v919
      %p952 = scmp.eq.s32.totalorder %s14, 2
      // Predicated region
      $region37: #{resnet_forward.8} parent=31 // pred_check
        %p953 = pneg %p952
      $region38: #{resnet_forward.8} parent=31 // pred_check_branch
        %955 = sbr.rel (%p953) target = $region40
      $region39: #{resnet_forward.8} parent=31 // pred_region
        %v956 = vld [vmem:[#allocation2] sm:$0xff]
        %v957 = vld [vmem:[#allocation2 + $0x8] sm:$0xff]
        %v958 = vld [vmem:[#allocation2 + $0x10] sm:$0xff]
        %v959 = vld [vmem:[#allocation2 + $0x18] sm:$0xff]
        %v960 = vld [vmem:[#allocation2 + $0x20] sm:$0xff]
        %v961 = vld [vmem:[#allocation2 + $0x28] sm:$0xff]
        %v962 = vld [vmem:[#allocation2 + $0x30] sm:$0xff]
        %v963 = vld [vmem:[#allocation2 + $0x38] sm:$0xff]
        %v964 = vld [vmem:[#allocation2 + $0x40] sm:$0xff]
        %v965 = vld [vmem:[#allocation2 + $0x48] sm:$0xff]
        %v966 = vld [vmem:[#allocation2 + $0x50] sm:$0xff]
        %v967 = vld [vmem:[#allocation2 + $0x58] sm:$0xff]
        %v968 = vld [vmem:[#allocation2 + $0x60] sm:$0xff]
        %v969 = vld [vmem:[#allocation2 + $0x68] sm:$0xff]
        %v970 = vld [vmem:[#allocation2 + $0x70] sm:$0xff]
        %v971 = vld [vmem:[#allocation2 + $0x78] sm:$0xff]
        %v972 = vld [vmem:[#allocation2 + $0x80] sm:$0xff]
        %v973 = vld [vmem:[#allocation2 + $0x88] sm:$0xff]
        %v974 = vld [vmem:[#allocation2 + $0x90] sm:$0xff]
        %v975 = vld [vmem:[#allocation2 + $0x98] sm:$0xff]
        %v976 = vld [vmem:[#allocation2 + $0xa0] sm:$0xff]
        %v977 = vld [vmem:[#allocation2 + $0xa8] sm:$0xff]
        %v978 = vld [vmem:[#allocation2 + $0xb0] sm:$0xff]
        %v979 = vld [vmem:[#allocation2 + $0xb8] sm:$0xff]
        %v980 = vld [vmem:[#allocation2 + $0xc0] sm:$0xff]
        %v981 = vld [vmem:[#allocation2 + $0xc8] sm:$0xff]
        %v982 = vld [vmem:[#allocation2 + $0xd0] sm:$0xff]
        %v983 = vld [vmem:[#allocation2 + $0xd8] sm:$0xff]
        %v984 = vld [vmem:[#allocation2 + $0xe0] sm:$0xff]
        %v985 = vld [vmem:[#allocation2 + $0xe8] sm:$0xff]
        %v986 = vld [vmem:[#allocation2 + $0xf0] sm:$0xff]
        %v987 = vld [vmem:[#allocation2 + $0xf8] sm:$0xff]
        %v988 = vadd.f32 %v956, %v957
        %v989 = vadd.f32 %v988, %v958
        %v990 = vadd.f32 %v989, %v959
        %v991 = vadd.f32 %v990, %v960
        %v992 = vadd.f32 %v991, %v961
        %v993 = vadd.f32 %v992, %v962
        %v994 = vadd.f32 %v993, %v963
        %v995 = vadd.f32 %v994, %v964
        %v996 = vadd.f32 %v995, %v965
        %v997 = vadd.f32 %v996, %v966
        %v998 = vadd.f32 %v997, %v967
        %v999 = vadd.f32 %v998, %v968
        %v1000 = vadd.f32 %v999, %v969
        %v1001 = vadd.f32 %v1000, %v970
        %v1002 = vadd.f32 %v1001, %v971
        %1003 = vadd.xlane.f32.xlu0 %v1002
        %v1004 = vpop.xlane.xlu0 %1003
        %v1005 = vadd.f32 %v972, %v973
        %v1006 = vadd.f32 %v1005, %v974
        %v1007 = vadd.f32 %v1006, %v975
        %v1008 = vadd.f32 %v1007, %v976
        %v1009 = vadd.f32 %v1008, %v977
        %v1010 = vadd.f32 %v1009, %v978
        %v1011 = vadd.f32 %v1010, %v979
        %v1012 = vadd.f32 %v1011, %v980
        %v1013 = vadd.f32 %v1012, %v981
        %v1014 = vadd.f32 %v1013, %v982
        %v1015 = vadd.f32 %v1014, %v983
        %v1016 = vadd.f32 %v1015, %v984
        %v1017 = vadd.f32 %v1016, %v985
        %v1018 = vadd.f32 %v1017, %v986
        %v1019 = vadd.f32 %v1018, %v987
        %1020 = vadd.xlane.f32.xlu0 %v1019
        %v1021 = vpop.xlane.xlu0 %1020
        %v1022 = vmul.f32 %v1004, 0.00048828125
        %v1023 = vmul.f32 %v1021, 0.00048828125
        %v1024 = vsub.f32 %v956, %v1022
        %v1025 = vsub.f32 %v957, %v1022
        %v1026 = vsub.f32 %v958, %v1022
        %v1027 = vsub.f32 %v959, %v1022
        %v1028 = vsub.f32 %v960, %v1022
        %v1029 = vsub.f32 %v961, %v1022
        %v1030 = vsub.f32 %v962, %v1022
        %v1031 = vsub.f32 %v963, %v1022
        %v1032 = vsub.f32 %v964, %v1022
        %v1033 = vsub.f32 %v965, %v1022
        %v1034 = vsub.f32 %v966, %v1022
        %v1035 = vsub.f32 %v967, %v1022
        %v1036 = vsub.f32 %v968, %v1022
        %v1037 = vsub.f32 %v969, %v1022
        %v1038 = vsub.f32 %v970, %v1022
        %v1039 = vsub.f32 %v971, %v1022
        %v1040 = vsub.f32 %v972, %v1023
        %v1041 = vsub.f32 %v973, %v1023
        %v1042 = vsub.f32 %v974, %v1023
        %v1043 = vsub.f32 %v975, %v1023
        %v1044 = vsub.f32 %v976, %v1023
        %v1045 = vsub.f32 %v977, %v1023
        %v1046 = vsub.f32 %v978, %v1023
        %v1047 = vsub.f32 %v979, %v1023
        %v1048 = vsub.f32 %v980, %v1023
        %v1049 = vsub.f32 %v981, %v1023
        %v1050 = vsub.f32 %v982, %v1023
        %v1051 = vsub.f32 %v983, %v1023
        %v1052 = vsub.f32 %v984, %v1023
        %v1053 = vsub.f32 %v985, %v1023
        %v1054 = vsub.f32 %v986, %v1023
        %v1055 = vsub.f32 %v987, %v1023
        %v1056 = vmul.f32 %v1024, %v1024
        %v1057 = vmul.f32 %v1025, %v1025
        %v1058 = vmul.f32 %v1026, %v1026
        %v1059 = vmul.f32 %v1027, %v1027
        %v1060 = vmul.f32 %v1028, %v1028
        %v1061 = vmul.f32 %v1029, %v1029
        %v1062 = vmul.f32 %v1030, %v1030
        %v1063 = vmul.f32 %v1031, %v1031
        %v1064 = vmul.f32 %v1032, %v1032
        %v1065 = vmul.f32 %v1033, %v1033
        %v1066 = vmul.f32 %v1034, %v1034
        %v1067 = vmul.f32 %v1035, %v1035
        %v1068 = vmul.f32 %v1036, %v1036
        %v1069 = vmul.f32 %v1037, %v1037
        %v1070 = vmul.f32 %v1038, %v1038
        %v1071 = vmul.f32 %v1039, %v1039
        %v1072 = vmul.f32 %v1040, %v1040
        %v1073 = vmul.f32 %v1041, %v1041
        %v1074 = vmul.f32 %v1042, %v1042
        %v1075 = vmul.f32 %v1043, %v1043
        %v1076 = vmul.f32 %v1044, %v1044
        %v1077 = vmul.f32 %v1045, %v1045
        %v1078 = vmul.f32 %v1046, %v1046
        %v1079 = vmul.f32 %v1047, %v1047
        %v1080 = vmul.f32 %v1048, %v1048
        %v1081 = vmul.f32 %v1049, %v1049
        %v1082 = vmul.f32 %v1050, %v1050
        %v1083 = vmul.f32 %v1051, %v1051
        %v1084 = vmul.f32 %v1052, %v1052
        %v1085 = vmul.f32 %v1053, %v1053
        %v1086 = vmul.f32 %v1054, %v1054
        %v1087 = vmul.f32 %v1055, %v1055
        %v1088 = vadd.f32 %v1056, %v1057
        %v1089 = vadd.f32 %v1088, %v1058
        %v1090 = vadd.f32 %v1089, %v1059
        %v1091 = vadd.f32 %v1090, %v1060
        %v1092 = vadd.f32 %v1091, %v1061
        %v1093 = vadd.f32 %v1092, %v1062
        %v1094 = vadd.f32 %v1093, %v1063
        %v1095 = vadd.f32 %v1094, %v1064
        %v1096 = vadd.f32 %v1095, %v1065
        %v1097 = vadd.f32 %v1096, %v1066
        %v1098 = vadd.f32 %v1097, %v1067
        %v1099 = vadd.f32 %v1098, %v1068
        %v1100 = vadd.f32 %v1099, %v1069
        %v1101 = vadd.f32 %v1100, %v1070
        %v1102 = vadd.f32 %v1101, %v1071
        %1103 = vadd.xlane.f32.xlu0 %v1102
        %v1104 = vpop.xlane.xlu0 %1103
        %v1105 = vadd.f32 %v1072, %v1073
        %v1106 = vadd.f32 %v1105, %v1074
        %v1107 = vadd.f32 %v1106, %v1075
        %v1108 = vadd.f32 %v1107, %v1076
        %v1109 = vadd.f32 %v1108, %v1077
        %v1110 = vadd.f32 %v1109, %v1078
        %v1111 = vadd.f32 %v1110, %v1079
        %v1112 = vadd.f32 %v1111, %v1080
        %v1113 = vadd.f32 %v1112, %v1081
        %v1114 = vadd.f32 %v1113, %v1082
        %v1115 = vadd.f32 %v1114, %v1083
        %v1116 = vadd.f32 %v1115, %v1084
        %v1117 = vadd.f32 %v1116, %v1085
        %v1118 = vadd.f32 %v1117, %v1086
        %v1119 = vadd.f32 %v1118, %v1087
        %1120 = vadd.xlane.f32.xlu0 %v1119
        %v1121 = vpop.xlane.xlu0 %1120
        %v1122 = vmul.f32 %v1104, 0.00048828125
        %v1123 = vmul.f32 %v1121, 0.00048828125
        %v1124 = vld [vmem:[%s2] sm:$0xff]
        %v1125 = vld [vmem:[%s2 + $0x8] sm:$0xff]
        %v1126 = vadd.f32 %v1122, 1e-05
        %v1127 = vadd.f32 %v1123, 1e-05
        %v1128 = vrsqrt.pop %v1126
        %v1129 = vrsqrt.pop %v1127
        %v1130 = vmul.f32 %v1124, %v1128
        %v1131 = vmul.f32 %v1125, %v1129
        %1133 = vset.pattern.permute.xlu0 0
        %1134 = vperm.xlu0 %1133, %v1130
        %v1135 = vpop.permute.xlu0 %1134
        %1138 = vset.pattern.permute.xlu0 0
        %1139 = vperm.xlu0 %1138, %v1131
        %v1140 = vpop.permute.xlu0 %1139
        %v1142 = vmul.f32 %v1024, %v1135
        %v1143 = vmul.f32 %v1025, %v1135
        %v1144 = vmul.f32 %v1026, %v1135
        %v1145 = vmul.f32 %v1027, %v1135
        %v1146 = vmul.f32 %v1028, %v1135
        %v1147 = vmul.f32 %v1029, %v1135
        %v1148 = vmul.f32 %v1030, %v1135
        %v1149 = vmul.f32 %v1031, %v1135
        %v1150 = vmul.f32 %v1032, %v1135
        %v1151 = vmul.f32 %v1033, %v1135
        %v1152 = vmul.f32 %v1034, %v1135
        %v1153 = vmul.f32 %v1035, %v1135
        %v1154 = vmul.f32 %v1036, %v1135
        %v1155 = vmul.f32 %v1037, %v1135
        %v1156 = vmul.f32 %v1038, %v1135
        %v1157 = vmul.f32 %v1039, %v1135
        %v1158 = vmul.f32 %v1040, %v1140
        %v1159 = vmul.f32 %v1041, %v1140
        %v1160 = vmul.f32 %v1042, %v1140
        %v1161 = vmul.f32 %v1043, %v1140
        %v1162 = vmul.f32 %v1044, %v1140
        %v1163 = vmul.f32 %v1045, %v1140
        %v1164 = vmul.f32 %v1046, %v1140
        %v1165 = vmul.f32 %v1047, %v1140
        %v1166 = vmul.f32 %v1048, %v1140
        %v1167 = vmul.f32 %v1049, %v1140
        %v1168 = vmul.f32 %v1050, %v1140
        %v1169 = vmul.f32 %v1051, %v1140
        %v1170 = vmul.f32 %v1052, %v1140
        %v1171 = vmul.f32 %v1053, %v1140
        %v1172 = vmul.f32 %v1054, %v1140
        %v1173 = vmul.f32 %v1055, %v1140
        %1175 = vset.pattern.permute.xlu0 1
        %1176 = vperm.xlu0 %1175, %v1124
        %v1177 = vpop.permute.xlu0 %1176
        %1180 = vset.pattern.permute.xlu0 1
        %1181 = vperm.xlu0 %1180, %v1125
        %v1182 = vpop.permute.xlu0 %1181
        %v1184 = vadd.f32 %v1142, %v1177
        %v1185 = vadd.f32 %v1143, %v1177
        %v1186 = vadd.f32 %v1144, %v1177
        %v1187 = vadd.f32 %v1145, %v1177
        %v1188 = vadd.f32 %v1146, %v1177
        %v1189 = vadd.f32 %v1147, %v1177
        %v1190 = vadd.f32 %v1148, %v1177
        %v1191 = vadd.f32 %v1149, %v1177
        %v1192 = vadd.f32 %v1150, %v1177
        %v1193 = vadd.f32 %v1151, %v1177
        %v1194 = vadd.f32 %v1152, %v1177
        %v1195 = vadd.f32 %v1153, %v1177
        %v1196 = vadd.f32 %v1154, %v1177
        %v1197 = vadd.f32 %v1155, %v1177
        %v1198 = vadd.f32 %v1156, %v1177
        %v1199 = vadd.f32 %v1157, %v1177
        %v1200 = vadd.f32 %v1158, %v1182
        %v1201 = vadd.f32 %v1159, %v1182
        %v1202 = vadd.f32 %v1160, %v1182
        %v1203 = vadd.f32 %v1161, %v1182
        %v1204 = vadd.f32 %v1162, %v1182
        %v1205 = vadd.f32 %v1163, %v1182
        %v1206 = vadd.f32 %v1164, %v1182
        %v1207 = vadd.f32 %v1165, %v1182
        %v1208 = vadd.f32 %v1166, %v1182
        %v1209 = vadd.f32 %v1167, %v1182
        %v1210 = vadd.f32 %v1168, %v1182
        %v1211 = vadd.f32 %v1169, %v1182
        %v1212 = vadd.f32 %v1170, %v1182
        %v1213 = vadd.f32 %v1171, %v1182
        %v1214 = vadd.f32 %v1172, %v1182
        %v1215 = vadd.f32 %v1173, %v1182
        %v1216 = vmax.f32 %v1184, 0.0
        %v1217 = vmax.f32 %v1185, 0.0
        %v1218 = vmax.f32 %v1186, 0.0
        %v1219 = vmax.f32 %v1187, 0.0
        %v1220 = vmax.f32 %v1188, 0.0
        %v1221 = vmax.f32 %v1189, 0.0
        %v1222 = vmax.f32 %v1190, 0.0
        %v1223 = vmax.f32 %v1191, 0.0
        %v1224 = vmax.f32 %v1192, 0.0
        %v1225 = vmax.f32 %v1193, 0.0
        %v1226 = vmax.f32 %v1194, 0.0
        %v1227 = vmax.f32 %v1195, 0.0
        %v1228 = vmax.f32 %v1196, 0.0
        %v1229 = vmax.f32 %v1197, 0.0
        %v1230 = vmax.f32 %v1198, 0.0
        %v1231 = vmax.f32 %v1199, 0.0
        %v1232 = vmax.f32 %v1200, 0.0
        %v1233 = vmax.f32 %v1201, 0.0
        %v1234 = vmax.f32 %v1202, 0.0
        %v1235 = vmax.f32 %v1203, 0.0
        %v1236 = vmax.f32 %v1204, 0.0
        %v1237 = vmax.f32 %v1205, 0.0
        %v1238 = vmax.f32 %v1206, 0.0
        %v1239 = vmax.f32 %v1207, 0.0
        %v1240 = vmax.f32 %v1208, 0.0
        %v1241 = vmax.f32 %v1209, 0.0
        %v1242 = vmax.f32 %v1210, 0.0
        %v1243 = vmax.f32 %v1211, 0.0
        %v1244 = vmax.f32 %v1212, 0.0
        %v1245 = vmax.f32 %v1213, 0.0
        %v1246 = vmax.f32 %v1214, 0.0
        %v1247 = vmax.f32 %v1215, 0.0
        %1248 = vst [vmem:[%s3] sm:$0xff] %v1216
        %1249 = vst [vmem:[%s3 + $0x8] sm:$0xff] %v1217
        %1250 = vst [vmem:[%s3 + $0x10] sm:$0xff] %v1218
        %1251 = vst [vmem:[%s3 + $0x18] sm:$0xff] %v1219
        %1252 = vst [vmem:[%s3 + $0x20] sm:$0xff] %v1220
        %1253 = vst [vmem:[%s3 + $0x28] sm:$0xff] %v1221
        %1254 = vst [vmem:[%s3 + $0x30] sm:$0xff] %v1222
        %1255 = vst [vmem:[%s3 + $0x38] sm:$0xff] %v1223
        %1256 = vst [vmem:[%s3 + $0x40] sm:$0xff] %v1224
        %1257 = vst [vmem:[%s3 + $0x48] sm:$0xff] %v1225
        %1258 = vst [vmem:[%s3 + $0x50] sm:$0xff] %v1226
        %1259 = vst [vmem:[%s3 + $0x58] sm:$0xff] %v1227
        %1260 = vst [vmem:[%s3 + $0x60] sm:$0xff] %v1228
        %1261 = vst [vmem:[%s3 + $0x68] sm:$0xff] %v1229
        %1262 = vst [vmem:[%s3 + $0x70] sm:$0xff] %v1230
        %1263 = vst [vmem:[%s3 + $0x78] sm:$0xff] %v1231
        %1264 = vst [vmem:[%s3 + $0x80] sm:$0xff] %v1232
        %1265 = vst [vmem:[%s3 + $0x88] sm:$0xff] %v1233
        %1266 = vst [vmem:[%s3 + $0x90] sm:$0xff] %v1234
        %1267 = vst [vmem:[%s3 + $0x98] sm:$0xff] %v1235
        %1268 = vst [vmem:[%s3 + $0xa0] sm:$0xff] %v1236
        %1269 = vst [vmem:[%s3 + $0xa8] sm:$0xff] %v1237
        %1270 = vst [vmem:[%s3 + $0xb0] sm:$0xff] %v1238
        %1271 = vst [vmem:[%s3 + $0xb8] sm:$0xff] %v1239
        %1272 = vst [vmem:[%s3 + $0xc0] sm:$0xff] %v1240
        %1273 = vst [vmem:[%s3 + $0xc8] sm:$0xff] %v1241
        %1274 = vst [vmem:[%s3 + $0xd0] sm:$0xff] %v1242
        %1275 = vst [vmem:[%s3 + $0xd8] sm:$0xff] %v1243
        %1276 = vst [vmem:[%s3 + $0xe0] sm:$0xff] %v1244
        %1277 = vst [vmem:[%s3 + $0xe8] sm:$0xff] %v1245
        %1278 = vst [vmem:[%s3 + $0xf0] sm:$0xff] %v1246
        %1279 = vst [vmem:[%s3 + $0xf8] sm:$0xff] %v1247
      $region40: #{resnet_forward.8} parent=31 // pred_fallthru
        _
      // Predicated region
      $region41: #{resnet_forward.8} parent=31 // pred_check
        %p1280 = pneg %p100
      $region42: #{resnet_forward.8} parent=31 // pred_check_branch
        %1282 = sbr.rel (%p1280) target = $region44
      $region43: #{resnet_forward.8} parent=31 // pred_region
        _
      $region44: #{resnet_forward.8} parent=31 // pred_fallthru
        _
      // Predicated region
      $region45: #{resnet_forward.8} parent=31 // pred_check
        %p1283 = pneg %p100
      $region46: #{resnet_forward.8} parent=31 // pred_check_branch
        %1285 = sbr.rel (%p1283) target = $region48
      $region47: #{resnet_forward.8} parent=31 // pred_region
        _
      $region48: #{resnet_forward.8} parent=31 // pred_fallthru
        _
    $region32: #{resnet_forward.8} parent=5 // pred_fallthru
      _
    %p1286 = scmp.le.s32.totalorder 2, %s9
    // Predicated region
    $region49: #{resnet_forward.8} parent=5 // pred_check
      %p1287 = pneg %p1286
    $region50: #{resnet_forward.8} parent=5 // pred_check_branch
      %1289 = sbr.rel (%p1287) target = $region52
    $region51: #{resnet_forward.8} parent=5 // pred_region
      %s1290 = ssub.s32 %s9, 2
    $region52: #{resnet_forward.8} parent=5 // pred_fallthru
      _
  $region6: #{resnet_forward.8} parent=0 // loop_footer
    %s13 = sadd.s32 1, %s9
  $region7: #{resnet_forward.8} parent=0 // loop_footer_branch
    %8 = sbr.rel target = $region3
  $region8: #{resnet_forward.8} parent=0 // loop_exit
    _

// kernel: resnet_forward.9
$region0: #{resnet_forward.9}
  #allocation0 [shape = 'u32[]', space=smem, size = 0x4, offset = 0x4, fixed_abs, tag = 'smem constant byte address 0x4 - core index']
  #allocation1 [shape = 'u32[144,128]{1,0:T(1,128)}', space=vmem, size = 0x12000, scoped, tag = 'internal scratch']
  #allocation2 [shape = 'f32[16,2048]{1,0:T(8,128)}', space=vmem, size = 0x20000, scoped, tag = 'scratch operand']
  %s0 = inlined_call_operand.vmem [shape: bf16[3,16,48], index: 0, kind: input, shape index: {}]
  %s1 = inlined_call_operand.vmem [shape: bf16[3,48,2048], index: 1, kind: input, shape index: {}]
  %s2 = inlined_call_operand.vmem [shape: f32[16,2], index: 2, kind: input, shape index: {}]
  %s3 = inlined_call_operand.vmem [shape: f32[16,2048], index: 3, kind: input, shape index: {}]
  %s4 = inlined_call_operand.vmem [shape: f32[16,2048], index: 4, kind: output, shape index: {}]
  %s5 = sld [smem:[#allocation0]]
  $region57: #{resnet_forward.9} parent=0
    _
  %s7 = ssub.s32 1, %s5
  %s8 = scalar_select 0, %s7, %s5
  loop: start=0, step=1, limit=5
  $region2: #{resnet_forward.9} parent=0 // loop_pre_header
    _
  $region3: #{resnet_forward.9} parent=0 // loop_header
    %s10 = sphi 0, %s14
    %p11 = scmp.ge.s32.totalorder %s10, 5
    %s20 = sphi 0, %s22
    %s23 = sphi 0, %s20
    %s24 = sphi 0, %s23
    %s40 = sphi 0, %s24
    %s46 = sphi 0, %s48
    %s49 = sphi 0, %s46
    %s50 = sphi 0, %s49
    %s66 = sphi 0, %s50
    %s70 = sphi 0, %s70
    %s72 = sphi 0, %s70
    %s73 = sphi 0, %s72
    %s87 = sphi 0, %s73
    %s91 = sphi 0, %s91
    %s93 = sphi 0, %s91
    %s94 = sphi 0, %s93
    %s108 = sphi 0, %s94
    %s112 = sphi 0, %s112
    %s114 = sphi 0, %s112
    %s115 = sphi 0, %s114
    %s129 = sphi 0, %s115
  $region4: #{resnet_forward.9} parent=0 // loop_header_branch
    %13 = sbr.rel (%p11) target = $region8
  $region5: #{resnet_forward.9} parent=0 // loop_body
    %s15 = ssub.s32 %s10, 1
    %s16 = ssub.s32 %s10, 2
    %s17 = sadd.s32 %s10, 1
    %s18 = ssub.s32 %s10, %s17
    %p19 = scmp.eq.s32.totalorder %s18, 0
    %s21 = sadd.s32 %s20, 1
    %s22 = scalar_select %p19, %s20, %s21
    %p25 = pneg %p19
    %p26 = scmp.eq.s32.totalorder %s10, 2
    %p27 = por %p25, %p26
    %p28 = scmp.ne.s32.totalorder %s20, %s23
    %p29 = scmp.eq.s32.totalorder %s10, 0
    %p30 = por %p28, %p29
    %p31 = scmp.ne.s32.totalorder %s20, %s23
    %p32 = scmp.eq.s32.totalorder %s15, 2
    %p33 = por %p31, %p32
    %p34 = scmp.ne.s32.totalorder %s23, %s24
    %p35 = scmp.eq.s32.totalorder %s15, 0
    %p36 = por %p34, %p35
    %p37 = scmp.ne.s32.totalorder %s23, %s24
    %p38 = scmp.eq.s32.totalorder %s16, 2
    %p39 = por %p37, %p38
    %p41 = scmp.ne.s32.totalorder %s24, %s40
    %p42 = scmp.eq.s32.totalorder %s16, 0
    %p43 = por %p41, %p42
    %s44 = ssub.s32 %s10, %s17
    %p45 = scmp.eq.s32.totalorder %s44, 0
    %s47 = sadd.s32 %s46, 1
    %s48 = scalar_select %p45, %s46, %s47
    %p51 = pneg %p45
    %p52 = scmp.eq.s32.totalorder %s10, 2
    %p53 = por %p51, %p52
    %p54 = scmp.ne.s32.totalorder %s46, %s49
    %p55 = scmp.eq.s32.totalorder %s10, 0
    %p56 = por %p54, %p55
    %p57 = scmp.ne.s32.totalorder %s46, %s49
    %p58 = scmp.eq.s32.totalorder %s15, 2
    %p59 = por %p57, %p58
    %p60 = scmp.ne.s32.totalorder %s49, %s50
    %p61 = scmp.eq.s32.totalorder %s15, 0
    %p62 = por %p60, %p61
    %p63 = scmp.ne.s32.totalorder %s49, %s50
    %p64 = scmp.eq.s32.totalorder %s16, 2
    %p65 = por %p63, %p64
    %p67 = scmp.ne.s32.totalorder %s50, %s66
    %p68 = scmp.eq.s32.totalorder %s16, 0
    %p69 = por %p67, %p68
    %s71 = sadd.s32 %s70, 1
    %p74 = scmp.eq.s32.totalorder %s10, 2
    %p75 = scmp.ne.s32.totalorder %s70, %s72
    %p76 = scmp.eq.s32.totalorder %s10, 0
    %p77 = por %p75, %p76
    %p78 = scmp.ne.s32.totalorder %s70, %s72
    %p79 = scmp.eq.s32.totalorder %s15, 2
    %p80 = por %p78, %p79
    %p81 = scmp.ne.s32.totalorder %s72, %s73
    %p82 = scmp.eq.s32.totalorder %s15, 0
    %p83 = por %p81, %p82
    %p84 = scmp.ne.s32.totalorder %s72, %s73
    %p85 = scmp.eq.s32.totalorder %s16, 2
    %p86 = por %p84, %p85
    %p88 = scmp.ne.s32.totalorder %s73, %s87
    %p89 = scmp.eq.s32.totalorder %s16, 0
    %p90 = por %p88, %p89
    %s92 = sadd.s32 %s91, 1
    %p95 = scmp.eq.s32.totalorder %s10, 2
    %p96 = scmp.ne.s32.totalorder %s91, %s93
    %p97 = scmp.eq.s32.totalorder %s10, 0
    %p98 = por %p96, %p97
    %p99 = scmp.ne.s32.totalorder %s91, %s93
    %p100 = scmp.eq.s32.totalorder %s15, 2
    %p101 = por %p99, %p100
    %p102 = scmp.ne.s32.totalorder %s93, %s94
    %p103 = scmp.eq.s32.totalorder %s15, 0
    %p104 = por %p102, %p103
    %p105 = scmp.ne.s32.totalorder %s93, %s94
    %p106 = scmp.eq.s32.totalorder %s16, 2
    %p107 = por %p105, %p106
    %p109 = scmp.ne.s32.totalorder %s94, %s108
    %p110 = scmp.eq.s32.totalorder %s16, 0
    %p111 = por %p109, %p110
    %s113 = sadd.s32 %s112, 1
    %p116 = scmp.eq.s32.totalorder %s10, 2
    %p117 = scmp.ne.s32.totalorder %s112, %s114
    %p118 = scmp.eq.s32.totalorder %s10, 0
    %p119 = por %p117, %p118
    %p120 = scmp.ne.s32.totalorder %s112, %s114
    %p121 = scmp.eq.s32.totalorder %s15, 2
    %p122 = por %p120, %p121
    %p123 = scmp.ne.s32.totalorder %s114, %s115
    %p124 = scmp.eq.s32.totalorder %s15, 0
    %p125 = por %p123, %p124
    %p126 = scmp.ne.s32.totalorder %s114, %s115
    %p127 = scmp.eq.s32.totalorder %s16, 2
    %p128 = por %p126, %p127
    %p130 = scmp.ne.s32.totalorder %s115, %s129
    %p131 = scmp.eq.s32.totalorder %s16, 0
    %p132 = por %p130, %p131
    %p133 = scmp.le.s32.totalorder 1, %s10
    %p134 = scmp.lt.s32.totalorder %s10, 4
    %p135 = pnand %p133, %p134
    %p136 = pneg %p135
    // Predicated region
    $region9: #{resnet_forward.9} parent=5 // pred_check
      _
    $region10: #{resnet_forward.9} parent=5 // pred_check_branch
      %138 = sbr.rel (%p135) target = $region12
    $region11: #{resnet_forward.9} parent=5 // pred_region
      %s139 = ssub.s32 %s10, 1
      // Predicated region
      $region13: #{resnet_forward.9} parent=11 // pred_check
        %p140 = pneg %p83
      $region14: #{resnet_forward.9} parent=11 // pred_check_branch
        %142 = sbr.rel (%p140) target = $region16
      $region15: #{resnet_forward.9} parent=11 // pred_region
        _
      $region16: #{resnet_forward.9} parent=11 // pred_fallthru
        _
      // Predicated region
      $region17: #{resnet_forward.9} parent=11 // pred_check
        %p143 = pneg %p104
      $region18: #{resnet_forward.9} parent=11 // pred_check_branch
        %145 = sbr.rel (%p143) target = $region20
      $region19: #{resnet_forward.9} parent=11 // pred_region
        _
      $region20: #{resnet_forward.9} parent=11 // pred_fallthru
        _
    $region12: #{resnet_forward.9} parent=5 // pred_fallthru
      _
    %p146 = scmp.lt.s32.totalorder %s10, 3
    // Predicated region
    $region21: #{resnet_forward.9} parent=5 // pred_check
      %p147 = pneg %p146
    $region22: #{resnet_forward.9} parent=5 // pred_check_branch
      %149 = sbr.rel (%p147) target = $region24
    $region23: #{resnet_forward.9} parent=5 // pred_region
      // Predicated region
      $region25: #{resnet_forward.9} parent=23 // pred_check
        %p150 = pneg %p30
      $region26: #{resnet_forward.9} parent=23 // pred_check_branch
        %152 = sbr.rel (%p150) target = $region28
      $region27: #{resnet_forward.9} parent=23 // pred_region
        %p153 = scmp.lt.s32.totalorder %s10, 2
        %s154 = scalar_select %p153, %s10, 2
        %s155 = smul.addr %s154, 2
        %s156 = smul.addr %s155, 4
        %s157 = scalar_lea.vmem %s0, %s156
      $region28: #{resnet_forward.9} parent=23 // pred_fallthru
        _
      // Predicated region
      $region29: #{resnet_forward.9} parent=23 // pred_check
        %p158 = pneg %p56
      $region30: #{resnet_forward.9} parent=23 // pred_check_branch
        %160 = sbr.rel (%p158) target = $region32
      $region31: #{resnet_forward.9} parent=23 // pred_region
        %p161 = scmp.lt.s32.totalorder %s10, 2
        %s162 = scalar_select %p161, %s10, 2
        %s163 = smul.addr %s162, 96
        %s164 = smul.addr %s163, 4
        %s165 = scalar_lea.vmem %s1, %s164
      $region32: #{resnet_forward.9} parent=23 // pred_fallthru
        _
    $region24: #{resnet_forward.9} parent=5 // pred_fallthru
      _
    %p166 = scmp.le.s32.totalorder 1, %s10
    %p167 = scmp.lt.s32.totalorder %s10, 4
    %p168 = pnand %p166, %p167
    %p169 = pneg %p168
    // Predicated region
    $region33: #{resnet_forward.9} parent=5 // pred_check
      _
    $region34: #{resnet_forward.9} parent=5 // pred_check_branch
      %171 = sbr.rel (%p168) target = $region36
    $region35: #{resnet_forward.9} parent=5 // pred_region
      %s172 = ssub.s32 %s10, 1
      %p173 = scmp.lt.s32.totalorder %s15, 2
      %s174 = scalar_select %p173, %s15, 2
      %s175 = smul.addr %s174, 2
      %s176 = smul.addr %s175, 4
      %s177 = scalar_lea.vmem %s0, %s176
      %p178 = pneg %p36
      %p179 = pneg %p33
      %p180 = scmp.lt.s32.totalorder %s15, 2
      %s181 = scalar_select %p180, %s15, 2
      %s182 = smul.addr %s181, 96
      %s183 = smul.addr %s182, 4
      %s184 = scalar_lea.vmem %s1, %s183
      %p185 = pneg %p62
      %p186 = pneg %p59
      %p187 = pneg %p83
      %p188 = pneg %p80
      %p189 = pneg %p104
      %p190 = pneg %p101
      %p191 = pneg %p125
      %p192 = pneg %p122
      %p193 = scmp.lt.s32.totalorder %s15, 2
      %s194 = scalar_select %p193, %s15, 2
      %s195 = smul.addr %s194, 2
      %s196 = smul.addr %s195, 4
      %s197 = scalar_lea.vmem %s0, %s196
      %p198 = scmp.lt.s32.totalorder %s15, 2
      %s199 = scalar_select %p198, %s15, 2
      %s200 = smul.addr %s199, 96
      %s201 = smul.addr %s200, 4
      %s202 = scalar_lea.vmem %s1, %s201
      %p204 = scmp.eq.s32.totalorder %s15, 0
      // Predicated region
      $region37: #{resnet_forward.9} parent=35 // pred_check
        %p205 = pneg %p204
      $region38: #{resnet_forward.9} parent=35 // pred_check_branch
        %207 = sbr.rel (%p205) target = $region40
      $region39: #{resnet_forward.9} parent=35 // pred_region
        %208 = vst [vmem:[#allocation2] sm:$0xff] 0.0
        %209 = vst [vmem:[#allocation2 + $0x8] sm:$0xff] 0.0
        %210 = vst [vmem:[#allocation2 + $0x10] sm:$0xff] 0.0
        %211 = vst [vmem:[#allocation2 + $0x18] sm:$0xff] 0.0
        %212 = vst [vmem:[#allocation2 + $0x20] sm:$0xff] 0.0
        %213 = vst [vmem:[#allocation2 + $0x28] sm:$0xff] 0.0
        %214 = vst [vmem:[#allocation2 + $0x30] sm:$0xff] 0.0
        %215 = vst [vmem:[#allocation2 + $0x38] sm:$0xff] 0.0
        %216 = vst [vmem:[#allocation2 + $0x40] sm:$0xff] 0.0
        %217 = vst [vmem:[#allocation2 + $0x48] sm:$0xff] 0.0
        %218 = vst [vmem:[#allocation2 + $0x50] sm:$0xff] 0.0
        %219 = vst [vmem:[#allocation2 + $0x58] sm:$0xff] 0.0
        %220 = vst [vmem:[#allocation2 + $0x60] sm:$0xff] 0.0
        %221 = vst [vmem:[#allocation2 + $0x68] sm:$0xff] 0.0
        %222 = vst [vmem:[#allocation2 + $0x70] sm:$0xff] 0.0
        %223 = vst [vmem:[#allocation2 + $0x78] sm:$0xff] 0.0
        %224 = vst [vmem:[#allocation2 + $0x80] sm:$0xff] 0.0
        %225 = vst [vmem:[#allocation2 + $0x88] sm:$0xff] 0.0
        %226 = vst [vmem:[#allocation2 + $0x90] sm:$0xff] 0.0
        %227 = vst [vmem:[#allocation2 + $0x98] sm:$0xff] 0.0
        %228 = vst [vmem:[#allocation2 + $0xa0] sm:$0xff] 0.0
        %229 = vst [vmem:[#allocation2 + $0xa8] sm:$0xff] 0.0
        %230 = vst [vmem:[#allocation2 + $0xb0] sm:$0xff] 0.0
        %231 = vst [vmem:[#allocation2 + $0xb8] sm:$0xff] 0.0
        %232 = vst [vmem:[#allocation2 + $0xc0] sm:$0xff] 0.0
        %233 = vst [vmem:[#allocation2 + $0xc8] sm:$0xff] 0.0
        %234 = vst [vmem:[#allocation2 + $0xd0] sm:$0xff] 0.0
        %235 = vst [vmem:[#allocation2 + $0xd8] sm:$0xff] 0.0
        %236 = vst [vmem:[#allocation2 + $0xe0] sm:$0xff] 0.0
        %237 = vst [vmem:[#allocation2 + $0xe8] sm:$0xff] 0.0
        %238 = vst [vmem:[#allocation2 + $0xf0] sm:$0xff] 0.0
        %239 = vst [vmem:[#allocation2 + $0xf8] sm:$0xff] 0.0
      $region40: #{resnet_forward.9} parent=35 // pred_fallthru
        _
      %v240 = vld [vmem:[#allocation2] sm:$0xff]
      %v241 = vld [vmem:[#allocation2 + $0x8] sm:$0xff]
      %v242 = vld [vmem:[#allocation2 + $0x10] sm:$0xff]
      %v243 = vld [vmem:[#allocation2 + $0x18] sm:$0xff]
      %v244 = vld [vmem:[#allocation2 + $0x20] sm:$0xff]
      %v245 = vld [vmem:[#allocation2 + $0x28] sm:$0xff]
      %v246 = vld [vmem:[#allocation2 + $0x30] sm:$0xff]
      %v247 = vld [vmem:[#allocation2 + $0x38] sm:$0xff]
      %v248 = vld [vmem:[#allocation2 + $0x40] sm:$0xff]
      %v249 = vld [vmem:[#allocation2 + $0x48] sm:$0xff]
      %v250 = vld [vmem:[#allocation2 + $0x50] sm:$0xff]
      %v251 = vld [vmem:[#allocation2 + $0x58] sm:$0xff]
      %v252 = vld [vmem:[#allocation2 + $0x60] sm:$0xff]
      %v253 = vld [vmem:[#allocation2 + $0x68] sm:$0xff]
      %v254 = vld [vmem:[#allocation2 + $0x70] sm:$0xff]
      %v255 = vld [vmem:[#allocation2 + $0x78] sm:$0xff]
      %v256 = vld [vmem:[#allocation2 + $0x80] sm:$0xff]
      %v257 = vld [vmem:[#allocation2 + $0x88] sm:$0xff]
      %v258 = vld [vmem:[#allocation2 + $0x90] sm:$0xff]
      %v259 = vld [vmem:[#allocation2 + $0x98] sm:$0xff]
      %v260 = vld [vmem:[#allocation2 + $0xa0] sm:$0xff]
      %v261 = vld [vmem:[#allocation2 + $0xa8] sm:$0xff]
      %v262 = vld [vmem:[#allocation2 + $0xb0] sm:$0xff]
      %v263 = vld [vmem:[#allocation2 + $0xb8] sm:$0xff]
      %v264 = vld [vmem:[#allocation2 + $0xc0] sm:$0xff]
      %v265 = vld [vmem:[#allocation2 + $0xc8] sm:$0xff]
      %v266 = vld [vmem:[#allocation2 + $0xd0] sm:$0xff]
      %v267 = vld [vmem:[#allocation2 + $0xd8] sm:$0xff]
      %v268 = vld [vmem:[#allocation2 + $0xe0] sm:$0xff]
      %v269 = vld [vmem:[#allocation2 + $0xe8] sm:$0xff]
      %v270 = vld [vmem:[#allocation2 + $0xf0] sm:$0xff]
      %v271 = vld [vmem:[#allocation2 + $0xf8] sm:$0xff]
      %v272 = vld [vmem:[%s197] sm:$0xf]
      %v273 = vld [vmem:[%s197 + $0x4] sm:$0xf]
      %v274 = vld [vmem:[%s202] sm:$0xff]
      %v275 = vld [vmem:[%s202 + $0x8] sm:$0xff]
      %v276 = vld [vmem:[%s202 + $0x10] sm:$0xff]
      %v277 = vld [vmem:[%s202 + $0x18] sm:$0xff]
      %v278 = vld [vmem:[%s202 + $0x20] sm:$0xff]
      %v279 = vld [vmem:[%s202 + $0x28] sm:$0xff]
      %v280 = vld [vmem:[%s202 + $0x30] sm:$0xff]
      %v281 = vld [vmem:[%s202 + $0x38] sm:$0xff]
      %v282 = vld [vmem:[%s202 + $0x40] sm:$0xff]
      %v283 = vld [vmem:[%s202 + $0x48] sm:$0xff]
      %v284 = vld [vmem:[%s202 + $0x50] sm:$0xff]
      %v285 = vld [vmem:[%s202 + $0x58] sm:$0xff]
      %v286 = vld [vmem:[%s202 + $0x60] sm:$0xff]
      %v287 = vld [vmem:[%s202 + $0x68] sm:$0xff]
      %v288 = vld [vmem:[%s202 + $0x70] sm:$0xff]
      %v289 = vld [vmem:[%s202 + $0x78] sm:$0xff]
      %v290 = vld [vmem:[%s202 + $0x80] sm:$0xff]
      %v291 = vld [vmem:[%s202 + $0x88] sm:$0xff]
      %v292 = vld [vmem:[%s202 + $0x90] sm:$0xff]
      %v293 = vld [vmem:[%s202 + $0x98] sm:$0xff]
      %v294 = vld [vmem:[%s202 + $0xa0] sm:$0xff]
      %v295 = vld [vmem:[%s202 + $0xa8] sm:$0xff]
      %v296 = vld [vmem:[%s202 + $0xb0] sm:$0xff]
      %v297 = vld [vmem:[%s202 + $0xb8] sm:$0xff]
      %v298 = vld [vmem:[%s202 + $0xc0] sm:$0xff]
      %v299 = vld [vmem:[%s202 + $0xc8] sm:$0xff]
      %v300 = vld [vmem:[%s202 + $0xd0] sm:$0xff]
      %v301 = vld [vmem:[%s202 + $0xd8] sm:$0xff]
      %v302 = vld [vmem:[%s202 + $0xe0] sm:$0xff]
      %v303 = vld [vmem:[%s202 + $0xe8] sm:$0xff]
      %v304 = vld [vmem:[%s202 + $0xf0] sm:$0xff]
      %v305 = vld [vmem:[%s202 + $0xf8] sm:$0xff]
      %v306 = vld [vmem:[%s202 + $0x100] sm:$0xff]
      %v307 = vld [vmem:[%s202 + $0x108] sm:$0xff]
      %v308 = vld [vmem:[%s202 + $0x110] sm:$0xff]
      %v309 = vld [vmem:[%s202 + $0x118] sm:$0xff]
      %v310 = vld [vmem:[%s202 + $0x120] sm:$0xff]
      %v311 = vld [vmem:[%s202 + $0x128] sm:$0xff]
      %v312 = vld [vmem:[%s202 + $0x130] sm:$0xff]
      %v313 = vld [vmem:[%s202 + $0x138] sm:$0xff]
      %v314 = vld [vmem:[%s202 + $0x140] sm:$0xff]
      %v315 = vld [vmem:[%s202 + $0x148] sm:$0xff]
      %v316 = vld [vmem:[%s202 + $0x150] sm:$0xff]
      %v317 = vld [vmem:[%s202 + $0x158] sm:$0xff]
      %v318 = vld [vmem:[%s202 + $0x160] sm:$0xff]
      %v319 = vld [vmem:[%s202 + $0x168] sm:$0xff]
      %v320 = vld [vmem:[%s202 + $0x170] sm:$0xff]
      %v321 = vld [vmem:[%s202 + $0x178] sm:$0xff]
      %v324 = vunpack.c.l.b16 %v272
      %v325 = vunpack.c.l.b16 %v273
      %v326 = vpack.c.b16 %v325, %v324
      %v375 = vunpack.c.l.b16 %v274
      %v376 = vunpack.c.h.b16 %v274
      %v377 = vunpack.c.l.b16 %v275
      %v378 = vunpack.c.h.b16 %v275
      %v379 = vunpack.c.l.b16 %v276
      %v380 = vunpack.c.h.b16 %v276
      %v381 = vunpack.c.l.b16 %v277
      %v382 = vunpack.c.h.b16 %v277
      %v383 = vunpack.c.l.b16 %v278
      %v384 = vunpack.c.h.b16 %v278
      %v385 = vunpack.c.l.b16 %v279
      %v386 = vunpack.c.h.b16 %v279
      %v387 = vunpack.c.l.b16 %v280
      %v388 = vunpack.c.h.b16 %v280
      %v389 = vunpack.c.l.b16 %v281
      %v390 = vunpack.c.h.b16 %v281
      %v391 = vunpack.c.l.b16 %v282
      %v392 = vunpack.c.h.b16 %v282
      %v393 = vunpack.c.l.b16 %v283
      %v394 = vunpack.c.h.b16 %v283
      %v395 = vunpack.c.l.b16 %v284
      %v396 = vunpack.c.h.b16 %v284
      %v397 = vunpack.c.l.b16 %v285
      %v398 = vunpack.c.h.b16 %v285
      %v399 = vunpack.c.l.b16 %v286
      %v400 = vunpack.c.h.b16 %v286
      %v401 = vunpack.c.l.b16 %v287
      %v402 = vunpack.c.h.b16 %v287
      %v403 = vunpack.c.l.b16 %v288
      %v404 = vunpack.c.h.b16 %v288
      %v405 = vunpack.c.l.b16 %v289
      %v406 = vunpack.c.h.b16 %v289
      %v407 = vunpack.c.l.b16 %v290
      %v408 = vunpack.c.h.b16 %v290
      %v409 = vunpack.c.l.b16 %v291
      %v410 = vunpack.c.h.b16 %v291
      %v411 = vunpack.c.l.b16 %v292
      %v412 = vunpack.c.h.b16 %v292
      %v413 = vunpack.c.l.b16 %v293
      %v414 = vunpack.c.h.b16 %v293
      %v415 = vunpack.c.l.b16 %v294
      %v416 = vunpack.c.h.b16 %v294
      %v417 = vunpack.c.l.b16 %v295
      %v418 = vunpack.c.h.b16 %v295
      %v419 = vunpack.c.l.b16 %v296
      %v420 = vunpack.c.h.b16 %v296
      %v421 = vunpack.c.l.b16 %v297
      %v422 = vunpack.c.h.b16 %v297
      %v423 = vunpack.c.l.b16 %v298
      %v424 = vunpack.c.h.b16 %v298
      %v425 = vunpack.c.l.b16 %v299
      %v426 = vunpack.c.h.b16 %v299
      %v427 = vunpack.c.l.b16 %v300
      %v428 = vunpack.c.h.b16 %v300
      %v429 = vunpack.c.l.b16 %v301
      %v430 = vunpack.c.h.b16 %v301
      %v431 = vunpack.c.l.b16 %v302
      %v432 = vunpack.c.h.b16 %v302
      %v433 = vunpack.c.l.b16 %v303
      %v434 = vunpack.c.h.b16 %v303
      %v435 = vunpack.c.l.b16 %v304
      %v436 = vunpack.c.h.b16 %v304
      %v437 = vunpack.c.l.b16 %v305
      %v438 = vunpack.c.h.b16 %v305
      %v439 = vunpack.c.l.b16 %v306
      %v440 = vunpack.c.h.b16 %v306
      %v441 = vunpack.c.l.b16 %v307
      %v442 = vunpack.c.h.b16 %v307
      %v443 = vunpack.c.l.b16 %v308
      %v444 = vunpack.c.h.b16 %v308
      %v445 = vunpack.c.l.b16 %v309
      %v446 = vunpack.c.h.b16 %v309
      %v447 = vunpack.c.l.b16 %v310
      %v448 = vunpack.c.h.b16 %v310
      %v449 = vunpack.c.l.b16 %v311
      %v450 = vunpack.c.h.b16 %v311
      %v451 = vunpack.c.l.b16 %v312
      %v452 = vunpack.c.h.b16 %v312
      %v453 = vunpack.c.l.b16 %v313
      %v454 = vunpack.c.h.b16 %v313
      %v455 = vunpack.c.l.b16 %v314
      %v456 = vunpack.c.h.b16 %v314
      %v457 = vunpack.c.l.b16 %v315
      %v458 = vunpack.c.h.b16 %v315
      %v459 = vunpack.c.l.b16 %v316
      %v460 = vunpack.c.h.b16 %v316
      %v461 = vunpack.c.l.b16 %v317
      %v462 = vunpack.c.h.b16 %v317
      %v463 = vunpack.c.l.b16 %v318
      %v464 = vunpack.c.h.b16 %v318
      %v465 = vunpack.c.l.b16 %v319
      %v466 = vunpack.c.h.b16 %v319
      %v467 = vunpack.c.l.b16 %v320
      %v468 = vunpack.c.h.b16 %v320
      %v469 = vunpack.c.l.b16 %v321
      %v470 = vunpack.c.h.b16 %v321
      %v471 = vpack.c.b16 %v391, %v375
      %v472 = vpack.c.b16 %v392, %v376
      %v473 = vpack.c.b16 %v393, %v377
      %v474 = vpack.c.b16 %v394, %v378
      %v475 = vpack.c.b16 %v395, %v379
      %v476 = vpack.c.b16 %v396, %v380
      %v477 = vpack.c.b16 %v397, %v381
      %v478 = vpack.c.b16 %v398, %v382
      %v479 = vpack.c.b16 %v399, %v383
      %v480 = vpack.c.b16 %v400, %v384
      %v481 = vpack.c.b16 %v401, %v385
      %v482 = vpack.c.b16 %v402, %v386
      %v483 = vpack.c.b16 %v403, %v387
      %v484 = vpack.c.b16 %v404, %v388
      %v485 = vpack.c.b16 %v405, %v389
      %v486 = vpack.c.b16 %v406, %v390
      %v487 = vpack.c.b16 %v423, %v407
      %v488 = vpack.c.b16 %v424, %v408
      %v489 = vpack.c.b16 %v425, %v409
      %v490 = vpack.c.b16 %v426, %v410
      %v491 = vpack.c.b16 %v427, %v411
      %v492 = vpack.c.b16 %v428, %v412
      %v493 = vpack.c.b16 %v429, %v413
      %v494 = vpack.c.b16 %v430, %v414
      %v495 = vpack.c.b16 %v431, %v415
      %v496 = vpack.c.b16 %v432, %v416
      %v497 = vpack.c.b16 %v433, %v417
      %v498 = vpack.c.b16 %v434, %v418
      %v499 = vpack.c.b16 %v435, %v419
      %v500 = vpack.c.b16 %v436, %v420
      %v501 = vpack.c.b16 %v437, %v421
      %v502 = vpack.c.b16 %v438, %v422
      %v503 = vpack.c.b16 %v455, %v439
      %v504 = vpack.c.b16 %v456, %v440
      %v505 = vpack.c.b16 %v457, %v441
      %v506 = vpack.c.b16 %v458, %v442
      %v507 = vpack.c.b16 %v459, %v443
      %v508 = vpack.c.b16 %v460, %v444
      %v509 = vpack.c.b16 %v461, %v445
      %v510 = vpack.c.b16 %v462, %v446
      %v511 = vpack.c.b16 %v463, %v447
      %v512 = vpack.c.b16 %v464, %v448
      %v513 = vpack.c.b16 %v465, %v449
      %v514 = vpack.c.b16 %v466, %v450
      %v515 = vpack.c.b16 %v467, %v451
      %v516 = vpack.c.b16 %v468, %v452
      %v517 = vpack.c.b16 %v469, %v453
      %v518 = vpack.c.b16 %v470, %v454
      %vm567 = vcmask 392192
      %v569 = vsel %vm567, %v326, 0
      %571 = vmatprep.subr.bf16.mxu0 %v472
      %572 = vmatpush1.bf16.msra.mxu0 %v471
      %573 = vmatprep.subr.bf16.mxu0 %v488
      %574 = vmatpush1.bf16.msra.mxu0 %v487
      %575 = vmatprep.subr.bf16.mxu0 %v504
      %576 = vmatpush1.bf16.msra.mxu0 %v503
      %577 = vmatprep.subr.bf16.mxu0 0
      %578 = vmatpush1.bf16.msra.mxu0 0
      %579 = vmatprep.subr.bf16.mxu0 0
      %580 = vmatpush1.bf16.msra.mxu0 0
      %581 = vmatprep.subr.bf16.mxu0 0
      %582 = vmatpush1.bf16.msra.mxu0 0
      %583 = vmatprep.subr.bf16.mxu0 0
      %584 = vmatpush1.bf16.msra.mxu0 0
      %585 = vmatprep.subr.bf16.mxu0 0
      %586 = vmatpush1.bf16.msra.mxu0 0
      %587 = vmatprep.subr.bf16.mxu0 0
      %588 = vmatpush1.bf16.msra.mxu0 0
      %589 = vmatprep.subr.bf16.mxu0 0
      %590 = vmatpush1.bf16.msra.mxu0 0
      %591 = vmatprep.subr.bf16.mxu0 0
      %592 = vmatpush1.bf16.msra.mxu0 0
      %593 = vmatprep.subr.bf16.mxu0 0
      %594 = vmatpush1.bf16.msra.mxu0 0
      %595 = vmatprep.subr.bf16.mxu0 0
      %596 = vmatpush1.bf16.msra.mxu0 0
      %597 = vmatprep.subr.bf16.mxu0 0
      %598 = vmatpush1.bf16.msra.mxu0 0
      %599 = vmatprep.subr.bf16.mxu0 0
      %600 = vmatpush1.bf16.msra.mxu0 0
      %601 = vmatprep.subr.bf16.mxu0 0
      %602 = vmatpush1.bf16.msra.mxu0 0
      %603 = vmatprep.mubr.bf16.mxu0 0
      %604 = vmatmul.mubr.bf16.gmra.mrb[0].mxu0 %v569
      %v605 = vpop.f32.mrb[0].mxu0
      %v606 = vadd.f32 0.0, %v605
      %v607 = vpop.f32.mrb[0].mxu0
      %v608 = vadd.f32 0.0, %v607
      %v609 = vpop.f32.mrb[0].mxu0
      %v610 = vadd.f32 0.0, %v609
      %v611 = vpop.f32.mrb[0].mxu0
      %v612 = vadd.f32 0.0, %v611
      %613 = vdwg.mxu0
      %614 = vmatprep.subr.bf16.mxu0 %v474
      %615 = vmatpush1.bf16.msra.mxu0 %v473
      %616 = vmatprep.subr.bf16.mxu0 %v490
      %617 = vmatpush1.bf16.msra.mxu0 %v489
      %618 = vmatprep.subr.bf16.mxu0 %v506
      %619 = vmatpush1.bf16.msra.mxu0 %v505
      %620 = vmatprep.subr.bf16.mxu0 0
      %621 = vmatpush1.bf16.msra.mxu0 0
      %622 = vmatprep.subr.bf16.mxu0 0
      %623 = vmatpush1.bf16.msra.mxu0 0
      %624 = vmatprep.subr.bf16.mxu0 0
      %625 = vmatpush1.bf16.msra.mxu0 0
      %626 = vmatprep.subr.bf16.mxu0 0
      %627 = vmatpush1.bf16.msra.mxu0 0
      %628 = vmatprep.subr.bf16.mxu0 0
      %629 = vmatpush1.bf16.msra.mxu0 0
      %630 = vmatprep.subr.bf16.mxu0 0
      %631 = vmatpush1.bf16.msra.mxu0 0
      %632 = vmatprep.subr.bf16.mxu0 0
      %633 = vmatpush1.bf16.msra.mxu0 0
      %634 = vmatprep.subr.bf16.mxu0 0
      %635 = vmatpush1.bf16.msra.mxu0 0
      %636 = vmatprep.subr.bf16.mxu0 0
      %637 = vmatpush1.bf16.msra.mxu0 0
      %638 = vmatprep.subr.bf16.mxu0 0
      %639 = vmatpush1.bf16.msra.mxu0 0
      %640 = vmatprep.subr.bf16.mxu0 0
      %641 = vmatpush1.bf16.msra.mxu0 0
      %642 = vmatprep.subr.bf16.mxu0 0
      %643 = vmatpush1.bf16.msra.mxu0 0
      %644 = vmatprep.subr.bf16.mxu0 0
      %645 = vmatpush1.bf16.msra.mxu0 0
      %646 = vmatprep.mubr.bf16.mxu0 0
      %647 = vmatmul.mubr.bf16.gmra.mrb[0].mxu0 %v569
      %v648 = vpop.f32.mrb[0].mxu0
      %v649 = vadd.f32 0.0, %v648
      %v650 = vpop.f32.mrb[0].mxu0
      %v651 = vadd.f32 0.0, %v650
      %v652 = vpop.f32.mrb[0].mxu0
      %v653 = vadd.f32 0.0, %v652
      %v654 = vpop.f32.mrb[0].mxu0
      %v655 = vadd.f32 0.0, %v654
      %656 = vdwg.mxu0
      %657 = vmatprep.subr.bf16.mxu0 %v476
      %658 = vmatpush1.bf16.msra.mxu0 %v475
      %659 = vmatprep.subr.bf16.mxu0 %v492
      %660 = vmatpush1.bf16.msra.mxu0 %v491
      %661 = vmatprep.subr.bf16.mxu0 %v508
      %662 = vmatpush1.bf16.msra.mxu0 %v507
      %663 = vmatprep.subr.bf16.mxu0 0
      %664 = vmatpush1.bf16.msra.mxu0 0
      %665 = vmatprep.subr.bf16.mxu0 0
      %666 = vmatpush1.bf16.msra.mxu0 0
      %667 = vmatprep.subr.bf16.mxu0 0
      %668 = vmatpush1.bf16.msra.mxu0 0
      %669 = vmatprep.subr.bf16.mxu0 0
      %670 = vmatpush1.bf16.msra.mxu0 0
      %671 = vmatprep.subr.bf16.mxu0 0
      %672 = vmatpush1.bf16.msra.mxu0 0
      %673 = vmatprep.subr.bf16.mxu0 0
      %674 = vmatpush1.bf16.msra.mxu0 0
      %675 = vmatprep.subr.bf16.mxu0 0
      %676 = vmatpush1.bf16.msra.mxu0 0
      %677 = vmatprep.subr.bf16.mxu0 0
      %678 = vmatpush1.bf16.msra.mxu0 0
      %679 = vmatprep.subr.bf16.mxu0 0
      %680 = vmatpush1.bf16.msra.mxu0 0
      %681 = vmatprep.subr.bf16.mxu0 0
      %682 = vmatpush1.bf16.msra.mxu0 0
      %683 = vmatprep.subr.bf16.mxu0 0
      %684 = vmatpush1.bf16.msra.mxu0 0
      %685 = vmatprep.subr.bf16.mxu0 0
      %686 = vmatpush1.bf16.msra.mxu0 0
      %687 = vmatprep.subr.bf16.mxu0 0
      %688 = vmatpush1.bf16.msra.mxu0 0
      %689 = vmatprep.mubr.bf16.mxu0 0
      %690 = vmatmul.mubr.bf16.gmra.mrb[0].mxu0 %v569
      %v691 = vpop.f32.mrb[0].mxu0
      %v692 = vadd.f32 0.0, %v691
      %v693 = vpop.f32.mrb[0].mxu0
      %v694 = vadd.f32 0.0, %v693
      %v695 = vpop.f32.mrb[0].mxu0
      %v696 = vadd.f32 0.0, %v695
      %v697 = vpop.f32.mrb[0].mxu0
      %v698 = vadd.f32 0.0, %v697
      %699 = vdwg.mxu0
      %700 = vmatprep.subr.bf16.mxu0 %v478
      %701 = vmatpush1.bf16.msra.mxu0 %v477
      %702 = vmatprep.subr.bf16.mxu0 %v494
      %703 = vmatpush1.bf16.msra.mxu0 %v493
      %704 = vmatprep.subr.bf16.mxu0 %v510
      %705 = vmatpush1.bf16.msra.mxu0 %v509
      %706 = vmatprep.subr.bf16.mxu0 0
      %707 = vmatpush1.bf16.msra.mxu0 0
      %708 = vmatprep.subr.bf16.mxu0 0
      %709 = vmatpush1.bf16.msra.mxu0 0
      %710 = vmatprep.subr.bf16.mxu0 0
      %711 = vmatpush1.bf16.msra.mxu0 0
      %712 = vmatprep.subr.bf16.mxu0 0
      %713 = vmatpush1.bf16.msra.mxu0 0
      %714 = vmatprep.subr.bf16.mxu0 0
      %715 = vmatpush1.bf16.msra.mxu0 0
      %716 = vmatprep.subr.bf16.mxu0 0
      %717 = vmatpush1.bf16.msra.mxu0 0
      %718 = vmatprep.subr.bf16.mxu0 0
      %719 = vmatpush1.bf16.msra.mxu0 0
      %720 = vmatprep.subr.bf16.mxu0 0
      %721 = vmatpush1.bf16.msra.mxu0 0
      %722 = vmatprep.subr.bf16.mxu0 0
      %723 = vmatpush1.bf16.msra.mxu0 0
      %724 = vmatprep.subr.bf16.mxu0 0
      %725 = vmatpush1.bf16.msra.mxu0 0
      %726 = vmatprep.subr.bf16.mxu0 0
      %727 = vmatpush1.bf16.msra.mxu0 0
      %728 = vmatprep.subr.bf16.mxu0 0
      %729 = vmatpush1.bf16.msra.mxu0 0
      %730 = vmatprep.subr.bf16.mxu0 0
      %731 = vmatpush1.bf16.msra.mxu0 0
      %732 = vmatprep.mubr.bf16.mxu0 0
      %733 = vmatmul.mubr.bf16.gmra.mrb[0].mxu0 %v569
      %v734 = vpop.f32.mrb[0].mxu0
      %v735 = vadd.f32 0.0, %v734
      %v736 = vpop.f32.mrb[0].mxu0
      %v737 = vadd.f32 0.0, %v736
      %v738 = vpop.f32.mrb[0].mxu0
      %v739 = vadd.f32 0.0, %v738
      %v740 = vpop.f32.mrb[0].mxu0
      %v741 = vadd.f32 0.0, %v740
      %742 = vdwg.mxu0
      %743 = vmatprep.subr.bf16.mxu0 %v480
      %744 = vmatpush1.bf16.msra.mxu0 %v479
      %745 = vmatprep.subr.bf16.mxu0 %v496
      %746 = vmatpush1.bf16.msra.mxu0 %v495
      %747 = vmatprep.subr.bf16.mxu0 %v512
      %748 = vmatpush1.bf16.msra.mxu0 %v511
      %749 = vmatprep.subr.bf16.mxu0 0
      %750 = vmatpush1.bf16.msra.mxu0 0
      %751 = vmatprep.subr.bf16.mxu0 0
      %752 = vmatpush1.bf16.msra.mxu0 0
      %753 = vmatprep.subr.bf16.mxu0 0
      %754 = vmatpush1.bf16.msra.mxu0 0
      %755 = vmatprep.subr.bf16.mxu0 0
      %756 = vmatpush1.bf16.msra.mxu0 0
      %757 = vmatprep.subr.bf16.mxu0 0
      %758 = vmatpush1.bf16.msra.mxu0 0
      %759 = vmatprep.subr.bf16.mxu0 0
      %760 = vmatpush1.bf16.msra.mxu0 0
      %761 = vmatprep.subr.bf16.mxu0 0
      %762 = vmatpush1.bf16.msra.mxu0 0
      %763 = vmatprep.subr.bf16.mxu0 0
      %764 = vmatpush1.bf16.msra.mxu0 0
      %765 = vmatprep.subr.bf16.mxu0 0
      %766 = vmatpush1.bf16.msra.mxu0 0
      %767 = vmatprep.subr.bf16.mxu0 0
      %768 = vmatpush1.bf16.msra.mxu0 0
      %769 = vmatprep.subr.bf16.mxu0 0
      %770 = vmatpush1.bf16.msra.mxu0 0
      %771 = vmatprep.subr.bf16.mxu0 0
      %772 = vmatpush1.bf16.msra.mxu0 0
      %773 = vmatprep.subr.bf16.mxu0 0
      %774 = vmatpush1.bf16.msra.mxu0 0
      %775 = vmatprep.mubr.bf16.mxu0 0
      %776 = vmatmul.mubr.bf16.gmra.mrb[0].mxu0 %v569
      %v777 = vpop.f32.mrb[0].mxu0
      %v778 = vadd.f32 0.0, %v777
      %v779 = vpop.f32.mrb[0].mxu0
      %v780 = vadd.f32 0.0, %v779
      %v781 = vpop.f32.mrb[0].mxu0
      %v782 = vadd.f32 0.0, %v781
      %v783 = vpop.f32.mrb[0].mxu0
      %v784 = vadd.f32 0.0, %v783
      %785 = vdwg.mxu0
      %786 = vmatprep.subr.bf16.mxu0 %v482
      %787 = vmatpush1.bf16.msra.mxu0 %v481
      %788 = vmatprep.subr.bf16.mxu0 %v498
      %789 = vmatpush1.bf16.msra.mxu0 %v497
      %790 = vmatprep.subr.bf16.mxu0 %v514
      %791 = vmatpush1.bf16.msra.mxu0 %v513
      %792 = vmatprep.subr.bf16.mxu0 0
      %793 = vmatpush1.bf16.msra.mxu0 0
      %794 = vmatprep.subr.bf16.mxu0 0
      %795 = vmatpush1.bf16.msra.mxu0 0
      %796 = vmatprep.subr.bf16.mxu0 0
      %797 = vmatpush1.bf16.msra.mxu0 0
      %798 = vmatprep.subr.bf16.mxu0 0
      %799 = vmatpush1.bf16.msra.mxu0 0
      %800 = vmatprep.subr.bf16.mxu0 0
      %801 = vmatpush1.bf16.msra.mxu0 0
      %802 = vmatprep.subr.bf16.mxu0 0
      %803 = vmatpush1.bf16.msra.mxu0 0
      %804 = vmatprep.subr.bf16.mxu0 0
      %805 = vmatpush1.bf16.msra.mxu0 0
      %806 = vmatprep.subr.bf16.mxu0 0
      %807 = vmatpush1.bf16.msra.mxu0 0
      %808 = vmatprep.subr.bf16.mxu0 0
      %809 = vmatpush1.bf16.msra.mxu0 0
      %810 = vmatprep.subr.bf16.mxu0 0
      %811 = vmatpush1.bf16.msra.mxu0 0
      %812 = vmatprep.subr.bf16.mxu0 0
      %813 = vmatpush1.bf16.msra.mxu0 0
      %814 = vmatprep.subr.bf16.mxu0 0
      %815 = vmatpush1.bf16.msra.mxu0 0
      %816 = vmatprep.subr.bf16.mxu0 0
      %817 = vmatpush1.bf16.msra.mxu0 0
      %818 = vmatprep.mubr.bf16.mxu0 0
      %819 = vmatmul.mubr.bf16.gmra.mrb[0].mxu0 %v569
      %v820 = vpop.f32.mrb[0].mxu0
      %v821 = vadd.f32 0.0, %v820
      %v822 = vpop.f32.mrb[0].mxu0
      %v823 = vadd.f32 0.0, %v822
      %v824 = vpop.f32.mrb[0].mxu0
      %v825 = vadd.f32 0.0, %v824
      %v826 = vpop.f32.mrb[0].mxu0
      %v827 = vadd.f32 0.0, %v826
      %828 = vdwg.mxu0
      %829 = vmatprep.subr.bf16.mxu0 %v484
      %830 = vmatpush1.bf16.msra.mxu0 %v483
      %831 = vmatprep.subr.bf16.mxu0 %v500
      %832 = vmatpush1.bf16.msra.mxu0 %v499
      %833 = vmatprep.subr.bf16.mxu0 %v516
      %834 = vmatpush1.bf16.msra.mxu0 %v515
      %835 = vmatprep.subr.bf16.mxu0 0
      %836 = vmatpush1.bf16.msra.mxu0 0
      %837 = vmatprep.subr.bf16.mxu0 0
      %838 = vmatpush1.bf16.msra.mxu0 0
      %839 = vmatprep.subr.bf16.mxu0 0
      %840 = vmatpush1.bf16.msra.mxu0 0
      %841 = vmatprep.subr.bf16.mxu0 0
      %842 = vmatpush1.bf16.msra.mxu0 0
      %843 = vmatprep.subr.bf16.mxu0 0
      %844 = vmatpush1.bf16.msra.mxu0 0
      %845 = vmatprep.subr.bf16.mxu0 0
      %846 = vmatpush1.bf16.msra.mxu0 0
      %847 = vmatprep.subr.bf16.mxu0 0
      %848 = vmatpush1.bf16.msra.mxu0 0
      %849 = vmatprep.subr.bf16.mxu0 0
      %850 = vmatpush1.bf16.msra.mxu0 0
      %851 = vmatprep.subr.bf16.mxu0 0
      %852 = vmatpush1.bf16.msra.mxu0 0
      %853 = vmatprep.subr.bf16.mxu0 0
      %854 = vmatpush1.bf16.msra.mxu0 0
      %855 = vmatprep.subr.bf16.mxu0 0
      %856 = vmatpush1.bf16.msra.mxu0 0
      %857 = vmatprep.subr.bf16.mxu0 0
      %858 = vmatpush1.bf16.msra.mxu0 0
      %859 = vmatprep.subr.bf16.mxu0 0
      %860 = vmatpush1.bf16.msra.mxu0 0
      %861 = vmatprep.mubr.bf16.mxu0 0
      %862 = vmatmul.mubr.bf16.gmra.mrb[0].mxu0 %v569
      %v863 = vpop.f32.mrb[0].mxu0
      %v864 = vadd.f32 0.0, %v863
      %v865 = vpop.f32.mrb[0].mxu0
      %v866 = vadd.f32 0.0, %v865
      %v867 = vpop.f32.mrb[0].mxu0
      %v868 = vadd.f32 0.0, %v867
      %v869 = vpop.f32.mrb[0].mxu0
      %v870 = vadd.f32 0.0, %v869
      %871 = vdwg.mxu0
      %872 = vmatprep.subr.bf16.mxu0 %v486
      %873 = vmatpush1.bf16.msra.mxu0 %v485
      %874 = vmatprep.subr.bf16.mxu0 %v502
      %875 = vmatpush1.bf16.msra.mxu0 %v501
      %876 = vmatprep.subr.bf16.mxu0 %v518
      %877 = vmatpush1.bf16.msra.mxu0 %v517
      %878 = vmatprep.subr.bf16.mxu0 0
      %879 = vmatpush1.bf16.msra.mxu0 0
      %880 = vmatprep.subr.bf16.mxu0 0
      %881 = vmatpush1.bf16.msra.mxu0 0
      %882 = vmatprep.subr.bf16.mxu0 0
      %883 = vmatpush1.bf16.msra.mxu0 0
      %884 = vmatprep.subr.bf16.mxu0 0
      %885 = vmatpush1.bf16.msra.mxu0 0
      %886 = vmatprep.subr.bf16.mxu0 0
      %887 = vmatpush1.bf16.msra.mxu0 0
      %888 = vmatprep.subr.bf16.mxu0 0
      %889 = vmatpush1.bf16.msra.mxu0 0
      %890 = vmatprep.subr.bf16.mxu0 0
      %891 = vmatpush1.bf16.msra.mxu0 0
      %892 = vmatprep.subr.bf16.mxu0 0
      %893 = vmatpush1.bf16.msra.mxu0 0
      %894 = vmatprep.subr.bf16.mxu0 0
      %895 = vmatpush1.bf16.msra.mxu0 0
      %896 = vmatprep.subr.bf16.mxu0 0
      %897 = vmatpush1.bf16.msra.mxu0 0
      %898 = vmatprep.subr.bf16.mxu0 0
      %899 = vmatpush1.bf16.msra.mxu0 0
      %900 = vmatprep.subr.bf16.mxu0 0
      %901 = vmatpush1.bf16.msra.mxu0 0
      %902 = vmatprep.subr.bf16.mxu0 0
      %903 = vmatpush1.bf16.msra.mxu0 0
      %904 = vmatprep.mubr.bf16.mxu0 0
      %905 = vmatmul.mubr.bf16.gmra.mrb[0].mxu0 %v569
      %v906 = vpop.f32.mrb[0].mxu0
      %v907 = vadd.f32 0.0, %v906
      %v908 = vpop.f32.mrb[0].mxu0
      %v909 = vadd.f32 0.0, %v908
      %v910 = vpop.f32.mrb[0].mxu0
      %v911 = vadd.f32 0.0, %v910
      %v912 = vpop.f32.mrb[0].mxu0
      %v913 = vadd.f32 0.0, %v912
      %914 = vdwg.mxu0
      %v915 = vadd.f32 %v240, %v606
      %v916 = vadd.f32 %v241, %v608
      %v917 = vadd.f32 %v242, %v649
      %v918 = vadd.f32 %v243, %v651
      %v919 = vadd.f32 %v244, %v692
      %v920 = vadd.f32 %v245, %v694
      %v921 = vadd.f32 %v246, %v735
      %v922 = vadd.f32 %v247, %v737
      %v923 = vadd.f32 %v248, %v778
      %v924 = vadd.f32 %v249, %v780
      %v925 = vadd.f32 %v250, %v821
      %v926 = vadd.f32 %v251, %v823
      %v927 = vadd.f32 %v252, %v864
      %v928 = vadd.f32 %v253, %v866
      %v929 = vadd.f32 %v254, %v907
      %v930 = vadd.f32 %v255, %v909
      %v931 = vadd.f32 %v256, %v610
      %v932 = vadd.f32 %v257, %v612
      %v933 = vadd.f32 %v258, %v653
      %v934 = vadd.f32 %v259, %v655
      %v935 = vadd.f32 %v260, %v696
      %v936 = vadd.f32 %v261, %v698
      %v937 = vadd.f32 %v262, %v739
      %v938 = vadd.f32 %v263, %v741
      %v939 = vadd.f32 %v264, %v782
      %v940 = vadd.f32 %v265, %v784
      %v941 = vadd.f32 %v266, %v825
      %v942 = vadd.f32 %v267, %v827
      %v943 = vadd.f32 %v268, %v868
      %v944 = vadd.f32 %v269, %v870
      %v945 = vadd.f32 %v270, %v911
      %v946 = vadd.f32 %v271, %v913
      %947 = vst [vmem:[#allocation2] sm:$0xff] %v915
      %948 = vst [vmem:[#allocation2 + $0x8] sm:$0xff] %v916
      %949 = vst [vmem:[#allocation2 + $0x10] sm:$0xff] %v917
      %950 = vst [vmem:[#allocation2 + $0x18] sm:$0xff] %v918
      %951 = vst [vmem:[#allocation2 + $0x20] sm:$0xff] %v919
      %952 = vst [vmem:[#allocation2 + $0x28] sm:$0xff] %v920
      %953 = vst [vmem:[#allocation2 + $0x30] sm:$0xff] %v921
      %954 = vst [vmem:[#allocation2 + $0x38] sm:$0xff] %v922
      %955 = vst [vmem:[#allocation2 + $0x40] sm:$0xff] %v923
      %956 = vst [vmem:[#allocation2 + $0x48] sm:$0xff] %v924
      %957 = vst [vmem:[#allocation2 + $0x50] sm:$0xff] %v925
      %958 = vst [vmem:[#allocation2 + $0x58] sm:$0xff] %v926
      %959 = vst [vmem:[#allocation2 + $0x60] sm:$0xff] %v927
      %960 = vst [vmem:[#allocation2 + $0x68] sm:$0xff] %v928
      %961 = vst [vmem:[#allocation2 + $0x70] sm:$0xff] %v929
      %962 = vst [vmem:[#allocation2 + $0x78] sm:$0xff] %v930
      %963 = vst [vmem:[#allocation2 + $0x80] sm:$0xff] %v931
      %964 = vst [vmem:[#allocation2 + $0x88] sm:$0xff] %v932
      %965 = vst [vmem:[#allocation2 + $0x90] sm:$0xff] %v933
      %966 = vst [vmem:[#allocation2 + $0x98] sm:$0xff] %v934
      %967 = vst [vmem:[#allocation2 + $0xa0] sm:$0xff] %v935
      %968 = vst [vmem:[#allocation2 + $0xa8] sm:$0xff] %v936
      %969 = vst [vmem:[#allocation2 + $0xb0] sm:$0xff] %v937
      %970 = vst [vmem:[#allocation2 + $0xb8] sm:$0xff] %v938
      %971 = vst [vmem:[#allocation2 + $0xc0] sm:$0xff] %v939
      %972 = vst [vmem:[#allocation2 + $0xc8] sm:$0xff] %v940
      %973 = vst [vmem:[#allocation2 + $0xd0] sm:$0xff] %v941
      %974 = vst [vmem:[#allocation2 + $0xd8] sm:$0xff] %v942
      %975 = vst [vmem:[#allocation2 + $0xe0] sm:$0xff] %v943
      %976 = vst [vmem:[#allocation2 + $0xe8] sm:$0xff] %v944
      %977 = vst [vmem:[#allocation2 + $0xf0] sm:$0xff] %v945
      %978 = vst [vmem:[#allocation2 + $0xf8] sm:$0xff] %v946
      %p979 = scmp.eq.s32.totalorder %s15, 2
      // Predicated region
      $region41: #{resnet_forward.9} parent=35 // pred_check
        %p980 = pneg %p979
      $region42: #{resnet_forward.9} parent=35 // pred_check_branch
        %982 = sbr.rel (%p980) target = $region44
      $region43: #{resnet_forward.9} parent=35 // pred_region
        %v983 = vld [vmem:[#allocation2] sm:$0xff]
        %v984 = vld [vmem:[#allocation2 + $0x8] sm:$0xff]
        %v985 = vld [vmem:[#allocation2 + $0x10] sm:$0xff]
        %v986 = vld [vmem:[#allocation2 + $0x18] sm:$0xff]
        %v987 = vld [vmem:[#allocation2 + $0x20] sm:$0xff]
        %v988 = vld [vmem:[#allocation2 + $0x28] sm:$0xff]
        %v989 = vld [vmem:[#allocation2 + $0x30] sm:$0xff]
        %v990 = vld [vmem:[#allocation2 + $0x38] sm:$0xff]
        %v991 = vld [vmem:[#allocation2 + $0x40] sm:$0xff]
        %v992 = vld [vmem:[#allocation2 + $0x48] sm:$0xff]
        %v993 = vld [vmem:[#allocation2 + $0x50] sm:$0xff]
        %v994 = vld [vmem:[#allocation2 + $0x58] sm:$0xff]
        %v995 = vld [vmem:[#allocation2 + $0x60] sm:$0xff]
        %v996 = vld [vmem:[#allocation2 + $0x68] sm:$0xff]
        %v997 = vld [vmem:[#allocation2 + $0x70] sm:$0xff]
        %v998 = vld [vmem:[#allocation2 + $0x78] sm:$0xff]
        %v999 = vld [vmem:[#allocation2 + $0x80] sm:$0xff]
        %v1000 = vld [vmem:[#allocation2 + $0x88] sm:$0xff]
        %v1001 = vld [vmem:[#allocation2 + $0x90] sm:$0xff]
        %v1002 = vld [vmem:[#allocation2 + $0x98] sm:$0xff]
        %v1003 = vld [vmem:[#allocation2 + $0xa0] sm:$0xff]
        %v1004 = vld [vmem:[#allocation2 + $0xa8] sm:$0xff]
        %v1005 = vld [vmem:[#allocation2 + $0xb0] sm:$0xff]
        %v1006 = vld [vmem:[#allocation2 + $0xb8] sm:$0xff]
        %v1007 = vld [vmem:[#allocation2 + $0xc0] sm:$0xff]
        %v1008 = vld [vmem:[#allocation2 + $0xc8] sm:$0xff]
        %v1009 = vld [vmem:[#allocation2 + $0xd0] sm:$0xff]
        %v1010 = vld [vmem:[#allocation2 + $0xd8] sm:$0xff]
        %v1011 = vld [vmem:[#allocation2 + $0xe0] sm:$0xff]
        %v1012 = vld [vmem:[#allocation2 + $0xe8] sm:$0xff]
        %v1013 = vld [vmem:[#allocation2 + $0xf0] sm:$0xff]
        %v1014 = vld [vmem:[#allocation2 + $0xf8] sm:$0xff]
        %v1015 = vadd.f32 %v983, %v984
        %v1016 = vadd.f32 %v1015, %v985
        %v1017 = vadd.f32 %v1016, %v986
        %v1018 = vadd.f32 %v1017, %v987
        %v1019 = vadd.f32 %v1018, %v988
        %v1020 = vadd.f32 %v1019, %v989
        %v1021 = vadd.f32 %v1020, %v990
        %v1022 = vadd.f32 %v1021, %v991
        %v1023 = vadd.f32 %v1022, %v992
        %v1024 = vadd.f32 %v1023, %v993
        %v1025 = vadd.f32 %v1024, %v994
        %v1026 = vadd.f32 %v1025, %v995
        %v1027 = vadd.f32 %v1026, %v996
        %v1028 = vadd.f32 %v1027, %v997
        %v1029 = vadd.f32 %v1028, %v998
        %1030 = vadd.xlane.f32.xlu0 %v1029
        %v1031 = vpop.xlane.xlu0 %1030
        %v1032 = vadd.f32 %v999, %v1000
        %v1033 = vadd.f32 %v1032, %v1001
        %v1034 = vadd.f32 %v1033, %v1002
        %v1035 = vadd.f32 %v1034, %v1003
        %v1036 = vadd.f32 %v1035, %v1004
        %v1037 = vadd.f32 %v1036, %v1005
        %v1038 = vadd.f32 %v1037, %v1006
        %v1039 = vadd.f32 %v1038, %v1007
        %v1040 = vadd.f32 %v1039, %v1008
        %v1041 = vadd.f32 %v1040, %v1009
        %v1042 = vadd.f32 %v1041, %v1010
        %v1043 = vadd.f32 %v1042, %v1011
        %v1044 = vadd.f32 %v1043, %v1012
        %v1045 = vadd.f32 %v1044, %v1013
        %v1046 = vadd.f32 %v1045, %v1014
        %1047 = vadd.xlane.f32.xlu0 %v1046
        %v1048 = vpop.xlane.xlu0 %1047
        %v1049 = vmul.f32 %v1031, 0.00048828125
        %v1050 = vmul.f32 %v1048, 0.00048828125
        %v1051 = vsub.f32 %v983, %v1049
        %v1052 = vsub.f32 %v984, %v1049
        %v1053 = vsub.f32 %v985, %v1049
        %v1054 = vsub.f32 %v986, %v1049
        %v1055 = vsub.f32 %v987, %v1049
        %v1056 = vsub.f32 %v988, %v1049
        %v1057 = vsub.f32 %v989, %v1049
        %v1058 = vsub.f32 %v990, %v1049
        %v1059 = vsub.f32 %v991, %v1049
        %v1060 = vsub.f32 %v992, %v1049
        %v1061 = vsub.f32 %v993, %v1049
        %v1062 = vsub.f32 %v994, %v1049
        %v1063 = vsub.f32 %v995, %v1049
        %v1064 = vsub.f32 %v996, %v1049
        %v1065 = vsub.f32 %v997, %v1049
        %v1066 = vsub.f32 %v998, %v1049
        %v1067 = vsub.f32 %v999, %v1050
        %v1068 = vsub.f32 %v1000, %v1050
        %v1069 = vsub.f32 %v1001, %v1050
        %v1070 = vsub.f32 %v1002, %v1050
        %v1071 = vsub.f32 %v1003, %v1050
        %v1072 = vsub.f32 %v1004, %v1050
        %v1073 = vsub.f32 %v1005, %v1050
        %v1074 = vsub.f32 %v1006, %v1050
        %v1075 = vsub.f32 %v1007, %v1050
        %v1076 = vsub.f32 %v1008, %v1050
        %v1077 = vsub.f32 %v1009, %v1050
        %v1078 = vsub.f32 %v1010, %v1050
        %v1079 = vsub.f32 %v1011, %v1050
        %v1080 = vsub.f32 %v1012, %v1050
        %v1081 = vsub.f32 %v1013, %v1050
        %v1082 = vsub.f32 %v1014, %v1050
        %v1083 = vmul.f32 %v1051, %v1051
        %v1084 = vmul.f32 %v1052, %v1052
        %v1085 = vmul.f32 %v1053, %v1053
        %v1086 = vmul.f32 %v1054, %v1054
        %v1087 = vmul.f32 %v1055, %v1055
        %v1088 = vmul.f32 %v1056, %v1056
        %v1089 = vmul.f32 %v1057, %v1057
        %v1090 = vmul.f32 %v1058, %v1058
        %v1091 = vmul.f32 %v1059, %v1059
        %v1092 = vmul.f32 %v1060, %v1060
        %v1093 = vmul.f32 %v1061, %v1061
        %v1094 = vmul.f32 %v1062, %v1062
        %v1095 = vmul.f32 %v1063, %v1063
        %v1096 = vmul.f32 %v1064, %v1064
        %v1097 = vmul.f32 %v1065, %v1065
        %v1098 = vmul.f32 %v1066, %v1066
        %v1099 = vmul.f32 %v1067, %v1067
        %v1100 = vmul.f32 %v1068, %v1068
        %v1101 = vmul.f32 %v1069, %v1069
        %v1102 = vmul.f32 %v1070, %v1070
        %v1103 = vmul.f32 %v1071, %v1071
        %v1104 = vmul.f32 %v1072, %v1072
        %v1105 = vmul.f32 %v1073, %v1073
        %v1106 = vmul.f32 %v1074, %v1074
        %v1107 = vmul.f32 %v1075, %v1075
        %v1108 = vmul.f32 %v1076, %v1076
        %v1109 = vmul.f32 %v1077, %v1077
        %v1110 = vmul.f32 %v1078, %v1078
        %v1111 = vmul.f32 %v1079, %v1079
        %v1112 = vmul.f32 %v1080, %v1080
        %v1113 = vmul.f32 %v1081, %v1081
        %v1114 = vmul.f32 %v1082, %v1082
        %v1115 = vadd.f32 %v1083, %v1084
        %v1116 = vadd.f32 %v1115, %v1085
        %v1117 = vadd.f32 %v1116, %v1086
        %v1118 = vadd.f32 %v1117, %v1087
        %v1119 = vadd.f32 %v1118, %v1088
        %v1120 = vadd.f32 %v1119, %v1089
        %v1121 = vadd.f32 %v1120, %v1090
        %v1122 = vadd.f32 %v1121, %v1091
        %v1123 = vadd.f32 %v1122, %v1092
        %v1124 = vadd.f32 %v1123, %v1093
        %v1125 = vadd.f32 %v1124, %v1094
        %v1126 = vadd.f32 %v1125, %v1095
        %v1127 = vadd.f32 %v1126, %v1096
        %v1128 = vadd.f32 %v1127, %v1097
        %v1129 = vadd.f32 %v1128, %v1098
        %1130 = vadd.xlane.f32.xlu0 %v1129
        %v1131 = vpop.xlane.xlu0 %1130
        %v1132 = vadd.f32 %v1099, %v1100
        %v1133 = vadd.f32 %v1132, %v1101
        %v1134 = vadd.f32 %v1133, %v1102
        %v1135 = vadd.f32 %v1134, %v1103
        %v1136 = vadd.f32 %v1135, %v1104
        %v1137 = vadd.f32 %v1136, %v1105
        %v1138 = vadd.f32 %v1137, %v1106
        %v1139 = vadd.f32 %v1138, %v1107
        %v1140 = vadd.f32 %v1139, %v1108
        %v1141 = vadd.f32 %v1140, %v1109
        %v1142 = vadd.f32 %v1141, %v1110
        %v1143 = vadd.f32 %v1142, %v1111
        %v1144 = vadd.f32 %v1143, %v1112
        %v1145 = vadd.f32 %v1144, %v1113
        %v1146 = vadd.f32 %v1145, %v1114
        %1147 = vadd.xlane.f32.xlu0 %v1146
        %v1148 = vpop.xlane.xlu0 %1147
        %v1149 = vmul.f32 %v1131, 0.00048828125
        %v1150 = vmul.f32 %v1148, 0.00048828125
        %v1151 = vld [vmem:[%s2] sm:$0xff]
        %v1152 = vld [vmem:[%s2 + $0x8] sm:$0xff]
        %v1153 = vadd.f32 %v1149, 1e-05
        %v1154 = vadd.f32 %v1150, 1e-05
        %v1155 = vrsqrt.pop %v1153
        %v1156 = vrsqrt.pop %v1154
        %v1157 = vmul.f32 %v1151, %v1155
        %v1158 = vmul.f32 %v1152, %v1156
        %1160 = vset.pattern.permute.xlu0 0
        %1161 = vperm.xlu0 %1160, %v1157
        %v1162 = vpop.permute.xlu0 %1161
        %1165 = vset.pattern.permute.xlu0 0
        %1166 = vperm.xlu0 %1165, %v1158
        %v1167 = vpop.permute.xlu0 %1166
        %v1169 = vmul.f32 %v1051, %v1162
        %v1170 = vmul.f32 %v1052, %v1162
        %v1171 = vmul.f32 %v1053, %v1162
        %v1172 = vmul.f32 %v1054, %v1162
        %v1173 = vmul.f32 %v1055, %v1162
        %v1174 = vmul.f32 %v1056, %v1162
        %v1175 = vmul.f32 %v1057, %v1162
        %v1176 = vmul.f32 %v1058, %v1162
        %v1177 = vmul.f32 %v1059, %v1162
        %v1178 = vmul.f32 %v1060, %v1162
        %v1179 = vmul.f32 %v1061, %v1162
        %v1180 = vmul.f32 %v1062, %v1162
        %v1181 = vmul.f32 %v1063, %v1162
        %v1182 = vmul.f32 %v1064, %v1162
        %v1183 = vmul.f32 %v1065, %v1162
        %v1184 = vmul.f32 %v1066, %v1162
        %v1185 = vmul.f32 %v1067, %v1167
        %v1186 = vmul.f32 %v1068, %v1167
        %v1187 = vmul.f32 %v1069, %v1167
        %v1188 = vmul.f32 %v1070, %v1167
        %v1189 = vmul.f32 %v1071, %v1167
        %v1190 = vmul.f32 %v1072, %v1167
        %v1191 = vmul.f32 %v1073, %v1167
        %v1192 = vmul.f32 %v1074, %v1167
        %v1193 = vmul.f32 %v1075, %v1167
        %v1194 = vmul.f32 %v1076, %v1167
        %v1195 = vmul.f32 %v1077, %v1167
        %v1196 = vmul.f32 %v1078, %v1167
        %v1197 = vmul.f32 %v1079, %v1167
        %v1198 = vmul.f32 %v1080, %v1167
        %v1199 = vmul.f32 %v1081, %v1167
        %v1200 = vmul.f32 %v1082, %v1167
        %1202 = vset.pattern.permute.xlu0 1
        %1203 = vperm.xlu0 %1202, %v1151
        %v1204 = vpop.permute.xlu0 %1203
        %1207 = vset.pattern.permute.xlu0 1
        %1208 = vperm.xlu0 %1207, %v1152
        %v1209 = vpop.permute.xlu0 %1208
        %v1211 = vadd.f32 %v1169, %v1204
        %v1212 = vadd.f32 %v1170, %v1204
        %v1213 = vadd.f32 %v1171, %v1204
        %v1214 = vadd.f32 %v1172, %v1204
        %v1215 = vadd.f32 %v1173, %v1204
        %v1216 = vadd.f32 %v1174, %v1204
        %v1217 = vadd.f32 %v1175, %v1204
        %v1218 = vadd.f32 %v1176, %v1204
        %v1219 = vadd.f32 %v1177, %v1204
        %v1220 = vadd.f32 %v1178, %v1204
        %v1221 = vadd.f32 %v1179, %v1204
        %v1222 = vadd.f32 %v1180, %v1204
        %v1223 = vadd.f32 %v1181, %v1204
        %v1224 = vadd.f32 %v1182, %v1204
        %v1225 = vadd.f32 %v1183, %v1204
        %v1226 = vadd.f32 %v1184, %v1204
        %v1227 = vadd.f32 %v1185, %v1209
        %v1228 = vadd.f32 %v1186, %v1209
        %v1229 = vadd.f32 %v1187, %v1209
        %v1230 = vadd.f32 %v1188, %v1209
        %v1231 = vadd.f32 %v1189, %v1209
        %v1232 = vadd.f32 %v1190, %v1209
        %v1233 = vadd.f32 %v1191, %v1209
        %v1234 = vadd.f32 %v1192, %v1209
        %v1235 = vadd.f32 %v1193, %v1209
        %v1236 = vadd.f32 %v1194, %v1209
        %v1237 = vadd.f32 %v1195, %v1209
        %v1238 = vadd.f32 %v1196, %v1209
        %v1239 = vadd.f32 %v1197, %v1209
        %v1240 = vadd.f32 %v1198, %v1209
        %v1241 = vadd.f32 %v1199, %v1209
        %v1242 = vadd.f32 %v1200, %v1209
        %v1243 = vld [vmem:[%s3] sm:$0xff]
        %v1244 = vld [vmem:[%s3 + $0x8] sm:$0xff]
        %v1245 = vld [vmem:[%s3 + $0x10] sm:$0xff]
        %v1246 = vld [vmem:[%s3 + $0x18] sm:$0xff]
        %v1247 = vld [vmem:[%s3 + $0x20] sm:$0xff]
        %v1248 = vld [vmem:[%s3 + $0x28] sm:$0xff]
        %v1249 = vld [vmem:[%s3 + $0x30] sm:$0xff]
        %v1250 = vld [vmem:[%s3 + $0x38] sm:$0xff]
        %v1251 = vld [vmem:[%s3 + $0x40] sm:$0xff]
        %v1252 = vld [vmem:[%s3 + $0x48] sm:$0xff]
        %v1253 = vld [vmem:[%s3 + $0x50] sm:$0xff]
        %v1254 = vld [vmem:[%s3 + $0x58] sm:$0xff]
        %v1255 = vld [vmem:[%s3 + $0x60] sm:$0xff]
        %v1256 = vld [vmem:[%s3 + $0x68] sm:$0xff]
        %v1257 = vld [vmem:[%s3 + $0x70] sm:$0xff]
        %v1258 = vld [vmem:[%s3 + $0x78] sm:$0xff]
        %v1259 = vld [vmem:[%s3 + $0x80] sm:$0xff]
        %v1260 = vld [vmem:[%s3 + $0x88] sm:$0xff]
        %v1261 = vld [vmem:[%s3 + $0x90] sm:$0xff]
        %v1262 = vld [vmem:[%s3 + $0x98] sm:$0xff]
        %v1263 = vld [vmem:[%s3 + $0xa0] sm:$0xff]
        %v1264 = vld [vmem:[%s3 + $0xa8] sm:$0xff]
        %v1265 = vld [vmem:[%s3 + $0xb0] sm:$0xff]
        %v1266 = vld [vmem:[%s3 + $0xb8] sm:$0xff]
        %v1267 = vld [vmem:[%s3 + $0xc0] sm:$0xff]
        %v1268 = vld [vmem:[%s3 + $0xc8] sm:$0xff]
        %v1269 = vld [vmem:[%s3 + $0xd0] sm:$0xff]
        %v1270 = vld [vmem:[%s3 + $0xd8] sm:$0xff]
        %v1271 = vld [vmem:[%s3 + $0xe0] sm:$0xff]
        %v1272 = vld [vmem:[%s3 + $0xe8] sm:$0xff]
        %v1273 = vld [vmem:[%s3 + $0xf0] sm:$0xff]
        %v1274 = vld [vmem:[%s3 + $0xf8] sm:$0xff]
        %v1275 = vadd.f32 %v1211, %v1243
        %v1276 = vadd.f32 %v1212, %v1244
        %v1277 = vadd.f32 %v1213, %v1245
        %v1278 = vadd.f32 %v1214, %v1246
        %v1279 = vadd.f32 %v1215, %v1247
        %v1280 = vadd.f32 %v1216, %v1248
        %v1281 = vadd.f32 %v1217, %v1249
        %v1282 = vadd.f32 %v1218, %v1250
        %v1283 = vadd.f32 %v1219, %v1251
        %v1284 = vadd.f32 %v1220, %v1252
        %v1285 = vadd.f32 %v1221, %v1253
        %v1286 = vadd.f32 %v1222, %v1254
        %v1287 = vadd.f32 %v1223, %v1255
        %v1288 = vadd.f32 %v1224, %v1256
        %v1289 = vadd.f32 %v1225, %v1257
        %v1290 = vadd.f32 %v1226, %v1258
        %v1291 = vadd.f32 %v1227, %v1259
        %v1292 = vadd.f32 %v1228, %v1260
        %v1293 = vadd.f32 %v1229, %v1261
        %v1294 = vadd.f32 %v1230, %v1262
        %v1295 = vadd.f32 %v1231, %v1263
        %v1296 = vadd.f32 %v1232, %v1264
        %v1297 = vadd.f32 %v1233, %v1265
        %v1298 = vadd.f32 %v1234, %v1266
        %v1299 = vadd.f32 %v1235, %v1267
        %v1300 = vadd.f32 %v1236, %v1268
        %v1301 = vadd.f32 %v1237, %v1269
        %v1302 = vadd.f32 %v1238, %v1270
        %v1303 = vadd.f32 %v1239, %v1271
        %v1304 = vadd.f32 %v1240, %v1272
        %v1305 = vadd.f32 %v1241, %v1273
        %v1306 = vadd.f32 %v1242, %v1274
        %v1307 = vmax.f32 %v1275, 0.0
        %v1308 = vmax.f32 %v1276, 0.0
        %v1309 = vmax.f32 %v1277, 0.0
        %v1310 = vmax.f32 %v1278, 0.0
        %v1311 = vmax.f32 %v1279, 0.0
        %v1312 = vmax.f32 %v1280, 0.0
        %v1313 = vmax.f32 %v1281, 0.0
        %v1314 = vmax.f32 %v1282, 0.0
        %v1315 = vmax.f32 %v1283, 0.0
        %v1316 = vmax.f32 %v1284, 0.0
        %v1317 = vmax.f32 %v1285, 0.0
        %v1318 = vmax.f32 %v1286, 0.0
        %v1319 = vmax.f32 %v1287, 0.0
        %v1320 = vmax.f32 %v1288, 0.0
        %v1321 = vmax.f32 %v1289, 0.0
        %v1322 = vmax.f32 %v1290, 0.0
        %v1323 = vmax.f32 %v1291, 0.0
        %v1324 = vmax.f32 %v1292, 0.0
        %v1325 = vmax.f32 %v1293, 0.0
        %v1326 = vmax.f32 %v1294, 0.0
        %v1327 = vmax.f32 %v1295, 0.0
        %v1328 = vmax.f32 %v1296, 0.0
        %v1329 = vmax.f32 %v1297, 0.0
        %v1330 = vmax.f32 %v1298, 0.0
        %v1331 = vmax.f32 %v1299, 0.0
        %v1332 = vmax.f32 %v1300, 0.0
        %v1333 = vmax.f32 %v1301, 0.0
        %v1334 = vmax.f32 %v1302, 0.0
        %v1335 = vmax.f32 %v1303, 0.0
        %v1336 = vmax.f32 %v1304, 0.0
        %v1337 = vmax.f32 %v1305, 0.0
        %v1338 = vmax.f32 %v1306, 0.0
        %1339 = vst [vmem:[%s4] sm:$0xff] %v1307
        %1340 = vst [vmem:[%s4 + $0x8] sm:$0xff] %v1308
        %1341 = vst [vmem:[%s4 + $0x10] sm:$0xff] %v1309
        %1342 = vst [vmem:[%s4 + $0x18] sm:$0xff] %v1310
        %1343 = vst [vmem:[%s4 + $0x20] sm:$0xff] %v1311
        %1344 = vst [vmem:[%s4 + $0x28] sm:$0xff] %v1312
        %1345 = vst [vmem:[%s4 + $0x30] sm:$0xff] %v1313
        %1346 = vst [vmem:[%s4 + $0x38] sm:$0xff] %v1314
        %1347 = vst [vmem:[%s4 + $0x40] sm:$0xff] %v1315
        %1348 = vst [vmem:[%s4 + $0x48] sm:$0xff] %v1316
        %1349 = vst [vmem:[%s4 + $0x50] sm:$0xff] %v1317
        %1350 = vst [vmem:[%s4 + $0x58] sm:$0xff] %v1318
        %1351 = vst [vmem:[%s4 + $0x60] sm:$0xff] %v1319
        %1352 = vst [vmem:[%s4 + $0x68] sm:$0xff] %v1320
        %1353 = vst [vmem:[%s4 + $0x70] sm:$0xff] %v1321
        %1354 = vst [vmem:[%s4 + $0x78] sm:$0xff] %v1322
        %1355 = vst [vmem:[%s4 + $0x80] sm:$0xff] %v1323
        %1356 = vst [vmem:[%s4 + $0x88] sm:$0xff] %v1324
        %1357 = vst [vmem:[%s4 + $0x90] sm:$0xff] %v1325
        %1358 = vst [vmem:[%s4 + $0x98] sm:$0xff] %v1326
        %1359 = vst [vmem:[%s4 + $0xa0] sm:$0xff] %v1327
        %1360 = vst [vmem:[%s4 + $0xa8] sm:$0xff] %v1328
        %1361 = vst [vmem:[%s4 + $0xb0] sm:$0xff] %v1329
        %1362 = vst [vmem:[%s4 + $0xb8] sm:$0xff] %v1330
        %1363 = vst [vmem:[%s4 + $0xc0] sm:$0xff] %v1331
        %1364 = vst [vmem:[%s4 + $0xc8] sm:$0xff] %v1332
        %1365 = vst [vmem:[%s4 + $0xd0] sm:$0xff] %v1333
        %1366 = vst [vmem:[%s4 + $0xd8] sm:$0xff] %v1334
        %1367 = vst [vmem:[%s4 + $0xe0] sm:$0xff] %v1335
        %1368 = vst [vmem:[%s4 + $0xe8] sm:$0xff] %v1336
        %1369 = vst [vmem:[%s4 + $0xf0] sm:$0xff] %v1337
        %1370 = vst [vmem:[%s4 + $0xf8] sm:$0xff] %v1338
      $region44: #{resnet_forward.9} parent=35 // pred_fallthru
        _
      // Predicated region
      $region45: #{resnet_forward.9} parent=35 // pred_check
        %p1371 = pneg %p122
      $region46: #{resnet_forward.9} parent=35 // pred_check_branch
        %1373 = sbr.rel (%p1371) target = $region48
      $region47: #{resnet_forward.9} parent=35 // pred_region
        _
      $region48: #{resnet_forward.9} parent=35 // pred_fallthru
        _
      // Predicated region
      $region49: #{resnet_forward.9} parent=35 // pred_check
        %p1374 = pneg %p122
      $region50: #{resnet_forward.9} parent=35 // pred_check_branch
        %1376 = sbr.rel (%p1374) target = $region52
      $region51: #{resnet_forward.9} parent=35 // pred_region
        _
      $region52: #{resnet_forward.9} parent=35 // pred_fallthru
        _
    $region36: #{resnet_forward.9} parent=5 // pred_fallthru
      _
    %p1377 = scmp.le.s32.totalorder 2, %s10
    // Predicated region
    $region53: #{resnet_forward.9} parent=5 // pred_check
      %p1378 = pneg %p1377
    $region54: #{resnet_forward.9} parent=5 // pred_check_branch
      %1380 = sbr.rel (%p1378) target = $region56
    $region55: #{resnet_forward.9} parent=5 // pred_region
      %s1381 = ssub.s32 %s10, 2
    $region56: #{resnet_forward.9} parent=5 // pred_fallthru
      _
  $region6: #{resnet_forward.9} parent=0 // loop_footer
    %s14 = sadd.s32 1, %s10
  $region7: #{resnet_forward.9} parent=0 // loop_footer_branch
    %9 = sbr.rel target = $region3
  $region8: #{resnet_forward.9} parent=0 // loop_exit
    _

// kernel: resnet_forward.10
$region0: #{resnet_forward.10}
  #allocation0 [shape = 'u32[]', space=smem, size = 0x4, offset = 0x4, fixed_abs, tag = 'smem constant byte address 0x4 - core index']
  #allocation1 [shape = 'u32[144,128]{1,0:T(1,128)}', space=vmem, size = 0x12000, scoped, tag = 'internal scratch']
  #allocation2 [shape = 'f32[32,512]{1,0:T(8,128)}', space=vmem, size = 0x10000, scoped, tag = 'scratch operand']
  %s0 = inlined_call_operand.vmem [shape: bf16[1,32,144], index: 0, kind: input, shape index: {}]
  %s1 = inlined_call_operand.vmem [shape: bf16[1,144,512], index: 1, kind: input, shape index: {}]
  %s2 = inlined_call_operand.vmem [shape: f32[32,2], index: 2, kind: input, shape index: {}]
  %s3 = inlined_call_operand.vmem [shape: f32[32,512], index: 3, kind: output, shape index: {}]
  %s4 = sld [smem:[#allocation0]]
  $region30: #{resnet_forward.10} parent=0
    _
  %s6 = ssub.s32 1, %s4
  %s7 = scalar_select 0, %s6, %s4
  // Predicated region
  $region2: #{resnet_forward.10} parent=0 // pred_check
    _
  $region3: #{resnet_forward.10} parent=0 // pred_check_branch
    %9 = sbr.rel (0) target = $region5
  $region4: #{resnet_forward.10} parent=0 // pred_region
    _
  $region5: #{resnet_forward.10} parent=0 // pred_fallthru
    _
  // Predicated region
  $region6: #{resnet_forward.10} parent=0 // pred_check
    _
  $region7: #{resnet_forward.10} parent=0 // pred_check_branch
    %11 = sbr.rel (0) target = $region9
  $region8: #{resnet_forward.10} parent=0 // pred_region
    _
  $region9: #{resnet_forward.10} parent=0 // pred_fallthru
    _
  // Predicated region
  $region10: #{resnet_forward.10} parent=0 // pred_check
    _
  $region11: #{resnet_forward.10} parent=0 // pred_check_branch
    %13 = sbr.rel (0) target = $region13
  $region12: #{resnet_forward.10} parent=0 // pred_region
    _
  $region13: #{resnet_forward.10} parent=0 // pred_fallthru
    _
  %p15 = scmp.eq.s32.totalorder 0, 0
  // Predicated region
  $region14: #{resnet_forward.10} parent=0 // pred_check
    %p16 = pneg %p15
  $region15: #{resnet_forward.10} parent=0 // pred_check_branch
    %18 = sbr.rel (%p16) target = $region17
  $region16: #{resnet_forward.10} parent=0 // pred_region
    %19 = vst [vmem:[#allocation2] sm:$0xff] 0.0
    %20 = vst [vmem:[#allocation2 + $0x8] sm:$0xff] 0.0
    %21 = vst [vmem:[#allocation2 + $0x10] sm:$0xff] 0.0
    %22 = vst [vmem:[#allocation2 + $0x18] sm:$0xff] 0.0
    %23 = vst [vmem:[#allocation2 + $0x20] sm:$0xff] 0.0
    %24 = vst [vmem:[#allocation2 + $0x28] sm:$0xff] 0.0
    %25 = vst [vmem:[#allocation2 + $0x30] sm:$0xff] 0.0
    %26 = vst [vmem:[#allocation2 + $0x38] sm:$0xff] 0.0
    %27 = vst [vmem:[#allocation2 + $0x40] sm:$0xff] 0.0
    %28 = vst [vmem:[#allocation2 + $0x48] sm:$0xff] 0.0
    %29 = vst [vmem:[#allocation2 + $0x50] sm:$0xff] 0.0
    %30 = vst [vmem:[#allocation2 + $0x58] sm:$0xff] 0.0
    %31 = vst [vmem:[#allocation2 + $0x60] sm:$0xff] 0.0
    %32 = vst [vmem:[#allocation2 + $0x68] sm:$0xff] 0.0
    %33 = vst [vmem:[#allocation2 + $0x70] sm:$0xff] 0.0
    %34 = vst [vmem:[#allocation2 + $0x78] sm:$0xff] 0.0
  $region17: #{resnet_forward.10} parent=0 // pred_fallthru
    _
  %v35 = vld [vmem:[#allocation2] sm:$0xff]
  %v36 = vld [vmem:[#allocation2 + $0x8] sm:$0xff]
  %v37 = vld [vmem:[#allocation2 + $0x10] sm:$0xff]
  %v38 = vld [vmem:[#allocation2 + $0x18] sm:$0xff]
  %v39 = vld [vmem:[#allocation2 + $0x20] sm:$0xff]
  %v40 = vld [vmem:[#allocation2 + $0x28] sm:$0xff]
  %v41 = vld [vmem:[#allocation2 + $0x30] sm:$0xff]
  %v42 = vld [vmem:[#allocation2 + $0x38] sm:$0xff]
  %v43 = vld [vmem:[#allocation2 + $0x40] sm:$0xff]
  %v44 = vld [vmem:[#allocation2 + $0x48] sm:$0xff]
  %v45 = vld [vmem:[#allocation2 + $0x50] sm:$0xff]
  %v46 = vld [vmem:[#allocation2 + $0x58] sm:$0xff]
  %v47 = vld [vmem:[#allocation2 + $0x60] sm:$0xff]
  %v48 = vld [vmem:[#allocation2 + $0x68] sm:$0xff]
  %v49 = vld [vmem:[#allocation2 + $0x70] sm:$0xff]
  %v50 = vld [vmem:[#allocation2 + $0x78] sm:$0xff]
  %v51 = vld [vmem:[%s0] sm:$0xff]
  %v52 = vld [vmem:[%s0 + $0x8] sm:$0xff]
  %v53 = vld [vmem:[%s0 + $0x10] sm:$0xff]
  %v54 = vld [vmem:[%s0 + $0x18] sm:$0xff]
  %v55 = vld [vmem:[%s1] sm:$0xff]
  %v56 = vld [vmem:[%s1 + $0x8] sm:$0xff]
  %v57 = vld [vmem:[%s1 + $0x10] sm:$0xff]
  %v58 = vld [vmem:[%s1 + $0x18] sm:$0xff]
  %v59 = vld [vmem:[%s1 + $0x20] sm:$0xff]
  %v60 = vld [vmem:[%s1 + $0x28] sm:$0xff]
  %v61 = vld [vmem:[%s1 + $0x30] sm:$0xff]
  %v62 = vld [vmem:[%s1 + $0x38] sm:$0xff]
  %v63 = vld [vmem:[%s1 + $0x40] sm:$0xff]
  %v64 = vld [vmem:[%s1 + $0x48] sm:$0xff]
  %v65 = vld [vmem:[%s1 + $0x50] sm:$0xff]
  %v66 = vld [vmem:[%s1 + $0x58] sm:$0xff]
  %v67 = vld [vmem:[%s1 + $0x60] sm:$0xff]
  %v68 = vld [vmem:[%s1 + $0x68] sm:$0xff]
  %v69 = vld [vmem:[%s1 + $0x70] sm:$0xff]
  %v70 = vld [vmem:[%s1 + $0x78] sm:$0xff]
  %v71 = vld [vmem:[%s1 + $0x80] sm:$0xff]
  %v72 = vld [vmem:[%s1 + $0x88] sm:$0xff]
  %v73 = vld [vmem:[%s1 + $0x90] sm:$0xff]
  %v74 = vld [vmem:[%s1 + $0x98] sm:$0xff]
  %v75 = vld [vmem:[%s1 + $0xa0] sm:$0xff]
  %v76 = vld [vmem:[%s1 + $0xa8] sm:$0xff]
  %v77 = vld [vmem:[%s1 + $0xb0] sm:$0xff]
  %v78 = vld [vmem:[%s1 + $0xb8] sm:$0xff]
  %v79 = vld [vmem:[%s1 + $0xc0] sm:$0xff]
  %v80 = vld [vmem:[%s1 + $0xc8] sm:$0xff]
  %v81 = vld [vmem:[%s1 + $0xd0] sm:$0xff]
  %v82 = vld [vmem:[%s1 + $0xd8] sm:$0xff]
  %v83 = vld [vmem:[%s1 + $0xe0] sm:$0xff]
  %v84 = vld [vmem:[%s1 + $0xe8] sm:$0xff]
  %v85 = vld [vmem:[%s1 + $0xf0] sm:$0xff]
  %v86 = vld [vmem:[%s1 + $0xf8] sm:$0xff]
  %v87 = vld [vmem:[%s1 + $0x100] sm:$0xff]
  %v88 = vld [vmem:[%s1 + $0x108] sm:$0xff]
  %v89 = vld [vmem:[%s1 + $0x110] sm:$0xff]
  %v90 = vld [vmem:[%s1 + $0x118] sm:$0xff]
  %v95 = vunpack.c.l.b16 %v51
  %v96 = vunpack.c.h.b16 %v51
  %v97 = vunpack.c.l.b16 %v52
  %v98 = vunpack.c.h.b16 %v52
  %v99 = vunpack.c.l.b16 %v53
  %v100 = vunpack.c.h.b16 %v53
  %v101 = vunpack.c.l.b16 %v54
  %v102 = vunpack.c.h.b16 %v54
  %v103 = vpack.c.b16 %v97, %v95
  %v104 = vpack.c.b16 %v98, %v96
  %v105 = vpack.c.b16 %v101, %v99
  %v106 = vpack.c.b16 %v102, %v100
  %v145 = vunpack.c.l.b16 %v55
  %v146 = vunpack.c.h.b16 %v55
  %v147 = vunpack.c.l.b16 %v56
  %v148 = vunpack.c.h.b16 %v56
  %v149 = vunpack.c.l.b16 %v57
  %v150 = vunpack.c.h.b16 %v57
  %v151 = vunpack.c.l.b16 %v58
  %v152 = vunpack.c.h.b16 %v58
  %v153 = vunpack.c.l.b16 %v59
  %v154 = vunpack.c.h.b16 %v59
  %v155 = vunpack.c.l.b16 %v60
  %v156 = vunpack.c.h.b16 %v60
  %v157 = vunpack.c.l.b16 %v61
  %v158 = vunpack.c.h.b16 %v61
  %v159 = vunpack.c.l.b16 %v62
  %v160 = vunpack.c.h.b16 %v62
  %v161 = vunpack.c.l.b16 %v63
  %v162 = vunpack.c.h.b16 %v63
  %v163 = vunpack.c.l.b16 %v64
  %v164 = vunpack.c.h.b16 %v64
  %v165 = vunpack.c.l.b16 %v65
  %v166 = vunpack.c.h.b16 %v65
  %v167 = vunpack.c.l.b16 %v66
  %v168 = vunpack.c.h.b16 %v66
  %v169 = vunpack.c.l.b16 %v67
  %v170 = vunpack.c.h.b16 %v67
  %v171 = vunpack.c.l.b16 %v68
  %v172 = vunpack.c.h.b16 %v68
  %v173 = vunpack.c.l.b16 %v69
  %v174 = vunpack.c.h.b16 %v69
  %v175 = vunpack.c.l.b16 %v70
  %v176 = vunpack.c.h.b16 %v70
  %v177 = vunpack.c.l.b16 %v71
  %v178 = vunpack.c.h.b16 %v71
  %v179 = vunpack.c.l.b16 %v72
  %v180 = vunpack.c.h.b16 %v72
  %v181 = vunpack.c.l.b16 %v73
  %v182 = vunpack.c.h.b16 %v73
  %v183 = vunpack.c.l.b16 %v74
  %v184 = vunpack.c.h.b16 %v74
  %v185 = vunpack.c.l.b16 %v75
  %v186 = vunpack.c.h.b16 %v75
  %v187 = vunpack.c.l.b16 %v76
  %v188 = vunpack.c.h.b16 %v76
  %v189 = vunpack.c.l.b16 %v77
  %v190 = vunpack.c.h.b16 %v77
  %v191 = vunpack.c.l.b16 %v78
  %v192 = vunpack.c.h.b16 %v78
  %v193 = vunpack.c.l.b16 %v79
  %v194 = vunpack.c.h.b16 %v79
  %v195 = vunpack.c.l.b16 %v80
  %v196 = vunpack.c.h.b16 %v80
  %v197 = vunpack.c.l.b16 %v81
  %v198 = vunpack.c.h.b16 %v81
  %v199 = vunpack.c.l.b16 %v82
  %v200 = vunpack.c.h.b16 %v82
  %v201 = vunpack.c.l.b16 %v83
  %v202 = vunpack.c.h.b16 %v83
  %v203 = vunpack.c.l.b16 %v84
  %v204 = vunpack.c.h.b16 %v84
  %v205 = vunpack.c.l.b16 %v85
  %v206 = vunpack.c.h.b16 %v85
  %v207 = vunpack.c.l.b16 %v86
  %v208 = vunpack.c.h.b16 %v86
  %v209 = vunpack.c.l.b16 %v87
  %v210 = vunpack.c.h.b16 %v87
  %v211 = vunpack.c.l.b16 %v88
  %v212 = vunpack.c.h.b16 %v88
  %v213 = vunpack.c.l.b16 %v89
  %v214 = vunpack.c.h.b16 %v89
  %v215 = vunpack.c.l.b16 %v90
  %v216 = vunpack.c.h.b16 %v90
  %v217 = vpack.c.b16 %v149, %v145
  %v218 = vpack.c.b16 %v150, %v146
  %v219 = vpack.c.b16 %v151, %v147
  %v220 = vpack.c.b16 %v152, %v148
  %v221 = vpack.c.b16 %v157, %v153
  %v222 = vpack.c.b16 %v158, %v154
  %v223 = vpack.c.b16 %v159, %v155
  %v224 = vpack.c.b16 %v160, %v156
  %v225 = vpack.c.b16 %v165, %v161
  %v226 = vpack.c.b16 %v166, %v162
  %v227 = vpack.c.b16 %v167, %v163
  %v228 = vpack.c.b16 %v168, %v164
  %v229 = vpack.c.b16 %v173, %v169
  %v230 = vpack.c.b16 %v174, %v170
  %v231 = vpack.c.b16 %v175, %v171
  %v232 = vpack.c.b16 %v176, %v172
  %v233 = vpack.c.b16 %v181, %v177
  %v234 = vpack.c.b16 %v182, %v178
  %v235 = vpack.c.b16 %v183, %v179
  %v236 = vpack.c.b16 %v184, %v180
  %v237 = vpack.c.b16 %v189, %v185
  %v238 = vpack.c.b16 %v190, %v186
  %v239 = vpack.c.b16 %v191, %v187
  %v240 = vpack.c.b16 %v192, %v188
  %v241 = vpack.c.b16 %v197, %v193
  %v242 = vpack.c.b16 %v198, %v194
  %v243 = vpack.c.b16 %v199, %v195
  %v244 = vpack.c.b16 %v200, %v196
  %v245 = vpack.c.b16 %v205, %v201
  %v246 = vpack.c.b16 %v206, %v202
  %v247 = vpack.c.b16 %v207, %v203
  %v248 = vpack.c.b16 %v208, %v204
  %v249 = vpack.c.b16 %v213, %v209
  %v250 = vpack.c.b16 %v214, %v210
  %v251 = vpack.c.b16 %v215, %v211
  %v252 = vpack.c.b16 %v216, %v212
  %vm289 = vcmask 130048
  %v291 = vsel %vm289, %v104, 0
  %v294 = vsel %vm289, %v106, 0
  %296 = vmatprep.subr.bf16.mxu0 %v218
  %297 = vmatpush1.bf16.msra.mxu0 %v217
  %298 = vmatprep.subr.bf16.mxu0 %v222
  %299 = vmatpush1.bf16.msra.mxu0 %v221
  %300 = vmatprep.subr.bf16.mxu0 %v226
  %301 = vmatpush1.bf16.msra.mxu0 %v225
  %302 = vmatprep.subr.bf16.mxu0 %v230
  %303 = vmatpush1.bf16.msra.mxu0 %v229
  %304 = vmatprep.subr.bf16.mxu0 %v234
  %305 = vmatpush1.bf16.msra.mxu0 %v233
  %306 = vmatprep.subr.bf16.mxu0 %v238
  %307 = vmatpush1.bf16.msra.mxu0 %v237
  %308 = vmatprep.subr.bf16.mxu0 %v242
  %309 = vmatpush1.bf16.msra.mxu0 %v241
  %310 = vmatprep.subr.bf16.mxu0 %v246
  %311 = vmatpush1.bf16.msra.mxu0 %v245
  %312 = vmatprep.subr.bf16.mxu0 %v250
  %313 = vmatpush1.bf16.msra.mxu0 %v249
  %314 = vmatprep.subr.bf16.mxu0 0
  %315 = vmatpush1.bf16.msra.mxu0 0
  %316 = vmatprep.subr.bf16.mxu0 0
  %317 = vmatpush1.bf16.msra.mxu0 0
  %318 = vmatprep.subr.bf16.mxu0 0
  %319 = vmatpush1.bf16.msra.mxu0 0
  %320 = vmatprep.subr.bf16.mxu0 0
  %321 = vmatpush1.bf16.msra.mxu0 0
  %322 = vmatprep.subr.bf16.mxu0 0
  %323 = vmatpush1.bf16.msra.mxu0 0
  %324 = vmatprep.subr.bf16.mxu0 0
  %325 = vmatpush1.bf16.msra.mxu0 0
  %326 = vmatprep.subr.bf16.mxu0 0
  %327 = vmatpush1.bf16.msra.mxu0 0
  %328 = vmatprep.mubr.bf16.mxu0 %v291
  %329 = vmatmul.mubr.bf16.gmra.mrb[0].mxu0 %v103
  %v330 = vpop.f32.mrb[0].mxu0
  %v331 = vadd.f32 0.0, %v330
  %v332 = vpop.f32.mrb[0].mxu0
  %v333 = vadd.f32 0.0, %v332
  %v334 = vpop.f32.mrb[0].mxu0
  %v335 = vadd.f32 0.0, %v334
  %v336 = vpop.f32.mrb[0].mxu0
  %v337 = vadd.f32 0.0, %v336
  %338 = vmatprep.mubr.bf16.mxu0 %v294
  %339 = vmatmul.mubr.bf16.gmra.mrb[0].mxu0 %v105
  %v340 = vpop.f32.mrb[0].mxu0
  %v341 = vadd.f32 0.0, %v340
  %v342 = vpop.f32.mrb[0].mxu0
  %v343 = vadd.f32 0.0, %v342
  %v344 = vpop.f32.mrb[0].mxu0
  %v345 = vadd.f32 0.0, %v344
  %v346 = vpop.f32.mrb[0].mxu0
  %v347 = vadd.f32 0.0, %v346
  %348 = vdwg.mxu0
  %349 = vmatprep.subr.bf16.mxu0 %v220
  %350 = vmatpush1.bf16.msra.mxu0 %v219
  %351 = vmatprep.subr.bf16.mxu0 %v224
  %352 = vmatpush1.bf16.msra.mxu0 %v223
  %353 = vmatprep.subr.bf16.mxu0 %v228
  %354 = vmatpush1.bf16.msra.mxu0 %v227
  %355 = vmatprep.subr.bf16.mxu0 %v232
  %356 = vmatpush1.bf16.msra.mxu0 %v231
  %357 = vmatprep.subr.bf16.mxu0 %v236
  %358 = vmatpush1.bf16.msra.mxu0 %v235
  %359 = vmatprep.subr.bf16.mxu0 %v240
  %360 = vmatpush1.bf16.msra.mxu0 %v239
  %361 = vmatprep.subr.bf16.mxu0 %v244
  %362 = vmatpush1.bf16.msra.mxu0 %v243
  %363 = vmatprep.subr.bf16.mxu0 %v248
  %364 = vmatpush1.bf16.msra.mxu0 %v247
  %365 = vmatprep.subr.bf16.mxu0 %v252
  %366 = vmatpush1.bf16.msra.mxu0 %v251
  %367 = vmatprep.subr.bf16.mxu0 0
  %368 = vmatpush1.bf16.msra.mxu0 0
  %369 = vmatprep.subr.bf16.mxu0 0
  %370 = vmatpush1.bf16.msra.mxu0 0
  %371 = vmatprep.subr.bf16.mxu0 0
  %372 = vmatpush1.bf16.msra.mxu0 0
  %373 = vmatprep.subr.bf16.mxu0 0
  %374 = vmatpush1.bf16.msra.mxu0 0
  %375 = vmatprep.subr.bf16.mxu0 0
  %376 = vmatpush1.bf16.msra.mxu0 0
  %377 = vmatprep.subr.bf16.mxu0 0
  %378 = vmatpush1.bf16.msra.mxu0 0
  %379 = vmatprep.subr.bf16.mxu0 0
  %380 = vmatpush1.bf16.msra.mxu0 0
  %381 = vmatprep.mubr.bf16.mxu0 %v291
  %382 = vmatmul.mubr.bf16.gmra.mrb[0].mxu0 %v103
  %v383 = vpop.f32.mrb[0].mxu0
  %v384 = vadd.f32 0.0, %v383
  %v385 = vpop.f32.mrb[0].mxu0
  %v386 = vadd.f32 0.0, %v385
  %v387 = vpop.f32.mrb[0].mxu0
  %v388 = vadd.f32 0.0, %v387
  %v389 = vpop.f32.mrb[0].mxu0
  %v390 = vadd.f32 0.0, %v389
  %391 = vmatprep.mubr.bf16.mxu0 %v294
  %392 = vmatmul.mubr.bf16.gmra.mrb[0].mxu0 %v105
  %v393 = vpop.f32.mrb[0].mxu0
  %v394 = vadd.f32 0.0, %v393
  %v395 = vpop.f32.mrb[0].mxu0
  %v396 = vadd.f32 0.0, %v395
  %v397 = vpop.f32.mrb[0].mxu0
  %v398 = vadd.f32 0.0, %v397
  %v399 = vpop.f32.mrb[0].mxu0
  %v400 = vadd.f32 0.0, %v399
  %401 = vdwg.mxu0
  %v402 = vadd.f32 %v35, %v331
  %v403 = vadd.f32 %v36, %v333
  %v404 = vadd.f32 %v37, %v384
  %v405 = vadd.f32 %v38, %v386
  %v406 = vadd.f32 %v39, %v335
  %v407 = vadd.f32 %v40, %v337
  %v408 = vadd.f32 %v41, %v388
  %v409 = vadd.f32 %v42, %v390
  %v410 = vadd.f32 %v43, %v341
  %v411 = vadd.f32 %v44, %v343
  %v412 = vadd.f32 %v45, %v394
  %v413 = vadd.f32 %v46, %v396
  %v414 = vadd.f32 %v47, %v345
  %v415 = vadd.f32 %v48, %v347
  %v416 = vadd.f32 %v49, %v398
  %v417 = vadd.f32 %v50, %v400
  %418 = vst [vmem:[#allocation2] sm:$0xff] %v402
  %419 = vst [vmem:[#allocation2 + $0x8] sm:$0xff] %v403
  %420 = vst [vmem:[#allocation2 + $0x10] sm:$0xff] %v404
  %421 = vst [vmem:[#allocation2 + $0x18] sm:$0xff] %v405
  %422 = vst [vmem:[#allocation2 + $0x20] sm:$0xff] %v406
  %423 = vst [vmem:[#allocation2 + $0x28] sm:$0xff] %v407
  %424 = vst [vmem:[#allocation2 + $0x30] sm:$0xff] %v408
  %425 = vst [vmem:[#allocation2 + $0x38] sm:$0xff] %v409
  %426 = vst [vmem:[#allocation2 + $0x40] sm:$0xff] %v410
  %427 = vst [vmem:[#allocation2 + $0x48] sm:$0xff] %v411
  %428 = vst [vmem:[#allocation2 + $0x50] sm:$0xff] %v412
  %429 = vst [vmem:[#allocation2 + $0x58] sm:$0xff] %v413
  %430 = vst [vmem:[#allocation2 + $0x60] sm:$0xff] %v414
  %431 = vst [vmem:[#allocation2 + $0x68] sm:$0xff] %v415
  %432 = vst [vmem:[#allocation2 + $0x70] sm:$0xff] %v416
  %433 = vst [vmem:[#allocation2 + $0x78] sm:$0xff] %v417
  // Predicated region
  $region18: #{resnet_forward.10} parent=0 // pred_check
    %p434 = pneg %p15
  $region19: #{resnet_forward.10} parent=0 // pred_check_branch
    %436 = sbr.rel (%p434) target = $region21
  $region20: #{resnet_forward.10} parent=0 // pred_region
    %v437 = vld [vmem:[#allocation2] sm:$0xff]
    %v438 = vld [vmem:[#allocation2 + $0x8] sm:$0xff]
    %v439 = vld [vmem:[#allocation2 + $0x10] sm:$0xff]
    %v440 = vld [vmem:[#allocation2 + $0x18] sm:$0xff]
    %v441 = vld [vmem:[#allocation2 + $0x20] sm:$0xff]
    %v442 = vld [vmem:[#allocation2 + $0x28] sm:$0xff]
    %v443 = vld [vmem:[#allocation2 + $0x30] sm:$0xff]
    %v444 = vld [vmem:[#allocation2 + $0x38] sm:$0xff]
    %v445 = vld [vmem:[#allocation2 + $0x40] sm:$0xff]
    %v446 = vld [vmem:[#allocation2 + $0x48] sm:$0xff]
    %v447 = vld [vmem:[#allocation2 + $0x50] sm:$0xff]
    %v448 = vld [vmem:[#allocation2 + $0x58] sm:$0xff]
    %v449 = vld [vmem:[#allocation2 + $0x60] sm:$0xff]
    %v450 = vld [vmem:[#allocation2 + $0x68] sm:$0xff]
    %v451 = vld [vmem:[#allocation2 + $0x70] sm:$0xff]
    %v452 = vld [vmem:[#allocation2 + $0x78] sm:$0xff]
    %v453 = vadd.f32 %v437, %v438
    %v454 = vadd.f32 %v453, %v439
    %v455 = vadd.f32 %v454, %v440
    %456 = vadd.xlane.f32.xlu0 %v455
    %v457 = vpop.xlane.xlu0 %456
    %v458 = vadd.f32 %v441, %v442
    %v459 = vadd.f32 %v458, %v443
    %v460 = vadd.f32 %v459, %v444
    %461 = vadd.xlane.f32.xlu0 %v460
    %v462 = vpop.xlane.xlu0 %461
    %v463 = vadd.f32 %v445, %v446
    %v464 = vadd.f32 %v463, %v447
    %v465 = vadd.f32 %v464, %v448
    %466 = vadd.xlane.f32.xlu0 %v465
    %v467 = vpop.xlane.xlu0 %466
    %v468 = vadd.f32 %v449, %v450
    %v469 = vadd.f32 %v468, %v451
    %v470 = vadd.f32 %v469, %v452
    %471 = vadd.xlane.f32.xlu0 %v470
    %v472 = vpop.xlane.xlu0 %471
    %v473 = vmul.f32 %v457, 0.001953125
    %v474 = vmul.f32 %v462, 0.001953125
    %v475 = vmul.f32 %v467, 0.001953125
    %v476 = vmul.f32 %v472, 0.001953125
    %v477 = vsub.f32 %v437, %v473
    %v478 = vsub.f32 %v438, %v473
    %v479 = vsub.f32 %v439, %v473
    %v480 = vsub.f32 %v440, %v473
    %v481 = vsub.f32 %v441, %v474
    %v482 = vsub.f32 %v442, %v474
    %v483 = vsub.f32 %v443, %v474
    %v484 = vsub.f32 %v444, %v474
    %v485 = vsub.f32 %v445, %v475
    %v486 = vsub.f32 %v446, %v475
    %v487 = vsub.f32 %v447, %v475
    %v488 = vsub.f32 %v448, %v475
    %v489 = vsub.f32 %v449, %v476
    %v490 = vsub.f32 %v450, %v476
    %v491 = vsub.f32 %v451, %v476
    %v492 = vsub.f32 %v452, %v476
    %v493 = vmul.f32 %v477, %v477
    %v494 = vmul.f32 %v478, %v478
    %v495 = vmul.f32 %v479, %v479
    %v496 = vmul.f32 %v480, %v480
    %v497 = vmul.f32 %v481, %v481
    %v498 = vmul.f32 %v482, %v482
    %v499 = vmul.f32 %v483, %v483
    %v500 = vmul.f32 %v484, %v484
    %v501 = vmul.f32 %v485, %v485
    %v502 = vmul.f32 %v486, %v486
    %v503 = vmul.f32 %v487, %v487
    %v504 = vmul.f32 %v488, %v488
    %v505 = vmul.f32 %v489, %v489
    %v506 = vmul.f32 %v490, %v490
    %v507 = vmul.f32 %v491, %v491
    %v508 = vmul.f32 %v492, %v492
    %v509 = vadd.f32 %v493, %v494
    %v510 = vadd.f32 %v509, %v495
    %v511 = vadd.f32 %v510, %v496
    %512 = vadd.xlane.f32.xlu0 %v511
    %v513 = vpop.xlane.xlu0 %512
    %v514 = vadd.f32 %v497, %v498
    %v515 = vadd.f32 %v514, %v499
    %v516 = vadd.f32 %v515, %v500
    %517 = vadd.xlane.f32.xlu0 %v516
    %v518 = vpop.xlane.xlu0 %517
    %v519 = vadd.f32 %v501, %v502
    %v520 = vadd.f32 %v519, %v503
    %v521 = vadd.f32 %v520, %v504
    %522 = vadd.xlane.f32.xlu0 %v521
    %v523 = vpop.xlane.xlu0 %522
    %v524 = vadd.f32 %v505, %v506
    %v525 = vadd.f32 %v524, %v507
    %v526 = vadd.f32 %v525, %v508
    %527 = vadd.xlane.f32.xlu0 %v526
    %v528 = vpop.xlane.xlu0 %527
    %v529 = vmul.f32 %v513, 0.001953125
    %v530 = vmul.f32 %v518, 0.001953125
    %v531 = vmul.f32 %v523, 0.001953125
    %v532 = vmul.f32 %v528, 0.001953125
    %v533 = vld [vmem:[%s2] sm:$0xff]
    %v534 = vld [vmem:[%s2 + $0x8] sm:$0xff]
    %v535 = vld [vmem:[%s2 + $0x10] sm:$0xff]
    %v536 = vld [vmem:[%s2 + $0x18] sm:$0xff]
    %v537 = vadd.f32 %v529, 1e-05
    %v538 = vadd.f32 %v530, 1e-05
    %v539 = vadd.f32 %v531, 1e-05
    %v540 = vadd.f32 %v532, 1e-05
    %v541 = vrsqrt.pop %v537
    %v542 = vrsqrt.pop %v538
    %v543 = vrsqrt.pop %v539
    %v544 = vrsqrt.pop %v540
    %v545 = vmul.f32 %v533, %v541
    %v546 = vmul.f32 %v534, %v542
    %v547 = vmul.f32 %v535, %v543
    %v548 = vmul.f32 %v536, %v544
    %550 = vset.pattern.permute.xlu0 0
    %551 = vperm.xlu0 %550, %v545
    %v552 = vpop.permute.xlu0 %551
    %555 = vset.pattern.permute.xlu0 0
    %556 = vperm.xlu0 %555, %v546
    %v557 = vpop.permute.xlu0 %556
    %560 = vset.pattern.permute.xlu0 0
    %561 = vperm.xlu0 %560, %v547
    %v562 = vpop.permute.xlu0 %561
    %565 = vset.pattern.permute.xlu0 0
    %566 = vperm.xlu0 %565, %v548
    %v567 = vpop.permute.xlu0 %566
    %v569 = vmul.f32 %v477, %v552
    %v570 = vmul.f32 %v478, %v552
    %v571 = vmul.f32 %v479, %v552
    %v572 = vmul.f32 %v480, %v552
    %v573 = vmul.f32 %v481, %v557
    %v574 = vmul.f32 %v482, %v557
    %v575 = vmul.f32 %v483, %v557
    %v576 = vmul.f32 %v484, %v557
    %v577 = vmul.f32 %v485, %v562
    %v578 = vmul.f32 %v486, %v562
    %v579 = vmul.f32 %v487, %v562
    %v580 = vmul.f32 %v488, %v562
    %v581 = vmul.f32 %v489, %v567
    %v582 = vmul.f32 %v490, %v567
    %v583 = vmul.f32 %v491, %v567
    %v584 = vmul.f32 %v492, %v567
    %586 = vset.pattern.permute.xlu0 1
    %587 = vperm.xlu0 %586, %v533
    %v588 = vpop.permute.xlu0 %587
    %591 = vset.pattern.permute.xlu0 1
    %592 = vperm.xlu0 %591, %v534
    %v593 = vpop.permute.xlu0 %592
    %596 = vset.pattern.permute.xlu0 1
    %597 = vperm.xlu0 %596, %v535
    %v598 = vpop.permute.xlu0 %597
    %601 = vset.pattern.permute.xlu0 1
    %602 = vperm.xlu0 %601, %v536
    %v603 = vpop.permute.xlu0 %602
    %v605 = vadd.f32 %v569, %v588
    %v606 = vadd.f32 %v570, %v588
    %v607 = vadd.f32 %v571, %v588
    %v608 = vadd.f32 %v572, %v588
    %v609 = vadd.f32 %v573, %v593
    %v610 = vadd.f32 %v574, %v593
    %v611 = vadd.f32 %v575, %v593
    %v612 = vadd.f32 %v576, %v593
    %v613 = vadd.f32 %v577, %v598
    %v614 = vadd.f32 %v578, %v598
    %v615 = vadd.f32 %v579, %v598
    %v616 = vadd.f32 %v580, %v598
    %v617 = vadd.f32 %v581, %v603
    %v618 = vadd.f32 %v582, %v603
    %v619 = vadd.f32 %v583, %v603
    %v620 = vadd.f32 %v584, %v603
    %v621 = vmax.f32 %v605, 0.0
    %v622 = vmax.f32 %v606, 0.0
    %v623 = vmax.f32 %v607, 0.0
    %v624 = vmax.f32 %v608, 0.0
    %v625 = vmax.f32 %v609, 0.0
    %v626 = vmax.f32 %v610, 0.0
    %v627 = vmax.f32 %v611, 0.0
    %v628 = vmax.f32 %v612, 0.0
    %v629 = vmax.f32 %v613, 0.0
    %v630 = vmax.f32 %v614, 0.0
    %v631 = vmax.f32 %v615, 0.0
    %v632 = vmax.f32 %v616, 0.0
    %v633 = vmax.f32 %v617, 0.0
    %v634 = vmax.f32 %v618, 0.0
    %v635 = vmax.f32 %v619, 0.0
    %v636 = vmax.f32 %v620, 0.0
    %637 = vst [vmem:[%s3] sm:$0xff] %v621
    %638 = vst [vmem:[%s3 + $0x8] sm:$0xff] %v622
    %639 = vst [vmem:[%s3 + $0x10] sm:$0xff] %v623
    %640 = vst [vmem:[%s3 + $0x18] sm:$0xff] %v624
    %641 = vst [vmem:[%s3 + $0x20] sm:$0xff] %v625
    %642 = vst [vmem:[%s3 + $0x28] sm:$0xff] %v626
    %643 = vst [vmem:[%s3 + $0x30] sm:$0xff] %v627
    %644 = vst [vmem:[%s3 + $0x38] sm:$0xff] %v628
    %645 = vst [vmem:[%s3 + $0x40] sm:$0xff] %v629
    %646 = vst [vmem:[%s3 + $0x48] sm:$0xff] %v630
    %647 = vst [vmem:[%s3 + $0x50] sm:$0xff] %v631
    %648 = vst [vmem:[%s3 + $0x58] sm:$0xff] %v632
    %649 = vst [vmem:[%s3 + $0x60] sm:$0xff] %v633
    %650 = vst [vmem:[%s3 + $0x68] sm:$0xff] %v634
    %651 = vst [vmem:[%s3 + $0x70] sm:$0xff] %v635
    %652 = vst [vmem:[%s3 + $0x78] sm:$0xff] %v636
  $region21: #{resnet_forward.10} parent=0 // pred_fallthru
    _
  // Predicated region
  $region22: #{resnet_forward.10} parent=0 // pred_check
    _
  $region23: #{resnet_forward.10} parent=0 // pred_check_branch
    %654 = sbr.rel (0) target = $region25
  $region24: #{resnet_forward.10} parent=0 // pred_region
    _
  $region25: #{resnet_forward.10} parent=0 // pred_fallthru
    _
  // Predicated region
  $region26: #{resnet_forward.10} parent=0 // pred_check
    _
  $region27: #{resnet_forward.10} parent=0 // pred_check_branch
    %656 = sbr.rel (0) target = $region29
  $region28: #{resnet_forward.10} parent=0 // pred_region
    _
  $region29: #{resnet_forward.10} parent=0 // pred_fallthru
    _

// kernel: resnet_forward.11
$region0: #{resnet_forward.11}
  #allocation0 [shape = 'u32[]', space=smem, size = 0x4, offset = 0x4, fixed_abs, tag = 'smem constant byte address 0x4 - core index']
  #allocation1 [shape = 'u32[144,128]{1,0:T(1,128)}', space=vmem, size = 0x12000, scoped, tag = 'internal scratch']
  #allocation2 [shape = 'f32[32,512]{1,0:T(8,128)}', space=vmem, size = 0x10000, scoped, tag = 'scratch operand']
  %s0 = inlined_call_operand.vmem [shape: bf16[3,32,96], index: 0, kind: input, shape index: {}]
  %s1 = inlined_call_operand.vmem [shape: bf16[3,96,512], index: 1, kind: input, shape index: {}]
  %s2 = inlined_call_operand.vmem [shape: f32[32,2], index: 2, kind: input, shape index: {}, may-alias: {2,5}]
  %s3 = inlined_call_operand.vmem [shape: bf16[32,16], index: 3, kind: input, shape index: {}]
  %s4 = inlined_call_operand.vmem [shape: bf16[16,512], index: 4, kind: input, shape index: {}]
  %s5 = inlined_call_operand.vmem [shape: f32[32,2], index: 5, kind: input, shape index: {}, may-alias: {2,5}]
  %s6 = inlined_call_operand.vmem [shape: f32[32,512], index: 6, kind: output, shape index: {}]
  %s7 = sld [smem:[#allocation0]]
  $region65: #{resnet_forward.11} parent=0
    _
  %s9 = ssub.s32 1, %s7
  %s10 = scalar_select 0, %s9, %s7
  loop: start=0, step=1, limit=5
  $region2: #{resnet_forward.11} parent=0 // loop_pre_header
    _
  $region3: #{resnet_forward.11} parent=0 // loop_header
    %s12 = sphi 0, %s16
    %p13 = scmp.ge.s32.totalorder %s12, 5
    %s22 = sphi 0, %s24
    %s25 = sphi 0, %s22
    %s26 = sphi 0, %s25
    %s42 = sphi 0, %s26
    %s48 = sphi 0, %s50
    %s51 = sphi 0, %s48
    %s52 = sphi 0, %s51
    %s68 = sphi 0, %s52
    %s72 = sphi 0, %s72
    %s74 = sphi 0, %s72
    %s75 = sphi 0, %s74
    %s89 = sphi 0, %s75
    %s93 = sphi 0, %s93
    %s95 = sphi 0, %s93
    %s96 = sphi 0, %s95
    %s110 = sphi 0, %s96
    %s114 = sphi 0, %s114
    %s116 = sphi 0, %s114
    %s117 = sphi 0, %s116
    %s131 = sphi 0, %s117
    %s135 = sphi 0, %s135
    %s137 = sphi 0, %s135
    %s138 = sphi 0, %s137
    %s152 = sphi 0, %s138
    %s156 = sphi 0, %s156
    %s158 = sphi 0, %s156
    %s159 = sphi 0, %s158
    %s173 = sphi 0, %s159
  $region4: #{resnet_forward.11} parent=0 // loop_header_branch
    %15 = sbr.rel (%p13) target = $region8
  $region5: #{resnet_forward.11} parent=0 // loop_body
    %s17 = ssub.s32 %s12, 1
    %s18 = ssub.s32 %s12, 2
    %s19 = sadd.s32 %s12, 1
    %s20 = ssub.s32 %s12, %s19
    %p21 = scmp.eq.s32.totalorder %s20, 0
    %s23 = sadd.s32 %s22, 1
    %s24 = scalar_select %p21, %s22, %s23
    %p27 = pneg %p21
    %p28 = scmp.eq.s32.totalorder %s12, 2
    %p29 = por %p27, %p28
    %p30 = scmp.ne.s32.totalorder %s22, %s25
    %p31 = scmp.eq.s32.totalorder %s12, 0
    %p32 = por %p30, %p31
    %p33 = scmp.ne.s32.totalorder %s22, %s25
    %p34 = scmp.eq.s32.totalorder %s17, 2
    %p35 = por %p33, %p34
    %p36 = scmp.ne.s32.totalorder %s25, %s26
    %p37 = scmp.eq.s32.totalorder %s17, 0
    %p38 = por %p36, %p37
    %p39 = scmp.ne.s32.totalorder %s25, %s26
    %p40 = scmp.eq.s32.totalorder %s18, 2
    %p41 = por %p39, %p40
    %p43 = scmp.ne.s32.totalorder %s26, %s42
    %p44 = scmp.eq.s32.totalorder %s18, 0
    %p45 = por %p43, %p44
    %s46 = ssub.s32 %s12, %s19
    %p47 = scmp.eq.s32.totalorder %s46, 0
    %s49 = sadd.s32 %s48, 1
    %s50 = scalar_select %p47, %s48, %s49
    %p53 = pneg %p47
    %p54 = scmp.eq.s32.totalorder %s12, 2
    %p55 = por %p53, %p54
    %p56 = scmp.ne.s32.totalorder %s48, %s51
    %p57 = scmp.eq.s32.totalorder %s12, 0
    %p58 = por %p56, %p57
    %p59 = scmp.ne.s32.totalorder %s48, %s51
    %p60 = scmp.eq.s32.totalorder %s17, 2
    %p61 = por %p59, %p60
    %p62 = scmp.ne.s32.totalorder %s51, %s52
    %p63 = scmp.eq.s32.totalorder %s17, 0
    %p64 = por %p62, %p63
    %p65 = scmp.ne.s32.totalorder %s51, %s52
    %p66 = scmp.eq.s32.totalorder %s18, 2
    %p67 = por %p65, %p66
    %p69 = scmp.ne.s32.totalorder %s52, %s68
    %p70 = scmp.eq.s32.totalorder %s18, 0
    %p71 = por %p69, %p70
    %s73 = sadd.s32 %s72, 1
    %p76 = scmp.eq.s32.totalorder %s12, 2
    %p77 = scmp.ne.s32.totalorder %s72, %s74
    %p78 = scmp.eq.s32.totalorder %s12, 0
    %p79 = por %p77, %p78
    %p80 = scmp.ne.s32.totalorder %s72, %s74
    %p81 = scmp.eq.s32.totalorder %s17, 2
    %p82 = por %p80, %p81
    %p83 = scmp.ne.s32.totalorder %s74, %s75
    %p84 = scmp.eq.s32.totalorder %s17, 0
    %p85 = por %p83, %p84
    %p86 = scmp.ne.s32.totalorder %s74, %s75
    %p87 = scmp.eq.s32.totalorder %s18, 2
    %p88 = por %p86, %p87
    %p90 = scmp.ne.s32.totalorder %s75, %s89
    %p91 = scmp.eq.s32.totalorder %s18, 0
    %p92 = por %p90, %p91
    %s94 = sadd.s32 %s93, 1
    %p97 = scmp.eq.s32.totalorder %s12, 2
    %p98 = scmp.ne.s32.totalorder %s93, %s95
    %p99 = scmp.eq.s32.totalorder %s12, 0
    %p100 = por %p98, %p99
    %p101 = scmp.ne.s32.totalorder %s93, %s95
    %p102 = scmp.eq.s32.totalorder %s17, 2
    %p103 = por %p101, %p102
    %p104 = scmp.ne.s32.totalorder %s95, %s96
    %p105 = scmp.eq.s32.totalorder %s17, 0
    %p106 = por %p104, %p105
    %p107 = scmp.ne.s32.totalorder %s95, %s96
    %p108 = scmp.eq.s32.totalorder %s18, 2
    %p109 = por %p107, %p108
    %p111 = scmp.ne.s32.totalorder %s96, %s110
    %p112 = scmp.eq.s32.totalorder %s18, 0
    %p113 = por %p111, %p112
    %s115 = sadd.s32 %s114, 1
    %p118 = scmp.eq.s32.totalorder %s12, 2
    %p119 = scmp.ne.s32.totalorder %s114, %s116
    %p120 = scmp.eq.s32.totalorder %s12, 0
    %p121 = por %p119, %p120
    %p122 = scmp.ne.s32.totalorder %s114, %s116
    %p123 = scmp.eq.s32.totalorder %s17, 2
    %p124 = por %p122, %p123
    %p125 = scmp.ne.s32.totalorder %s116, %s117
    %p126 = scmp.eq.s32.totalorder %s17, 0
    %p127 = por %p125, %p126
    %p128 = scmp.ne.s32.totalorder %s116, %s117
    %p129 = scmp.eq.s32.totalorder %s18, 2
    %p130 = por %p128, %p129
    %p132 = scmp.ne.s32.totalorder %s117, %s131
    %p133 = scmp.eq.s32.totalorder %s18, 0
    %p134 = por %p132, %p133
    %s136 = sadd.s32 %s135, 1
    %p139 = scmp.eq.s32.totalorder %s12, 2
    %p140 = scmp.ne.s32.totalorder %s135, %s137
    %p141 = scmp.eq.s32.totalorder %s12, 0
    %p142 = por %p140, %p141
    %p143 = scmp.ne.s32.totalorder %s135, %s137
    %p144 = scmp.eq.s32.totalorder %s17, 2
    %p145 = por %p143, %p144
    %p146 = scmp.ne.s32.totalorder %s137, %s138
    %p147 = scmp.eq.s32.totalorder %s17, 0
    %p148 = por %p146, %p147
    %p149 = scmp.ne.s32.totalorder %s137, %s138
    %p150 = scmp.eq.s32.totalorder %s18, 2
    %p151 = por %p149, %p150
    %p153 = scmp.ne.s32.totalorder %s138, %s152
    %p154 = scmp.eq.s32.totalorder %s18, 0
    %p155 = por %p153, %p154
    %s157 = sadd.s32 %s156, 1
    %p160 = scmp.eq.s32.totalorder %s12, 2
    %p161 = scmp.ne.s32.totalorder %s156, %s158
    %p162 = scmp.eq.s32.totalorder %s12, 0
    %p163 = por %p161, %p162
    %p164 = scmp.ne.s32.totalorder %s156, %s158
    %p165 = scmp.eq.s32.totalorder %s17, 2
    %p166 = por %p164, %p165
    %p167 = scmp.ne.s32.totalorder %s158, %s159
    %p168 = scmp.eq.s32.totalorder %s17, 0
    %p169 = por %p167, %p168
    %p170 = scmp.ne.s32.totalorder %s158, %s159
    %p171 = scmp.eq.s32.totalorder %s18, 2
    %p172 = por %p170, %p171
    %p174 = scmp.ne.s32.totalorder %s159, %s173
    %p175 = scmp.eq.s32.totalorder %s18, 0
    %p176 = por %p174, %p175
    %p177 = scmp.le.s32.totalorder 1, %s12
    %p178 = scmp.lt.s32.totalorder %s12, 4
    %p179 = pnand %p177, %p178
    %p180 = pneg %p179
    // Predicated region
    $region9: #{resnet_forward.11} parent=5 // pred_check
      _
    $region10: #{resnet_forward.11} parent=5 // pred_check_branch
      %182 = sbr.rel (%p179) target = $region12
    $region11: #{resnet_forward.11} parent=5 // pred_region
      %s183 = ssub.s32 %s12, 1
      // Predicated region
      $region13: #{resnet_forward.11} parent=11 // pred_check
        %p184 = pneg %p85
      $region14: #{resnet_forward.11} parent=11 // pred_check_branch
        %186 = sbr.rel (%p184) target = $region16
      $region15: #{resnet_forward.11} parent=11 // pred_region
        _
      $region16: #{resnet_forward.11} parent=11 // pred_fallthru
        _
      // Predicated region
      $region17: #{resnet_forward.11} parent=11 // pred_check
        %p187 = pneg %p106
      $region18: #{resnet_forward.11} parent=11 // pred_check_branch
        %189 = sbr.rel (%p187) target = $region20
      $region19: #{resnet_forward.11} parent=11 // pred_region
        _
      $region20: #{resnet_forward.11} parent=11 // pred_fallthru
        _
      // Predicated region
      $region21: #{resnet_forward.11} parent=11 // pred_check
        %p190 = pneg %p127
      $region22: #{resnet_forward.11} parent=11 // pred_check_branch
        %192 = sbr.rel (%p190) target = $region24
      $region23: #{resnet_forward.11} parent=11 // pred_region
        _
      $region24: #{resnet_forward.11} parent=11 // pred_fallthru
        _
      // Predicated region
      $region25: #{resnet_forward.11} parent=11 // pred_check
        %p193 = pneg %p148
      $region26: #{resnet_forward.11} parent=11 // pred_check_branch
        %195 = sbr.rel (%p193) target = $region28
      $region27: #{resnet_forward.11} parent=11 // pred_region
        _
      $region28: #{resnet_forward.11} parent=11 // pred_fallthru
        _
    $region12: #{resnet_forward.11} parent=5 // pred_fallthru
      _
    %p196 = scmp.lt.s32.totalorder %s12, 3
    // Predicated region
    $region29: #{resnet_forward.11} parent=5 // pred_check
      %p197 = pneg %p196
    $region30: #{resnet_forward.11} parent=5 // pred_check_branch
      %199 = sbr.rel (%p197) target = $region32
    $region31: #{resnet_forward.11} parent=5 // pred_region
      // Predicated region
      $region33: #{resnet_forward.11} parent=31 // pred_check
        %p200 = pneg %p32
      $region34: #{resnet_forward.11} parent=31 // pred_check_branch
        %202 = sbr.rel (%p200) target = $region36
      $region35: #{resnet_forward.11} parent=31 // pred_region
        %p203 = scmp.lt.s32.totalorder %s12, 2
        %s204 = scalar_select %p203, %s12, 2
        %s205 = smul.addr %s204, 4
        %s206 = smul.addr %s205, 4
        %s207 = scalar_lea.vmem %s0, %s206
      $region36: #{resnet_forward.11} parent=31 // pred_fallthru
        _
      // Predicated region
      $region37: #{resnet_forward.11} parent=31 // pred_check
        %p208 = pneg %p58
      $region38: #{resnet_forward.11} parent=31 // pred_check_branch
        %210 = sbr.rel (%p208) target = $region40
      $region39: #{resnet_forward.11} parent=31 // pred_region
        %p211 = scmp.lt.s32.totalorder %s12, 2
        %s212 = scalar_select %p211, %s12, 2
        %s213 = smul.addr %s212, 48
        %s214 = smul.addr %s213, 4
        %s215 = scalar_lea.vmem %s1, %s214
      $region40: #{resnet_forward.11} parent=31 // pred_fallthru
        _
    $region32: #{resnet_forward.11} parent=5 // pred_fallthru
      _
    %p216 = scmp.le.s32.totalorder 1, %s12
    %p217 = scmp.lt.s32.totalorder %s12, 4
    %p218 = pnand %p216, %p217
    %p219 = pneg %p218
    // Predicated region
    $region41: #{resnet_forward.11} parent=5 // pred_check
      _
    $region42: #{resnet_forward.11} parent=5 // pred_check_branch
      %221 = sbr.rel (%p218) target = $region44
    $region43: #{resnet_forward.11} parent=5 // pred_region
      %s222 = ssub.s32 %s12, 1
      %p223 = scmp.lt.s32.totalorder %s17, 2
      %s224 = scalar_select %p223, %s17, 2
      %s225 = smul.addr %s224, 4
      %s226 = smul.addr %s225, 4
      %s227 = scalar_lea.vmem %s0, %s226
      %p228 = pneg %p38
      %p229 = pneg %p35
      %p230 = scmp.lt.s32.totalorder %s17, 2
      %s231 = scalar_select %p230, %s17, 2
      %s232 = smul.addr %s231, 48
      %s233 = smul.addr %s232, 4
      %s234 = scalar_lea.vmem %s1, %s233
      %p235 = pneg %p64
      %p236 = pneg %p61
      %p237 = pneg %p85
      %p238 = pneg %p82
      %p239 = pneg %p106
      %p240 = pneg %p103
      %p241 = pneg %p127
      %p242 = pneg %p124
      %p243 = pneg %p148
      %p244 = pneg %p145
      %p245 = pneg %p169
      %p246 = pneg %p166
      %p247 = scmp.lt.s32.totalorder %s17, 2
      %s248 = scalar_select %p247, %s17, 2
      %s249 = smul.addr %s248, 4
      %s250 = smul.addr %s249, 4
      %s251 = scalar_lea.vmem %s0, %s250
      %p252 = scmp.lt.s32.totalorder %s17, 2
      %s253 = scalar_select %p252, %s17, 2
      %s254 = smul.addr %s253, 48
      %s255 = smul.addr %s254, 4
      %s256 = scalar_lea.vmem %s1, %s255
      %p258 = scmp.eq.s32.totalorder %s17, 0
      // Predicated region
      $region45: #{resnet_forward.11} parent=43 // pred_check
        %p259 = pneg %p258
      $region46: #{resnet_forward.11} parent=43 // pred_check_branch
        %261 = sbr.rel (%p259) target = $region48
      $region47: #{resnet_forward.11} parent=43 // pred_region
        %262 = vst [vmem:[#allocation2] sm:$0xff] 0.0
        %263 = vst [vmem:[#allocation2 + $0x8] sm:$0xff] 0.0
        %264 = vst [vmem:[#allocation2 + $0x10] sm:$0xff] 0.0
        %265 = vst [vmem:[#allocation2 + $0x18] sm:$0xff] 0.0
        %266 = vst [vmem:[#allocation2 + $0x20] sm:$0xff] 0.0
        %267 = vst [vmem:[#allocation2 + $0x28] sm:$0xff] 0.0
        %268 = vst [vmem:[#allocation2 + $0x30] sm:$0xff] 0.0
        %269 = vst [vmem:[#allocation2 + $0x38] sm:$0xff] 0.0
        %270 = vst [vmem:[#allocation2 + $0x40] sm:$0xff] 0.0
        %271 = vst [vmem:[#allocation2 + $0x48] sm:$0xff] 0.0
        %272 = vst [vmem:[#allocation2 + $0x50] sm:$0xff] 0.0
        %273 = vst [vmem:[#allocation2 + $0x58] sm:$0xff] 0.0
        %274 = vst [vmem:[#allocation2 + $0x60] sm:$0xff] 0.0
        %275 = vst [vmem:[#allocation2 + $0x68] sm:$0xff] 0.0
        %276 = vst [vmem:[#allocation2 + $0x70] sm:$0xff] 0.0
        %277 = vst [vmem:[#allocation2 + $0x78] sm:$0xff] 0.0
      $region48: #{resnet_forward.11} parent=43 // pred_fallthru
        _
      %v278 = vld [vmem:[#allocation2] sm:$0xff]
      %v279 = vld [vmem:[#allocation2 + $0x8] sm:$0xff]
      %v280 = vld [vmem:[#allocation2 + $0x10] sm:$0xff]
      %v281 = vld [vmem:[#allocation2 + $0x18] sm:$0xff]
      %v282 = vld [vmem:[#allocation2 + $0x20] sm:$0xff]
      %v283 = vld [vmem:[#allocation2 + $0x28] sm:$0xff]
      %v284 = vld [vmem:[#allocation2 + $0x30] sm:$0xff]
      %v285 = vld [vmem:[#allocation2 + $0x38] sm:$0xff]
      %v286 = vld [vmem:[#allocation2 + $0x40] sm:$0xff]
      %v287 = vld [vmem:[#allocation2 + $0x48] sm:$0xff]
      %v288 = vld [vmem:[#allocation2 + $0x50] sm:$0xff]
      %v289 = vld [vmem:[#allocation2 + $0x58] sm:$0xff]
      %v290 = vld [vmem:[#allocation2 + $0x60] sm:$0xff]
      %v291 = vld [vmem:[#allocation2 + $0x68] sm:$0xff]
      %v292 = vld [vmem:[#allocation2 + $0x70] sm:$0xff]
      %v293 = vld [vmem:[#allocation2 + $0x78] sm:$0xff]
      %v294 = vld [vmem:[%s251] sm:$0xf]
      %v295 = vld [vmem:[%s251 + $0x4] sm:$0xf]
      %v296 = vld [vmem:[%s251 + $0x8] sm:$0xf]
      %v297 = vld [vmem:[%s251 + $0xc] sm:$0xf]
      %v298 = vld [vmem:[%s256] sm:$0xff]
      %v299 = vld [vmem:[%s256 + $0x8] sm:$0xff]
      %v300 = vld [vmem:[%s256 + $0x10] sm:$0xff]
      %v301 = vld [vmem:[%s256 + $0x18] sm:$0xff]
      %v302 = vld [vmem:[%s256 + $0x20] sm:$0xff]
      %v303 = vld [vmem:[%s256 + $0x28] sm:$0xff]
      %v304 = vld [vmem:[%s256 + $0x30] sm:$0xff]
      %v305 = vld [vmem:[%s256 + $0x38] sm:$0xff]
      %v306 = vld [vmem:[%s256 + $0x40] sm:$0xff]
      %v307 = vld [vmem:[%s256 + $0x48] sm:$0xff]
      %v308 = vld [vmem:[%s256 + $0x50] sm:$0xff]
      %v309 = vld [vmem:[%s256 + $0x58] sm:$0xff]
      %v310 = vld [vmem:[%s256 + $0x60] sm:$0xff]
      %v311 = vld [vmem:[%s256 + $0x68] sm:$0xff]
      %v312 = vld [vmem:[%s256 + $0x70] sm:$0xff]
      %v313 = vld [vmem:[%s256 + $0x78] sm:$0xff]
      %v314 = vld [vmem:[%s256 + $0x80] sm:$0xff]
      %v315 = vld [vmem:[%s256 + $0x88] sm:$0xff]
      %v316 = vld [vmem:[%s256 + $0x90] sm:$0xff]
      %v317 = vld [vmem:[%s256 + $0x98] sm:$0xff]
      %v318 = vld [vmem:[%s256 + $0xa0] sm:$0xff]
      %v319 = vld [vmem:[%s256 + $0xa8] sm:$0xff]
      %v320 = vld [vmem:[%s256 + $0xb0] sm:$0xff]
      %v321 = vld [vmem:[%s256 + $0xb8] sm:$0xff]
      %v326 = vunpack.c.l.b16 %v294
      %v327 = vunpack.c.l.b16 %v295
      %v328 = vunpack.c.l.b16 %v296
      %v329 = vunpack.c.l.b16 %v297
      %v330 = vpack.c.b16 %v327, %v326
      %v331 = vpack.c.b16 %v329, %v328
      %v356 = vunpack.c.l.b16 %v298
      %v357 = vunpack.c.h.b16 %v298
      %v358 = vunpack.c.l.b16 %v299
      %v359 = vunpack.c.h.b16 %v299
      %v360 = vunpack.c.l.b16 %v300
      %v361 = vunpack.c.h.b16 %v300
      %v362 = vunpack.c.l.b16 %v301
      %v363 = vunpack.c.h.b16 %v301
      %v364 = vunpack.c.l.b16 %v302
      %v365 = vunpack.c.h.b16 %v302
      %v366 = vunpack.c.l.b16 %v303
      %v367 = vunpack.c.h.b16 %v303
      %v368 = vunpack.c.l.b16 %v304
      %v369 = vunpack.c.h.b16 %v304
      %v370 = vunpack.c.l.b16 %v305
      %v371 = vunpack.c.h.b16 %v305
      %v372 = vunpack.c.l.b16 %v306
      %v373 = vunpack.c.h.b16 %v306
      %v374 = vunpack.c.l.b16 %v307
      %v375 = vunpack.c.h.b16 %v307
      %v376 = vunpack.c.l.b16 %v308
      %v377 = vunpack.c.h.b16 %v308
      %v378 = vunpack.c.l.b16 %v309
      %v379 = vunpack.c.h.b16 %v309
      %v380 = vunpack.c.l.b16 %v310
      %v381 = vunpack.c.h.b16 %v310
      %v382 = vunpack.c.l.b16 %v311
      %v383 = vunpack.c.h.b16 %v311
      %v384 = vunpack.c.l.b16 %v312
      %v385 = vunpack.c.h.b16 %v312
      %v386 = vunpack.c.l.b16 %v313
      %v387 = vunpack.c.h.b16 %v313
      %v388 = vunpack.c.l.b16 %v314
      %v389 = vunpack.c.h.b16 %v314
      %v390 = vunpack.c.l.b16 %v315
      %v391 = vunpack.c.h.b16 %v315
      %v392 = vunpack.c.l.b16 %v316
      %v393 = vunpack.c.h.b16 %v316
      %v394 = vunpack.c.l.b16 %v317
      %v395 = vunpack.c.h.b16 %v317
      %v396 = vunpack.c.l.b16 %v318
      %v397 = vunpack.c.h.b16 %v318
      %v398 = vunpack.c.l.b16 %v319
      %v399 = vunpack.c.h.b16 %v319
      %v400 = vunpack.c.l.b16 %v320
      %v401 = vunpack.c.h.b16 %v320
      %v402 = vunpack.c.l.b16 %v321
      %v403 = vunpack.c.h.b16 %v321
      %v404 = vpack.c.b16 %v360, %v356
      %v405 = vpack.c.b16 %v361, %v357
      %v406 = vpack.c.b16 %v362, %v358
      %v407 = vpack.c.b16 %v363, %v359
      %v408 = vpack.c.b16 %v368, %v364
      %v409 = vpack.c.b16 %v369, %v365
      %v410 = vpack.c.b16 %v370, %v366
      %v411 = vpack.c.b16 %v371, %v367
      %v412 = vpack.c.b16 %v376, %v372
      %v413 = vpack.c.b16 %v377, %v373
      %v414 = vpack.c.b16 %v378, %v374
      %v415 = vpack.c.b16 %v379, %v375
      %v416 = vpack.c.b16 %v384, %v380
      %v417 = vpack.c.b16 %v385, %v381
      %v418 = vpack.c.b16 %v386, %v382
      %v419 = vpack.c.b16 %v387, %v383
      %v420 = vpack.c.b16 %v392, %v388
      %v421 = vpack.c.b16 %v393, %v389
      %v422 = vpack.c.b16 %v394, %v390
      %v423 = vpack.c.b16 %v395, %v391
      %v424 = vpack.c.b16 %v400, %v396
      %v425 = vpack.c.b16 %v401, %v397
      %v426 = vpack.c.b16 %v402, %v398
      %v427 = vpack.c.b16 %v403, %v399
      %vm452 = vcmask 785408
      %v454 = vsel %vm452, %v330, 0
      %v457 = vsel %vm452, %v331, 0
      %459 = vmatprep.subr.bf16.mxu0 %v405
      %460 = vmatpush1.bf16.msra.mxu0 %v404
      %461 = vmatprep.subr.bf16.mxu0 %v409
      %462 = vmatpush1.bf16.msra.mxu0 %v408
      %463 = vmatprep.subr.bf16.mxu0 %v413
      %464 = vmatpush1.bf16.msra.mxu0 %v412
      %465 = vmatprep.subr.bf16.mxu0 %v417
      %466 = vmatpush1.bf16.msra.mxu0 %v416
      %467 = vmatprep.subr.bf16.mxu0 %v421
      %468 = vmatpush1.bf16.msra.mxu0 %v420
      %469 = vmatprep.subr.bf16.mxu0 %v425
      %470 = vmatpush1.bf16.msra.mxu0 %v424
      %471 = vmatprep.subr.bf16.mxu0 0
      %472 = vmatpush1.bf16.msra.mxu0 0
      %473 = vmatprep.subr.bf16.mxu0 0
      %474 = vmatpush1.bf16.msra.mxu0 0
      %475 = vmatprep.subr.bf16.mxu0 0
      %476 = vmatpush1.bf16.msra.mxu0 0
      %477 = vmatprep.subr.bf16.mxu0 0
      %478 = vmatpush1.bf16.msra.mxu0 0
      %479 = vmatprep.subr.bf16.mxu0 0
      %480 = vmatpush1.bf16.msra.mxu0 0
      %481 = vmatprep.subr.bf16.mxu0 0
      %482 = vmatpush1.bf16.msra.mxu0 0
      %483 = vmatprep.subr.bf16.mxu0 0
      %484 = vmatpush1.bf16.msra.mxu0 0
      %485 = vmatprep.subr.bf16.mxu0 0
      %486 = vmatpush1.bf16.msra.mxu0 0
      %487 = vmatprep.subr.bf16.mxu0 0
      %488 = vmatpush1.bf16.msra.mxu0 0
      %489 = vmatprep.subr.bf16.mxu0 0
      %490 = vmatpush1.bf16.msra.mxu0 0
      %491 = vmatprep.mubr.bf16.mxu0 0
      %492 = vmatmul.mubr.bf16.gmra.mrb[0].mxu0 %v454
      %v493 = vpop.f32.mrb[0].mxu0
      %v494 = vadd.f32 0.0, %v493
      %v495 = vpop.f32.mrb[0].mxu0
      %v496 = vadd.f32 0.0, %v495
      %v497 = vpop.f32.mrb[0].mxu0
      %v498 = vadd.f32 0.0, %v497
      %v499 = vpop.f32.mrb[0].mxu0
      %v500 = vadd.f32 0.0, %v499
      %501 = vmatprep.mubr.bf16.mxu0 0
      %502 = vmatmul.mubr.bf16.gmra.mrb[0].mxu0 %v457
      %v503 = vpop.f32.mrb[0].mxu0
      %v504 = vadd.f32 0.0, %v503
      %v505 = vpop.f32.mrb[0].mxu0
      %v506 = vadd.f32 0.0, %v505
      %v507 = vpop.f32.mrb[0].mxu0
      %v508 = vadd.f32 0.0, %v507
      %v509 = vpop.f32.mrb[0].mxu0
      %v510 = vadd.f32 0.0, %v509
      %511 = vdwg.mxu0
      %512 = vmatprep.subr.bf16.mxu0 %v407
      %513 = vmatpush1.bf16.msra.mxu0 %v406
      %514 = vmatprep.subr.bf16.mxu0 %v411
      %515 = vmatpush1.bf16.msra.mxu0 %v410
      %516 = vmatprep.subr.bf16.mxu0 %v415
      %517 = vmatpush1.bf16.msra.mxu0 %v414
      %518 = vmatprep.subr.bf16.mxu0 %v419
      %519 = vmatpush1.bf16.msra.mxu0 %v418
      %520 = vmatprep.subr.bf16.mxu0 %v423
      %521 = vmatpush1.bf16.msra.mxu0 %v422
      %522 = vmatprep.subr.bf16.mxu0 %v427
      %523 = vmatpush1.bf16.msra.mxu0 %v426
      %524 = vmatprep.subr.bf16.mxu0 0
      %525 = vmatpush1.bf16.msra.mxu0 0
      %526 = vmatprep.subr.bf16.mxu0 0
      %527 = vmatpush1.bf16.msra.mxu0 0
      %528 = vmatprep.subr.bf16.mxu0 0
      %529 = vmatpush1.bf16.msra.mxu0 0
      %530 = vmatprep.subr.bf16.mxu0 0
      %531 = vmatpush1.bf16.msra.mxu0 0
      %532 = vmatprep.subr.bf16.mxu0 0
      %533 = vmatpush1.bf16.msra.mxu0 0
      %534 = vmatprep.subr.bf16.mxu0 0
      %535 = vmatpush1.bf16.msra.mxu0 0
      %536 = vmatprep.subr.bf16.mxu0 0
      %537 = vmatpush1.bf16.msra.mxu0 0
      %538 = vmatprep.subr.bf16.mxu0 0
      %539 = vmatpush1.bf16.msra.mxu0 0
      %540 = vmatprep.subr.bf16.mxu0 0
      %541 = vmatpush1.bf16.msra.mxu0 0
      %542 = vmatprep.subr.bf16.mxu0 0
      %543 = vmatpush1.bf16.msra.mxu0 0
      %544 = vmatprep.mubr.bf16.mxu0 0
      %545 = vmatmul.mubr.bf16.gmra.mrb[0].mxu0 %v454
      %v546 = vpop.f32.mrb[0].mxu0
      %v547 = vadd.f32 0.0, %v546
      %v548 = vpop.f32.mrb[0].mxu0
      %v549 = vadd.f32 0.0, %v548
      %v550 = vpop.f32.mrb[0].mxu0
      %v551 = vadd.f32 0.0, %v550
      %v552 = vpop.f32.mrb[0].mxu0
      %v553 = vadd.f32 0.0, %v552
      %554 = vmatprep.mubr.bf16.mxu0 0
      %555 = vmatmul.mubr.bf16.gmra.mrb[0].mxu0 %v457
      %v556 = vpop.f32.mrb[0].mxu0
      %v557 = vadd.f32 0.0, %v556
      %v558 = vpop.f32.mrb[0].mxu0
      %v559 = vadd.f32 0.0, %v558
      %v560 = vpop.f32.mrb[0].mxu0
      %v561 = vadd.f32 0.0, %v560
      %v562 = vpop.f32.mrb[0].mxu0
      %v563 = vadd.f32 0.0, %v562
      %564 = vdwg.mxu0
      %v565 = vadd.f32 %v278, %v494
      %v566 = vadd.f32 %v279, %v496
      %v567 = vadd.f32 %v280, %v547
      %v568 = vadd.f32 %v281, %v549
      %v569 = vadd.f32 %v282, %v498
      %v570 = vadd.f32 %v283, %v500
      %v571 = vadd.f32 %v284, %v551
      %v572 = vadd.f32 %v285, %v553
      %v573 = vadd.f32 %v286, %v504
      %v574 = vadd.f32 %v287, %v506
      %v575 = vadd.f32 %v288, %v557
      %v576 = vadd.f32 %v289, %v559
      %v577 = vadd.f32 %v290, %v508
      %v578 = vadd.f32 %v291, %v510
      %v579 = vadd.f32 %v292, %v561
      %v580 = vadd.f32 %v293, %v563
      %581 = vst [vmem:[#allocation2] sm:$0xff] %v565
      %582 = vst [vmem:[#allocation2 + $0x8] sm:$0xff] %v566
      %583 = vst [vmem:[#allocation2 + $0x10] sm:$0xff] %v567
      %584 = vst [vmem:[#allocation2 + $0x18] sm:$0xff] %v568
      %585 = vst [vmem:[#allocation2 + $0x20] sm:$0xff] %v569
      %586 = vst [vmem:[#allocation2 + $0x28] sm:$0xff] %v570
      %587 = vst [vmem:[#allocation2 + $0x30] sm:$0xff] %v571
      %588 = vst [vmem:[#allocation2 + $0x38] sm:$0xff] %v572
      %589 = vst [vmem:[#allocation2 + $0x40] sm:$0xff] %v573
      %590 = vst [vmem:[#allocation2 + $0x48] sm:$0xff] %v574
      %591 = vst [vmem:[#allocation2 + $0x50] sm:$0xff] %v575
      %592 = vst [vmem:[#allocation2 + $0x58] sm:$0xff] %v576
      %593 = vst [vmem:[#allocation2 + $0x60] sm:$0xff] %v577
      %594 = vst [vmem:[#allocation2 + $0x68] sm:$0xff] %v578
      %595 = vst [vmem:[#allocation2 + $0x70] sm:$0xff] %v579
      %596 = vst [vmem:[#allocation2 + $0x78] sm:$0xff] %v580
      %p597 = scmp.eq.s32.totalorder %s17, 2
      // Predicated region
      $region49: #{resnet_forward.11} parent=43 // pred_check
        %p598 = pneg %p597
      $region50: #{resnet_forward.11} parent=43 // pred_check_branch
        %600 = sbr.rel (%p598) target = $region52
      $region51: #{resnet_forward.11} parent=43 // pred_region
        %v601 = vld [vmem:[#allocation2] sm:$0xff]
        %v602 = vld [vmem:[#allocation2 + $0x8] sm:$0xff]
        %v603 = vld [vmem:[#allocation2 + $0x10] sm:$0xff]
        %v604 = vld [vmem:[#allocation2 + $0x18] sm:$0xff]
        %v605 = vld [vmem:[#allocation2 + $0x20] sm:$0xff]
        %v606 = vld [vmem:[#allocation2 + $0x28] sm:$0xff]
        %v607 = vld [vmem:[#allocation2 + $0x30] sm:$0xff]
        %v608 = vld [vmem:[#allocation2 + $0x38] sm:$0xff]
        %v609 = vld [vmem:[#allocation2 + $0x40] sm:$0xff]
        %v610 = vld [vmem:[#allocation2 + $0x48] sm:$0xff]
        %v611 = vld [vmem:[#allocation2 + $0x50] sm:$0xff]
        %v612 = vld [vmem:[#allocation2 + $0x58] sm:$0xff]
        %v613 = vld [vmem:[#allocation2 + $0x60] sm:$0xff]
        %v614 = vld [vmem:[#allocation2 + $0x68] sm:$0xff]
        %v615 = vld [vmem:[#allocation2 + $0x70] sm:$0xff]
        %v616 = vld [vmem:[#allocation2 + $0x78] sm:$0xff]
        %v617 = vadd.f32 %v601, %v602
        %v618 = vadd.f32 %v617, %v603
        %v619 = vadd.f32 %v618, %v604
        %620 = vadd.xlane.f32.xlu0 %v619
        %v621 = vpop.xlane.xlu0 %620
        %v622 = vadd.f32 %v605, %v606
        %v623 = vadd.f32 %v622, %v607
        %v624 = vadd.f32 %v623, %v608
        %625 = vadd.xlane.f32.xlu0 %v624
        %v626 = vpop.xlane.xlu0 %625
        %v627 = vadd.f32 %v609, %v610
        %v628 = vadd.f32 %v627, %v611
        %v629 = vadd.f32 %v628, %v612
        %630 = vadd.xlane.f32.xlu0 %v629
        %v631 = vpop.xlane.xlu0 %630
        %v632 = vadd.f32 %v613, %v614
        %v633 = vadd.f32 %v632, %v615
        %v634 = vadd.f32 %v633, %v616
        %635 = vadd.xlane.f32.xlu0 %v634
        %v636 = vpop.xlane.xlu0 %635
        %v637 = vmul.f32 %v621, 0.001953125
        %v638 = vmul.f32 %v626, 0.001953125
        %v639 = vmul.f32 %v631, 0.001953125
        %v640 = vmul.f32 %v636, 0.001953125
        %v641 = vsub.f32 %v601, %v637
        %v642 = vsub.f32 %v602, %v637
        %v643 = vsub.f32 %v603, %v637
        %v644 = vsub.f32 %v604, %v637
        %v645 = vsub.f32 %v605, %v638
        %v646 = vsub.f32 %v606, %v638
        %v647 = vsub.f32 %v607, %v638
        %v648 = vsub.f32 %v608, %v638
        %v649 = vsub.f32 %v609, %v639
        %v650 = vsub.f32 %v610, %v639
        %v651 = vsub.f32 %v611, %v639
        %v652 = vsub.f32 %v612, %v639
        %v653 = vsub.f32 %v613, %v640
        %v654 = vsub.f32 %v614, %v640
        %v655 = vsub.f32 %v615, %v640
        %v656 = vsub.f32 %v616, %v640
        %v657 = vmul.f32 %v641, %v641
        %v658 = vmul.f32 %v642, %v642
        %v659 = vmul.f32 %v643, %v643
        %v660 = vmul.f32 %v644, %v644
        %v661 = vmul.f32 %v645, %v645
        %v662 = vmul.f32 %v646, %v646
        %v663 = vmul.f32 %v647, %v647
        %v664 = vmul.f32 %v648, %v648
        %v665 = vmul.f32 %v649, %v649
        %v666 = vmul.f32 %v650, %v650
        %v667 = vmul.f32 %v651, %v651
        %v668 = vmul.f32 %v652, %v652
        %v669 = vmul.f32 %v653, %v653
        %v670 = vmul.f32 %v654, %v654
        %v671 = vmul.f32 %v655, %v655
        %v672 = vmul.f32 %v656, %v656
        %v673 = vadd.f32 %v657, %v658
        %v674 = vadd.f32 %v673, %v659
        %v675 = vadd.f32 %v674, %v660
        %676 = vadd.xlane.f32.xlu0 %v675
        %v677 = vpop.xlane.xlu0 %676
        %v678 = vadd.f32 %v661, %v662
        %v679 = vadd.f32 %v678, %v663
        %v680 = vadd.f32 %v679, %v664
        %681 = vadd.xlane.f32.xlu0 %v680
        %v682 = vpop.xlane.xlu0 %681
        %v683 = vadd.f32 %v665, %v666
        %v684 = vadd.f32 %v683, %v667
        %v685 = vadd.f32 %v684, %v668
        %686 = vadd.xlane.f32.xlu0 %v685
        %v687 = vpop.xlane.xlu0 %686
        %v688 = vadd.f32 %v669, %v670
        %v689 = vadd.f32 %v688, %v671
        %v690 = vadd.f32 %v689, %v672
        %691 = vadd.xlane.f32.xlu0 %v690
        %v692 = vpop.xlane.xlu0 %691
        %v693 = vmul.f32 %v677, 0.001953125
        %v694 = vmul.f32 %v682, 0.001953125
        %v695 = vmul.f32 %v687, 0.001953125
        %v696 = vmul.f32 %v692, 0.001953125
        %v697 = vld [vmem:[%s2] sm:$0xff]
        %v698 = vld [vmem:[%s2 + $0x8] sm:$0xff]
        %v699 = vld [vmem:[%s2 + $0x10] sm:$0xff]
        %v700 = vld [vmem:[%s2 + $0x18] sm:$0xff]
        %v701 = vadd.f32 %v693, 1e-05
        %v702 = vadd.f32 %v694, 1e-05
        %v703 = vadd.f32 %v695, 1e-05
        %v704 = vadd.f32 %v696, 1e-05
        %v705 = vrsqrt.pop %v701
        %v706 = vrsqrt.pop %v702
        %v707 = vrsqrt.pop %v703
        %v708 = vrsqrt.pop %v704
        %v709 = vmul.f32 %v697, %v705
        %v710 = vmul.f32 %v698, %v706
        %v711 = vmul.f32 %v699, %v707
        %v712 = vmul.f32 %v700, %v708
        %714 = vset.pattern.permute.xlu0 0
        %715 = vperm.xlu0 %714, %v709
        %v716 = vpop.permute.xlu0 %715
        %719 = vset.pattern.permute.xlu0 0
        %720 = vperm.xlu0 %719, %v710
        %v721 = vpop.permute.xlu0 %720
        %724 = vset.pattern.permute.xlu0 0
        %725 = vperm.xlu0 %724, %v711
        %v726 = vpop.permute.xlu0 %725
        %729 = vset.pattern.permute.xlu0 0
        %730 = vperm.xlu0 %729, %v712
        %v731 = vpop.permute.xlu0 %730
        %v733 = vmul.f32 %v641, %v716
        %v734 = vmul.f32 %v642, %v716
        %v735 = vmul.f32 %v643, %v716
        %v736 = vmul.f32 %v644, %v716
        %v737 = vmul.f32 %v645, %v721
        %v738 = vmul.f32 %v646, %v721
        %v739 = vmul.f32 %v647, %v721
        %v740 = vmul.f32 %v648, %v721
        %v741 = vmul.f32 %v649, %v726
        %v742 = vmul.f32 %v650, %v726
        %v743 = vmul.f32 %v651, %v726
        %v744 = vmul.f32 %v652, %v726
        %v745 = vmul.f32 %v653, %v731
        %v746 = vmul.f32 %v654, %v731
        %v747 = vmul.f32 %v655, %v731
        %v748 = vmul.f32 %v656, %v731
        %750 = vset.pattern.permute.xlu0 1
        %751 = vperm.xlu0 %750, %v697
        %v752 = vpop.permute.xlu0 %751
        %755 = vset.pattern.permute.xlu0 1
        %756 = vperm.xlu0 %755, %v698
        %v757 = vpop.permute.xlu0 %756
        %760 = vset.pattern.permute.xlu0 1
        %761 = vperm.xlu0 %760, %v699
        %v762 = vpop.permute.xlu0 %761
        %765 = vset.pattern.permute.xlu0 1
        %766 = vperm.xlu0 %765, %v700
        %v767 = vpop.permute.xlu0 %766
        %v769 = vadd.f32 %v733, %v752
        %v770 = vadd.f32 %v734, %v752
        %v771 = vadd.f32 %v735, %v752
        %v772 = vadd.f32 %v736, %v752
        %v773 = vadd.f32 %v737, %v757
        %v774 = vadd.f32 %v738, %v757
        %v775 = vadd.f32 %v739, %v757
        %v776 = vadd.f32 %v740, %v757
        %v777 = vadd.f32 %v741, %v762
        %v778 = vadd.f32 %v742, %v762
        %v779 = vadd.f32 %v743, %v762
        %v780 = vadd.f32 %v744, %v762
        %v781 = vadd.f32 %v745, %v767
        %v782 = vadd.f32 %v746, %v767
        %v783 = vadd.f32 %v747, %v767
        %v784 = vadd.f32 %v748, %v767
        %v785 = vld [vmem:[%s3] sm:$0xf]
        %v786 = vld [vmem:[%s3 + $0x4] sm:$0xf]
        %v787 = vld [vmem:[%s3 + $0x8] sm:$0xf]
        %v788 = vld [vmem:[%s3 + $0xc] sm:$0xf]
        %v789 = vld [vmem:[%s4] sm:$0xff]
        %v790 = vld [vmem:[%s4 + $0x8] sm:$0xff]
        %v791 = vld [vmem:[%s4 + $0x10] sm:$0xff]
        %v792 = vld [vmem:[%s4 + $0x18] sm:$0xff]
        %v797 = vunpack.c.l.b16 %v785
        %v798 = vunpack.c.l.b16 %v786
        %v799 = vunpack.c.l.b16 %v787
        %v800 = vunpack.c.l.b16 %v788
        %v801 = vpack.c.b16 %v798, %v797
        %v802 = vpack.c.b16 %v800, %v799
        %v807 = vunpack.c.l.b16 %v789
        %v808 = vunpack.c.h.b16 %v789
        %v809 = vunpack.c.l.b16 %v790
        %v810 = vunpack.c.h.b16 %v790
        %v811 = vunpack.c.l.b16 %v791
        %v812 = vunpack.c.h.b16 %v791
        %v813 = vunpack.c.l.b16 %v792
        %v814 = vunpack.c.h.b16 %v792
        %v815 = vpack.c.b16 %v811, %v807
        %v816 = vpack.c.b16 %v812, %v808
        %v817 = vpack.c.b16 %v813, %v809
        %v818 = vpack.c.b16 %v814, %v810
        %vm823 = vcmask 130048
        %v825 = vsel %vm823, %v801, 0
        %v828 = vsel %vm823, %v802, 0
        %830 = vmatprep.subr.bf16.mxu0 %v816
        %831 = vmatpush1.bf16.msra.mxu0 %v815
        %832 = vmatprep.subr.bf16.mxu0 0
        %833 = vmatpush1.bf16.msra.mxu0 0
        %834 = vmatprep.subr.bf16.mxu0 0
        %835 = vmatpush1.bf16.msra.mxu0 0
        %836 = vmatprep.subr.bf16.mxu0 0
        %837 = vmatpush1.bf16.msra.mxu0 0
        %838 = vmatprep.subr.bf16.mxu0 0
        %839 = vmatpush1.bf16.msra.mxu0 0
        %840 = vmatprep.subr.bf16.mxu0 0
        %841 = vmatpush1.bf16.msra.mxu0 0
        %842 = vmatprep.subr.bf16.mxu0 0
        %843 = vmatpush1.bf16.msra.mxu0 0
        %844 = vmatprep.subr.bf16.mxu0 0
        %845 = vmatpush1.bf16.msra.mxu0 0
        %846 = vmatprep.subr.bf16.mxu0 0
        %847 = vmatpush1.bf16.msra.mxu0 0
        %848 = vmatprep.subr.bf16.mxu0 0
        %849 = vmatpush1.bf16.msra.mxu0 0
        %850 = vmatprep.subr.bf16.mxu0 0
        %851 = vmatpush1.bf16.msra.mxu0 0
        %852 = vmatprep.subr.bf16.mxu0 0
        %853 = vmatpush1.bf16.msra.mxu0 0
        %854 = vmatprep.subr.bf16.mxu0 0
        %855 = vmatpush1.bf16.msra.mxu0 0
        %856 = vmatprep.subr.bf16.mxu0 0
        %857 = vmatpush1.bf16.msra.mxu0 0
        %858 = vmatprep.subr.bf16.mxu0 0
        %859 = vmatpush1.bf16.msra.mxu0 0
        %860 = vmatprep.subr.bf16.mxu0 0
        %861 = vmatpush1.bf16.msra.mxu0 0
        %862 = vmatprep.mubr.bf16.mxu0 0
        %863 = vmatmul.mubr.bf16.gmra.mrb[0].mxu0 %v825
        %v864 = vpop.f32.mrb[0].mxu0
        %v865 = vadd.f32 0.0, %v864
        %v866 = vpop.f32.mrb[0].mxu0
        %v867 = vadd.f32 0.0, %v866
        %v868 = vpop.f32.mrb[0].mxu0
        %v869 = vadd.f32 0.0, %v868
        %v870 = vpop.f32.mrb[0].mxu0
        %v871 = vadd.f32 0.0, %v870
        %872 = vmatprep.mubr.bf16.mxu0 0
        %873 = vmatmul.mubr.bf16.gmra.mrb[0].mxu0 %v828
        %v874 = vpop.f32.mrb[0].mxu0
        %v875 = vadd.f32 0.0, %v874
        %v876 = vpop.f32.mrb[0].mxu0
        %v877 = vadd.f32 0.0, %v876
        %v878 = vpop.f32.mrb[0].mxu0
        %v879 = vadd.f32 0.0, %v878
        %v880 = vpop.f32.mrb[0].mxu0
        %v881 = vadd.f32 0.0, %v880
        %882 = vdwg.mxu0
        %883 = vmatprep.subr.bf16.mxu0 %v818
        %884 = vmatpush1.bf16.msra.mxu0 %v817
        %885 = vmatprep.subr.bf16.mxu0 0
        %886 = vmatpush1.bf16.msra.mxu0 0
        %887 = vmatprep.subr.bf16.mxu0 0
        %888 = vmatpush1.bf16.msra.mxu0 0
        %889 = vmatprep.subr.bf16.mxu0 0
        %890 = vmatpush1.bf16.msra.mxu0 0
        %891 = vmatprep.subr.bf16.mxu0 0
        %892 = vmatpush1.bf16.msra.mxu0 0
        %893 = vmatprep.subr.bf16.mxu0 0
        %894 = vmatpush1.bf16.msra.mxu0 0
        %895 = vmatprep.subr.bf16.mxu0 0
        %896 = vmatpush1.bf16.msra.mxu0 0
        %897 = vmatprep.subr.bf16.mxu0 0
        %898 = vmatpush1.bf16.msra.mxu0 0
        %899 = vmatprep.subr.bf16.mxu0 0
        %900 = vmatpush1.bf16.msra.mxu0 0
        %901 = vmatprep.subr.bf16.mxu0 0
        %902 = vmatpush1.bf16.msra.mxu0 0
        %903 = vmatprep.subr.bf16.mxu0 0
        %904 = vmatpush1.bf16.msra.mxu0 0
        %905 = vmatprep.subr.bf16.mxu0 0
        %906 = vmatpush1.bf16.msra.mxu0 0
        %907 = vmatprep.subr.bf16.mxu0 0
        %908 = vmatpush1.bf16.msra.mxu0 0
        %909 = vmatprep.subr.bf16.mxu0 0
        %910 = vmatpush1.bf16.msra.mxu0 0
        %911 = vmatprep.subr.bf16.mxu0 0
        %912 = vmatpush1.bf16.msra.mxu0 0
        %913 = vmatprep.subr.bf16.mxu0 0
        %914 = vmatpush1.bf16.msra.mxu0 0
        %915 = vmatprep.mubr.bf16.mxu0 0
        %916 = vmatmul.mubr.bf16.gmra.mrb[0].mxu0 %v825
        %v917 = vpop.f32.mrb[0].mxu0
        %v918 = vadd.f32 0.0, %v917
        %v919 = vpop.f32.mrb[0].mxu0
        %v920 = vadd.f32 0.0, %v919
        %v921 = vpop.f32.mrb[0].mxu0
        %v922 = vadd.f32 0.0, %v921
        %v923 = vpop.f32.mrb[0].mxu0
        %v924 = vadd.f32 0.0, %v923
        %925 = vmatprep.mubr.bf16.mxu0 0
        %926 = vmatmul.mubr.bf16.gmra.mrb[0].mxu0 %v828
        %v927 = vpop.f32.mrb[0].mxu0
        %v928 = vadd.f32 0.0, %v927
        %v929 = vpop.f32.mrb[0].mxu0
        %v930 = vadd.f32 0.0, %v929
        %v931 = vpop.f32.mrb[0].mxu0
        %v932 = vadd.f32 0.0, %v931
        %v933 = vpop.f32.mrb[0].mxu0
        %v934 = vadd.f32 0.0, %v933
        %935 = vdwg.mxu0
        %v936 = vadd.f32 %v865, %v867
        %v937 = vadd.f32 %v936, %v918
        %v938 = vadd.f32 %v937, %v920
        %939 = vadd.xlane.f32.xlu0 %v938
        %v940 = vpop.xlane.xlu0 %939
        %v941 = vadd.f32 %v869, %v871
        %v942 = vadd.f32 %v941, %v922
        %v943 = vadd.f32 %v942, %v924
        %944 = vadd.xlane.f32.xlu0 %v943
        %v945 = vpop.xlane.xlu0 %944
        %v946 = vadd.f32 %v875, %v877
        %v947 = vadd.f32 %v946, %v928
        %v948 = vadd.f32 %v947, %v930
        %949 = vadd.xlane.f32.xlu0 %v948
        %v950 = vpop.xlane.xlu0 %949
        %v951 = vadd.f32 %v879, %v881
        %v952 = vadd.f32 %v951, %v932
        %v953 = vadd.f32 %v952, %v934
        %954 = vadd.xlane.f32.xlu0 %v953
        %v955 = vpop.xlane.xlu0 %954
        %v956 = vmul.f32 %v940, 0.001953125
        %v957 = vmul.f32 %v945, 0.001953125
        %v958 = vmul.f32 %v950, 0.001953125
        %v959 = vmul.f32 %v955, 0.001953125
        %v960 = vsub.f32 %v865, %v956
        %v961 = vsub.f32 %v867, %v956
        %v962 = vsub.f32 %v918, %v956
        %v963 = vsub.f32 %v920, %v956
        %v964 = vsub.f32 %v869, %v957
        %v965 = vsub.f32 %v871, %v957
        %v966 = vsub.f32 %v922, %v957
        %v967 = vsub.f32 %v924, %v957
        %v968 = vsub.f32 %v875, %v958
        %v969 = vsub.f32 %v877, %v958
        %v970 = vsub.f32 %v928, %v958
        %v971 = vsub.f32 %v930, %v958
        %v972 = vsub.f32 %v879, %v959
        %v973 = vsub.f32 %v881, %v959
        %v974 = vsub.f32 %v932, %v959
        %v975 = vsub.f32 %v934, %v959
        %v976 = vmul.f32 %v960, %v960
        %v977 = vmul.f32 %v961, %v961
        %v978 = vmul.f32 %v962, %v962
        %v979 = vmul.f32 %v963, %v963
        %v980 = vmul.f32 %v964, %v964
        %v981 = vmul.f32 %v965, %v965
        %v982 = vmul.f32 %v966, %v966
        %v983 = vmul.f32 %v967, %v967
        %v984 = vmul.f32 %v968, %v968
        %v985 = vmul.f32 %v969, %v969
        %v986 = vmul.f32 %v970, %v970
        %v987 = vmul.f32 %v971, %v971
        %v988 = vmul.f32 %v972, %v972
        %v989 = vmul.f32 %v973, %v973
        %v990 = vmul.f32 %v974, %v974
        %v991 = vmul.f32 %v975, %v975
        %v992 = vadd.f32 %v976, %v977
        %v993 = vadd.f32 %v992, %v978
        %v994 = vadd.f32 %v993, %v979
        %995 = vadd.xlane.f32.xlu0 %v994
        %v996 = vpop.xlane.xlu0 %995
        %v997 = vadd.f32 %v980, %v981
        %v998 = vadd.f32 %v997, %v982
        %v999 = vadd.f32 %v998, %v983
        %1000 = vadd.xlane.f32.xlu0 %v999
        %v1001 = vpop.xlane.xlu0 %1000
        %v1002 = vadd.f32 %v984, %v985
        %v1003 = vadd.f32 %v1002, %v986
        %v1004 = vadd.f32 %v1003, %v987
        %1005 = vadd.xlane.f32.xlu0 %v1004
        %v1006 = vpop.xlane.xlu0 %1005
        %v1007 = vadd.f32 %v988, %v989
        %v1008 = vadd.f32 %v1007, %v990
        %v1009 = vadd.f32 %v1008, %v991
        %1010 = vadd.xlane.f32.xlu0 %v1009
        %v1011 = vpop.xlane.xlu0 %1010
        %v1012 = vmul.f32 %v996, 0.001953125
        %v1013 = vmul.f32 %v1001, 0.001953125
        %v1014 = vmul.f32 %v1006, 0.001953125
        %v1015 = vmul.f32 %v1011, 0.001953125
        %v1016 = vld [vmem:[%s5] sm:$0xff]
        %v1017 = vld [vmem:[%s5 + $0x8] sm:$0xff]
        %v1018 = vld [vmem:[%s5 + $0x10] sm:$0xff]
        %v1019 = vld [vmem:[%s5 + $0x18] sm:$0xff]
        %v1020 = vadd.f32 %v1012, 1e-05
        %v1021 = vadd.f32 %v1013, 1e-05
        %v1022 = vadd.f32 %v1014, 1e-05
        %v1023 = vadd.f32 %v1015, 1e-05
        %v1024 = vrsqrt.pop %v1020
        %v1025 = vrsqrt.pop %v1021
        %v1026 = vrsqrt.pop %v1022
        %v1027 = vrsqrt.pop %v1023
        %v1028 = vmul.f32 %v1016, %v1024
        %v1029 = vmul.f32 %v1017, %v1025
        %v1030 = vmul.f32 %v1018, %v1026
        %v1031 = vmul.f32 %v1019, %v1027
        %1033 = vset.pattern.permute.xlu0 0
        %1034 = vperm.xlu0 %1033, %v1028
        %v1035 = vpop.permute.xlu0 %1034
        %1038 = vset.pattern.permute.xlu0 0
        %1039 = vperm.xlu0 %1038, %v1029
        %v1040 = vpop.permute.xlu0 %1039
        %1043 = vset.pattern.permute.xlu0 0
        %1044 = vperm.xlu0 %1043, %v1030
        %v1045 = vpop.permute.xlu0 %1044
        %1048 = vset.pattern.permute.xlu0 0
        %1049 = vperm.xlu0 %1048, %v1031
        %v1050 = vpop.permute.xlu0 %1049
        %v1052 = vmul.f32 %v960, %v1035
        %v1053 = vmul.f32 %v961, %v1035
        %v1054 = vmul.f32 %v962, %v1035
        %v1055 = vmul.f32 %v963, %v1035
        %v1056 = vmul.f32 %v964, %v1040
        %v1057 = vmul.f32 %v965, %v1040
        %v1058 = vmul.f32 %v966, %v1040
        %v1059 = vmul.f32 %v967, %v1040
        %v1060 = vmul.f32 %v968, %v1045
        %v1061 = vmul.f32 %v969, %v1045
        %v1062 = vmul.f32 %v970, %v1045
        %v1063 = vmul.f32 %v971, %v1045
        %v1064 = vmul.f32 %v972, %v1050
        %v1065 = vmul.f32 %v973, %v1050
        %v1066 = vmul.f32 %v974, %v1050
        %v1067 = vmul.f32 %v975, %v1050
        %v1068 = vadd.f32 %v769, %v1052
        %v1069 = vadd.f32 %v770, %v1053
        %v1070 = vadd.f32 %v771, %v1054
        %v1071 = vadd.f32 %v772, %v1055
        %v1072 = vadd.f32 %v773, %v1056
        %v1073 = vadd.f32 %v774, %v1057
        %v1074 = vadd.f32 %v775, %v1058
        %v1075 = vadd.f32 %v776, %v1059
        %v1076 = vadd.f32 %v777, %v1060
        %v1077 = vadd.f32 %v778, %v1061
        %v1078 = vadd.f32 %v779, %v1062
        %v1079 = vadd.f32 %v780, %v1063
        %v1080 = vadd.f32 %v781, %v1064
        %v1081 = vadd.f32 %v782, %v1065
        %v1082 = vadd.f32 %v783, %v1066
        %v1083 = vadd.f32 %v784, %v1067
        %1085 = vset.pattern.permute.xlu0 1
        %1086 = vperm.xlu0 %1085, %v1016
        %v1087 = vpop.permute.xlu0 %1086
        %1090 = vset.pattern.permute.xlu0 1
        %1091 = vperm.xlu0 %1090, %v1017
        %v1092 = vpop.permute.xlu0 %1091
        %1095 = vset.pattern.permute.xlu0 1
        %1096 = vperm.xlu0 %1095, %v1018
        %v1097 = vpop.permute.xlu0 %1096
        %1100 = vset.pattern.permute.xlu0 1
        %1101 = vperm.xlu0 %1100, %v1019
        %v1102 = vpop.permute.xlu0 %1101
        %v1104 = vadd.f32 %v1068, %v1087
        %v1105 = vadd.f32 %v1069, %v1087
        %v1106 = vadd.f32 %v1070, %v1087
        %v1107 = vadd.f32 %v1071, %v1087
        %v1108 = vadd.f32 %v1072, %v1092
        %v1109 = vadd.f32 %v1073, %v1092
        %v1110 = vadd.f32 %v1074, %v1092
        %v1111 = vadd.f32 %v1075, %v1092
        %v1112 = vadd.f32 %v1076, %v1097
        %v1113 = vadd.f32 %v1077, %v1097
        %v1114 = vadd.f32 %v1078, %v1097
        %v1115 = vadd.f32 %v1079, %v1097
        %v1116 = vadd.f32 %v1080, %v1102
        %v1117 = vadd.f32 %v1081, %v1102
        %v1118 = vadd.f32 %v1082, %v1102
        %v1119 = vadd.f32 %v1083, %v1102
        %v1120 = vmax.f32 %v1104, 0.0
        %v1121 = vmax.f32 %v1105, 0.0
        %v1122 = vmax.f32 %v1106, 0.0
        %v1123 = vmax.f32 %v1107, 0.0
        %v1124 = vmax.f32 %v1108, 0.0
        %v1125 = vmax.f32 %v1109, 0.0
        %v1126 = vmax.f32 %v1110, 0.0
        %v1127 = vmax.f32 %v1111, 0.0
        %v1128 = vmax.f32 %v1112, 0.0
        %v1129 = vmax.f32 %v1113, 0.0
        %v1130 = vmax.f32 %v1114, 0.0
        %v1131 = vmax.f32 %v1115, 0.0
        %v1132 = vmax.f32 %v1116, 0.0
        %v1133 = vmax.f32 %v1117, 0.0
        %v1134 = vmax.f32 %v1118, 0.0
        %v1135 = vmax.f32 %v1119, 0.0
        %1136 = vst [vmem:[%s6] sm:$0xff] %v1120
        %1137 = vst [vmem:[%s6 + $0x8] sm:$0xff] %v1121
        %1138 = vst [vmem:[%s6 + $0x10] sm:$0xff] %v1122
        %1139 = vst [vmem:[%s6 + $0x18] sm:$0xff] %v1123
        %1140 = vst [vmem:[%s6 + $0x20] sm:$0xff] %v1124
        %1141 = vst [vmem:[%s6 + $0x28] sm:$0xff] %v1125
        %1142 = vst [vmem:[%s6 + $0x30] sm:$0xff] %v1126
        %1143 = vst [vmem:[%s6 + $0x38] sm:$0xff] %v1127
        %1144 = vst [vmem:[%s6 + $0x40] sm:$0xff] %v1128
        %1145 = vst [vmem:[%s6 + $0x48] sm:$0xff] %v1129
        %1146 = vst [vmem:[%s6 + $0x50] sm:$0xff] %v1130
        %1147 = vst [vmem:[%s6 + $0x58] sm:$0xff] %v1131
        %1148 = vst [vmem:[%s6 + $0x60] sm:$0xff] %v1132
        %1149 = vst [vmem:[%s6 + $0x68] sm:$0xff] %v1133
        %1150 = vst [vmem:[%s6 + $0x70] sm:$0xff] %v1134
        %1151 = vst [vmem:[%s6 + $0x78] sm:$0xff] %v1135
      $region52: #{resnet_forward.11} parent=43 // pred_fallthru
        _
      // Predicated region
      $region53: #{resnet_forward.11} parent=43 // pred_check
        %p1152 = pneg %p166
      $region54: #{resnet_forward.11} parent=43 // pred_check_branch
        %1154 = sbr.rel (%p1152) target = $region56
      $region55: #{resnet_forward.11} parent=43 // pred_region
        _
      $region56: #{resnet_forward.11} parent=43 // pred_fallthru
        _
      // Predicated region
      $region57: #{resnet_forward.11} parent=43 // pred_check
        %p1155 = pneg %p166
      $region58: #{resnet_forward.11} parent=43 // pred_check_branch
        %1157 = sbr.rel (%p1155) target = $region60
      $region59: #{resnet_forward.11} parent=43 // pred_region
        _
      $region60: #{resnet_forward.11} parent=43 // pred_fallthru
        _
    $region44: #{resnet_forward.11} parent=5 // pred_fallthru
      _
    %p1158 = scmp.le.s32.totalorder 2, %s12
    // Predicated region
    $region61: #{resnet_forward.11} parent=5 // pred_check
      %p1159 = pneg %p1158
    $region62: #{resnet_forward.11} parent=5 // pred_check_branch
      %1161 = sbr.rel (%p1159) target = $region64
    $region63: #{resnet_forward.11} parent=5 // pred_region
      %s1162 = ssub.s32 %s12, 2
    $region64: #{resnet_forward.11} parent=5 // pred_fallthru
      _
  $region6: #{resnet_forward.11} parent=0 // loop_footer
    %s16 = sadd.s32 1, %s12
  $region7: #{resnet_forward.11} parent=0 // loop_footer_branch
    %11 = sbr.rel target = $region3
  $region8: #{resnet_forward.11} parent=0 // loop_exit
    _

// kernel: resnet_forward.12
$region0: #{resnet_forward.12}
  #allocation0 [shape = 'u32[]', space=smem, size = 0x4, offset = 0x4, fixed_abs, tag = 'smem constant byte address 0x4 - core index']
  #allocation1 [shape = 'u32[144,128]{1,0:T(1,128)}', space=vmem, size = 0x12000, scoped, tag = 'internal scratch']
  #allocation2 [shape = 'f32[64,128]{1,0:T(8,128)}', space=vmem, size = 0x8000, scoped, tag = 'scratch operand']
  %s0 = inlined_call_operand.vmem [shape: bf16[1,64,288], index: 0, kind: input, shape index: {}]
  %s1 = inlined_call_operand.vmem [shape: bf16[1,288,128], index: 1, kind: input, shape index: {}]
  %s2 = inlined_call_operand.vmem [shape: f32[64,2], index: 2, kind: input, shape index: {}]
  %s3 = inlined_call_operand.vmem [shape: f32[64,128], index: 3, kind: output, shape index: {}]
  %s4 = sld [smem:[#allocation0]]
  $region30: #{resnet_forward.12} parent=0
    _
  %s6 = ssub.s32 1, %s4
  %s7 = scalar_select 0, %s6, %s4
  // Predicated region
  $region2: #{resnet_forward.12} parent=0 // pred_check
    _
  $region3: #{resnet_forward.12} parent=0 // pred_check_branch
    %9 = sbr.rel (0) target = $region5
  $region4: #{resnet_forward.12} parent=0 // pred_region
    _
  $region5: #{resnet_forward.12} parent=0 // pred_fallthru
    _
  // Predicated region
  $region6: #{resnet_forward.12} parent=0 // pred_check
    _
  $region7: #{resnet_forward.12} parent=0 // pred_check_branch
    %11 = sbr.rel (0) target = $region9
  $region8: #{resnet_forward.12} parent=0 // pred_region
    _
  $region9: #{resnet_forward.12} parent=0 // pred_fallthru
    _
  // Predicated region
  $region10: #{resnet_forward.12} parent=0 // pred_check
    _
  $region11: #{resnet_forward.12} parent=0 // pred_check_branch
    %13 = sbr.rel (0) target = $region13
  $region12: #{resnet_forward.12} parent=0 // pred_region
    _
  $region13: #{resnet_forward.12} parent=0 // pred_fallthru
    _
  %p15 = scmp.eq.s32.totalorder 0, 0
  // Predicated region
  $region14: #{resnet_forward.12} parent=0 // pred_check
    %p16 = pneg %p15
  $region15: #{resnet_forward.12} parent=0 // pred_check_branch
    %18 = sbr.rel (%p16) target = $region17
  $region16: #{resnet_forward.12} parent=0 // pred_region
    %19 = vst [vmem:[#allocation2] sm:$0xff] 0.0
    %20 = vst [vmem:[#allocation2 + $0x8] sm:$0xff] 0.0
    %21 = vst [vmem:[#allocation2 + $0x10] sm:$0xff] 0.0
    %22 = vst [vmem:[#allocation2 + $0x18] sm:$0xff] 0.0
    %23 = vst [vmem:[#allocation2 + $0x20] sm:$0xff] 0.0
    %24 = vst [vmem:[#allocation2 + $0x28] sm:$0xff] 0.0
    %25 = vst [vmem:[#allocation2 + $0x30] sm:$0xff] 0.0
    %26 = vst [vmem:[#allocation2 + $0x38] sm:$0xff] 0.0
  $region17: #{resnet_forward.12} parent=0 // pred_fallthru
    _
  %v27 = vld [vmem:[#allocation2] sm:$0xff]
  %v28 = vld [vmem:[#allocation2 + $0x8] sm:$0xff]
  %v29 = vld [vmem:[#allocation2 + $0x10] sm:$0xff]
  %v30 = vld [vmem:[#allocation2 + $0x18] sm:$0xff]
  %v31 = vld [vmem:[#allocation2 + $0x20] sm:$0xff]
  %v32 = vld [vmem:[#allocation2 + $0x28] sm:$0xff]
  %v33 = vld [vmem:[#allocation2 + $0x30] sm:$0xff]
  %v34 = vld [vmem:[#allocation2 + $0x38] sm:$0xff]
  %v35 = vld [vmem:[%s0] sm:$0xff]
  %v36 = vld [vmem:[%s0 + $0x8] sm:$0xf]
  %v37 = vld [vmem:[%s0 + $0xc] sm:$0xff]
  %v38 = vld [vmem:[%s0 + $0x14] sm:$0xf]
  %v39 = vld [vmem:[%s0 + $0x18] sm:$0xff]
  %v40 = vld [vmem:[%s0 + $0x20] sm:$0xf]
  %v41 = vld [vmem:[%s0 + $0x24] sm:$0xff]
  %v42 = vld [vmem:[%s0 + $0x2c] sm:$0xf]
  %v43 = vld [vmem:[%s0 + $0x30] sm:$0xff]
  %v44 = vld [vmem:[%s0 + $0x38] sm:$0xf]
  %v45 = vld [vmem:[%s0 + $0x3c] sm:$0xff]
  %v46 = vld [vmem:[%s0 + $0x44] sm:$0xf]
  %v47 = vld [vmem:[%s0 + $0x48] sm:$0xff]
  %v48 = vld [vmem:[%s0 + $0x50] sm:$0xf]
  %v49 = vld [vmem:[%s0 + $0x54] sm:$0xff]
  %v50 = vld [vmem:[%s0 + $0x5c] sm:$0xf]
  %v51 = vld [vmem:[%s1] sm:$0xf]
  %v52 = vld [vmem:[%s1 + $0x4] sm:$0xf]
  %v53 = vld [vmem:[%s1 + $0x8] sm:$0xf]
  %v54 = vld [vmem:[%s1 + $0xc] sm:$0xf]
  %v55 = vld [vmem:[%s1 + $0x10] sm:$0xf]
  %v56 = vld [vmem:[%s1 + $0x14] sm:$0xf]
  %v57 = vld [vmem:[%s1 + $0x18] sm:$0xf]
  %v58 = vld [vmem:[%s1 + $0x1c] sm:$0xf]
  %v59 = vld [vmem:[%s1 + $0x20] sm:$0xf]
  %v60 = vld [vmem:[%s1 + $0x24] sm:$0xf]
  %v61 = vld [vmem:[%s1 + $0x28] sm:$0xf]
  %v62 = vld [vmem:[%s1 + $0x2c] sm:$0xf]
  %v63 = vld [vmem:[%s1 + $0x30] sm:$0xf]
  %v64 = vld [vmem:[%s1 + $0x34] sm:$0xf]
  %v65 = vld [vmem:[%s1 + $0x38] sm:$0xf]
  %v66 = vld [vmem:[%s1 + $0x3c] sm:$0xf]
  %v67 = vld [vmem:[%s1 + $0x40] sm:$0xf]
  %v68 = vld [vmem:[%s1 + $0x44] sm:$0xf]
  %v69 = vld [vmem:[%s1 + $0x48] sm:$0xf]
  %v70 = vld [vmem:[%s1 + $0x4c] sm:$0xf]
  %v71 = vld [vmem:[%s1 + $0x50] sm:$0xf]
  %v72 = vld [vmem:[%s1 + $0x54] sm:$0xf]
  %v73 = vld [vmem:[%s1 + $0x58] sm:$0xf]
  %v74 = vld [vmem:[%s1 + $0x5c] sm:$0xf]
  %v75 = vld [vmem:[%s1 + $0x60] sm:$0xf]
  %v76 = vld [vmem:[%s1 + $0x64] sm:$0xf]
  %v77 = vld [vmem:[%s1 + $0x68] sm:$0xf]
  %v78 = vld [vmem:[%s1 + $0x6c] sm:$0xf]
  %v79 = vld [vmem:[%s1 + $0x70] sm:$0xf]
  %v80 = vld [vmem:[%s1 + $0x74] sm:$0xf]
  %v81 = vld [vmem:[%s1 + $0x78] sm:$0xf]
  %v82 = vld [vmem:[%s1 + $0x7c] sm:$0xf]
  %v83 = vld [vmem:[%s1 + $0x80] sm:$0xf]
  %v84 = vld [vmem:[%s1 + $0x84] sm:$0xf]
  %v85 = vld [vmem:[%s1 + $0x88] sm:$0xf]
  %v86 = vld [vmem:[%s1 + $0x8c] sm:$0xf]
  %v103 = vunpack.c.l.b16 %v35
  %v104 = vunpack.c.h.b16 %v35
  %v105 = vunpack.c.l.b16 %v36
  %v106 = vunpack.c.l.b16 %v37
  %v107 = vunpack.c.h.b16 %v37
  %v108 = vunpack.c.l.b16 %v38
  %v109 = vunpack.c.l.b16 %v39
  %v110 = vunpack.c.h.b16 %v39
  %v111 = vunpack.c.l.b16 %v40
  %v112 = vunpack.c.l.b16 %v41
  %v113 = vunpack.c.h.b16 %v41
  %v114 = vunpack.c.l.b16 %v42
  %v115 = vunpack.c.l.b16 %v43
  %v116 = vunpack.c.h.b16 %v43
  %v117 = vunpack.c.l.b16 %v44
  %v118 = vunpack.c.l.b16 %v45
  %v119 = vunpack.c.h.b16 %v45
  %v120 = vunpack.c.l.b16 %v46
  %v121 = vunpack.c.l.b16 %v47
  %v122 = vunpack.c.h.b16 %v47
  %v123 = vunpack.c.l.b16 %v48
  %v124 = vunpack.c.l.b16 %v49
  %v125 = vunpack.c.h.b16 %v49
  %v126 = vunpack.c.l.b16 %v50
  %v127 = vpack.c.b16 %v106, %v103
  %v128 = vpack.c.b16 %v107, %v104
  %v129 = vpack.c.b16 %v108, %v105
  %v130 = vpack.c.b16 %v112, %v109
  %v131 = vpack.c.b16 %v113, %v110
  %v132 = vpack.c.b16 %v114, %v111
  %v133 = vpack.c.b16 %v118, %v115
  %v134 = vpack.c.b16 %v119, %v116
  %v135 = vpack.c.b16 %v120, %v117
  %v136 = vpack.c.b16 %v124, %v121
  %v137 = vpack.c.b16 %v125, %v122
  %v138 = vpack.c.b16 %v126, %v123
  %v183 = vunpack.c.l.b16 %v51
  %v184 = vunpack.c.l.b16 %v52
  %v185 = vunpack.c.l.b16 %v53
  %v186 = vunpack.c.l.b16 %v54
  %v187 = vunpack.c.l.b16 %v55
  %v188 = vunpack.c.l.b16 %v56
  %v189 = vunpack.c.l.b16 %v57
  %v190 = vunpack.c.l.b16 %v58
  %v191 = vunpack.c.l.b16 %v59
  %v192 = vunpack.c.l.b16 %v60
  %v193 = vunpack.c.l.b16 %v61
  %v194 = vunpack.c.l.b16 %v62
  %v195 = vunpack.c.l.b16 %v63
  %v196 = vunpack.c.l.b16 %v64
  %v197 = vunpack.c.l.b16 %v65
  %v198 = vunpack.c.l.b16 %v66
  %v199 = vunpack.c.l.b16 %v67
  %v200 = vunpack.c.l.b16 %v68
  %v201 = vunpack.c.l.b16 %v69
  %v202 = vunpack.c.l.b16 %v70
  %v203 = vunpack.c.l.b16 %v71
  %v204 = vunpack.c.l.b16 %v72
  %v205 = vunpack.c.l.b16 %v73
  %v206 = vunpack.c.l.b16 %v74
  %v207 = vunpack.c.l.b16 %v75
  %v208 = vunpack.c.l.b16 %v76
  %v209 = vunpack.c.l.b16 %v77
  %v210 = vunpack.c.l.b16 %v78
  %v211 = vunpack.c.l.b16 %v79
  %v212 = vunpack.c.l.b16 %v80
  %v213 = vunpack.c.l.b16 %v81
  %v214 = vunpack.c.l.b16 %v82
  %v215 = vunpack.c.l.b16 %v83
  %v216 = vunpack.c.l.b16 %v84
  %v217 = vunpack.c.l.b16 %v85
  %v218 = vunpack.c.l.b16 %v86
  %v219 = vpack.c.b16 %v184, %v183
  %v220 = vpack.c.b16 %v186, %v185
  %v221 = vpack.c.b16 %v188, %v187
  %v222 = vpack.c.b16 %v190, %v189
  %v223 = vpack.c.b16 %v192, %v191
  %v224 = vpack.c.b16 %v194, %v193
  %v225 = vpack.c.b16 %v196, %v195
  %v226 = vpack.c.b16 %v198, %v197
  %v227 = vpack.c.b16 %v200, %v199
  %v228 = vpack.c.b16 %v202, %v201
  %v229 = vpack.c.b16 %v204, %v203
  %v230 = vpack.c.b16 %v206, %v205
  %v231 = vpack.c.b16 %v208, %v207
  %v232 = vpack.c.b16 %v210, %v209
  %v233 = vpack.c.b16 %v212, %v211
  %v234 = vpack.c.b16 %v214, %v213
  %v235 = vpack.c.b16 %v216, %v215
  %v236 = vpack.c.b16 %v218, %v217
  %vm255 = vcmask 261120
  %v257 = vsel %vm255, %v129, 0
  %v260 = vsel %vm255, %v132, 0
  %v263 = vsel %vm255, %v135, 0
  %v266 = vsel %vm255, %v138, 0
  %268 = vmatprep.subr.bf16.mxu0 0
  %269 = vmatpush1.bf16.msra.mxu0 %v219
  %270 = vmatprep.subr.bf16.mxu0 0
  %271 = vmatpush1.bf16.msra.mxu0 %v220
  %272 = vmatprep.subr.bf16.mxu0 0
  %273 = vmatpush1.bf16.msra.mxu0 %v221
  %274 = vmatprep.subr.bf16.mxu0 0
  %275 = vmatpush1.bf16.msra.mxu0 %v222
  %276 = vmatprep.subr.bf16.mxu0 0
  %277 = vmatpush1.bf16.msra.mxu0 %v223
  %278 = vmatprep.subr.bf16.mxu0 0
  %279 = vmatpush1.bf16.msra.mxu0 %v224
  %280 = vmatprep.subr.bf16.mxu0 0
  %281 = vmatpush1.bf16.msra.mxu0 %v225
  %282 = vmatprep.subr.bf16.mxu0 0
  %283 = vmatpush1.bf16.msra.mxu0 %v226
  %284 = vmatprep.subr.bf16.mxu0 0
  %285 = vmatpush1.bf16.msra.mxu0 %v227
  %286 = vmatprep.subr.bf16.mxu0 0
  %287 = vmatpush1.bf16.msra.mxu0 %v228
  %288 = vmatprep.subr.bf16.mxu0 0
  %289 = vmatpush1.bf16.msra.mxu0 %v229
  %290 = vmatprep.subr.bf16.mxu0 0
  %291 = vmatpush1.bf16.msra.mxu0 %v230
  %292 = vmatprep.subr.bf16.mxu0 0
  %293 = vmatpush1.bf16.msra.mxu0 %v231
  %294 = vmatprep.subr.bf16.mxu0 0
  %295 = vmatpush1.bf16.msra.mxu0 %v232
  %296 = vmatprep.subr.bf16.mxu0 0
  %297 = vmatpush1.bf16.msra.mxu0 %v233
  %298 = vmatprep.subr.bf16.mxu0 0
  %299 = vmatpush1.bf16.msra.mxu0 %v234
  %300 = vmatprep.mubr.bf16.mxu0 %v128
  %301 = vmatmul.mubr.bf16.gmra.mrb[0].mxu0 %v127
  %v302 = vpop.f32.mrb[0].mxu0
  %v303 = vadd.f32 0.0, %v302
  %v304 = vpop.f32.mrb[0].mxu0
  %v305 = vpop.f32.mrb[0].mxu0
  %v306 = vadd.f32 0.0, %v305
  %v307 = vpop.f32.mrb[0].mxu0
  %308 = vmatprep.mubr.bf16.mxu0 %v131
  %309 = vmatmul.mubr.bf16.gmra.mrb[0].mxu0 %v130
  %v310 = vpop.f32.mrb[0].mxu0
  %v311 = vadd.f32 0.0, %v310
  %v312 = vpop.f32.mrb[0].mxu0
  %v313 = vpop.f32.mrb[0].mxu0
  %v314 = vadd.f32 0.0, %v313
  %v315 = vpop.f32.mrb[0].mxu0
  %316 = vmatprep.mubr.bf16.mxu0 %v134
  %317 = vmatmul.mubr.bf16.gmra.mrb[0].mxu0 %v133
  %v318 = vpop.f32.mrb[0].mxu0
  %v319 = vadd.f32 0.0, %v318
  %v320 = vpop.f32.mrb[0].mxu0
  %v321 = vpop.f32.mrb[0].mxu0
  %v322 = vadd.f32 0.0, %v321
  %v323 = vpop.f32.mrb[0].mxu0
  %324 = vmatprep.mubr.bf16.mxu0 %v137
  %325 = vmatmul.mubr.bf16.gmra.mrb[0].mxu0 %v136
  %v326 = vpop.f32.mrb[0].mxu0
  %v327 = vadd.f32 0.0, %v326
  %v328 = vpop.f32.mrb[0].mxu0
  %v329 = vpop.f32.mrb[0].mxu0
  %v330 = vadd.f32 0.0, %v329
  %v331 = vpop.f32.mrb[0].mxu0
  %332 = vdwg.mxu0
  %333 = vmatprep.subr.bf16.mxu0 0
  %334 = vmatpush1.bf16.msra.mxu0 %v235
  %335 = vmatprep.subr.bf16.mxu0 0
  %336 = vmatpush1.bf16.msra.mxu0 %v236
  %337 = vmatprep.subr.bf16.mxu0 0
  %338 = vmatpush1.bf16.msra.mxu0 0
  %339 = vmatprep.subr.bf16.mxu0 0
  %340 = vmatpush1.bf16.msra.mxu0 0
  %341 = vmatprep.subr.bf16.mxu0 0
  %342 = vmatpush1.bf16.msra.mxu0 0
  %343 = vmatprep.subr.bf16.mxu0 0
  %344 = vmatpush1.bf16.msra.mxu0 0
  %345 = vmatprep.subr.bf16.mxu0 0
  %346 = vmatpush1.bf16.msra.mxu0 0
  %347 = vmatprep.subr.bf16.mxu0 0
  %348 = vmatpush1.bf16.msra.mxu0 0
  %349 = vmatprep.subr.bf16.mxu0 0
  %350 = vmatpush1.bf16.msra.mxu0 0
  %351 = vmatprep.subr.bf16.mxu0 0
  %352 = vmatpush1.bf16.msra.mxu0 0
  %353 = vmatprep.subr.bf16.mxu0 0
  %354 = vmatpush1.bf16.msra.mxu0 0
  %355 = vmatprep.subr.bf16.mxu0 0
  %356 = vmatpush1.bf16.msra.mxu0 0
  %357 = vmatprep.subr.bf16.mxu0 0
  %358 = vmatpush1.bf16.msra.mxu0 0
  %359 = vmatprep.subr.bf16.mxu0 0
  %360 = vmatpush1.bf16.msra.mxu0 0
  %361 = vmatprep.subr.bf16.mxu0 0
  %362 = vmatpush1.bf16.msra.mxu0 0
  %363 = vmatprep.subr.bf16.mxu0 0
  %364 = vmatpush1.bf16.msra.mxu0 0
  %365 = vmatprep.mubr.bf16.mxu0 0
  %366 = vmatmul.mubr.bf16.gmra.mrb[0].mxu0 %v257
  %v367 = vpop.f32.mrb[0].mxu0
  %v368 = vadd.f32 %v303, %v367
  %v369 = vpop.f32.mrb[0].mxu0
  %v370 = vpop.f32.mrb[0].mxu0
  %v371 = vadd.f32 %v306, %v370
  %v372 = vpop.f32.mrb[0].mxu0
  %373 = vmatprep.mubr.bf16.mxu0 0
  %374 = vmatmul.mubr.bf16.gmra.mrb[0].mxu0 %v260
  %v375 = vpop.f32.mrb[0].mxu0
  %v376 = vadd.f32 %v311, %v375
  %v377 = vpop.f32.mrb[0].mxu0
  %v378 = vpop.f32.mrb[0].mxu0
  %v379 = vadd.f32 %v314, %v378
  %v380 = vpop.f32.mrb[0].mxu0
  %381 = vmatprep.mubr.bf16.mxu0 0
  %382 = vmatmul.mubr.bf16.gmra.mrb[0].mxu0 %v263
  %v383 = vpop.f32.mrb[0].mxu0
  %v384 = vadd.f32 %v319, %v383
  %v385 = vpop.f32.mrb[0].mxu0
  %v386 = vpop.f32.mrb[0].mxu0
  %v387 = vadd.f32 %v322, %v386
  %v388 = vpop.f32.mrb[0].mxu0
  %389 = vmatprep.mubr.bf16.mxu0 0
  %390 = vmatmul.mubr.bf16.gmra.mrb[0].mxu0 %v266
  %v391 = vpop.f32.mrb[0].mxu0
  %v392 = vadd.f32 %v327, %v391
  %v393 = vpop.f32.mrb[0].mxu0
  %v394 = vpop.f32.mrb[0].mxu0
  %v395 = vadd.f32 %v330, %v394
  %v396 = vpop.f32.mrb[0].mxu0
  %397 = vdwg.mxu0
  %v398 = vadd.f32 %v27, %v368
  %v399 = vadd.f32 %v28, %v371
  %v400 = vadd.f32 %v29, %v376
  %v401 = vadd.f32 %v30, %v379
  %v402 = vadd.f32 %v31, %v384
  %v403 = vadd.f32 %v32, %v387
  %v404 = vadd.f32 %v33, %v392
  %v405 = vadd.f32 %v34, %v395
  %406 = vst [vmem:[#allocation2] sm:$0xff] %v398
  %407 = vst [vmem:[#allocation2 + $0x8] sm:$0xff] %v399
  %408 = vst [vmem:[#allocation2 + $0x10] sm:$0xff] %v400
  %409 = vst [vmem:[#allocation2 + $0x18] sm:$0xff] %v401
  %410 = vst [vmem:[#allocation2 + $0x20] sm:$0xff] %v402
  %411 = vst [vmem:[#allocation2 + $0x28] sm:$0xff] %v403
  %412 = vst [vmem:[#allocation2 + $0x30] sm:$0xff] %v404
  %413 = vst [vmem:[#allocation2 + $0x38] sm:$0xff] %v405
  // Predicated region
  $region18: #{resnet_forward.12} parent=0 // pred_check
    %p414 = pneg %p15
  $region19: #{resnet_forward.12} parent=0 // pred_check_branch
    %416 = sbr.rel (%p414) target = $region21
  $region20: #{resnet_forward.12} parent=0 // pred_region
    %v417 = vld [vmem:[#allocation2] sm:$0xff]
    %v418 = vld [vmem:[#allocation2 + $0x8] sm:$0xff]
    %v419 = vld [vmem:[#allocation2 + $0x10] sm:$0xff]
    %v420 = vld [vmem:[#allocation2 + $0x18] sm:$0xff]
    %v421 = vld [vmem:[#allocation2 + $0x20] sm:$0xff]
    %v422 = vld [vmem:[#allocation2 + $0x28] sm:$0xff]
    %v423 = vld [vmem:[#allocation2 + $0x30] sm:$0xff]
    %v424 = vld [vmem:[#allocation2 + $0x38] sm:$0xff]
    %425 = vadd.xlane.f32.xlu0 %v417
    %v426 = vpop.xlane.xlu0 %425
    %427 = vadd.xlane.f32.xlu0 %v418
    %v428 = vpop.xlane.xlu0 %427
    %429 = vadd.xlane.f32.xlu0 %v419
    %v430 = vpop.xlane.xlu0 %429
    %431 = vadd.xlane.f32.xlu0 %v420
    %v432 = vpop.xlane.xlu0 %431
    %433 = vadd.xlane.f32.xlu0 %v421
    %v434 = vpop.xlane.xlu0 %433
    %435 = vadd.xlane.f32.xlu0 %v422
    %v436 = vpop.xlane.xlu0 %435
    %437 = vadd.xlane.f32.xlu0 %v423
    %v438 = vpop.xlane.xlu0 %437
    %439 = vadd.xlane.f32.xlu0 %v424
    %v440 = vpop.xlane.xlu0 %439
    %v441 = vmul.f32 %v426, 0.0078125
    %v442 = vmul.f32 %v428, 0.0078125
    %v443 = vmul.f32 %v430, 0.0078125
    %v444 = vmul.f32 %v432, 0.0078125
    %v445 = vmul.f32 %v434, 0.0078125
    %v446 = vmul.f32 %v436, 0.0078125
    %v447 = vmul.f32 %v438, 0.0078125
    %v448 = vmul.f32 %v440, 0.0078125
    %v449 = vsub.f32 %v417, %v441
    %v450 = vsub.f32 %v418, %v442
    %v451 = vsub.f32 %v419, %v443
    %v452 = vsub.f32 %v420, %v444
    %v453 = vsub.f32 %v421, %v445
    %v454 = vsub.f32 %v422, %v446
    %v455 = vsub.f32 %v423, %v447
    %v456 = vsub.f32 %v424, %v448
    %v457 = vmul.f32 %v449, %v449
    %v458 = vmul.f32 %v450, %v450
    %v459 = vmul.f32 %v451, %v451
    %v460 = vmul.f32 %v452, %v452
    %v461 = vmul.f32 %v453, %v453
    %v462 = vmul.f32 %v454, %v454
    %v463 = vmul.f32 %v455, %v455
    %v464 = vmul.f32 %v456, %v456
    %465 = vadd.xlane.f32.xlu0 %v457
    %v466 = vpop.xlane.xlu0 %465
    %467 = vadd.xlane.f32.xlu0 %v458
    %v468 = vpop.xlane.xlu0 %467
    %469 = vadd.xlane.f32.xlu0 %v459
    %v470 = vpop.xlane.xlu0 %469
    %471 = vadd.xlane.f32.xlu0 %v460
    %v472 = vpop.xlane.xlu0 %471
    %473 = vadd.xlane.f32.xlu0 %v461
    %v474 = vpop.xlane.xlu0 %473
    %475 = vadd.xlane.f32.xlu0 %v462
    %v476 = vpop.xlane.xlu0 %475
    %477 = vadd.xlane.f32.xlu0 %v463
    %v478 = vpop.xlane.xlu0 %477
    %479 = vadd.xlane.f32.xlu0 %v464
    %v480 = vpop.xlane.xlu0 %479
    %v481 = vmul.f32 %v466, 0.0078125
    %v482 = vmul.f32 %v468, 0.0078125
    %v483 = vmul.f32 %v470, 0.0078125
    %v484 = vmul.f32 %v472, 0.0078125
    %v485 = vmul.f32 %v474, 0.0078125
    %v486 = vmul.f32 %v476, 0.0078125
    %v487 = vmul.f32 %v478, 0.0078125
    %v488 = vmul.f32 %v480, 0.0078125
    %v489 = vld [vmem:[%s2] sm:$0xff]
    %v490 = vld [vmem:[%s2 + $0x8] sm:$0xff]
    %v491 = vld [vmem:[%s2 + $0x10] sm:$0xff]
    %v492 = vld [vmem:[%s2 + $0x18] sm:$0xff]
    %v493 = vld [vmem:[%s2 + $0x20] sm:$0xff]
    %v494 = vld [vmem:[%s2 + $0x28] sm:$0xff]
    %v495 = vld [vmem:[%s2 + $0x30] sm:$0xff]
    %v496 = vld [vmem:[%s2 + $0x38] sm:$0xff]
    %v497 = vadd.f32 %v481, 1e-05
    %v498 = vadd.f32 %v482, 1e-05
    %v499 = vadd.f32 %v483, 1e-05
    %v500 = vadd.f32 %v484, 1e-05
    %v501 = vadd.f32 %v485, 1e-05
    %v502 = vadd.f32 %v486, 1e-05
    %v503 = vadd.f32 %v487, 1e-05
    %v504 = vadd.f32 %v488, 1e-05
    %v505 = vrsqrt.pop %v497
    %v506 = vrsqrt.pop %v498
    %v507 = vrsqrt.pop %v499
    %v508 = vrsqrt.pop %v500
    %v509 = vrsqrt.pop %v501
    %v510 = vrsqrt.pop %v502
    %v511 = vrsqrt.pop %v503
    %v512 = vrsqrt.pop %v504
    %v513 = vmul.f32 %v489, %v505
    %v514 = vmul.f32 %v490, %v506
    %v515 = vmul.f32 %v491, %v507
    %v516 = vmul.f32 %v492, %v508
    %v517 = vmul.f32 %v493, %v509
    %v518 = vmul.f32 %v494, %v510
    %v519 = vmul.f32 %v495, %v511
    %v520 = vmul.f32 %v496, %v512
    %522 = vset.pattern.permute.xlu0 0
    %523 = vperm.xlu0 %522, %v513
    %v524 = vpop.permute.xlu0 %523
    %527 = vset.pattern.permute.xlu0 0
    %528 = vperm.xlu0 %527, %v514
    %v529 = vpop.permute.xlu0 %528
    %532 = vset.pattern.permute.xlu0 0
    %533 = vperm.xlu0 %532, %v515
    %v534 = vpop.permute.xlu0 %533
    %537 = vset.pattern.permute.xlu0 0
    %538 = vperm.xlu0 %537, %v516
    %v539 = vpop.permute.xlu0 %538
    %542 = vset.pattern.permute.xlu0 0
    %543 = vperm.xlu0 %542, %v517
    %v544 = vpop.permute.xlu0 %543
    %547 = vset.pattern.permute.xlu0 0
    %548 = vperm.xlu0 %547, %v518
    %v549 = vpop.permute.xlu0 %548
    %552 = vset.pattern.permute.xlu0 0
    %553 = vperm.xlu0 %552, %v519
    %v554 = vpop.permute.xlu0 %553
    %557 = vset.pattern.permute.xlu0 0
    %558 = vperm.xlu0 %557, %v520
    %v559 = vpop.permute.xlu0 %558
    %v561 = vmul.f32 %v449, %v524
    %v562 = vmul.f32 %v450, %v529
    %v563 = vmul.f32 %v451, %v534
    %v564 = vmul.f32 %v452, %v539
    %v565 = vmul.f32 %v453, %v544
    %v566 = vmul.f32 %v454, %v549
    %v567 = vmul.f32 %v455, %v554
    %v568 = vmul.f32 %v456, %v559
    %570 = vset.pattern.permute.xlu0 1
    %571 = vperm.xlu0 %570, %v489
    %v572 = vpop.permute.xlu0 %571
    %575 = vset.pattern.permute.xlu0 1
    %576 = vperm.xlu0 %575, %v490
    %v577 = vpop.permute.xlu0 %576
    %580 = vset.pattern.permute.xlu0 1
    %581 = vperm.xlu0 %580, %v491
    %v582 = vpop.permute.xlu0 %581
    %585 = vset.pattern.permute.xlu0 1
    %586 = vperm.xlu0 %585, %v492
    %v587 = vpop.permute.xlu0 %586
    %590 = vset.pattern.permute.xlu0 1
    %591 = vperm.xlu0 %590, %v493
    %v592 = vpop.permute.xlu0 %591
    %595 = vset.pattern.permute.xlu0 1
    %596 = vperm.xlu0 %595, %v494
    %v597 = vpop.permute.xlu0 %596
    %600 = vset.pattern.permute.xlu0 1
    %601 = vperm.xlu0 %600, %v495
    %v602 = vpop.permute.xlu0 %601
    %605 = vset.pattern.permute.xlu0 1
    %606 = vperm.xlu0 %605, %v496
    %v607 = vpop.permute.xlu0 %606
    %v609 = vadd.f32 %v561, %v572
    %v610 = vadd.f32 %v562, %v577
    %v611 = vadd.f32 %v563, %v582
    %v612 = vadd.f32 %v564, %v587
    %v613 = vadd.f32 %v565, %v592
    %v614 = vadd.f32 %v566, %v597
    %v615 = vadd.f32 %v567, %v602
    %v616 = vadd.f32 %v568, %v607
    %v617 = vmax.f32 %v609, 0.0
    %v618 = vmax.f32 %v610, 0.0
    %v619 = vmax.f32 %v611, 0.0
    %v620 = vmax.f32 %v612, 0.0
    %v621 = vmax.f32 %v613, 0.0
    %v622 = vmax.f32 %v614, 0.0
    %v623 = vmax.f32 %v615, 0.0
    %v624 = vmax.f32 %v616, 0.0
    %625 = vst [vmem:[%s3] sm:$0xff] %v617
    %626 = vst [vmem:[%s3 + $0x8] sm:$0xff] %v618
    %627 = vst [vmem:[%s3 + $0x10] sm:$0xff] %v619
    %628 = vst [vmem:[%s3 + $0x18] sm:$0xff] %v620
    %629 = vst [vmem:[%s3 + $0x20] sm:$0xff] %v621
    %630 = vst [vmem:[%s3 + $0x28] sm:$0xff] %v622
    %631 = vst [vmem:[%s3 + $0x30] sm:$0xff] %v623
    %632 = vst [vmem:[%s3 + $0x38] sm:$0xff] %v624
  $region21: #{resnet_forward.12} parent=0 // pred_fallthru
    _
  // Predicated region
  $region22: #{resnet_forward.12} parent=0 // pred_check
    _
  $region23: #{resnet_forward.12} parent=0 // pred_check_branch
    %634 = sbr.rel (0) target = $region25
  $region24: #{resnet_forward.12} parent=0 // pred_region
    _
  $region25: #{resnet_forward.12} parent=0 // pred_fallthru
    _
  // Predicated region
  $region26: #{resnet_forward.12} parent=0 // pred_check
    _
  $region27: #{resnet_forward.12} parent=0 // pred_check_branch
    %636 = sbr.rel (0) target = $region29
  $region28: #{resnet_forward.12} parent=0 // pred_region
    _
  $region29: #{resnet_forward.12} parent=0 // pred_fallthru
    _

// kernel: resnet_forward.13
$region0: #{resnet_forward.13}
  #allocation0 [shape = 'u32[]', space=smem, size = 0x4, offset = 0x4, fixed_abs, tag = 'smem constant byte address 0x4 - core index']
  #allocation1 [shape = 'u32[144,128]{1,0:T(1,128)}', space=vmem, size = 0x12000, scoped, tag = 'internal scratch']
  #allocation2 [shape = 'f32[64,128]{1,0:T(8,128)}', space=vmem, size = 0x8000, scoped, tag = 'scratch operand']
  %s0 = inlined_call_operand.vmem [shape: bf16[1,64,576], index: 0, kind: input, shape index: {}]
  %s1 = inlined_call_operand.vmem [shape: bf16[1,576,128], index: 1, kind: input, shape index: {}]
  %s2 = inlined_call_operand.vmem [shape: f32[64,2], index: 2, kind: input, shape index: {}, may-alias: {2,5}]
  %s3 = inlined_call_operand.vmem [shape: bf16[64,32], index: 3, kind: input, shape index: {}]
  %s4 = inlined_call_operand.vmem [shape: bf16[32,128], index: 4, kind: input, shape index: {}]
  %s5 = inlined_call_operand.vmem [shape: f32[64,2], index: 5, kind: input, shape index: {}, may-alias: {2,5}]
  %s6 = inlined_call_operand.vmem [shape: f32[64,128], index: 6, kind: output, shape index: {}]
  %s7 = sld [smem:[#allocation0]]
  $region42: #{resnet_forward.13} parent=0
    _
  %s9 = ssub.s32 1, %s7
  %s10 = scalar_select 0, %s9, %s7
  // Predicated region
  $region2: #{resnet_forward.13} parent=0 // pred_check
    _
  $region3: #{resnet_forward.13} parent=0 // pred_check_branch
    %12 = sbr.rel (0) target = $region5
  $region4: #{resnet_forward.13} parent=0 // pred_region
    _
  $region5: #{resnet_forward.13} parent=0 // pred_fallthru
    _
  // Predicated region
  $region6: #{resnet_forward.13} parent=0 // pred_check
    _
  $region7: #{resnet_forward.13} parent=0 // pred_check_branch
    %14 = sbr.rel (0) target = $region9
  $region8: #{resnet_forward.13} parent=0 // pred_region
    _
  $region9: #{resnet_forward.13} parent=0 // pred_fallthru
    _
  // Predicated region
  $region10: #{resnet_forward.13} parent=0 // pred_check
    _
  $region11: #{resnet_forward.13} parent=0 // pred_check_branch
    %16 = sbr.rel (0) target = $region13
  $region12: #{resnet_forward.13} parent=0 // pred_region
    _
  $region13: #{resnet_forward.13} parent=0 // pred_fallthru
    _
  // Predicated region
  $region14: #{resnet_forward.13} parent=0 // pred_check
    _
  $region15: #{resnet_forward.13} parent=0 // pred_check_branch
    %18 = sbr.rel (0) target = $region17
  $region16: #{resnet_forward.13} parent=0 // pred_region
    _
  $region17: #{resnet_forward.13} parent=0 // pred_fallthru
    _
  // Predicated region
  $region18: #{resnet_forward.13} parent=0 // pred_check
    _
  $region19: #{resnet_forward.13} parent=0 // pred_check_branch
    %20 = sbr.rel (0) target = $region21
  $region20: #{resnet_forward.13} parent=0 // pred_region
    _
  $region21: #{resnet_forward.13} parent=0 // pred_fallthru
    _
  // Predicated region
  $region22: #{resnet_forward.13} parent=0 // pred_check
    _
  $region23: #{resnet_forward.13} parent=0 // pred_check_branch
    %22 = sbr.rel (0) target = $region25
  $region24: #{resnet_forward.13} parent=0 // pred_region
    _
  $region25: #{resnet_forward.13} parent=0 // pred_fallthru
    _
  %p24 = scmp.eq.s32.totalorder 0, 0
  // Predicated region
  $region26: #{resnet_forward.13} parent=0 // pred_check
    %p25 = pneg %p24
  $region27: #{resnet_forward.13} parent=0 // pred_check_branch
    %27 = sbr.rel (%p25) target = $region29
  $region28: #{resnet_forward.13} parent=0 // pred_region
    %28 = vst [vmem:[#allocation2] sm:$0xff] 0.0
    %29 = vst [vmem:[#allocation2 + $0x8] sm:$0xff] 0.0
    %30 = vst [vmem:[#allocation2 + $0x10] sm:$0xff] 0.0
    %31 = vst [vmem:[#allocation2 + $0x18] sm:$0xff] 0.0
    %32 = vst [vmem:[#allocation2 + $0x20] sm:$0xff] 0.0
    %33 = vst [vmem:[#allocation2 + $0x28] sm:$0xff] 0.0
    %34 = vst [vmem:[#allocation2 + $0x30] sm:$0xff] 0.0
    %35 = vst [vmem:[#allocation2 + $0x38] sm:$0xff] 0.0
  $region29: #{resnet_forward.13} parent=0 // pred_fallthru
    _
  %v36 = vld [vmem:[#allocation2] sm:$0xff]
  %v37 = vld [vmem:[#allocation2 + $0x8] sm:$0xff]
  %v38 = vld [vmem:[#allocation2 + $0x10] sm:$0xff]
  %v39 = vld [vmem:[#allocation2 + $0x18] sm:$0xff]
  %v40 = vld [vmem:[#allocation2 + $0x20] sm:$0xff]
  %v41 = vld [vmem:[#allocation2 + $0x28] sm:$0xff]
  %v42 = vld [vmem:[#allocation2 + $0x30] sm:$0xff]
  %v43 = vld [vmem:[#allocation2 + $0x38] sm:$0xff]
  %v44 = vld [vmem:[%s0] sm:$0xff]
  %v45 = vld [vmem:[%s0 + $0x8] sm:$0xff]
  %v46 = vld [vmem:[%s0 + $0x10] sm:$0xf]
  %v47 = vld [vmem:[%s0 + $0x14] sm:$0xff]
  %v48 = vld [vmem:[%s0 + $0x1c] sm:$0xff]
  %v49 = vld [vmem:[%s0 + $0x24] sm:$0xf]
  %v50 = vld [vmem:[%s0 + $0x28] sm:$0xff]
  %v51 = vld [vmem:[%s0 + $0x30] sm:$0xff]
  %v52 = vld [vmem:[%s0 + $0x38] sm:$0xf]
  %v53 = vld [vmem:[%s0 + $0x3c] sm:$0xff]
  %v54 = vld [vmem:[%s0 + $0x44] sm:$0xff]
  %v55 = vld [vmem:[%s0 + $0x4c] sm:$0xf]
  %v56 = vld [vmem:[%s0 + $0x50] sm:$0xff]
  %v57 = vld [vmem:[%s0 + $0x58] sm:$0xff]
  %v58 = vld [vmem:[%s0 + $0x60] sm:$0xf]
  %v59 = vld [vmem:[%s0 + $0x64] sm:$0xff]
  %v60 = vld [vmem:[%s0 + $0x6c] sm:$0xff]
  %v61 = vld [vmem:[%s0 + $0x74] sm:$0xf]
  %v62 = vld [vmem:[%s0 + $0x78] sm:$0xff]
  %v63 = vld [vmem:[%s0 + $0x80] sm:$0xff]
  %v64 = vld [vmem:[%s0 + $0x88] sm:$0xf]
  %v65 = vld [vmem:[%s0 + $0x8c] sm:$0xff]
  %v66 = vld [vmem:[%s0 + $0x94] sm:$0xff]
  %v67 = vld [vmem:[%s0 + $0x9c] sm:$0xf]
  %v68 = vld [vmem:[%s1] sm:$0xf]
  %v69 = vld [vmem:[%s1 + $0x4] sm:$0xf]
  %v70 = vld [vmem:[%s1 + $0x8] sm:$0xf]
  %v71 = vld [vmem:[%s1 + $0xc] sm:$0xf]
  %v72 = vld [vmem:[%s1 + $0x10] sm:$0xf]
  %v73 = vld [vmem:[%s1 + $0x14] sm:$0xf]
  %v74 = vld [vmem:[%s1 + $0x18] sm:$0xf]
  %v75 = vld [vmem:[%s1 + $0x1c] sm:$0xf]
  %v76 = vld [vmem:[%s1 + $0x20] sm:$0xf]
  %v77 = vld [vmem:[%s1 + $0x24] sm:$0xf]
  %v78 = vld [vmem:[%s1 + $0x28] sm:$0xf]
  %v79 = vld [vmem:[%s1 + $0x2c] sm:$0xf]
  %v80 = vld [vmem:[%s1 + $0x30] sm:$0xf]
  %v81 = vld [vmem:[%s1 + $0x34] sm:$0xf]
  %v82 = vld [vmem:[%s1 + $0x38] sm:$0xf]
  %v83 = vld [vmem:[%s1 + $0x3c] sm:$0xf]
  %v84 = vld [vmem:[%s1 + $0x40] sm:$0xf]
  %v85 = vld [vmem:[%s1 + $0x44] sm:$0xf]
  %v86 = vld [vmem:[%s1 + $0x48] sm:$0xf]
  %v87 = vld [vmem:[%s1 + $0x4c] sm:$0xf]
  %v88 = vld [vmem:[%s1 + $0x50] sm:$0xf]
  %v89 = vld [vmem:[%s1 + $0x54] sm:$0xf]
  %v90 = vld [vmem:[%s1 + $0x58] sm:$0xf]
  %v91 = vld [vmem:[%s1 + $0x5c] sm:$0xf]
  %v92 = vld [vmem:[%s1 + $0x60] sm:$0xf]
  %v93 = vld [vmem:[%s1 + $0x64] sm:$0xf]
  %v94 = vld [vmem:[%s1 + $0x68] sm:$0xf]
  %v95 = vld [vmem:[%s1 + $0x6c] sm:$0xf]
  %v96 = vld [vmem:[%s1 + $0x70] sm:$0xf]
  %v97 = vld [vmem:[%s1 + $0x74] sm:$0xf]
  %v98 = vld [vmem:[%s1 + $0x78] sm:$0xf]
  %v99 = vld [vmem:[%s1 + $0x7c] sm:$0xf]
  %v100 = vld [vmem:[%s1 + $0x80] sm:$0xf]
  %v101 = vld [vmem:[%s1 + $0x84] sm:$0xf]
  %v102 = vld [vmem:[%s1 + $0x88] sm:$0xf]
  %v103 = vld [vmem:[%s1 + $0x8c] sm:$0xf]
  %v104 = vld [vmem:[%s1 + $0x90] sm:$0xf]
  %v105 = vld [vmem:[%s1 + $0x94] sm:$0xf]
  %v106 = vld [vmem:[%s1 + $0x98] sm:$0xf]
  %v107 = vld [vmem:[%s1 + $0x9c] sm:$0xf]
  %v108 = vld [vmem:[%s1 + $0xa0] sm:$0xf]
  %v109 = vld [vmem:[%s1 + $0xa4] sm:$0xf]
  %v110 = vld [vmem:[%s1 + $0xa8] sm:$0xf]
  %v111 = vld [vmem:[%s1 + $0xac] sm:$0xf]
  %v112 = vld [vmem:[%s1 + $0xb0] sm:$0xf]
  %v113 = vld [vmem:[%s1 + $0xb4] sm:$0xf]
  %v114 = vld [vmem:[%s1 + $0xb8] sm:$0xf]
  %v115 = vld [vmem:[%s1 + $0xbc] sm:$0xf]
  %v116 = vld [vmem:[%s1 + $0xc0] sm:$0xf]
  %v117 = vld [vmem:[%s1 + $0xc4] sm:$0xf]
  %v118 = vld [vmem:[%s1 + $0xc8] sm:$0xf]
  %v119 = vld [vmem:[%s1 + $0xcc] sm:$0xf]
  %v120 = vld [vmem:[%s1 + $0xd0] sm:$0xf]
  %v121 = vld [vmem:[%s1 + $0xd4] sm:$0xf]
  %v122 = vld [vmem:[%s1 + $0xd8] sm:$0xf]
  %v123 = vld [vmem:[%s1 + $0xdc] sm:$0xf]
  %v124 = vld [vmem:[%s1 + $0xe0] sm:$0xf]
  %v125 = vld [vmem:[%s1 + $0xe4] sm:$0xf]
  %v126 = vld [vmem:[%s1 + $0xe8] sm:$0xf]
  %v127 = vld [vmem:[%s1 + $0xec] sm:$0xf]
  %v128 = vld [vmem:[%s1 + $0xf0] sm:$0xf]
  %v129 = vld [vmem:[%s1 + $0xf4] sm:$0xf]
  %v130 = vld [vmem:[%s1 + $0xf8] sm:$0xf]
  %v131 = vld [vmem:[%s1 + $0xfc] sm:$0xf]
  %v132 = vld [vmem:[%s1 + $0x100] sm:$0xf]
  %v133 = vld [vmem:[%s1 + $0x104] sm:$0xf]
  %v134 = vld [vmem:[%s1 + $0x108] sm:$0xf]
  %v135 = vld [vmem:[%s1 + $0x10c] sm:$0xf]
  %v136 = vld [vmem:[%s1 + $0x110] sm:$0xf]
  %v137 = vld [vmem:[%s1 + $0x114] sm:$0xf]
  %v138 = vld [vmem:[%s1 + $0x118] sm:$0xf]
  %v139 = vld [vmem:[%s1 + $0x11c] sm:$0xf]
  %v164 = vunpack.c.l.b16 %v44
  %v165 = vunpack.c.h.b16 %v44
  %v166 = vunpack.c.l.b16 %v45
  %v167 = vunpack.c.h.b16 %v45
  %v168 = vunpack.c.l.b16 %v46
  %v169 = vunpack.c.l.b16 %v47
  %v170 = vunpack.c.h.b16 %v47
  %v171 = vunpack.c.l.b16 %v48
  %v172 = vunpack.c.h.b16 %v48
  %v173 = vunpack.c.l.b16 %v49
  %v174 = vunpack.c.l.b16 %v50
  %v175 = vunpack.c.h.b16 %v50
  %v176 = vunpack.c.l.b16 %v51
  %v177 = vunpack.c.h.b16 %v51
  %v178 = vunpack.c.l.b16 %v52
  %v179 = vunpack.c.l.b16 %v53
  %v180 = vunpack.c.h.b16 %v53
  %v181 = vunpack.c.l.b16 %v54
  %v182 = vunpack.c.h.b16 %v54
  %v183 = vunpack.c.l.b16 %v55
  %v184 = vunpack.c.l.b16 %v56
  %v185 = vunpack.c.h.b16 %v56
  %v186 = vunpack.c.l.b16 %v57
  %v187 = vunpack.c.h.b16 %v57
  %v188 = vunpack.c.l.b16 %v58
  %v189 = vunpack.c.l.b16 %v59
  %v190 = vunpack.c.h.b16 %v59
  %v191 = vunpack.c.l.b16 %v60
  %v192 = vunpack.c.h.b16 %v60
  %v193 = vunpack.c.l.b16 %v61
  %v194 = vunpack.c.l.b16 %v62
  %v195 = vunpack.c.h.b16 %v62
  %v196 = vunpack.c.l.b16 %v63
  %v197 = vunpack.c.h.b16 %v63
  %v198 = vunpack.c.l.b16 %v64
  %v199 = vunpack.c.l.b16 %v65
  %v200 = vunpack.c.h.b16 %v65
  %v201 = vunpack.c.l.b16 %v66
  %v202 = vunpack.c.h.b16 %v66
  %v203 = vunpack.c.l.b16 %v67
  %v204 = vpack.c.b16 %v169, %v164
  %v205 = vpack.c.b16 %v170, %v165
  %v206 = vpack.c.b16 %v171, %v166
  %v207 = vpack.c.b16 %v172, %v167
  %v208 = vpack.c.b16 %v173, %v168
  %v209 = vpack.c.b16 %v179, %v174
  %v210 = vpack.c.b16 %v180, %v175
  %v211 = vpack.c.b16 %v181, %v176
  %v212 = vpack.c.b16 %v182, %v177
  %v213 = vpack.c.b16 %v183, %v178
  %v214 = vpack.c.b16 %v189, %v184
  %v215 = vpack.c.b16 %v190, %v185
  %v216 = vpack.c.b16 %v191, %v186
  %v217 = vpack.c.b16 %v192, %v187
  %v218 = vpack.c.b16 %v193, %v188
  %v219 = vpack.c.b16 %v199, %v194
  %v220 = vpack.c.b16 %v200, %v195
  %v221 = vpack.c.b16 %v201, %v196
  %v222 = vpack.c.b16 %v202, %v197
  %v223 = vpack.c.b16 %v203, %v198
  %v312 = vunpack.c.l.b16 %v68
  %v313 = vunpack.c.l.b16 %v69
  %v314 = vunpack.c.l.b16 %v70
  %v315 = vunpack.c.l.b16 %v71
  %v316 = vunpack.c.l.b16 %v72
  %v317 = vunpack.c.l.b16 %v73
  %v318 = vunpack.c.l.b16 %v74
  %v319 = vunpack.c.l.b16 %v75
  %v320 = vunpack.c.l.b16 %v76
  %v321 = vunpack.c.l.b16 %v77
  %v322 = vunpack.c.l.b16 %v78
  %v323 = vunpack.c.l.b16 %v79
  %v324 = vunpack.c.l.b16 %v80
  %v325 = vunpack.c.l.b16 %v81
  %v326 = vunpack.c.l.b16 %v82
  %v327 = vunpack.c.l.b16 %v83
  %v328 = vunpack.c.l.b16 %v84
  %v329 = vunpack.c.l.b16 %v85
  %v330 = vunpack.c.l.b16 %v86
  %v331 = vunpack.c.l.b16 %v87
  %v332 = vunpack.c.l.b16 %v88
  %v333 = vunpack.c.l.b16 %v89
  %v334 = vunpack.c.l.b16 %v90
  %v335 = vunpack.c.l.b16 %v91
  %v336 = vunpack.c.l.b16 %v92
  %v337 = vunpack.c.l.b16 %v93
  %v338 = vunpack.c.l.b16 %v94
  %v339 = vunpack.c.l.b16 %v95
  %v340 = vunpack.c.l.b16 %v96
  %v341 = vunpack.c.l.b16 %v97
  %v342 = vunpack.c.l.b16 %v98
  %v343 = vunpack.c.l.b16 %v99
  %v344 = vunpack.c.l.b16 %v100
  %v345 = vunpack.c.l.b16 %v101
  %v346 = vunpack.c.l.b16 %v102
  %v347 = vunpack.c.l.b16 %v103
  %v348 = vunpack.c.l.b16 %v104
  %v349 = vunpack.c.l.b16 %v105
  %v350 = vunpack.c.l.b16 %v106
  %v351 = vunpack.c.l.b16 %v107
  %v352 = vunpack.c.l.b16 %v108
  %v353 = vunpack.c.l.b16 %v109
  %v354 = vunpack.c.l.b16 %v110
  %v355 = vunpack.c.l.b16 %v111
  %v356 = vunpack.c.l.b16 %v112
  %v357 = vunpack.c.l.b16 %v113
  %v358 = vunpack.c.l.b16 %v114
  %v359 = vunpack.c.l.b16 %v115
  %v360 = vunpack.c.l.b16 %v116
  %v361 = vunpack.c.l.b16 %v117
  %v362 = vunpack.c.l.b16 %v118
  %v363 = vunpack.c.l.b16 %v119
  %v364 = vunpack.c.l.b16 %v120
  %v365 = vunpack.c.l.b16 %v121
  %v366 = vunpack.c.l.b16 %v122
  %v367 = vunpack.c.l.b16 %v123
  %v368 = vunpack.c.l.b16 %v124
  %v369 = vunpack.c.l.b16 %v125
  %v370 = vunpack.c.l.b16 %v126
  %v371 = vunpack.c.l.b16 %v127
  %v372 = vunpack.c.l.b16 %v128
  %v373 = vunpack.c.l.b16 %v129
  %v374 = vunpack.c.l.b16 %v130
  %v375 = vunpack.c.l.b16 %v131
  %v376 = vunpack.c.l.b16 %v132
  %v377 = vunpack.c.l.b16 %v133
  %v378 = vunpack.c.l.b16 %v134
  %v379 = vunpack.c.l.b16 %v135
  %v380 = vunpack.c.l.b16 %v136
  %v381 = vunpack.c.l.b16 %v137
  %v382 = vunpack.c.l.b16 %v138
  %v383 = vunpack.c.l.b16 %v139
  %v384 = vpack.c.b16 %v313, %v312
  %v385 = vpack.c.b16 %v315, %v314
  %v386 = vpack.c.b16 %v317, %v316
  %v387 = vpack.c.b16 %v319, %v318
  %v388 = vpack.c.b16 %v321, %v320
  %v389 = vpack.c.b16 %v323, %v322
  %v390 = vpack.c.b16 %v325, %v324
  %v391 = vpack.c.b16 %v327, %v326
  %v392 = vpack.c.b16 %v329, %v328
  %v393 = vpack.c.b16 %v331, %v330
  %v394 = vpack.c.b16 %v333, %v332
  %v395 = vpack.c.b16 %v335, %v334
  %v396 = vpack.c.b16 %v337, %v336
  %v397 = vpack.c.b16 %v339, %v338
  %v398 = vpack.c.b16 %v341, %v340
  %v399 = vpack.c.b16 %v343, %v342
  %v400 = vpack.c.b16 %v345, %v344
  %v401 = vpack.c.b16 %v347, %v346
  %v402 = vpack.c.b16 %v349, %v348
  %v403 = vpack.c.b16 %v351, %v350
  %v404 = vpack.c.b16 %v353, %v352
  %v405 = vpack.c.b16 %v355, %v354
  %v406 = vpack.c.b16 %v357, %v356
  %v407 = vpack.c.b16 %v359, %v358
  %v408 = vpack.c.b16 %v361, %v360
  %v409 = vpack.c.b16 %v363, %v362
  %v410 = vpack.c.b16 %v365, %v364
  %v411 = vpack.c.b16 %v367, %v366
  %v412 = vpack.c.b16 %v369, %v368
  %v413 = vpack.c.b16 %v371, %v370
  %v414 = vpack.c.b16 %v373, %v372
  %v415 = vpack.c.b16 %v375, %v374
  %v416 = vpack.c.b16 %v377, %v376
  %v417 = vpack.c.b16 %v379, %v378
  %v418 = vpack.c.b16 %v381, %v380
  %v419 = vpack.c.b16 %v383, %v382
  %vm456 = vcmask 523264
  %v458 = vsel %vm456, %v208, 0
  %v461 = vsel %vm456, %v213, 0
  %v464 = vsel %vm456, %v218, 0
  %v467 = vsel %vm456, %v223, 0
  %469 = vmatprep.subr.bf16.mxu0 0
  %470 = vmatpush1.bf16.msra.mxu0 %v384
  %471 = vmatprep.subr.bf16.mxu0 0
  %472 = vmatpush1.bf16.msra.mxu0 %v385
  %473 = vmatprep.subr.bf16.mxu0 0
  %474 = vmatpush1.bf16.msra.mxu0 %v386
  %475 = vmatprep.subr.bf16.mxu0 0
  %476 = vmatpush1.bf16.msra.mxu0 %v387
  %477 = vmatprep.subr.bf16.mxu0 0
  %478 = vmatpush1.bf16.msra.mxu0 %v388
  %479 = vmatprep.subr.bf16.mxu0 0
  %480 = vmatpush1.bf16.msra.mxu0 %v389
  %481 = vmatprep.subr.bf16.mxu0 0
  %482 = vmatpush1.bf16.msra.mxu0 %v390
  %483 = vmatprep.subr.bf16.mxu0 0
  %484 = vmatpush1.bf16.msra.mxu0 %v391
  %485 = vmatprep.subr.bf16.mxu0 0
  %486 = vmatpush1.bf16.msra.mxu0 %v392
  %487 = vmatprep.subr.bf16.mxu0 0
  %488 = vmatpush1.bf16.msra.mxu0 %v393
  %489 = vmatprep.subr.bf16.mxu0 0
  %490 = vmatpush1.bf16.msra.mxu0 %v394
  %491 = vmatprep.subr.bf16.mxu0 0
  %492 = vmatpush1.bf16.msra.mxu0 %v395
  %493 = vmatprep.subr.bf16.mxu0 0
  %494 = vmatpush1.bf16.msra.mxu0 %v396
  %495 = vmatprep.subr.bf16.mxu0 0
  %496 = vmatpush1.bf16.msra.mxu0 %v397
  %497 = vmatprep.subr.bf16.mxu0 0
  %498 = vmatpush1.bf16.msra.mxu0 %v398
  %499 = vmatprep.subr.bf16.mxu0 0
  %500 = vmatpush1.bf16.msra.mxu0 %v399
  %501 = vmatprep.mubr.bf16.mxu0 %v205
  %502 = vmatmul.mubr.bf16.gmra.mrb[0].mxu0 %v204
  %v503 = vpop.f32.mrb[0].mxu0
  %v504 = vadd.f32 0.0, %v503
  %v505 = vpop.f32.mrb[0].mxu0
  %v506 = vpop.f32.mrb[0].mxu0
  %v507 = vadd.f32 0.0, %v506
  %v508 = vpop.f32.mrb[0].mxu0
  %509 = vmatprep.mubr.bf16.mxu0 %v210
  %510 = vmatmul.mubr.bf16.gmra.mrb[0].mxu0 %v209
  %v511 = vpop.f32.mrb[0].mxu0
  %v512 = vadd.f32 0.0, %v511
  %v513 = vpop.f32.mrb[0].mxu0
  %v514 = vpop.f32.mrb[0].mxu0
  %v515 = vadd.f32 0.0, %v514
  %v516 = vpop.f32.mrb[0].mxu0
  %517 = vmatprep.mubr.bf16.mxu0 %v215
  %518 = vmatmul.mubr.bf16.gmra.mrb[0].mxu0 %v214
  %v519 = vpop.f32.mrb[0].mxu0
  %v520 = vadd.f32 0.0, %v519
  %v521 = vpop.f32.mrb[0].mxu0
  %v522 = vpop.f32.mrb[0].mxu0
  %v523 = vadd.f32 0.0, %v522
  %v524 = vpop.f32.mrb[0].mxu0
  %525 = vmatprep.mubr.bf16.mxu0 %v220
  %526 = vmatmul.mubr.bf16.gmra.mrb[0].mxu0 %v219
  %v527 = vpop.f32.mrb[0].mxu0
  %v528 = vadd.f32 0.0, %v527
  %v529 = vpop.f32.mrb[0].mxu0
  %v530 = vpop.f32.mrb[0].mxu0
  %v531 = vadd.f32 0.0, %v530
  %v532 = vpop.f32.mrb[0].mxu0
  %533 = vdwg.mxu0
  %534 = vmatprep.subr.bf16.mxu0 0
  %535 = vmatpush1.bf16.msra.mxu0 %v400
  %536 = vmatprep.subr.bf16.mxu0 0
  %537 = vmatpush1.bf16.msra.mxu0 %v401
  %538 = vmatprep.subr.bf16.mxu0 0
  %539 = vmatpush1.bf16.msra.mxu0 %v402
  %540 = vmatprep.subr.bf16.mxu0 0
  %541 = vmatpush1.bf16.msra.mxu0 %v403
  %542 = vmatprep.subr.bf16.mxu0 0
  %543 = vmatpush1.bf16.msra.mxu0 %v404
  %544 = vmatprep.subr.bf16.mxu0 0
  %545 = vmatpush1.bf16.msra.mxu0 %v405
  %546 = vmatprep.subr.bf16.mxu0 0
  %547 = vmatpush1.bf16.msra.mxu0 %v406
  %548 = vmatprep.subr.bf16.mxu0 0
  %549 = vmatpush1.bf16.msra.mxu0 %v407
  %550 = vmatprep.subr.bf16.mxu0 0
  %551 = vmatpush1.bf16.msra.mxu0 %v408
  %552 = vmatprep.subr.bf16.mxu0 0
  %553 = vmatpush1.bf16.msra.mxu0 %v409
  %554 = vmatprep.subr.bf16.mxu0 0
  %555 = vmatpush1.bf16.msra.mxu0 %v410
  %556 = vmatprep.subr.bf16.mxu0 0
  %557 = vmatpush1.bf16.msra.mxu0 %v411
  %558 = vmatprep.subr.bf16.mxu0 0
  %559 = vmatpush1.bf16.msra.mxu0 %v412
  %560 = vmatprep.subr.bf16.mxu0 0
  %561 = vmatpush1.bf16.msra.mxu0 %v413
  %562 = vmatprep.subr.bf16.mxu0 0
  %563 = vmatpush1.bf16.msra.mxu0 %v414
  %564 = vmatprep.subr.bf16.mxu0 0
  %565 = vmatpush1.bf16.msra.mxu0 %v415
  %566 = vmatprep.mubr.bf16.mxu0 %v207
  %567 = vmatmul.mubr.bf16.gmra.mrb[0].mxu0 %v206
  %v568 = vpop.f32.mrb[0].mxu0
  %v569 = vadd.f32 %v504, %v568
  %v570 = vpop.f32.mrb[0].mxu0
  %v571 = vpop.f32.mrb[0].mxu0
  %v572 = vadd.f32 %v507, %v571
  %v573 = vpop.f32.mrb[0].mxu0
  %574 = vmatprep.mubr.bf16.mxu0 %v212
  %575 = vmatmul.mubr.bf16.gmra.mrb[0].mxu0 %v211
  %v576 = vpop.f32.mrb[0].mxu0
  %v577 = vadd.f32 %v512, %v576
  %v578 = vpop.f32.mrb[0].mxu0
  %v579 = vpop.f32.mrb[0].mxu0
  %v580 = vadd.f32 %v515, %v579
  %v581 = vpop.f32.mrb[0].mxu0
  %582 = vmatprep.mubr.bf16.mxu0 %v217
  %583 = vmatmul.mubr.bf16.gmra.mrb[0].mxu0 %v216
  %v584 = vpop.f32.mrb[0].mxu0
  %v585 = vadd.f32 %v520, %v584
  %v586 = vpop.f32.mrb[0].mxu0
  %v587 = vpop.f32.mrb[0].mxu0
  %v588 = vadd.f32 %v523, %v587
  %v589 = vpop.f32.mrb[0].mxu0
  %590 = vmatprep.mubr.bf16.mxu0 %v222
  %591 = vmatmul.mubr.bf16.gmra.mrb[0].mxu0 %v221
  %v592 = vpop.f32.mrb[0].mxu0
  %v593 = vadd.f32 %v528, %v592
  %v594 = vpop.f32.mrb[0].mxu0
  %v595 = vpop.f32.mrb[0].mxu0
  %v596 = vadd.f32 %v531, %v595
  %v597 = vpop.f32.mrb[0].mxu0
  %598 = vdwg.mxu0
  %599 = vmatprep.subr.bf16.mxu0 0
  %600 = vmatpush1.bf16.msra.mxu0 %v416
  %601 = vmatprep.subr.bf16.mxu0 0
  %602 = vmatpush1.bf16.msra.mxu0 %v417
  %603 = vmatprep.subr.bf16.mxu0 0
  %604 = vmatpush1.bf16.msra.mxu0 %v418
  %605 = vmatprep.subr.bf16.mxu0 0
  %606 = vmatpush1.bf16.msra.mxu0 %v419
  %607 = vmatprep.subr.bf16.mxu0 0
  %608 = vmatpush1.bf16.msra.mxu0 0
  %609 = vmatprep.subr.bf16.mxu0 0
  %610 = vmatpush1.bf16.msra.mxu0 0
  %611 = vmatprep.subr.bf16.mxu0 0
  %612 = vmatpush1.bf16.msra.mxu0 0
  %613 = vmatprep.subr.bf16.mxu0 0
  %614 = vmatpush1.bf16.msra.mxu0 0
  %615 = vmatprep.subr.bf16.mxu0 0
  %616 = vmatpush1.bf16.msra.mxu0 0
  %617 = vmatprep.subr.bf16.mxu0 0
  %618 = vmatpush1.bf16.msra.mxu0 0
  %619 = vmatprep.subr.bf16.mxu0 0
  %620 = vmatpush1.bf16.msra.mxu0 0
  %621 = vmatprep.subr.bf16.mxu0 0
  %622 = vmatpush1.bf16.msra.mxu0 0
  %623 = vmatprep.subr.bf16.mxu0 0
  %624 = vmatpush1.bf16.msra.mxu0 0
  %625 = vmatprep.subr.bf16.mxu0 0
  %626 = vmatpush1.bf16.msra.mxu0 0
  %627 = vmatprep.subr.bf16.mxu0 0
  %628 = vmatpush1.bf16.msra.mxu0 0
  %629 = vmatprep.subr.bf16.mxu0 0
  %630 = vmatpush1.bf16.msra.mxu0 0
  %631 = vmatprep.mubr.bf16.mxu0 0
  %632 = vmatmul.mubr.bf16.gmra.mrb[0].mxu0 %v458
  %v633 = vpop.f32.mrb[0].mxu0
  %v634 = vadd.f32 %v569, %v633
  %v635 = vpop.f32.mrb[0].mxu0
  %v636 = vpop.f32.mrb[0].mxu0
  %v637 = vadd.f32 %v572, %v636
  %v638 = vpop.f32.mrb[0].mxu0
  %639 = vmatprep.mubr.bf16.mxu0 0
  %640 = vmatmul.mubr.bf16.gmra.mrb[0].mxu0 %v461
  %v641 = vpop.f32.mrb[0].mxu0
  %v642 = vadd.f32 %v577, %v641
  %v643 = vpop.f32.mrb[0].mxu0
  %v644 = vpop.f32.mrb[0].mxu0
  %v645 = vadd.f32 %v580, %v644
  %v646 = vpop.f32.mrb[0].mxu0
  %647 = vmatprep.mubr.bf16.mxu0 0
  %648 = vmatmul.mubr.bf16.gmra.mrb[0].mxu0 %v464
  %v649 = vpop.f32.mrb[0].mxu0
  %v650 = vadd.f32 %v585, %v649
  %v651 = vpop.f32.mrb[0].mxu0
  %v652 = vpop.f32.mrb[0].mxu0
  %v653 = vadd.f32 %v588, %v652
  %v654 = vpop.f32.mrb[0].mxu0
  %655 = vmatprep.mubr.bf16.mxu0 0
  %656 = vmatmul.mubr.bf16.gmra.mrb[0].mxu0 %v467
  %v657 = vpop.f32.mrb[0].mxu0
  %v658 = vadd.f32 %v593, %v657
  %v659 = vpop.f32.mrb[0].mxu0
  %v660 = vpop.f32.mrb[0].mxu0
  %v661 = vadd.f32 %v596, %v660
  %v662 = vpop.f32.mrb[0].mxu0
  %663 = vdwg.mxu0
  %v664 = vadd.f32 %v36, %v634
  %v665 = vadd.f32 %v37, %v637
  %v666 = vadd.f32 %v38, %v642
  %v667 = vadd.f32 %v39, %v645
  %v668 = vadd.f32 %v40, %v650
  %v669 = vadd.f32 %v41, %v653
  %v670 = vadd.f32 %v42, %v658
  %v671 = vadd.f32 %v43, %v661
  %672 = vst [vmem:[#allocation2] sm:$0xff] %v664
  %673 = vst [vmem:[#allocation2 + $0x8] sm:$0xff] %v665
  %674 = vst [vmem:[#allocation2 + $0x10] sm:$0xff] %v666
  %675 = vst [vmem:[#allocation2 + $0x18] sm:$0xff] %v667
  %676 = vst [vmem:[#allocation2 + $0x20] sm:$0xff] %v668
  %677 = vst [vmem:[#allocation2 + $0x28] sm:$0xff] %v669
  %678 = vst [vmem:[#allocation2 + $0x30] sm:$0xff] %v670
  %679 = vst [vmem:[#allocation2 + $0x38] sm:$0xff] %v671
  // Predicated region
  $region30: #{resnet_forward.13} parent=0 // pred_check
    %p680 = pneg %p24
  $region31: #{resnet_forward.13} parent=0 // pred_check_branch
    %682 = sbr.rel (%p680) target = $region33
  $region32: #{resnet_forward.13} parent=0 // pred_region
    %v683 = vld [vmem:[#allocation2] sm:$0xff]
    %v684 = vld [vmem:[#allocation2 + $0x8] sm:$0xff]
    %v685 = vld [vmem:[#allocation2 + $0x10] sm:$0xff]
    %v686 = vld [vmem:[#allocation2 + $0x18] sm:$0xff]
    %v687 = vld [vmem:[#allocation2 + $0x20] sm:$0xff]
    %v688 = vld [vmem:[#allocation2 + $0x28] sm:$0xff]
    %v689 = vld [vmem:[#allocation2 + $0x30] sm:$0xff]
    %v690 = vld [vmem:[#allocation2 + $0x38] sm:$0xff]
    %691 = vadd.xlane.f32.xlu0 %v683
    %v692 = vpop.xlane.xlu0 %691
    %693 = vadd.xlane.f32.xlu0 %v684
    %v694 = vpop.xlane.xlu0 %693
    %695 = vadd.xlane.f32.xlu0 %v685
    %v696 = vpop.xlane.xlu0 %695
    %697 = vadd.xlane.f32.xlu0 %v686
    %v698 = vpop.xlane.xlu0 %697
    %699 = vadd.xlane.f32.xlu0 %v687
    %v700 = vpop.xlane.xlu0 %699
    %701 = vadd.xlane.f32.xlu0 %v688
    %v702 = vpop.xlane.xlu0 %701
    %703 = vadd.xlane.f32.xlu0 %v689
    %v704 = vpop.xlane.xlu0 %703
    %705 = vadd.xlane.f32.xlu0 %v690
    %v706 = vpop.xlane.xlu0 %705
    %v707 = vmul.f32 %v692, 0.0078125
    %v708 = vmul.f32 %v694, 0.0078125
    %v709 = vmul.f32 %v696, 0.0078125
    %v710 = vmul.f32 %v698, 0.0078125
    %v711 = vmul.f32 %v700, 0.0078125
    %v712 = vmul.f32 %v702, 0.0078125
    %v713 = vmul.f32 %v704, 0.0078125
    %v714 = vmul.f32 %v706, 0.0078125
    %v715 = vsub.f32 %v683, %v707
    %v716 = vsub.f32 %v684, %v708
    %v717 = vsub.f32 %v685, %v709
    %v718 = vsub.f32 %v686, %v710
    %v719 = vsub.f32 %v687, %v711
    %v720 = vsub.f32 %v688, %v712
    %v721 = vsub.f32 %v689, %v713
    %v722 = vsub.f32 %v690, %v714
    %v723 = vmul.f32 %v715, %v715
    %v724 = vmul.f32 %v716, %v716
    %v725 = vmul.f32 %v717, %v717
    %v726 = vmul.f32 %v718, %v718
    %v727 = vmul.f32 %v719, %v719
    %v728 = vmul.f32 %v720, %v720
    %v729 = vmul.f32 %v721, %v721
    %v730 = vmul.f32 %v722, %v722
    %731 = vadd.xlane.f32.xlu0 %v723
    %v732 = vpop.xlane.xlu0 %731
    %733 = vadd.xlane.f32.xlu0 %v724
    %v734 = vpop.xlane.xlu0 %733
    %735 = vadd.xlane.f32.xlu0 %v725
    %v736 = vpop.xlane.xlu0 %735
    %737 = vadd.xlane.f32.xlu0 %v726
    %v738 = vpop.xlane.xlu0 %737
    %739 = vadd.xlane.f32.xlu0 %v727
    %v740 = vpop.xlane.xlu0 %739
    %741 = vadd.xlane.f32.xlu0 %v728
    %v742 = vpop.xlane.xlu0 %741
    %743 = vadd.xlane.f32.xlu0 %v729
    %v744 = vpop.xlane.xlu0 %743
    %745 = vadd.xlane.f32.xlu0 %v730
    %v746 = vpop.xlane.xlu0 %745
    %v747 = vmul.f32 %v732, 0.0078125
    %v748 = vmul.f32 %v734, 0.0078125
    %v749 = vmul.f32 %v736, 0.0078125
    %v750 = vmul.f32 %v738, 0.0078125
    %v751 = vmul.f32 %v740, 0.0078125
    %v752 = vmul.f32 %v742, 0.0078125
    %v753 = vmul.f32 %v744, 0.0078125
    %v754 = vmul.f32 %v746, 0.0078125
    %v755 = vld [vmem:[%s2] sm:$0xff]
    %v756 = vld [vmem:[%s2 + $0x8] sm:$0xff]
    %v757 = vld [vmem:[%s2 + $0x10] sm:$0xff]
    %v758 = vld [vmem:[%s2 + $0x18] sm:$0xff]
    %v759 = vld [vmem:[%s2 + $0x20] sm:$0xff]
    %v760 = vld [vmem:[%s2 + $0x28] sm:$0xff]
    %v761 = vld [vmem:[%s2 + $0x30] sm:$0xff]
    %v762 = vld [vmem:[%s2 + $0x38] sm:$0xff]
    %v763 = vadd.f32 %v747, 1e-05
    %v764 = vadd.f32 %v748, 1e-05
    %v765 = vadd.f32 %v749, 1e-05
    %v766 = vadd.f32 %v750, 1e-05
    %v767 = vadd.f32 %v751, 1e-05
    %v768 = vadd.f32 %v752, 1e-05
    %v769 = vadd.f32 %v753, 1e-05
    %v770 = vadd.f32 %v754, 1e-05
    %v771 = vrsqrt.pop %v763
    %v772 = vrsqrt.pop %v764
    %v773 = vrsqrt.pop %v765
    %v774 = vrsqrt.pop %v766
    %v775 = vrsqrt.pop %v767
    %v776 = vrsqrt.pop %v768
    %v777 = vrsqrt.pop %v769
    %v778 = vrsqrt.pop %v770
    %v779 = vmul.f32 %v755, %v771
    %v780 = vmul.f32 %v756, %v772
    %v781 = vmul.f32 %v757, %v773
    %v782 = vmul.f32 %v758, %v774
    %v783 = vmul.f32 %v759, %v775
    %v784 = vmul.f32 %v760, %v776
    %v785 = vmul.f32 %v761, %v777
    %v786 = vmul.f32 %v762, %v778
    %788 = vset.pattern.permute.xlu0 0
    %789 = vperm.xlu0 %788, %v779
    %v790 = vpop.permute.xlu0 %789
    %793 = vset.pattern.permute.xlu0 0
    %794 = vperm.xlu0 %793, %v780
    %v795 = vpop.permute.xlu0 %794
    %798 = vset.pattern.permute.xlu0 0
    %799 = vperm.xlu0 %798, %v781
    %v800 = vpop.permute.xlu0 %799
    %803 = vset.pattern.permute.xlu0 0
    %804 = vperm.xlu0 %803, %v782
    %v805 = vpop.permute.xlu0 %804
    %808 = vset.pattern.permute.xlu0 0
    %809 = vperm.xlu0 %808, %v783
    %v810 = vpop.permute.xlu0 %809
    %813 = vset.pattern.permute.xlu0 0
    %814 = vperm.xlu0 %813, %v784
    %v815 = vpop.permute.xlu0 %814
    %818 = vset.pattern.permute.xlu0 0
    %819 = vperm.xlu0 %818, %v785
    %v820 = vpop.permute.xlu0 %819
    %823 = vset.pattern.permute.xlu0 0
    %824 = vperm.xlu0 %823, %v786
    %v825 = vpop.permute.xlu0 %824
    %v827 = vmul.f32 %v715, %v790
    %v828 = vmul.f32 %v716, %v795
    %v829 = vmul.f32 %v717, %v800
    %v830 = vmul.f32 %v718, %v805
    %v831 = vmul.f32 %v719, %v810
    %v832 = vmul.f32 %v720, %v815
    %v833 = vmul.f32 %v721, %v820
    %v834 = vmul.f32 %v722, %v825
    %836 = vset.pattern.permute.xlu0 1
    %837 = vperm.xlu0 %836, %v755
    %v838 = vpop.permute.xlu0 %837
    %841 = vset.pattern.permute.xlu0 1
    %842 = vperm.xlu0 %841, %v756
    %v843 = vpop.permute.xlu0 %842
    %846 = vset.pattern.permute.xlu0 1
    %847 = vperm.xlu0 %846, %v757
    %v848 = vpop.permute.xlu0 %847
    %851 = vset.pattern.permute.xlu0 1
    %852 = vperm.xlu0 %851, %v758
    %v853 = vpop.permute.xlu0 %852
    %856 = vset.pattern.permute.xlu0 1
    %857 = vperm.xlu0 %856, %v759
    %v858 = vpop.permute.xlu0 %857
    %861 = vset.pattern.permute.xlu0 1
    %862 = vperm.xlu0 %861, %v760
    %v863 = vpop.permute.xlu0 %862
    %866 = vset.pattern.permute.xlu0 1
    %867 = vperm.xlu0 %866, %v761
    %v868 = vpop.permute.xlu0 %867
    %871 = vset.pattern.permute.xlu0 1
    %872 = vperm.xlu0 %871, %v762
    %v873 = vpop.permute.xlu0 %872
    %v875 = vadd.f32 %v827, %v838
    %v876 = vadd.f32 %v828, %v843
    %v877 = vadd.f32 %v829, %v848
    %v878 = vadd.f32 %v830, %v853
    %v879 = vadd.f32 %v831, %v858
    %v880 = vadd.f32 %v832, %v863
    %v881 = vadd.f32 %v833, %v868
    %v882 = vadd.f32 %v834, %v873
    %v883 = vld [vmem:[%s3] sm:$0xf]
    %v884 = vld [vmem:[%s3 + $0x4] sm:$0xf]
    %v885 = vld [vmem:[%s3 + $0x8] sm:$0xf]
    %v886 = vld [vmem:[%s3 + $0xc] sm:$0xf]
    %v887 = vld [vmem:[%s3 + $0x10] sm:$0xf]
    %v888 = vld [vmem:[%s3 + $0x14] sm:$0xf]
    %v889 = vld [vmem:[%s3 + $0x18] sm:$0xf]
    %v890 = vld [vmem:[%s3 + $0x1c] sm:$0xf]
    %v891 = vld [vmem:[%s4] sm:$0xf]
    %v892 = vld [vmem:[%s4 + $0x4] sm:$0xf]
    %v893 = vld [vmem:[%s4 + $0x8] sm:$0xf]
    %v894 = vld [vmem:[%s4 + $0xc] sm:$0xf]
    %v903 = vunpack.c.l.b16 %v883
    %v904 = vunpack.c.l.b16 %v884
    %v905 = vunpack.c.l.b16 %v885
    %v906 = vunpack.c.l.b16 %v886
    %v907 = vunpack.c.l.b16 %v887
    %v908 = vunpack.c.l.b16 %v888
    %v909 = vunpack.c.l.b16 %v889
    %v910 = vunpack.c.l.b16 %v890
    %v911 = vpack.c.b16 %v904, %v903
    %v912 = vpack.c.b16 %v906, %v905
    %v913 = vpack.c.b16 %v908, %v907
    %v914 = vpack.c.b16 %v910, %v909
    %v919 = vunpack.c.l.b16 %v891
    %v920 = vunpack.c.l.b16 %v892
    %v921 = vunpack.c.l.b16 %v893
    %v922 = vunpack.c.l.b16 %v894
    %v923 = vpack.c.b16 %v920, %v919
    %v924 = vpack.c.b16 %v922, %v921
    %vm927 = vcmask 261120
    %v929 = vsel %vm927, %v911, 0
    %v932 = vsel %vm927, %v912, 0
    %v935 = vsel %vm927, %v913, 0
    %v938 = vsel %vm927, %v914, 0
    %940 = vmatprep.subr.bf16.mxu0 0
    %941 = vmatpush1.bf16.msra.mxu0 %v923
    %942 = vmatprep.subr.bf16.mxu0 0
    %943 = vmatpush1.bf16.msra.mxu0 %v924
    %944 = vmatprep.subr.bf16.mxu0 0
    %945 = vmatpush1.bf16.msra.mxu0 0
    %946 = vmatprep.subr.bf16.mxu0 0
    %947 = vmatpush1.bf16.msra.mxu0 0
    %948 = vmatprep.subr.bf16.mxu0 0
    %949 = vmatpush1.bf16.msra.mxu0 0
    %950 = vmatprep.subr.bf16.mxu0 0
    %951 = vmatpush1.bf16.msra.mxu0 0
    %952 = vmatprep.subr.bf16.mxu0 0
    %953 = vmatpush1.bf16.msra.mxu0 0
    %954 = vmatprep.subr.bf16.mxu0 0
    %955 = vmatpush1.bf16.msra.mxu0 0
    %956 = vmatprep.subr.bf16.mxu0 0
    %957 = vmatpush1.bf16.msra.mxu0 0
    %958 = vmatprep.subr.bf16.mxu0 0
    %959 = vmatpush1.bf16.msra.mxu0 0
    %960 = vmatprep.subr.bf16.mxu0 0
    %961 = vmatpush1.bf16.msra.mxu0 0
    %962 = vmatprep.subr.bf16.mxu0 0
    %963 = vmatpush1.bf16.msra.mxu0 0
    %964 = vmatprep.subr.bf16.mxu0 0
    %965 = vmatpush1.bf16.msra.mxu0 0
    %966 = vmatprep.subr.bf16.mxu0 0
    %967 = vmatpush1.bf16.msra.mxu0 0
    %968 = vmatprep.subr.bf16.mxu0 0
    %969 = vmatpush1.bf16.msra.mxu0 0
    %970 = vmatprep.subr.bf16.mxu0 0
    %971 = vmatpush1.bf16.msra.mxu0 0
    %972 = vmatprep.mubr.bf16.mxu0 0
    %973 = vmatmul.mubr.bf16.gmra.mrb[0].mxu0 %v929
    %v974 = vpop.f32.mrb[0].mxu0
    %v975 = vadd.f32 0.0, %v974
    %v976 = vpop.f32.mrb[0].mxu0
    %v977 = vpop.f32.mrb[0].mxu0
    %v978 = vadd.f32 0.0, %v977
    %v979 = vpop.f32.mrb[0].mxu0
    %980 = vmatprep.mubr.bf16.mxu0 0
    %981 = vmatmul.mubr.bf16.gmra.mrb[0].mxu0 %v932
    %v982 = vpop.f32.mrb[0].mxu0
    %v983 = vadd.f32 0.0, %v982
    %v984 = vpop.f32.mrb[0].mxu0
    %v985 = vpop.f32.mrb[0].mxu0
    %v986 = vadd.f32 0.0, %v985
    %v987 = vpop.f32.mrb[0].mxu0
    %988 = vmatprep.mubr.bf16.mxu0 0
    %989 = vmatmul.mubr.bf16.gmra.mrb[0].mxu0 %v935
    %v990 = vpop.f32.mrb[0].mxu0
    %v991 = vadd.f32 0.0, %v990
    %v992 = vpop.f32.mrb[0].mxu0
    %v993 = vpop.f32.mrb[0].mxu0
    %v994 = vadd.f32 0.0, %v993
    %v995 = vpop.f32.mrb[0].mxu0
    %996 = vmatprep.mubr.bf16.mxu0 0
    %997 = vmatmul.mubr.bf16.gmra.mrb[0].mxu0 %v938
    %v998 = vpop.f32.mrb[0].mxu0
    %v999 = vadd.f32 0.0, %v998
    %v1000 = vpop.f32.mrb[0].mxu0
    %v1001 = vpop.f32.mrb[0].mxu0
    %v1002 = vadd.f32 0.0, %v1001
    %v1003 = vpop.f32.mrb[0].mxu0
    %1004 = vdwg.mxu0
    %1005 = vadd.xlane.f32.xlu0 %v975
    %v1006 = vpop.xlane.xlu0 %1005
    %1007 = vadd.xlane.f32.xlu0 %v978
    %v1008 = vpop.xlane.xlu0 %1007
    %1009 = vadd.xlane.f32.xlu0 %v983
    %v1010 = vpop.xlane.xlu0 %1009
    %1011 = vadd.xlane.f32.xlu0 %v986
    %v1012 = vpop.xlane.xlu0 %1011
    %1013 = vadd.xlane.f32.xlu0 %v991
    %v1014 = vpop.xlane.xlu0 %1013
    %1015 = vadd.xlane.f32.xlu0 %v994
    %v1016 = vpop.xlane.xlu0 %1015
    %1017 = vadd.xlane.f32.xlu0 %v999
    %v1018 = vpop.xlane.xlu0 %1017
    %1019 = vadd.xlane.f32.xlu0 %v1002
    %v1020 = vpop.xlane.xlu0 %1019
    %v1021 = vmul.f32 %v1006, 0.0078125
    %v1022 = vmul.f32 %v1008, 0.0078125
    %v1023 = vmul.f32 %v1010, 0.0078125
    %v1024 = vmul.f32 %v1012, 0.0078125
    %v1025 = vmul.f32 %v1014, 0.0078125
    %v1026 = vmul.f32 %v1016, 0.0078125
    %v1027 = vmul.f32 %v1018, 0.0078125
    %v1028 = vmul.f32 %v1020, 0.0078125
    %v1029 = vsub.f32 %v975, %v1021
    %v1030 = vsub.f32 %v978, %v1022
    %v1031 = vsub.f32 %v983, %v1023
    %v1032 = vsub.f32 %v986, %v1024
    %v1033 = vsub.f32 %v991, %v1025
    %v1034 = vsub.f32 %v994, %v1026
    %v1035 = vsub.f32 %v999, %v1027
    %v1036 = vsub.f32 %v1002, %v1028
    %v1037 = vmul.f32 %v1029, %v1029
    %v1038 = vmul.f32 %v1030, %v1030
    %v1039 = vmul.f32 %v1031, %v1031
    %v1040 = vmul.f32 %v1032, %v1032
    %v1041 = vmul.f32 %v1033, %v1033
    %v1042 = vmul.f32 %v1034, %v1034
    %v1043 = vmul.f32 %v1035, %v1035
    %v1044 = vmul.f32 %v1036, %v1036
    %1045 = vadd.xlane.f32.xlu0 %v1037
    %v1046 = vpop.xlane.xlu0 %1045
    %1047 = vadd.xlane.f32.xlu0 %v1038
    %v1048 = vpop.xlane.xlu0 %1047
    %1049 = vadd.xlane.f32.xlu0 %v1039
    %v1050 = vpop.xlane.xlu0 %1049
    %1051 = vadd.xlane.f32.xlu0 %v1040
    %v1052 = vpop.xlane.xlu0 %1051
    %1053 = vadd.xlane.f32.xlu0 %v1041
    %v1054 = vpop.xlane.xlu0 %1053
    %1055 = vadd.xlane.f32.xlu0 %v1042
    %v1056 = vpop.xlane.xlu0 %1055
    %1057 = vadd.xlane.f32.xlu0 %v1043
    %v1058 = vpop.xlane.xlu0 %1057
    %1059 = vadd.xlane.f32.xlu0 %v1044
    %v1060 = vpop.xlane.xlu0 %1059
    %v1061 = vmul.f32 %v1046, 0.0078125
    %v1062 = vmul.f32 %v1048, 0.0078125
    %v1063 = vmul.f32 %v1050, 0.0078125
    %v1064 = vmul.f32 %v1052, 0.0078125
    %v1065 = vmul.f32 %v1054, 0.0078125
    %v1066 = vmul.f32 %v1056, 0.0078125
    %v1067 = vmul.f32 %v1058, 0.0078125
    %v1068 = vmul.f32 %v1060, 0.0078125
    %v1069 = vld [vmem:[%s5] sm:$0xff]
    %v1070 = vld [vmem:[%s5 + $0x8] sm:$0xff]
    %v1071 = vld [vmem:[%s5 + $0x10] sm:$0xff]
    %v1072 = vld [vmem:[%s5 + $0x18] sm:$0xff]
    %v1073 = vld [vmem:[%s5 + $0x20] sm:$0xff]
    %v1074 = vld [vmem:[%s5 + $0x28] sm:$0xff]
    %v1075 = vld [vmem:[%s5 + $0x30] sm:$0xff]
    %v1076 = vld [vmem:[%s5 + $0x38] sm:$0xff]
    %v1077 = vadd.f32 %v1061, 1e-05
    %v1078 = vadd.f32 %v1062, 1e-05
    %v1079 = vadd.f32 %v1063, 1e-05
    %v1080 = vadd.f32 %v1064, 1e-05
    %v1081 = vadd.f32 %v1065, 1e-05
    %v1082 = vadd.f32 %v1066, 1e-05
    %v1083 = vadd.f32 %v1067, 1e-05
    %v1084 = vadd.f32 %v1068, 1e-05
    %v1085 = vrsqrt.pop %v1077
    %v1086 = vrsqrt.pop %v1078
    %v1087 = vrsqrt.pop %v1079
    %v1088 = vrsqrt.pop %v1080
    %v1089 = vrsqrt.pop %v1081
    %v1090 = vrsqrt.pop %v1082
    %v1091 = vrsqrt.pop %v1083
    %v1092 = vrsqrt.pop %v1084
    %v1093 = vmul.f32 %v1069, %v1085
    %v1094 = vmul.f32 %v1070, %v1086
    %v1095 = vmul.f32 %v1071, %v1087
    %v1096 = vmul.f32 %v1072, %v1088
    %v1097 = vmul.f32 %v1073, %v1089
    %v1098 = vmul.f32 %v1074, %v1090
    %v1099 = vmul.f32 %v1075, %v1091
    %v1100 = vmul.f32 %v1076, %v1092
    %1102 = vset.pattern.permute.xlu0 0
    %1103 = vperm.xlu0 %1102, %v1093
    %v1104 = vpop.permute.xlu0 %1103
    %1107 = vset.pattern.permute.xlu0 0
    %1108 = vperm.xlu0 %1107, %v1094
    %v1109 = vpop.permute.xlu0 %1108
    %1112 = vset.pattern.permute.xlu0 0
    %1113 = vperm.xlu0 %1112, %v1095
    %v1114 = vpop.permute.xlu0 %1113
    %1117 = vset.pattern.permute.xlu0 0
    %1118 = vperm.xlu0 %1117, %v1096
    %v1119 = vpop.permute.xlu0 %1118
    %1122 = vset.pattern.permute.xlu0 0
    %1123 = vperm.xlu0 %1122, %v1097
    %v1124 = vpop.permute.xlu0 %1123
    %1127 = vset.pattern.permute.xlu0 0
    %1128 = vperm.xlu0 %1127, %v1098
    %v1129 = vpop.permute.xlu0 %1128
    %1132 = vset.pattern.permute.xlu0 0
    %1133 = vperm.xlu0 %1132, %v1099
    %v1134 = vpop.permute.xlu0 %1133
    %1137 = vset.pattern.permute.xlu0 0
    %1138 = vperm.xlu0 %1137, %v1100
    %v1139 = vpop.permute.xlu0 %1138
    %v1141 = vmul.f32 %v1029, %v1104
    %v1142 = vmul.f32 %v1030, %v1109
    %v1143 = vmul.f32 %v1031, %v1114
    %v1144 = vmul.f32 %v1032, %v1119
    %v1145 = vmul.f32 %v1033, %v1124
    %v1146 = vmul.f32 %v1034, %v1129
    %v1147 = vmul.f32 %v1035, %v1134
    %v1148 = vmul.f32 %v1036, %v1139
    %v1149 = vadd.f32 %v875, %v1141
    %v1150 = vadd.f32 %v876, %v1142
    %v1151 = vadd.f32 %v877, %v1143
    %v1152 = vadd.f32 %v878, %v1144
    %v1153 = vadd.f32 %v879, %v1145
    %v1154 = vadd.f32 %v880, %v1146
    %v1155 = vadd.f32 %v881, %v1147
    %v1156 = vadd.f32 %v882, %v1148
    %1158 = vset.pattern.permute.xlu0 1
    %1159 = vperm.xlu0 %1158, %v1069
    %v1160 = vpop.permute.xlu0 %1159
    %1163 = vset.pattern.permute.xlu0 1
    %1164 = vperm.xlu0 %1163, %v1070
    %v1165 = vpop.permute.xlu0 %1164
    %1168 = vset.pattern.permute.xlu0 1
    %1169 = vperm.xlu0 %1168, %v1071
    %v1170 = vpop.permute.xlu0 %1169
    %1173 = vset.pattern.permute.xlu0 1
    %1174 = vperm.xlu0 %1173, %v1072
    %v1175 = vpop.permute.xlu0 %1174
    %1178 = vset.pattern.permute.xlu0 1
    %1179 = vperm.xlu0 %1178, %v1073
    %v1180 = vpop.permute.xlu0 %1179
    %1183 = vset.pattern.permute.xlu0 1
    %1184 = vperm.xlu0 %1183, %v1074
    %v1185 = vpop.permute.xlu0 %1184
    %1188 = vset.pattern.permute.xlu0 1
    %1189 = vperm.xlu0 %1188, %v1075
    %v1190 = vpop.permute.xlu0 %1189
    %1193 = vset.pattern.permute.xlu0 1
    %1194 = vperm.xlu0 %1193, %v1076
    %v1195 = vpop.permute.xlu0 %1194
    %v1197 = vadd.f32 %v1149, %v1160
    %v1198 = vadd.f32 %v1150, %v1165
    %v1199 = vadd.f32 %v1151, %v1170
    %v1200 = vadd.f32 %v1152, %v1175
    %v1201 = vadd.f32 %v1153, %v1180
    %v1202 = vadd.f32 %v1154, %v1185
    %v1203 = vadd.f32 %v1155, %v1190
    %v1204 = vadd.f32 %v1156, %v1195
    %v1205 = vmax.f32 %v1197, 0.0
    %v1206 = vmax.f32 %v1198, 0.0
    %v1207 = vmax.f32 %v1199, 0.0
    %v1208 = vmax.f32 %v1200, 0.0
    %v1209 = vmax.f32 %v1201, 0.0
    %v1210 = vmax.f32 %v1202, 0.0
    %v1211 = vmax.f32 %v1203, 0.0
    %v1212 = vmax.f32 %v1204, 0.0
    %1213 = vst [vmem:[%s6] sm:$0xff] %v1205
    %1214 = vst [vmem:[%s6 + $0x8] sm:$0xff] %v1206
    %1215 = vst [vmem:[%s6 + $0x10] sm:$0xff] %v1207
    %1216 = vst [vmem:[%s6 + $0x18] sm:$0xff] %v1208
    %1217 = vst [vmem:[%s6 + $0x20] sm:$0xff] %v1209
    %1218 = vst [vmem:[%s6 + $0x28] sm:$0xff] %v1210
    %1219 = vst [vmem:[%s6 + $0x30] sm:$0xff] %v1211
    %1220 = vst [vmem:[%s6 + $0x38] sm:$0xff] %v1212
  $region33: #{resnet_forward.13} parent=0 // pred_fallthru
    _
  // Predicated region
  $region34: #{resnet_forward.13} parent=0 // pred_check
    _
  $region35: #{resnet_forward.13} parent=0 // pred_check_branch
    %1222 = sbr.rel (0) target = $region37
  $region36: #{resnet_forward.13} parent=0 // pred_region
    _
  $region37: #{resnet_forward.13} parent=0 // pred_fallthru
    _
  // Predicated region
  $region38: #{resnet_forward.13} parent=0 // pred_check
    _
  $region39: #{resnet_forward.13} parent=0 // pred_check_branch
    %1224 = sbr.rel (0) target = $region41
  $region40: #{resnet_forward.13} parent=0 // pred_region
    _
  $region41: #{resnet_forward.13} parent=0 // pred_fallthru
    _

</llo_original>
